<compile_context>
chip_gen: v7x
topology: tpu7x:2x2x1
jax: 0.10.0
libtpu: 0.0.40
codegen_flags: <defaults>
</compile_context>

<pallas_src>
import functools

import jax
import jax.numpy as jnp
from jax.experimental import pallas as pl
from jax.experimental.pallas import tpu as pltpu


# ----------------------------------------------------------------------------
# Tile selection helpers
# ----------------------------------------------------------------------------
def _pick_tile(dim, preferred, quantum):
    """Largest tile <= preferred that is a multiple of `quantum` and divides
    `dim`; falls back to the full dimension (always legal as a block dim)."""
    if dim <= preferred:
        return dim
    t = (preferred // quantum) * quantum
    while t >= quantum:
        if dim % t == 0:
            return t
        t -= quantum
    return dim


# ----------------------------------------------------------------------------
# Pallas kernels
# ----------------------------------------------------------------------------
def _fused_matmul_kernel(a_ref, b_ref, s_ref, c_ref, m_ref, *rest, has_res):
    """(tm,tk)@(tk,tn) accumulated over the K grid axis into a VMEM f32 scratch.

    Epilogue (last K step): per-column scale/bias (folded frozen BN),
    optional residual add, per-column ReLU mask.
    """
    if has_res:
        r_ref, o_ref, acc_ref = rest
    else:
        o_ref, acc_ref = rest
        r_ref = None

    k = pl.program_id(2)

    @pl.when(k == 0)
    def _init():
        acc_ref[...] = jnp.zeros_like(acc_ref)

    acc_ref[...] += jnp.dot(a_ref[...], b_ref[...],
                            preferred_element_type=jnp.float32)

    @pl.when(k == pl.num_programs(2) - 1)
    def _finalize():
        y = acc_ref[...] * s_ref[...] + c_ref[...]
        if has_res:
            y = y + r_ref[...]
        y = jnp.where(m_ref[...] > 0.0, jnp.maximum(y, 0.0), y)
        o_ref[...] = y.astype(o_ref.dtype)


def _maxpool_reduce_kernel(x_ref, o_ref):
    """Running max over the tap grid axis; output block resident across taps."""
    t = pl.program_id(1)

    @pl.when(t == 0)
    def _():
        o_ref[...] = x_ref[0]

    @pl.when(t != 0)
    def _():
        o_ref[...] = jnp.maximum(o_ref[...], x_ref[0])


def _gap_kernel(x_ref, o_ref):
    # x: (B, S, C) -> mean over the spatial axis (axis=1), no host transpose.
    o_ref[...] = jnp.mean(x_ref[...], axis=1)


# ----------------------------------------------------------------------------
# Pallas wrappers
# ----------------------------------------------------------------------------
_MM_COMPILER_PARAMS = pltpu.CompilerParams(
    dimension_semantics=("parallel", "parallel", "arbitrary"),
    vmem_limit_bytes=32 * 1024 * 1024,
)


def fused_matmul(a, b, scale, bias, relu_mask, residual=None,
                 tm_target=256, tn_target=256, tk_target=256):
    """(M,K)@(K,N) with folded-BN scale/bias, optional residual, per-col ReLU.

    A/B are cast to bf16 for the MXU; accumulation and epilogue are f32.
    Tiles are chosen so they exactly divide each dim (or span it), so no
    host-side zero-padding / slicing is needed around the kernel.
    """
    M, K = a.shape
    K2, N = b.shape
    assert K == K2
    tm = _pick_tile(M, tm_target, 8)
    tn = _pick_tile(N, tn_target, 128)
    tk = _pick_tile(K, tk_target, 128)

    a16 = a.astype(jnp.bfloat16)
    b16 = b.astype(jnp.bfloat16)
    s2 = scale.reshape(1, N).astype(jnp.float32)
    c2 = bias.reshape(1, N).astype(jnp.float32)
    m2 = relu_mask.reshape(1, N).astype(jnp.float32)

    in_specs = [
        pl.BlockSpec((tm, tk), lambda i, j, k: (i, k)),
        pl.BlockSpec((tk, tn), lambda i, j, k: (k, j)),
        pl.BlockSpec((1, tn), lambda i, j, k: (0, j)),
        pl.BlockSpec((1, tn), lambda i, j, k: (0, j)),
        pl.BlockSpec((1, tn), lambda i, j, k: (0, j)),
    ]
    args = [a16, b16, s2, c2, m2]
    has_res = residual is not None
    if has_res:
        in_specs.append(pl.BlockSpec((tm, tn), lambda i, j, k: (i, j)))
        args.append(residual.astype(jnp.float32))

    out = pl.pallas_call(
        functools.partial(_fused_matmul_kernel, has_res=has_res),
        out_shape=jax.ShapeDtypeStruct((M, N), jnp.float32),
        grid=(M // tm, N // tn, K // tk),
        in_specs=in_specs,
        out_specs=pl.BlockSpec((tm, tn), lambda i, j, k: (i, j)),
        scratch_shapes=[pltpu.VMEM((tm, tn), jnp.float32)],
        compiler_params=_MM_COMPILER_PARAMS,
    )(*args)
    return out


def maxpool3x3_s2(x):
    B, H, W, C = x.shape
    k, s, pad = 3, 2, 1
    Ho = (H + 2 * pad - k) // s + 1
    Wo = (W + 2 * pad - k) // s + 1
    x_p = jnp.pad(x, ((0, 0), (pad, pad), (pad, pad), (0, 0)),
                  constant_values=-jnp.inf)
    wins = []
    for dy in range(k):
        for dx in range(k):
            wins.append(jax.lax.slice(
                x_p,
                (0, dy, dx, 0),
                (B, dy + (Ho - 1) * s + 1, dx + (Wo - 1) * s + 1, C),
                (1, s, s, 1),
            ))
    stack = jnp.stack(wins, axis=0).reshape(k * k, B * Ho * Wo, C)
    M = B * Ho * Wo
    tm = _pick_tile(M, 512, 8)
    out = pl.pallas_call(
        _maxpool_reduce_kernel,
        out_shape=jax.ShapeDtypeStruct((M, C), jnp.float32),
        grid=(M // tm, k * k),
        in_specs=[pl.BlockSpec((1, tm, C), lambda i, t: (t, i, 0))],
        out_specs=pl.BlockSpec((tm, C), lambda i, t: (i, 0)),
        compiler_params=pltpu.CompilerParams(
            dimension_semantics=("parallel", "arbitrary")),
    )(stack)
    return out.reshape(B, Ho, Wo, C)


def global_avg_pool(x_bsc):
    B, S, C = x_bsc.shape
    return pl.pallas_call(
        _gap_kernel,
        out_shape=jax.ShapeDtypeStruct((B, C), jnp.float32),
        grid=(1,),
        in_specs=[pl.BlockSpec((B, S, C), lambda i: (0, 0, 0))],
        out_specs=pl.BlockSpec((B, C), lambda i: (0, 0)),
        compiler_params=pltpu.CompilerParams(
            dimension_semantics=("arbitrary",)),
    )(x_bsc)


# ----------------------------------------------------------------------------
# JAX glue: im2col, conv+frozenBN(+ReLU+residual), BasicBlock
# ----------------------------------------------------------------------------
def _im2col(x, kh, kw, stride, pad):
    B, H, W, C = x.shape
    x_p = jnp.pad(x, ((0, 0), (pad, pad), (pad, pad), (0, 0)))
    Ho = (H + 2 * pad - kh) // stride + 1
    Wo = (W + 2 * pad - kw) // stride + 1
    cols = []
    for dy in range(kh):
        for dx in range(kw):
            patch = jax.lax.slice(
                x_p,
                (0, dy, dx, 0),
                (B, dy + (Ho - 1) * stride + 1, dx + (Wo - 1) * stride + 1, C),
                (1, stride, stride, 1),
            )
            cols.append(patch)
    col = jnp.concatenate(cols, axis=-1)  # (B, Ho, Wo, kh*kw*C)
    return col.reshape(B * Ho * Wo, kh * kw * C), Ho, Wo


def _bn_fold(bn, eps=1e-5):
    gamma, beta, mean, var = bn
    scale = gamma / jnp.sqrt(var + eps)
    bias = beta - mean * scale
    return scale, bias


def conv_bn(x, w_hwio, bn, stride, pad, relu, residual=None):
    """Conv + frozen BN (+ optional residual add) + optional ReLU in one kernel."""
    kh, kw, cin, cout = w_hwio.shape
    B = x.shape[0]
    col, Ho, Wo = _im2col(x, kh, kw, stride, pad)
    scale, bias = _bn_fold(bn)
    mask = jnp.full((cout,), 1.0 if relu else 0.0, jnp.float32)
    res2d = None if residual is None else residual.reshape(B * Ho * Wo, cout)
    y = fused_matmul(col, w_hwio.reshape(kh * kw * cin, cout),
                     scale, bias, mask, res2d)
    return y.reshape(B, Ho, Wo, cout)


def conv1_with_downsample(x, w1, bn1, wd, bnd, stride):
    """Fold the BasicBlock's 1x1 downsample into conv1's matmul.

    The 1x1 stride-s conv (pad 0) reads x exactly at the center tap of conv1's
    3x3/pad-1/stride-s im2col, so its weights go into the center-tap rows of a
    widened (9*Cin, 2*Cout) weight matrix.  Conv1 columns get ReLU, the
    shortcut columns do not (per-column ReLU mask).
    """
    kh, kw, cin, cout = w1.shape
    B = x.shape[0]
    col, Ho, Wo = _im2col(x, kh, kw, stride, 1)

    w1_flat = w1.reshape(kh * kw * cin, cout)
    center = (kh // 2) * kw + (kw // 2)
    wd_big = jnp.zeros((kh * kw * cin, cout), jnp.float32)
    wd_big = wd_big.at[center * cin:(center + 1) * cin, :].set(
        wd.reshape(cin, cout))
    w_comb = jnp.concatenate([w1_flat, wd_big], axis=1)

    s1, b1 = _bn_fold(bn1)
    sd, bd = _bn_fold(bnd)
    scale = jnp.concatenate([s1, sd])
    bias = jnp.concatenate([b1, bd])
    mask = jnp.concatenate([jnp.ones((cout,), jnp.float32),
                            jnp.zeros((cout,), jnp.float32)])

    y = fused_matmul(col, w_comb, scale, bias, mask)
    y = y.reshape(B, Ho, Wo, 2 * cout)
    return y[..., :cout], y[..., cout:]


def basic_block(x, p, stride):
    if "down_w" in p:
        out1, shortcut = conv1_with_downsample(
            x, p["conv1_w"], p["bn1"], p["down_w"], p["down_bn"], stride)
    else:
        out1 = conv_bn(x, p["conv1_w"], p["bn1"], stride, 1, relu=True)
        shortcut = x
    # conv2 + BN + residual add + ReLU all fused in one matmul epilogue.
    return conv_bn(out1, p["conv2_w"], p["bn2"], 1, 1, relu=True,
                   residual=shortcut)


# ----------------------------------------------------------------------------
# Deterministic parameter initialization
# ----------------------------------------------------------------------------
def _kaiming_conv(key, kh, kw, cin, cout):
    std = (2.0 / (kh * kw * cin)) ** 0.5
    return std * jax.random.normal(key, (kh, kw, cin, cout), jnp.float32)


def _bn_params(key, c):
    k1, k2, k3, k4 = jax.random.split(key, 4)
    gamma = 1.0 + 0.1 * jax.random.normal(k1, (c,), jnp.float32)
    beta = 0.1 * jax.random.normal(k2, (c,), jnp.float32)
    mean = 0.1 * jax.random.normal(k3, (c,), jnp.float32)
    var = 0.5 + jax.random.uniform(k4, (c,), jnp.float32)
    return (gamma, beta, mean, var)


def init_params(key, num_classes):
    widths = [16, 32, 64, 128]
    keys = jax.random.split(key, 32)
    ki = iter(range(32))
    params = {}
    params["stem"] = {
        "conv_w": _kaiming_conv(keys[next(ki)], 3, 3, 3, widths[0]),
        "bn": _bn_params(keys[next(ki)], widths[0]),
    }
    cin = widths[0]
    for li, cout in enumerate(widths, start=1):
        stride = 1 if li == 1 else 2
        p = {
            "conv1_w": _kaiming_conv(keys[next(ki)], 3, 3, cin, cout),
            "bn1": _bn_params(keys[next(ki)], cout),
            "conv2_w": _kaiming_conv(keys[next(ki)], 3, 3, cout, cout),
            "bn2": _bn_params(keys[next(ki)], cout),
        }
        if stride != 1 or cin != cout:
            p["down_w"] = _kaiming_conv(keys[next(ki)], 1, 1, cin, cout)
            p["down_bn"] = _bn_params(keys[next(ki)], cout)
        params[f"layer{li}"] = p
        cin = cout
    n_outputs = widths[-1]
    # classifier: weights_init_classifier -> normal(std=0.001), bias 0
    w = 0.001 * jax.random.normal(keys[next(ki)], (num_classes, n_outputs),
                                  jnp.float32)
    params["classifier"] = {"w": jnp.transpose(w),
                            "b": jnp.zeros((num_classes,), jnp.float32)}
    params["n_outputs"] = n_outputs
    return params


# ----------------------------------------------------------------------------
# URResNet.forward: score, feat = classifier(flatten(network(x))), feature
# ----------------------------------------------------------------------------
def urresnet_forward(params, x_nchw):
    x = jnp.transpose(x_nchw, (0, 2, 3, 1)).astype(jnp.float32)  # NCHW -> NHWC
    # stem: conv -> frozen BN -> ReLU -> maxpool
    x = conv_bn(x, params["stem"]["conv_w"], params["stem"]["bn"], 1, 1,
                relu=True)
    x = maxpool3x3_s2(x)
    # block1..block4
    x = basic_block(x, params["layer1"], 1)
    x = basic_block(x, params["layer2"], 2)
    x = basic_block(x, params["layer3"], 2)
    x = basic_block(x, params["layer4"], 2)
    # global average pool -> (B, n_outputs)
    B, H, W, C = x.shape
    feat = global_avg_pool(x.reshape(B, H * W, C))
    # dropout (eval) == identity; globalfeat = x.view(B, -1)
    w = params["classifier"]["w"]
    b = params["classifier"]["b"]
    score = fused_matmul(
        feat, w,
        jnp.ones((w.shape[1],), jnp.float32), b,
        jnp.zeros((w.shape[1],), jnp.float32))
    return score, feat


if __name__ == "__main__":
    NUM_CLASSES = 7
    key = jax.random.PRNGKey(0)
    kx, kp = jax.random.split(key)
    params = init_params(kp, NUM_CLASSES)
    x = jax.random.normal(kx, (2, 3, 32, 32), jnp.float32)  # small NCHW input
    score, feat = jax.jit(urresnet_forward)(params, x)
    jax.block_until_ready((score, feat))
    assert score.shape == (2, NUM_CLASSES), score.shape
    assert feat.shape == (2, params["n_outputs"]), feat.shape
    assert bool(jnp.all(jnp.isfinite(score))) and bool(jnp.all(jnp.isfinite(feat)))
    print("KERNEL_OK")
</pallas_src>

<mosaic_0001>
module attributes {stable_mosaic.version = 11 : i64} {
  func.func @_fused_matmul_kernel(%arg0: i32, %arg1: i32, %arg2: i32, %arg3: memref<256x27xbf16, #tpu.memory_space<vmem>>, %arg4: memref<27x16xbf16, #tpu.memory_space<vmem>>, %arg5: memref<1x16xf32, #tpu.memory_space<vmem>>, %arg6: memref<1x16xf32, #tpu.memory_space<vmem>>, %arg7: memref<1x16xf32, #tpu.memory_space<vmem>>, %arg8: memref<256x16xf32, #tpu.memory_space<vmem>>, %arg9: memref<256x16xf32, #tpu.memory_space<vmem>>) attributes {dimension_semantics = [#tpu.dimension_semantics<parallel>, #tpu.dimension_semantics<parallel>, #tpu.dimension_semantics<arbitrary>], iteration_bounds = array<i64: 8, 1, 1>, scalar_prefetch = 0 : i64, scratch_operands = 1 : i64, tpu.core_type = #tpu.core_type<tc>, window_params = [{transform_indices = @transform_0, window_bounds = array<i64: 256, 27>}, {transform_indices = @transform_1, window_bounds = array<i64: 27, 16>}, {transform_indices = @transform_2, window_bounds = array<i64: 1, 16>}, {transform_indices = @transform_3, window_bounds = array<i64: 1, 16>}, {transform_indices = @transform_4, window_bounds = array<i64: 1, 16>}, {transform_indices = @transform_5, window_bounds = array<i64: 256, 16>}]} {
    %c0_i32 = arith.constant 0 : i32
    %0 = arith.cmpi eq, %arg2, %c0_i32 : i32
    %1 = arith.extui %0 : i1 to i32
    %c0_i32_0 = arith.constant 0 : i32
    %2 = arith.cmpi ne, %1, %c0_i32_0 : i32
    scf.if %2 {
      %cst_10 = arith.constant 0.000000e+00 : f32
      %12 = vector.broadcast %cst_10 : f32 to vector<256x16xf32>
      %c0_11 = arith.constant 0 : index
      %c0_12 = arith.constant 0 : index
      %13 = vector.load %arg9[%c0_11, %c0_12] : memref<256x16xf32, #tpu.memory_space<vmem>>, vector<256x16xf32>
      tpu.vector_store %arg9[%c0_11, %c0_12], %12 {strides = array<i32>} : memref<256x16xf32, #tpu.memory_space<vmem>>, vector<256x16xf32>,
    } else {
    }
    %c0 = arith.constant 0 : index
    %c0_1 = arith.constant 0 : index
    %3 = vector.load %arg9[%c0, %c0_1] : memref<256x16xf32, #tpu.memory_space<vmem>>, vector<256x16xf32>
    %c0_2 = arith.constant 0 : index
    %c0_3 = arith.constant 0 : index
    %4 = vector.load %arg3[%c0_2, %c0_3] : memref<256x27xbf16, #tpu.memory_space<vmem>>, vector<256x27xbf16>
    %c0_4 = arith.constant 0 : index
    %c0_5 = arith.constant 0 : index
    %5 = vector.load %arg4[%c0_4, %c0_5] : memref<27x16xbf16, #tpu.memory_space<vmem>>, vector<27x16xbf16>
    %cst = arith.constant dense<0.000000e+00> : vector<256x16xf32>
    %6 = tpu.matmul %4, %5, %cst {dimension_numbers = #tpu.dot_dimension_numbers<[1], [0], [0], [1], [0, 0, 1, 1], [], []>} : vector<256x27xbf16>, vector<27x16xbf16>, vector<256x16xf32> -> vector<256x16xf32>
    %7 = arith.addf %3, %6 : vector<256x16xf32>
    %c0_6 = arith.constant 0 : index
    %c0_7 = arith.constant 0 : index
    %8 = vector.load %arg9[%c0_6, %c0_7] : memref<256x16xf32, #tpu.memory_space<vmem>>, vector<256x16xf32>
    tpu.vector_store %arg9[%c0_6, %c0_7], %7 {strides = array<i32>} : memref<256x16xf32, #tpu.memory_space<vmem>>, vector<256x16xf32>,
    %c0_i32_8 = arith.constant 0 : i32
    %9 = arith.cmpi eq, %arg2, %c0_i32_8 : i32
    %10 = arith.extui %9 : i1 to i32
    %c0_i32_9 = arith.constant 0 : i32
    %11 = arith.cmpi ne, %10, %c0_i32_9 : i32
    scf.if %11 {
      %c0_10 = arith.constant 0 : index
      %c0_11 = arith.constant 0 : index
      %12 = vector.load %arg9[%c0_10, %c0_11] : memref<256x16xf32, #tpu.memory_space<vmem>>, vector<256x16xf32>
      %c0_12 = arith.constant 0 : index
      %c0_13 = arith.constant 0 : index
      %13 = vector.load %arg5[%c0_12, %c0_13] : memref<1x16xf32, #tpu.memory_space<vmem>>, vector<1x16xf32>
      %14 = vector.broadcast %13 : vector<1x16xf32> to vector<256x16xf32>
      %15 = arith.mulf %12, %14 : vector<256x16xf32>
      %c0_14 = arith.constant 0 : index
      %c0_15 = arith.constant 0 : index
      %16 = vector.load %arg6[%c0_14, %c0_15] : memref<1x16xf32, #tpu.memory_space<vmem>>, vector<1x16xf32>
      %17 = vector.broadcast %16 : vector<1x16xf32> to vector<256x16xf32>
      %18 = arith.addf %15, %17 : vector<256x16xf32>
      %c0_16 = arith.constant 0 : index
      %c0_17 = arith.constant 0 : index
      %19 = vector.load %arg7[%c0_16, %c0_17] : memref<1x16xf32, #tpu.memory_space<vmem>>, vector<1x16xf32>
      %cst_18 = arith.constant 0.000000e+00 : f32
      %20 = vector.broadcast %cst_18 : f32 to vector<1x16xf32>
      %21 = arith.cmpf ogt, %19, %20 : vector<1x16xf32>
      %cst_19 = arith.constant 0.000000e+00 : f32
      %22 = vector.broadcast %cst_19 : f32 to vector<256x16xf32>
      %23 = arith.maximumf %18, %22 : vector<256x16xf32>
      %24 = vector.shape_cast %21 : vector<1x16xi1> to vector<1x16xi1>
      %25 = vector.broadcast %24 : vector<1x16xi1> to vector<256x16xi1>
      %26 = arith.select %25, %23, %18 : vector<256x16xi1>, vector<256x16xf32>
      %c0_20 = arith.constant 0 : index
      %c0_21 = arith.constant 0 : index
      %27 = vector.load %arg8[%c0_20, %c0_21] : memref<256x16xf32, #tpu.memory_space<vmem>>, vector<256x16xf32>
      tpu.vector_store %arg8[%c0_20, %c0_21], %26 {strides = array<i32>} : memref<256x16xf32, #tpu.memory_space<vmem>>, vector<256x16xf32>,
    } else {
    }
    return
  }
  func.func @transform_0(%arg0: i32, %arg1: i32, %arg2: i32) -> (i32, i32) {
    %c0_i32 = arith.constant 0 : i32
    return %arg0, %arg2 : i32, i32
  }
  func.func @transform_1(%arg0: i32, %arg1: i32, %arg2: i32) -> (i32, i32) {
    %c0_i32 = arith.constant 0 : i32
    return %arg2, %arg1 : i32, i32
  }
  func.func @transform_2(%arg0: i32, %arg1: i32, %arg2: i32) -> (i32, i32) {
    %c0_i32 = arith.constant 0 : i32
    %c0_i32_0 = arith.constant 0 : i32
    return %c0_i32, %arg1 : i32, i32
  }
  func.func @transform_3(%arg0: i32, %arg1: i32, %arg2: i32) -> (i32, i32) {
    %c0_i32 = arith.constant 0 : i32
    %c0_i32_0 = arith.constant 0 : i32
    return %c0_i32, %arg1 : i32, i32
  }
  func.func @transform_4(%arg0: i32, %arg1: i32, %arg2: i32) -> (i32, i32) {
    %c0_i32 = arith.constant 0 : i32
    %c0_i32_0 = arith.constant 0 : i32
    return %c0_i32, %arg1 : i32, i32
  }
  func.func @transform_5(%arg0: i32, %arg1: i32, %arg2: i32) -> (i32, i32) {
    %c0_i32 = arith.constant 0 : i32
    return %arg0, %arg1 : i32, i32
  }
}

module attributes {stable_mosaic.version = 11 : i64} {
  func.func @_maxpool_reduce_kernel(%arg0: i32, %arg1: i32, %arg2: memref<1x512x16xf32, #tpu.memory_space<vmem>>, %arg3: memref<512x16xf32, #tpu.memory_space<vmem>>) attributes {dimension_semantics = [#tpu.dimension_semantics<parallel>, #tpu.dimension_semantics<arbitrary>], iteration_bounds = array<i64: 1, 9>, scalar_prefetch = 0 : i64, scratch_operands = 0 : i64, tpu.core_type = #tpu.core_type<tc>, window_params = [{transform_indices = @transform_0, window_bounds = array<i64: 1, 512, 16>}, {transform_indices = @transform_1, window_bounds = array<i64: 512, 16>}]} {
    %c0_i32 = arith.constant 0 : i32
    %0 = arith.cmpi eq, %arg1, %c0_i32 : i32
    %1 = arith.extui %0 : i1 to i32
    %c0_i32_0 = arith.constant 0 : i32
    %2 = arith.cmpi ne, %1, %c0_i32_0 : i32
    scf.if %2 {
      %c0 = arith.constant 0 : index
      %c0_3 = arith.constant 0 : index
      %c0_4 = arith.constant 0 : index
      %6 = vector.load %arg2[%c0, %c0_3, %c0_4] : memref<1x512x16xf32, #tpu.memory_space<vmem>>, vector<1x512x16xf32>
      %7 = vector.shape_cast %6 : vector<1x512x16xf32> to vector<512x16xf32>
      %c0_5 = arith.constant 0 : index
      %c0_6 = arith.constant 0 : index
      %8 = vector.load %arg3[%c0_5, %c0_6] : memref<512x16xf32, #tpu.memory_space<vmem>>, vector<512x16xf32>
      tpu.vector_store %arg3[%c0_5, %c0_6], %7 {strides = array<i32>} : memref<512x16xf32, #tpu.memory_space<vmem>>, vector<512x16xf32>,
    } else {
    }
    %c0_i32_1 = arith.constant 0 : i32
    %3 = arith.cmpi ne, %arg1, %c0_i32_1 : i32
    %4 = arith.extui %3 : i1 to i32
    %c0_i32_2 = arith.constant 0 : i32
    %5 = arith.cmpi ne, %4, %c0_i32_2 : i32
    scf.if %5 {
      %c0 = arith.constant 0 : index
      %c0_3 = arith.constant 0 : index
      %6 = vector.load %arg3[%c0, %c0_3] : memref<512x16xf32, #tpu.memory_space<vmem>>, vector<512x16xf32>
      %c0_4 = arith.constant 0 : index
      %c0_5 = arith.constant 0 : index
      %c0_6 = arith.constant 0 : index
      %7 = vector.load %arg2[%c0_4, %c0_5, %c0_6] : memref<1x512x16xf32, #tpu.memory_space<vmem>>, vector<1x512x16xf32>
      %8 = vector.shape_cast %7 : vector<1x512x16xf32> to vector<512x16xf32>
      %9 = arith.maximumf %6, %8 : vector<512x16xf32>
      %c0_7 = arith.constant 0 : index
      %c0_8 = arith.constant 0 : index
      %10 = vector.load %arg3[%c0_7, %c0_8] : memref<512x16xf32, #tpu.memory_space<vmem>>, vector<512x16xf32>
      tpu.vector_store %arg3[%c0_7, %c0_8], %9 {strides = array<i32>} : memref<512x16xf32, #tpu.memory_space<vmem>>, vector<512x16xf32>,
    } else {
    }
    return
  }
  func.func @transform_0(%arg0: i32, %arg1: i32) -> (i32, i32, i32) {
    %c0_i32 = arith.constant 0 : i32
    %c0_i32_0 = arith.constant 0 : i32
    return %arg1, %arg0, %c0_i32 : i32, i32, i32
  }
  func.func @transform_1(%arg0: i32, %arg1: i32) -> (i32, i32) {
    %c0_i32 = arith.constant 0 : i32
    %c0_i32_0 = arith.constant 0 : i32
    return %arg0, %c0_i32 : i32, i32
  }
}

module attributes {stable_mosaic.version = 11 : i64} {
  func.func @_fused_matmul_kernel(%arg0: i32, %arg1: i32, %arg2: i32, %arg3: memref<256x144xbf16, #tpu.memory_space<vmem>>, %arg4: memref<144x16xbf16, #tpu.memory_space<vmem>>, %arg5: memref<1x16xf32, #tpu.memory_space<vmem>>, %arg6: memref<1x16xf32, #tpu.memory_space<vmem>>, %arg7: memref<1x16xf32, #tpu.memory_space<vmem>>, %arg8: memref<256x16xf32, #tpu.memory_space<vmem>>, %arg9: memref<256x16xf32, #tpu.memory_space<vmem>>) attributes {dimension_semantics = [#tpu.dimension_semantics<parallel>, #tpu.dimension_semantics<parallel>, #tpu.dimension_semantics<arbitrary>], iteration_bounds = array<i64: 2, 1, 1>, scalar_prefetch = 0 : i64, scratch_operands = 1 : i64, tpu.core_type = #tpu.core_type<tc>, window_params = [{transform_indices = @transform_0, window_bounds = array<i64: 256, 144>}, {transform_indices = @transform_1, window_bounds = array<i64: 144, 16>}, {transform_indices = @transform_2, window_bounds = array<i64: 1, 16>}, {transform_indices = @transform_3, window_bounds = array<i64: 1, 16>}, {transform_indices = @transform_4, window_bounds = array<i64: 1, 16>}, {transform_indices = @transform_5, window_bounds = array<i64: 256, 16>}]} {
    %c0_i32 = arith.constant 0 : i32
    %0 = arith.cmpi eq, %arg2, %c0_i32 : i32
    %1 = arith.extui %0 : i1 to i32
    %c0_i32_0 = arith.constant 0 : i32
    %2 = arith.cmpi ne, %1, %c0_i32_0 : i32
    scf.if %2 {
      %cst_10 = arith.constant 0.000000e+00 : f32
      %12 = vector.broadcast %cst_10 : f32 to vector<256x16xf32>
      %c0_11 = arith.constant 0 : index
      %c0_12 = arith.constant 0 : index
      %13 = vector.load %arg9[%c0_11, %c0_12] : memref<256x16xf32, #tpu.memory_space<vmem>>, vector<256x16xf32>
      tpu.vector_store %arg9[%c0_11, %c0_12], %12 {strides = array<i32>} : memref<256x16xf32, #tpu.memory_space<vmem>>, vector<256x16xf32>,
    } else {
    }
    %c0 = arith.constant 0 : index
    %c0_1 = arith.constant 0 : index
    %3 = vector.load %arg9[%c0, %c0_1] : memref<256x16xf32, #tpu.memory_space<vmem>>, vector<256x16xf32>
    %c0_2 = arith.constant 0 : index
    %c0_3 = arith.constant 0 : index
    %4 = vector.load %arg3[%c0_2, %c0_3] : memref<256x144xbf16, #tpu.memory_space<vmem>>, vector<256x144xbf16>
    %c0_4 = arith.constant 0 : index
    %c0_5 = arith.constant 0 : index
    %5 = vector.load %arg4[%c0_4, %c0_5] : memref<144x16xbf16, #tpu.memory_space<vmem>>, vector<144x16xbf16>
    %cst = arith.constant dense<0.000000e+00> : vector<256x16xf32>
    %6 = tpu.matmul %4, %5, %cst {dimension_numbers = #tpu.dot_dimension_numbers<[1], [0], [0], [1], [0, 0, 1, 1], [], []>} : vector<256x144xbf16>, vector<144x16xbf16>, vector<256x16xf32> -> vector<256x16xf32>
    %7 = arith.addf %3, %6 : vector<256x16xf32>
    %c0_6 = arith.constant 0 : index
    %c0_7 = arith.constant 0 : index
    %8 = vector.load %arg9[%c0_6, %c0_7] : memref<256x16xf32, #tpu.memory_space<vmem>>, vector<256x16xf32>
    tpu.vector_store %arg9[%c0_6, %c0_7], %7 {strides = array<i32>} : memref<256x16xf32, #tpu.memory_space<vmem>>, vector<256x16xf32>,
    %c0_i32_8 = arith.constant 0 : i32
    %9 = arith.cmpi eq, %arg2, %c0_i32_8 : i32
    %10 = arith.extui %9 : i1 to i32
    %c0_i32_9 = arith.constant 0 : i32
    %11 = arith.cmpi ne, %10, %c0_i32_9 : i32
    scf.if %11 {
      %c0_10 = arith.constant 0 : index
      %c0_11 = arith.constant 0 : index
      %12 = vector.load %arg9[%c0_10, %c0_11] : memref<256x16xf32, #tpu.memory_space<vmem>>, vector<256x16xf32>
      %c0_12 = arith.constant 0 : index
      %c0_13 = arith.constant 0 : index
      %13 = vector.load %arg5[%c0_12, %c0_13] : memref<1x16xf32, #tpu.memory_space<vmem>>, vector<1x16xf32>
      %14 = vector.broadcast %13 : vector<1x16xf32> to vector<256x16xf32>
      %15 = arith.mulf %12, %14 : vector<256x16xf32>
      %c0_14 = arith.constant 0 : index
      %c0_15 = arith.constant 0 : index
      %16 = vector.load %arg6[%c0_14, %c0_15] : memref<1x16xf32, #tpu.memory_space<vmem>>, vector<1x16xf32>
      %17 = vector.broadcast %16 : vector<1x16xf32> to vector<256x16xf32>
      %18 = arith.addf %15, %17 : vector<256x16xf32>
      %c0_16 = arith.constant 0 : index
      %c0_17 = arith.constant 0 : index
      %19 = vector.load %arg7[%c0_16, %c0_17] : memref<1x16xf32, #tpu.memory_space<vmem>>, vector<1x16xf32>
      %cst_18 = arith.constant 0.000000e+00 : f32
      %20 = vector.broadcast %cst_18 : f32 to vector<1x16xf32>
      %21 = arith.cmpf ogt, %19, %20 : vector<1x16xf32>
      %cst_19 = arith.constant 0.000000e+00 : f32
      %22 = vector.broadcast %cst_19 : f32 to vector<256x16xf32>
      %23 = arith.maximumf %18, %22 : vector<256x16xf32>
      %24 = vector.shape_cast %21 : vector<1x16xi1> to vector<1x16xi1>
      %25 = vector.broadcast %24 : vector<1x16xi1> to vector<256x16xi1>
      %26 = arith.select %25, %23, %18 : vector<256x16xi1>, vector<256x16xf32>
      %c0_20 = arith.constant 0 : index
      %c0_21 = arith.constant 0 : index
      %27 = vector.load %arg8[%c0_20, %c0_21] : memref<256x16xf32, #tpu.memory_space<vmem>>, vector<256x16xf32>
      tpu.vector_store %arg8[%c0_20, %c0_21], %26 {strides = array<i32>} : memref<256x16xf32, #tpu.memory_space<vmem>>, vector<256x16xf32>,
    } else {
    }
    return
  }
  func.func @transform_0(%arg0: i32, %arg1: i32, %arg2: i32) -> (i32, i32) {
    %c0_i32 = arith.constant 0 : i32
    return %arg0, %arg2 : i32, i32
  }
  func.func @transform_1(%arg0: i32, %arg1: i32, %arg2: i32) -> (i32, i32) {
    %c0_i32 = arith.constant 0 : i32
    return %arg2, %arg1 : i32, i32
  }
  func.func @transform_2(%arg0: i32, %arg1: i32, %arg2: i32) -> (i32, i32) {
    %c0_i32 = arith.constant 0 : i32
    %c0_i32_0 = arith.constant 0 : i32
    return %c0_i32, %arg1 : i32, i32
  }
  func.func @transform_3(%arg0: i32, %arg1: i32, %arg2: i32) -> (i32, i32) {
    %c0_i32 = arith.constant 0 : i32
    %c0_i32_0 = arith.constant 0 : i32
    return %c0_i32, %arg1 : i32, i32
  }
  func.func @transform_4(%arg0: i32, %arg1: i32, %arg2: i32) -> (i32, i32) {
    %c0_i32 = arith.constant 0 : i32
    %c0_i32_0 = arith.constant 0 : i32
    return %c0_i32, %arg1 : i32, i32
  }
  func.func @transform_5(%arg0: i32, %arg1: i32, %arg2: i32) -> (i32, i32) {
    %c0_i32 = arith.constant 0 : i32
    return %arg0, %arg1 : i32, i32
  }
}

module attributes {stable_mosaic.version = 11 : i64} {
  func.func @_fused_matmul_kernel(%arg0: i32, %arg1: i32, %arg2: i32, %arg3: memref<256x144xbf16, #tpu.memory_space<vmem>>, %arg4: memref<144x16xbf16, #tpu.memory_space<vmem>>, %arg5: memref<1x16xf32, #tpu.memory_space<vmem>>, %arg6: memref<1x16xf32, #tpu.memory_space<vmem>>, %arg7: memref<1x16xf32, #tpu.memory_space<vmem>>, %arg8: memref<256x16xf32, #tpu.memory_space<vmem>>, %arg9: memref<256x16xf32, #tpu.memory_space<vmem>>, %arg10: memref<256x16xf32, #tpu.memory_space<vmem>>) attributes {dimension_semantics = [#tpu.dimension_semantics<parallel>, #tpu.dimension_semantics<parallel>, #tpu.dimension_semantics<arbitrary>], iteration_bounds = array<i64: 2, 1, 1>, scalar_prefetch = 0 : i64, scratch_operands = 1 : i64, tpu.core_type = #tpu.core_type<tc>, window_params = [{transform_indices = @transform_0, window_bounds = array<i64: 256, 144>}, {transform_indices = @transform_1, window_bounds = array<i64: 144, 16>}, {transform_indices = @transform_2, window_bounds = array<i64: 1, 16>}, {transform_indices = @transform_3, window_bounds = array<i64: 1, 16>}, {transform_indices = @transform_4, window_bounds = array<i64: 1, 16>}, {transform_indices = @transform_5, window_bounds = array<i64: 256, 16>}, {transform_indices = @transform_6, window_bounds = array<i64: 256, 16>}]} {
    %c0_i32 = arith.constant 0 : i32
    %0 = arith.cmpi eq, %arg2, %c0_i32 : i32
    %1 = arith.extui %0 : i1 to i32
    %c0_i32_0 = arith.constant 0 : i32
    %2 = arith.cmpi ne, %1, %c0_i32_0 : i32
    scf.if %2 {
      %cst_10 = arith.constant 0.000000e+00 : f32
      %12 = vector.broadcast %cst_10 : f32 to vector<256x16xf32>
      %c0_11 = arith.constant 0 : index
      %c0_12 = arith.constant 0 : index
      %13 = vector.load %arg10[%c0_11, %c0_12] : memref<256x16xf32, #tpu.memory_space<vmem>>, vector<256x16xf32>
      tpu.vector_store %arg10[%c0_11, %c0_12], %12 {strides = array<i32>} : memref<256x16xf32, #tpu.memory_space<vmem>>, vector<256x16xf32>,
    } else {
    }
    %c0 = arith.constant 0 : index
    %c0_1 = arith.constant 0 : index
    %3 = vector.load %arg10[%c0, %c0_1] : memref<256x16xf32, #tpu.memory_space<vmem>>, vector<256x16xf32>
    %c0_2 = arith.constant 0 : index
    %c0_3 = arith.constant 0 : index
    %4 = vector.load %arg3[%c0_2, %c0_3] : memref<256x144xbf16, #tpu.memory_space<vmem>>, vector<256x144xbf16>
    %c0_4 = arith.constant 0 : index
    %c0_5 = arith.constant 0 : index
    %5 = vector.load %arg4[%c0_4, %c0_5] : memref<144x16xbf16, #tpu.memory_space<vmem>>, vector<144x16xbf16>
    %cst = arith.constant dense<0.000000e+00> : vector<256x16xf32>
    %6 = tpu.matmul %4, %5, %cst {dimension_numbers = #tpu.dot_dimension_numbers<[1], [0], [0], [1], [0, 0, 1, 1], [], []>} : vector<256x144xbf16>, vector<144x16xbf16>, vector<256x16xf32> -> vector<256x16xf32>
    %7 = arith.addf %3, %6 : vector<256x16xf32>
    %c0_6 = arith.constant 0 : index
    %c0_7 = arith.constant 0 : index
    %8 = vector.load %arg10[%c0_6, %c0_7] : memref<256x16xf32, #tpu.memory_space<vmem>>, vector<256x16xf32>
    tpu.vector_store %arg10[%c0_6, %c0_7], %7 {strides = array<i32>} : memref<256x16xf32, #tpu.memory_space<vmem>>, vector<256x16xf32>,
    %c0_i32_8 = arith.constant 0 : i32
    %9 = arith.cmpi eq, %arg2, %c0_i32_8 : i32
    %10 = arith.extui %9 : i1 to i32
    %c0_i32_9 = arith.constant 0 : i32
    %11 = arith.cmpi ne, %10, %c0_i32_9 : i32
    scf.if %11 {
      %c0_10 = arith.constant 0 : index
      %c0_11 = arith.constant 0 : index
      %12 = vector.load %arg10[%c0_10, %c0_11] : memref<256x16xf32, #tpu.memory_space<vmem>>, vector<256x16xf32>
      %c0_12 = arith.constant 0 : index
      %c0_13 = arith.constant 0 : index
      %13 = vector.load %arg5[%c0_12, %c0_13] : memref<1x16xf32, #tpu.memory_space<vmem>>, vector<1x16xf32>
      %14 = vector.broadcast %13 : vector<1x16xf32> to vector<256x16xf32>
      %15 = arith.mulf %12, %14 : vector<256x16xf32>
      %c0_14 = arith.constant 0 : index
      %c0_15 = arith.constant 0 : index
      %16 = vector.load %arg6[%c0_14, %c0_15] : memref<1x16xf32, #tpu.memory_space<vmem>>, vector<1x16xf32>
      %17 = vector.broadcast %16 : vector<1x16xf32> to vector<256x16xf32>
      %18 = arith.addf %15, %17 : vector<256x16xf32>
      %c0_16 = arith.constant 0 : index
      %c0_17 = arith.constant 0 : index
      %19 = vector.load %arg8[%c0_16, %c0_17] : memref<256x16xf32, #tpu.memory_space<vmem>>, vector<256x16xf32>
      %20 = arith.addf %18, %19 : vector<256x16xf32>
      %c0_18 = arith.constant 0 : index
      %c0_19 = arith.constant 0 : index
      %21 = vector.load %arg7[%c0_18, %c0_19] : memref<1x16xf32, #tpu.memory_space<vmem>>, vector<1x16xf32>
      %cst_20 = arith.constant 0.000000e+00 : f32
      %22 = vector.broadcast %cst_20 : f32 to vector<1x16xf32>
      %23 = arith.cmpf ogt, %21, %22 : vector<1x16xf32>
      %cst_21 = arith.constant 0.000000e+00 : f32
      %24 = vector.broadcast %cst_21 : f32 to vector<256x16xf32>
      %25 = arith.maximumf %20, %24 : vector<256x16xf32>
      %26 = vector.shape_cast %23 : vector<1x16xi1> to vector<1x16xi1>
      %27 = vector.broadcast %26 : vector<1x16xi1> to vector<256x16xi1>
      %28 = arith.select %27, %25, %20 : vector<256x16xi1>, vector<256x16xf32>
      %c0_22 = arith.constant 0 : index
      %c0_23 = arith.constant 0 : index
      %29 = vector.load %arg9[%c0_22, %c0_23] : memref<256x16xf32, #tpu.memory_space<vmem>>, vector<256x16xf32>
      tpu.vector_store %arg9[%c0_22, %c0_23], %28 {strides = array<i32>} : memref<256x16xf32, #tpu.memory_space<vmem>>, vector<256x16xf32>,
    } else {
    }
    return
  }
  func.func @transform_0(%arg0: i32, %arg1: i32, %arg2: i32) -> (i32, i32) {
    %c0_i32 = arith.constant 0 : i32
    return %arg0, %arg2 : i32, i32
  }
  func.func @transform_1(%arg0: i32, %arg1: i32, %arg2: i32) -> (i32, i32) {
    %c0_i32 = arith.constant 0 : i32
    return %arg2, %arg1 : i32, i32
  }
  func.func @transform_2(%arg0: i32, %arg1: i32, %arg2: i32) -> (i32, i32) {
    %c0_i32 = arith.constant 0 : i32
    %c0_i32_0 = arith.constant 0 : i32
    return %c0_i32, %arg1 : i32, i32
  }
  func.func @transform_3(%arg0: i32, %arg1: i32, %arg2: i32) -> (i32, i32) {
    %c0_i32 = arith.constant 0 : i32
    %c0_i32_0 = arith.constant 0 : i32
    return %c0_i32, %arg1 : i32, i32
  }
  func.func @transform_4(%arg0: i32, %arg1: i32, %arg2: i32) -> (i32, i32) {
    %c0_i32 = arith.constant 0 : i32
    %c0_i32_0 = arith.constant 0 : i32
    return %c0_i32, %arg1 : i32, i32
  }
  func.func @transform_5(%arg0: i32, %arg1: i32, %arg2: i32) -> (i32, i32) {
    %c0_i32 = arith.constant 0 : i32
    return %arg0, %arg1 : i32, i32
  }
  func.func @transform_6(%arg0: i32, %arg1: i32, %arg2: i32) -> (i32, i32) {
    %c0_i32 = arith.constant 0 : i32
    return %arg0, %arg1 : i32, i32
  }
}

module attributes {stable_mosaic.version = 11 : i64} {
  func.func @_fused_matmul_kernel(%arg0: i32, %arg1: i32, %arg2: i32, %arg3: memref<128x144xbf16, #tpu.memory_space<vmem>>, %arg4: memref<144x64xbf16, #tpu.memory_space<vmem>>, %arg5: memref<1x64xf32, #tpu.memory_space<vmem>>, %arg6: memref<1x64xf32, #tpu.memory_space<vmem>>, %arg7: memref<1x64xf32, #tpu.memory_space<vmem>>, %arg8: memref<128x64xf32, #tpu.memory_space<vmem>>, %arg9: memref<128x64xf32, #tpu.memory_space<vmem>>) attributes {dimension_semantics = [#tpu.dimension_semantics<parallel>, #tpu.dimension_semantics<parallel>, #tpu.dimension_semantics<arbitrary>], iteration_bounds = array<i64: 1, 1, 1>, scalar_prefetch = 0 : i64, scratch_operands = 1 : i64, tpu.core_type = #tpu.core_type<tc>, window_params = [{transform_indices = @transform_0, window_bounds = array<i64: 128, 144>}, {transform_indices = @transform_1, window_bounds = array<i64: 144, 64>}, {transform_indices = @transform_2, window_bounds = array<i64: 1, 64>}, {transform_indices = @transform_3, window_bounds = array<i64: 1, 64>}, {transform_indices = @transform_4, window_bounds = array<i64: 1, 64>}, {transform_indices = @transform_5, window_bounds = array<i64: 128, 64>}]} {
    %c0_i32 = arith.constant 0 : i32
    %0 = arith.cmpi eq, %arg2, %c0_i32 : i32
    %1 = arith.extui %0 : i1 to i32
    %c0_i32_0 = arith.constant 0 : i32
    %2 = arith.cmpi ne, %1, %c0_i32_0 : i32
    scf.if %2 {
      %cst_10 = arith.constant 0.000000e+00 : f32
      %12 = vector.broadcast %cst_10 : f32 to vector<128x64xf32>
      %c0_11 = arith.constant 0 : index
      %c0_12 = arith.constant 0 : index
      %13 = vector.load %arg9[%c0_11, %c0_12] : memref<128x64xf32, #tpu.memory_space<vmem>>, vector<128x64xf32>
      tpu.vector_store %arg9[%c0_11, %c0_12], %12 {strides = array<i32>} : memref<128x64xf32, #tpu.memory_space<vmem>>, vector<128x64xf32>,
    } else {
    }
    %c0 = arith.constant 0 : index
    %c0_1 = arith.constant 0 : index
    %3 = vector.load %arg9[%c0, %c0_1] : memref<128x64xf32, #tpu.memory_space<vmem>>, vector<128x64xf32>
    %c0_2 = arith.constant 0 : index
    %c0_3 = arith.constant 0 : index
    %4 = vector.load %arg3[%c0_2, %c0_3] : memref<128x144xbf16, #tpu.memory_space<vmem>>, vector<128x144xbf16>
    %c0_4 = arith.constant 0 : index
    %c0_5 = arith.constant 0 : index
    %5 = vector.load %arg4[%c0_4, %c0_5] : memref<144x64xbf16, #tpu.memory_space<vmem>>, vector<144x64xbf16>
    %cst = arith.constant dense<0.000000e+00> : vector<128x64xf32>
    %6 = tpu.matmul %4, %5, %cst {dimension_numbers = #tpu.dot_dimension_numbers<[1], [0], [0], [1], [0, 0, 1, 1], [], []>} : vector<128x144xbf16>, vector<144x64xbf16>, vector<128x64xf32> -> vector<128x64xf32>
    %7 = arith.addf %3, %6 : vector<128x64xf32>
    %c0_6 = arith.constant 0 : index
    %c0_7 = arith.constant 0 : index
    %8 = vector.load %arg9[%c0_6, %c0_7] : memref<128x64xf32, #tpu.memory_space<vmem>>, vector<128x64xf32>
    tpu.vector_store %arg9[%c0_6, %c0_7], %7 {strides = array<i32>} : memref<128x64xf32, #tpu.memory_space<vmem>>, vector<128x64xf32>,
    %c0_i32_8 = arith.constant 0 : i32
    %9 = arith.cmpi eq, %arg2, %c0_i32_8 : i32
    %10 = arith.extui %9 : i1 to i32
    %c0_i32_9 = arith.constant 0 : i32
    %11 = arith.cmpi ne, %10, %c0_i32_9 : i32
    scf.if %11 {
      %c0_10 = arith.constant 0 : index
      %c0_11 = arith.constant 0 : index
      %12 = vector.load %arg9[%c0_10, %c0_11] : memref<128x64xf32, #tpu.memory_space<vmem>>, vector<128x64xf32>
      %c0_12 = arith.constant 0 : index
      %c0_13 = arith.constant 0 : index
      %13 = vector.load %arg5[%c0_12, %c0_13] : memref<1x64xf32, #tpu.memory_space<vmem>>, vector<1x64xf32>
      %14 = vector.broadcast %13 : vector<1x64xf32> to vector<128x64xf32>
      %15 = arith.mulf %12, %14 : vector<128x64xf32>
      %c0_14 = arith.constant 0 : index
      %c0_15 = arith.constant 0 : index
      %16 = vector.load %arg6[%c0_14, %c0_15] : memref<1x64xf32, #tpu.memory_space<vmem>>, vector<1x64xf32>
      %17 = vector.broadcast %16 : vector<1x64xf32> to vector<128x64xf32>
      %18 = arith.addf %15, %17 : vector<128x64xf32>
      %c0_16 = arith.constant 0 : index
      %c0_17 = arith.constant 0 : index
      %19 = vector.load %arg7[%c0_16, %c0_17] : memref<1x64xf32, #tpu.memory_space<vmem>>, vector<1x64xf32>
      %cst_18 = arith.constant 0.000000e+00 : f32
      %20 = vector.broadcast %cst_18 : f32 to vector<1x64xf32>
      %21 = arith.cmpf ogt, %19, %20 : vector<1x64xf32>
      %cst_19 = arith.constant 0.000000e+00 : f32
      %22 = vector.broadcast %cst_19 : f32 to vector<128x64xf32>
      %23 = arith.maximumf %18, %22 : vector<128x64xf32>
      %24 = vector.shape_cast %21 : vector<1x64xi1> to vector<1x64xi1>
      %25 = vector.broadcast %24 : vector<1x64xi1> to vector<128x64xi1>
      %26 = arith.select %25, %23, %18 : vector<128x64xi1>, vector<128x64xf32>
      %c0_20 = arith.constant 0 : index
      %c0_21 = arith.constant 0 : index
      %27 = vector.load %arg8[%c0_20, %c0_21] : memref<128x64xf32, #tpu.memory_space<vmem>>, vector<128x64xf32>
      tpu.vector_store %arg8[%c0_20, %c0_21], %26 {strides = array<i32>} : memref<128x64xf32, #tpu.memory_space<vmem>>, vector<128x64xf32>,
    } else {
    }
    return
  }
  func.func @transform_0(%arg0: i32, %arg1: i32, %arg2: i32) -> (i32, i32) {
    %c0_i32 = arith.constant 0 : i32
    return %arg0, %arg2 : i32, i32
  }
  func.func @transform_1(%arg0: i32, %arg1: i32, %arg2: i32) -> (i32, i32) {
    %c0_i32 = arith.constant 0 : i32
    return %arg2, %arg1 : i32, i32
  }
  func.func @transform_2(%arg0: i32, %arg1: i32, %arg2: i32) -> (i32, i32) {
    %c0_i32 = arith.constant 0 : i32
    %c0_i32_0 = arith.constant 0 : i32
    return %c0_i32, %arg1 : i32, i32
  }
  func.func @transform_3(%arg0: i32, %arg1: i32, %arg2: i32) -> (i32, i32) {
    %c0_i32 = arith.constant 0 : i32
    %c0_i32_0 = arith.constant 0 : i32
    return %c0_i32, %arg1 : i32, i32
  }
  func.func @transform_4(%arg0: i32, %arg1: i32, %arg2: i32) -> (i32, i32) {
    %c0_i32 = arith.constant 0 : i32
    %c0_i32_0 = arith.constant 0 : i32
    return %c0_i32, %arg1 : i32, i32
  }
  func.func @transform_5(%arg0: i32, %arg1: i32, %arg2: i32) -> (i32, i32) {
    %c0_i32 = arith.constant 0 : i32
    return %arg0, %arg1 : i32, i32
  }
}

module attributes {stable_mosaic.version = 11 : i64} {
  func.func @_fused_matmul_kernel(%arg0: i32, %arg1: i32, %arg2: i32, %arg3: memref<128x288xbf16, #tpu.memory_space<vmem>>, %arg4: memref<288x32xbf16, #tpu.memory_space<vmem>>, %arg5: memref<1x32xf32, #tpu.memory_space<vmem>>, %arg6: memref<1x32xf32, #tpu.memory_space<vmem>>, %arg7: memref<1x32xf32, #tpu.memory_space<vmem>>, %arg8: memref<128x32xf32, #tpu.memory_space<vmem>>, %arg9: memref<128x32xf32, #tpu.memory_space<vmem>>, %arg10: memref<128x32xf32, #tpu.memory_space<vmem>>) attributes {dimension_semantics = [#tpu.dimension_semantics<parallel>, #tpu.dimension_semantics<parallel>, #tpu.dimension_semantics<arbitrary>], iteration_bounds = array<i64: 1, 1, 1>, scalar_prefetch = 0 : i64, scratch_operands = 1 : i64, tpu.core_type = #tpu.core_type<tc>, window_params = [{transform_indices = @transform_0, window_bounds = array<i64: 128, 288>}, {transform_indices = @transform_1, window_bounds = array<i64: 288, 32>}, {transform_indices = @transform_2, window_bounds = array<i64: 1, 32>}, {transform_indices = @transform_3, window_bounds = array<i64: 1, 32>}, {transform_indices = @transform_4, window_bounds = array<i64: 1, 32>}, {transform_indices = @transform_5, window_bounds = array<i64: 128, 32>}, {transform_indices = @transform_6, window_bounds = array<i64: 128, 32>}]} {
    %c0_i32 = arith.constant 0 : i32
    %0 = arith.cmpi eq, %arg2, %c0_i32 : i32
    %1 = arith.extui %0 : i1 to i32
    %c0_i32_0 = arith.constant 0 : i32
    %2 = arith.cmpi ne, %1, %c0_i32_0 : i32
    scf.if %2 {
      %cst_10 = arith.constant 0.000000e+00 : f32
      %12 = vector.broadcast %cst_10 : f32 to vector<128x32xf32>
      %c0_11 = arith.constant 0 : index
      %c0_12 = arith.constant 0 : index
      %13 = vector.load %arg10[%c0_11, %c0_12] : memref<128x32xf32, #tpu.memory_space<vmem>>, vector<128x32xf32>
      tpu.vector_store %arg10[%c0_11, %c0_12], %12 {strides = array<i32>} : memref<128x32xf32, #tpu.memory_space<vmem>>, vector<128x32xf32>,
    } else {
    }
    %c0 = arith.constant 0 : index
    %c0_1 = arith.constant 0 : index
    %3 = vector.load %arg10[%c0, %c0_1] : memref<128x32xf32, #tpu.memory_space<vmem>>, vector<128x32xf32>
    %c0_2 = arith.constant 0 : index
    %c0_3 = arith.constant 0 : index
    %4 = vector.load %arg3[%c0_2, %c0_3] : memref<128x288xbf16, #tpu.memory_space<vmem>>, vector<128x288xbf16>
    %c0_4 = arith.constant 0 : index
    %c0_5 = arith.constant 0 : index
    %5 = vector.load %arg4[%c0_4, %c0_5] : memref<288x32xbf16, #tpu.memory_space<vmem>>, vector<288x32xbf16>
    %cst = arith.constant dense<0.000000e+00> : vector<128x32xf32>
    %6 = tpu.matmul %4, %5, %cst {dimension_numbers = #tpu.dot_dimension_numbers<[1], [0], [0], [1], [0, 0, 1, 1], [], []>} : vector<128x288xbf16>, vector<288x32xbf16>, vector<128x32xf32> -> vector<128x32xf32>
    %7 = arith.addf %3, %6 : vector<128x32xf32>
    %c0_6 = arith.constant 0 : index
    %c0_7 = arith.constant 0 : index
    %8 = vector.load %arg10[%c0_6, %c0_7] : memref<128x32xf32, #tpu.memory_space<vmem>>, vector<128x32xf32>
    tpu.vector_store %arg10[%c0_6, %c0_7], %7 {strides = array<i32>} : memref<128x32xf32, #tpu.memory_space<vmem>>, vector<128x32xf32>,
    %c0_i32_8 = arith.constant 0 : i32
    %9 = arith.cmpi eq, %arg2, %c0_i32_8 : i32
    %10 = arith.extui %9 : i1 to i32
    %c0_i32_9 = arith.constant 0 : i32
    %11 = arith.cmpi ne, %10, %c0_i32_9 : i32
    scf.if %11 {
      %c0_10 = arith.constant 0 : index
      %c0_11 = arith.constant 0 : index
      %12 = vector.load %arg10[%c0_10, %c0_11] : memref<128x32xf32, #tpu.memory_space<vmem>>, vector<128x32xf32>
      %c0_12 = arith.constant 0 : index
      %c0_13 = arith.constant 0 : index
      %13 = vector.load %arg5[%c0_12, %c0_13] : memref<1x32xf32, #tpu.memory_space<vmem>>, vector<1x32xf32>
      %14 = vector.broadcast %13 : vector<1x32xf32> to vector<128x32xf32>
      %15 = arith.mulf %12, %14 : vector<128x32xf32>
      %c0_14 = arith.constant 0 : index
      %c0_15 = arith.constant 0 : index
      %16 = vector.load %arg6[%c0_14, %c0_15] : memref<1x32xf32, #tpu.memory_space<vmem>>, vector<1x32xf32>
      %17 = vector.broadcast %16 : vector<1x32xf32> to vector<128x32xf32>
      %18 = arith.addf %15, %17 : vector<128x32xf32>
      %c0_16 = arith.constant 0 : index
      %c0_17 = arith.constant 0 : index
      %19 = vector.load %arg8[%c0_16, %c0_17] : memref<128x32xf32, #tpu.memory_space<vmem>>, vector<128x32xf32>
      %20 = arith.addf %18, %19 : vector<128x32xf32>
      %c0_18 = arith.constant 0 : index
      %c0_19 = arith.constant 0 : index
      %21 = vector.load %arg7[%c0_18, %c0_19] : memref<1x32xf32, #tpu.memory_space<vmem>>, vector<1x32xf32>
      %cst_20 = arith.constant 0.000000e+00 : f32
      %22 = vector.broadcast %cst_20 : f32 to vector<1x32xf32>
      %23 = arith.cmpf ogt, %21, %22 : vector<1x32xf32>
      %cst_21 = arith.constant 0.000000e+00 : f32
      %24 = vector.broadcast %cst_21 : f32 to vector<128x32xf32>
      %25 = arith.maximumf %20, %24 : vector<128x32xf32>
      %26 = vector.shape_cast %23 : vector<1x32xi1> to vector<1x32xi1>
      %27 = vector.broadcast %26 : vector<1x32xi1> to vector<128x32xi1>
      %28 = arith.select %27, %25, %20 : vector<128x32xi1>, vector<128x32xf32>
      %c0_22 = arith.constant 0 : index
      %c0_23 = arith.constant 0 : index
      %29 = vector.load %arg9[%c0_22, %c0_23] : memref<128x32xf32, #tpu.memory_space<vmem>>, vector<128x32xf32>
      tpu.vector_store %arg9[%c0_22, %c0_23], %28 {strides = array<i32>} : memref<128x32xf32, #tpu.memory_space<vmem>>, vector<128x32xf32>,
    } else {
    }
    return
  }
  func.func @transform_0(%arg0: i32, %arg1: i32, %arg2: i32) -> (i32, i32) {
    %c0_i32 = arith.constant 0 : i32
    return %arg0, %arg2 : i32, i32
  }
  func.func @transform_1(%arg0: i32, %arg1: i32, %arg2: i32) -> (i32, i32) {
    %c0_i32 = arith.constant 0 : i32
    return %arg2, %arg1 : i32, i32
  }
  func.func @transform_2(%arg0: i32, %arg1: i32, %arg2: i32) -> (i32, i32) {
    %c0_i32 = arith.constant 0 : i32
    %c0_i32_0 = arith.constant 0 : i32
    return %c0_i32, %arg1 : i32, i32
  }
  func.func @transform_3(%arg0: i32, %arg1: i32, %arg2: i32) -> (i32, i32) {
    %c0_i32 = arith.constant 0 : i32
    %c0_i32_0 = arith.constant 0 : i32
    return %c0_i32, %arg1 : i32, i32
  }
  func.func @transform_4(%arg0: i32, %arg1: i32, %arg2: i32) -> (i32, i32) {
    %c0_i32 = arith.constant 0 : i32
    %c0_i32_0 = arith.constant 0 : i32
    return %c0_i32, %arg1 : i32, i32
  }
  func.func @transform_5(%arg0: i32, %arg1: i32, %arg2: i32) -> (i32, i32) {
    %c0_i32 = arith.constant 0 : i32
    return %arg0, %arg1 : i32, i32
  }
  func.func @transform_6(%arg0: i32, %arg1: i32, %arg2: i32) -> (i32, i32) {
    %c0_i32 = arith.constant 0 : i32
    return %arg0, %arg1 : i32, i32
  }
}

module attributes {stable_mosaic.version = 11 : i64} {
  func.func @_fused_matmul_kernel(%arg0: i32, %arg1: i32, %arg2: i32, %arg3: memref<32x288xbf16, #tpu.memory_space<vmem>>, %arg4: memref<288x128xbf16, #tpu.memory_space<vmem>>, %arg5: memref<1x128xf32, #tpu.memory_space<vmem>>, %arg6: memref<1x128xf32, #tpu.memory_space<vmem>>, %arg7: memref<1x128xf32, #tpu.memory_space<vmem>>, %arg8: memref<32x128xf32, #tpu.memory_space<vmem>>, %arg9: memref<32x128xf32, #tpu.memory_space<vmem>>) attributes {dimension_semantics = [#tpu.dimension_semantics<parallel>, #tpu.dimension_semantics<parallel>, #tpu.dimension_semantics<arbitrary>], iteration_bounds = array<i64: 1, 1, 1>, scalar_prefetch = 0 : i64, scratch_operands = 1 : i64, tpu.core_type = #tpu.core_type<tc>, window_params = [{transform_indices = @transform_0, window_bounds = array<i64: 32, 288>}, {transform_indices = @transform_1, window_bounds = array<i64: 288, 128>}, {transform_indices = @transform_2, window_bounds = array<i64: 1, 128>}, {transform_indices = @transform_3, window_bounds = array<i64: 1, 128>}, {transform_indices = @transform_4, window_bounds = array<i64: 1, 128>}, {transform_indices = @transform_5, window_bounds = array<i64: 32, 128>}]} {
    %c0_i32 = arith.constant 0 : i32
    %0 = arith.cmpi eq, %arg2, %c0_i32 : i32
    %1 = arith.extui %0 : i1 to i32
    %c0_i32_0 = arith.constant 0 : i32
    %2 = arith.cmpi ne, %1, %c0_i32_0 : i32
    scf.if %2 {
      %cst_10 = arith.constant 0.000000e+00 : f32
      %12 = vector.broadcast %cst_10 : f32 to vector<32x128xf32>
      %c0_11 = arith.constant 0 : index
      %c0_12 = arith.constant 0 : index
      %13 = vector.load %arg9[%c0_11, %c0_12] : memref<32x128xf32, #tpu.memory_space<vmem>>, vector<32x128xf32>
      tpu.vector_store %arg9[%c0_11, %c0_12], %12 {strides = array<i32>} : memref<32x128xf32, #tpu.memory_space<vmem>>, vector<32x128xf32>,
    } else {
    }
    %c0 = arith.constant 0 : index
    %c0_1 = arith.constant 0 : index
    %3 = vector.load %arg9[%c0, %c0_1] : memref<32x128xf32, #tpu.memory_space<vmem>>, vector<32x128xf32>
    %c0_2 = arith.constant 0 : index
    %c0_3 = arith.constant 0 : index
    %4 = vector.load %arg3[%c0_2, %c0_3] : memref<32x288xbf16, #tpu.memory_space<vmem>>, vector<32x288xbf16>
    %c0_4 = arith.constant 0 : index
    %c0_5 = arith.constant 0 : index
    %5 = vector.load %arg4[%c0_4, %c0_5] : memref<288x128xbf16, #tpu.memory_space<vmem>>, vector<288x128xbf16>
    %cst = arith.constant dense<0.000000e+00> : vector<32x128xf32>
    %6 = tpu.matmul %4, %5, %cst {dimension_numbers = #tpu.dot_dimension_numbers<[1], [0], [0], [1], [0, 0, 1, 1], [], []>} : vector<32x288xbf16>, vector<288x128xbf16>, vector<32x128xf32> -> vector<32x128xf32>
    %7 = arith.addf %3, %6 : vector<32x128xf32>
    %c0_6 = arith.constant 0 : index
    %c0_7 = arith.constant 0 : index
    %8 = vector.load %arg9[%c0_6, %c0_7] : memref<32x128xf32, #tpu.memory_space<vmem>>, vector<32x128xf32>
    tpu.vector_store %arg9[%c0_6, %c0_7], %7 {strides = array<i32>} : memref<32x128xf32, #tpu.memory_space<vmem>>, vector<32x128xf32>,
    %c0_i32_8 = arith.constant 0 : i32
    %9 = arith.cmpi eq, %arg2, %c0_i32_8 : i32
    %10 = arith.extui %9 : i1 to i32
    %c0_i32_9 = arith.constant 0 : i32
    %11 = arith.cmpi ne, %10, %c0_i32_9 : i32
    scf.if %11 {
      %c0_10 = arith.constant 0 : index
      %c0_11 = arith.constant 0 : index
      %12 = vector.load %arg9[%c0_10, %c0_11] : memref<32x128xf32, #tpu.memory_space<vmem>>, vector<32x128xf32>
      %c0_12 = arith.constant 0 : index
      %c0_13 = arith.constant 0 : index
      %13 = vector.load %arg5[%c0_12, %c0_13] : memref<1x128xf32, #tpu.memory_space<vmem>>, vector<1x128xf32>
      %14 = vector.broadcast %13 : vector<1x128xf32> to vector<32x128xf32>
      %15 = arith.mulf %12, %14 : vector<32x128xf32>
      %c0_14 = arith.constant 0 : index
      %c0_15 = arith.constant 0 : index
      %16 = vector.load %arg6[%c0_14, %c0_15] : memref<1x128xf32, #tpu.memory_space<vmem>>, vector<1x128xf32>
      %17 = vector.broadcast %16 : vector<1x128xf32> to vector<32x128xf32>
      %18 = arith.addf %15, %17 : vector<32x128xf32>
      %c0_16 = arith.constant 0 : index
      %c0_17 = arith.constant 0 : index
      %19 = vector.load %arg7[%c0_16, %c0_17] : memref<1x128xf32, #tpu.memory_space<vmem>>, vector<1x128xf32>
      %cst_18 = arith.constant 0.000000e+00 : f32
      %20 = vector.broadcast %cst_18 : f32 to vector<1x128xf32>
      %21 = arith.cmpf ogt, %19, %20 : vector<1x128xf32>
      %cst_19 = arith.constant 0.000000e+00 : f32
      %22 = vector.broadcast %cst_19 : f32 to vector<32x128xf32>
      %23 = arith.maximumf %18, %22 : vector<32x128xf32>
      %24 = vector.shape_cast %21 : vector<1x128xi1> to vector<1x128xi1>
      %25 = vector.broadcast %24 : vector<1x128xi1> to vector<32x128xi1>
      %26 = arith.select %25, %23, %18 : vector<32x128xi1>, vector<32x128xf32>
      %c0_20 = arith.constant 0 : index
      %c0_21 = arith.constant 0 : index
      %27 = vector.load %arg8[%c0_20, %c0_21] : memref<32x128xf32, #tpu.memory_space<vmem>>, vector<32x128xf32>
      tpu.vector_store %arg8[%c0_20, %c0_21], %26 {strides = array<i32>} : memref<32x128xf32, #tpu.memory_space<vmem>>, vector<32x128xf32>,
    } else {
    }
    return
  }
  func.func @transform_0(%arg0: i32, %arg1: i32, %arg2: i32) -> (i32, i32) {
    %c0_i32 = arith.constant 0 : i32
    return %arg0, %arg2 : i32, i32
  }
  func.func @transform_1(%arg0: i32, %arg1: i32, %arg2: i32) -> (i32, i32) {
    %c0_i32 = arith.constant 0 : i32
    return %arg2, %arg1 : i32, i32
  }
  func.func @transform_2(%arg0: i32, %arg1: i32, %arg2: i32) -> (i32, i32) {
    %c0_i32 = arith.constant 0 : i32
    %c0_i32_0 = arith.constant 0 : i32
    return %c0_i32, %arg1 : i32, i32
  }
  func.func @transform_3(%arg0: i32, %arg1: i32, %arg2: i32) -> (i32, i32) {
    %c0_i32 = arith.constant 0 : i32
    %c0_i32_0 = arith.constant 0 : i32
    return %c0_i32, %arg1 : i32, i32
  }
  func.func @transform_4(%arg0: i32, %arg1: i32, %arg2: i32) -> (i32, i32) {
    %c0_i32 = arith.constant 0 : i32
    %c0_i32_0 = arith.constant 0 : i32
    return %c0_i32, %arg1 : i32, i32
  }
  func.func @transform_5(%arg0: i32, %arg1: i32, %arg2: i32) -> (i32, i32) {
    %c0_i32 = arith.constant 0 : i32
    return %arg0, %arg1 : i32, i32
  }
}

module attributes {stable_mosaic.version = 11 : i64} {
  func.func @_fused_matmul_kernel(%arg0: i32, %arg1: i32, %arg2: i32, %arg3: memref<32x576xbf16, #tpu.memory_space<vmem>>, %arg4: memref<576x64xbf16, #tpu.memory_space<vmem>>, %arg5: memref<1x64xf32, #tpu.memory_space<vmem>>, %arg6: memref<1x64xf32, #tpu.memory_space<vmem>>, %arg7: memref<1x64xf32, #tpu.memory_space<vmem>>, %arg8: memref<32x64xf32, #tpu.memory_space<vmem>>, %arg9: memref<32x64xf32, #tpu.memory_space<vmem>>, %arg10: memref<32x64xf32, #tpu.memory_space<vmem>>) attributes {dimension_semantics = [#tpu.dimension_semantics<parallel>, #tpu.dimension_semantics<parallel>, #tpu.dimension_semantics<arbitrary>], iteration_bounds = array<i64: 1, 1, 1>, scalar_prefetch = 0 : i64, scratch_operands = 1 : i64, tpu.core_type = #tpu.core_type<tc>, window_params = [{transform_indices = @transform_0, window_bounds = array<i64: 32, 576>}, {transform_indices = @transform_1, window_bounds = array<i64: 576, 64>}, {transform_indices = @transform_2, window_bounds = array<i64: 1, 64>}, {transform_indices = @transform_3, window_bounds = array<i64: 1, 64>}, {transform_indices = @transform_4, window_bounds = array<i64: 1, 64>}, {transform_indices = @transform_5, window_bounds = array<i64: 32, 64>}, {transform_indices = @transform_6, window_bounds = array<i64: 32, 64>}]} {
    %c0_i32 = arith.constant 0 : i32
    %0 = arith.cmpi eq, %arg2, %c0_i32 : i32
    %1 = arith.extui %0 : i1 to i32
    %c0_i32_0 = arith.constant 0 : i32
    %2 = arith.cmpi ne, %1, %c0_i32_0 : i32
    scf.if %2 {
      %cst_10 = arith.constant 0.000000e+00 : f32
      %12 = vector.broadcast %cst_10 : f32 to vector<32x64xf32>
      %c0_11 = arith.constant 0 : index
      %c0_12 = arith.constant 0 : index
      %13 = vector.load %arg10[%c0_11, %c0_12] : memref<32x64xf32, #tpu.memory_space<vmem>>, vector<32x64xf32>
      tpu.vector_store %arg10[%c0_11, %c0_12], %12 {strides = array<i32>} : memref<32x64xf32, #tpu.memory_space<vmem>>, vector<32x64xf32>,
    } else {
    }
    %c0 = arith.constant 0 : index
    %c0_1 = arith.constant 0 : index
    %3 = vector.load %arg10[%c0, %c0_1] : memref<32x64xf32, #tpu.memory_space<vmem>>, vector<32x64xf32>
    %c0_2 = arith.constant 0 : index
    %c0_3 = arith.constant 0 : index
    %4 = vector.load %arg3[%c0_2, %c0_3] : memref<32x576xbf16, #tpu.memory_space<vmem>>, vector<32x576xbf16>
    %c0_4 = arith.constant 0 : index
    %c0_5 = arith.constant 0 : index
    %5 = vector.load %arg4[%c0_4, %c0_5] : memref<576x64xbf16, #tpu.memory_space<vmem>>, vector<576x64xbf16>
    %cst = arith.constant dense<0.000000e+00> : vector<32x64xf32>
    %6 = tpu.matmul %4, %5, %cst {dimension_numbers = #tpu.dot_dimension_numbers<[1], [0], [0], [1], [0, 0, 1, 1], [], []>} : vector<32x576xbf16>, vector<576x64xbf16>, vector<32x64xf32> -> vector<32x64xf32>
    %7 = arith.addf %3, %6 : vector<32x64xf32>
    %c0_6 = arith.constant 0 : index
    %c0_7 = arith.constant 0 : index
    %8 = vector.load %arg10[%c0_6, %c0_7] : memref<32x64xf32, #tpu.memory_space<vmem>>, vector<32x64xf32>
    tpu.vector_store %arg10[%c0_6, %c0_7], %7 {strides = array<i32>} : memref<32x64xf32, #tpu.memory_space<vmem>>, vector<32x64xf32>,
    %c0_i32_8 = arith.constant 0 : i32
    %9 = arith.cmpi eq, %arg2, %c0_i32_8 : i32
    %10 = arith.extui %9 : i1 to i32
    %c0_i32_9 = arith.constant 0 : i32
    %11 = arith.cmpi ne, %10, %c0_i32_9 : i32
    scf.if %11 {
      %c0_10 = arith.constant 0 : index
      %c0_11 = arith.constant 0 : index
      %12 = vector.load %arg10[%c0_10, %c0_11] : memref<32x64xf32, #tpu.memory_space<vmem>>, vector<32x64xf32>
      %c0_12 = arith.constant 0 : index
      %c0_13 = arith.constant 0 : index
      %13 = vector.load %arg5[%c0_12, %c0_13] : memref<1x64xf32, #tpu.memory_space<vmem>>, vector<1x64xf32>
      %14 = vector.broadcast %13 : vector<1x64xf32> to vector<32x64xf32>
      %15 = arith.mulf %12, %14 : vector<32x64xf32>
      %c0_14 = arith.constant 0 : index
      %c0_15 = arith.constant 0 : index
      %16 = vector.load %arg6[%c0_14, %c0_15] : memref<1x64xf32, #tpu.memory_space<vmem>>, vector<1x64xf32>
      %17 = vector.broadcast %16 : vector<1x64xf32> to vector<32x64xf32>
      %18 = arith.addf %15, %17 : vector<32x64xf32>
      %c0_16 = arith.constant 0 : index
      %c0_17 = arith.constant 0 : index
      %19 = vector.load %arg8[%c0_16, %c0_17] : memref<32x64xf32, #tpu.memory_space<vmem>>, vector<32x64xf32>
      %20 = arith.addf %18, %19 : vector<32x64xf32>
      %c0_18 = arith.constant 0 : index
      %c0_19 = arith.constant 0 : index
      %21 = vector.load %arg7[%c0_18, %c0_19] : memref<1x64xf32, #tpu.memory_space<vmem>>, vector<1x64xf32>
      %cst_20 = arith.constant 0.000000e+00 : f32
      %22 = vector.broadcast %cst_20 : f32 to vector<1x64xf32>
      %23 = arith.cmpf ogt, %21, %22 : vector<1x64xf32>
      %cst_21 = arith.constant 0.000000e+00 : f32
      %24 = vector.broadcast %cst_21 : f32 to vector<32x64xf32>
      %25 = arith.maximumf %20, %24 : vector<32x64xf32>
      %26 = vector.shape_cast %23 : vector<1x64xi1> to vector<1x64xi1>
      %27 = vector.broadcast %26 : vector<1x64xi1> to vector<32x64xi1>
      %28 = arith.select %27, %25, %20 : vector<32x64xi1>, vector<32x64xf32>
      %c0_22 = arith.constant 0 : index
      %c0_23 = arith.constant 0 : index
      %29 = vector.load %arg9[%c0_22, %c0_23] : memref<32x64xf32, #tpu.memory_space<vmem>>, vector<32x64xf32>
      tpu.vector_store %arg9[%c0_22, %c0_23], %28 {strides = array<i32>} : memref<32x64xf32, #tpu.memory_space<vmem>>, vector<32x64xf32>,
    } else {
    }
    return
  }
  func.func @transform_0(%arg0: i32, %arg1: i32, %arg2: i32) -> (i32, i32) {
    %c0_i32 = arith.constant 0 : i32
    return %arg0, %arg2 : i32, i32
  }
  func.func @transform_1(%arg0: i32, %arg1: i32, %arg2: i32) -> (i32, i32) {
    %c0_i32 = arith.constant 0 : i32
    return %arg2, %arg1 : i32, i32
  }
  func.func @transform_2(%arg0: i32, %arg1: i32, %arg2: i32) -> (i32, i32) {
    %c0_i32 = arith.constant 0 : i32
    %c0_i32_0 = arith.constant 0 : i32
    return %c0_i32, %arg1 : i32, i32
  }
  func.func @transform_3(%arg0: i32, %arg1: i32, %arg2: i32) -> (i32, i32) {
    %c0_i32 = arith.constant 0 : i32
    %c0_i32_0 = arith.constant 0 : i32
    return %c0_i32, %arg1 : i32, i32
  }
  func.func @transform_4(%arg0: i32, %arg1: i32, %arg2: i32) -> (i32, i32) {
    %c0_i32 = arith.constant 0 : i32
    %c0_i32_0 = arith.constant 0 : i32
    return %c0_i32, %arg1 : i32, i32
  }
  func.func @transform_5(%arg0: i32, %arg1: i32, %arg2: i32) -> (i32, i32) {
    %c0_i32 = arith.constant 0 : i32
    return %arg0, %arg1 : i32, i32
  }
  func.func @transform_6(%arg0: i32, %arg1: i32, %arg2: i32) -> (i32, i32) {
    %c0_i32 = arith.constant 0 : i32
    return %arg0, %arg1 : i32, i32
  }
}

module attributes {stable_mosaic.version = 11 : i64} {
  func.func @_fused_matmul_kernel(%arg0: i32, %arg1: i32, %arg2: i32, %arg3: memref<8x576xbf16, #tpu.memory_space<vmem>>, %arg4: memref<576x256xbf16, #tpu.memory_space<vmem>>, %arg5: memref<1x256xf32, #tpu.memory_space<vmem>>, %arg6: memref<1x256xf32, #tpu.memory_space<vmem>>, %arg7: memref<1x256xf32, #tpu.memory_space<vmem>>, %arg8: memref<8x256xf32, #tpu.memory_space<vmem>>, %arg9: memref<8x256xf32, #tpu.memory_space<vmem>>) attributes {dimension_semantics = [#tpu.dimension_semantics<parallel>, #tpu.dimension_semantics<parallel>, #tpu.dimension_semantics<arbitrary>], iteration_bounds = array<i64: 1, 1, 1>, scalar_prefetch = 0 : i64, scratch_operands = 1 : i64, tpu.core_type = #tpu.core_type<tc>, window_params = [{transform_indices = @transform_0, window_bounds = array<i64: 8, 576>}, {transform_indices = @transform_1, window_bounds = array<i64: 576, 256>}, {transform_indices = @transform_2, window_bounds = array<i64: 1, 256>}, {transform_indices = @transform_3, window_bounds = array<i64: 1, 256>}, {transform_indices = @transform_4, window_bounds = array<i64: 1, 256>}, {transform_indices = @transform_5, window_bounds = array<i64: 8, 256>}]} {
    %c0_i32 = arith.constant 0 : i32
    %0 = arith.cmpi eq, %arg2, %c0_i32 : i32
    %1 = arith.extui %0 : i1 to i32
    %c0_i32_0 = arith.constant 0 : i32
    %2 = arith.cmpi ne, %1, %c0_i32_0 : i32
    scf.if %2 {
      %cst_10 = arith.constant 0.000000e+00 : f32
      %12 = vector.broadcast %cst_10 : f32 to vector<8x256xf32>
      %c0_11 = arith.constant 0 : index
      %c0_12 = arith.constant 0 : index
      %13 = vector.load %arg9[%c0_11, %c0_12] : memref<8x256xf32, #tpu.memory_space<vmem>>, vector<8x256xf32>
      tpu.vector_store %arg9[%c0_11, %c0_12], %12 {strides = array<i32>} : memref<8x256xf32, #tpu.memory_space<vmem>>, vector<8x256xf32>,
    } else {
    }
    %c0 = arith.constant 0 : index
    %c0_1 = arith.constant 0 : index
    %3 = vector.load %arg9[%c0, %c0_1] : memref<8x256xf32, #tpu.memory_space<vmem>>, vector<8x256xf32>
    %c0_2 = arith.constant 0 : index
    %c0_3 = arith.constant 0 : index
    %4 = vector.load %arg3[%c0_2, %c0_3] : memref<8x576xbf16, #tpu.memory_space<vmem>>, vector<8x576xbf16>
    %c0_4 = arith.constant 0 : index
    %c0_5 = arith.constant 0 : index
    %5 = vector.load %arg4[%c0_4, %c0_5] : memref<576x256xbf16, #tpu.memory_space<vmem>>, vector<576x256xbf16>
    %cst = arith.constant dense<0.000000e+00> : vector<8x256xf32>
    %6 = tpu.matmul %4, %5, %cst {dimension_numbers = #tpu.dot_dimension_numbers<[1], [0], [0], [1], [0, 0, 1, 1], [], []>} : vector<8x576xbf16>, vector<576x256xbf16>, vector<8x256xf32> -> vector<8x256xf32>
    %7 = arith.addf %3, %6 : vector<8x256xf32>
    %c0_6 = arith.constant 0 : index
    %c0_7 = arith.constant 0 : index
    %8 = vector.load %arg9[%c0_6, %c0_7] : memref<8x256xf32, #tpu.memory_space<vmem>>, vector<8x256xf32>
    tpu.vector_store %arg9[%c0_6, %c0_7], %7 {strides = array<i32>} : memref<8x256xf32, #tpu.memory_space<vmem>>, vector<8x256xf32>,
    %c0_i32_8 = arith.constant 0 : i32
    %9 = arith.cmpi eq, %arg2, %c0_i32_8 : i32
    %10 = arith.extui %9 : i1 to i32
    %c0_i32_9 = arith.constant 0 : i32
    %11 = arith.cmpi ne, %10, %c0_i32_9 : i32
    scf.if %11 {
      %c0_10 = arith.constant 0 : index
      %c0_11 = arith.constant 0 : index
      %12 = vector.load %arg9[%c0_10, %c0_11] : memref<8x256xf32, #tpu.memory_space<vmem>>, vector<8x256xf32>
      %c0_12 = arith.constant 0 : index
      %c0_13 = arith.constant 0 : index
      %13 = vector.load %arg5[%c0_12, %c0_13] : memref<1x256xf32, #tpu.memory_space<vmem>>, vector<1x256xf32>
      %14 = vector.broadcast %13 : vector<1x256xf32> to vector<8x256xf32>
      %15 = arith.mulf %12, %14 : vector<8x256xf32>
      %c0_14 = arith.constant 0 : index
      %c0_15 = arith.constant 0 : index
      %16 = vector.load %arg6[%c0_14, %c0_15] : memref<1x256xf32, #tpu.memory_space<vmem>>, vector<1x256xf32>
      %17 = vector.broadcast %16 : vector<1x256xf32> to vector<8x256xf32>
      %18 = arith.addf %15, %17 : vector<8x256xf32>
      %c0_16 = arith.constant 0 : index
      %c0_17 = arith.constant 0 : index
      %19 = vector.load %arg7[%c0_16, %c0_17] : memref<1x256xf32, #tpu.memory_space<vmem>>, vector<1x256xf32>
      %cst_18 = arith.constant 0.000000e+00 : f32
      %20 = vector.broadcast %cst_18 : f32 to vector<1x256xf32>
      %21 = arith.cmpf ogt, %19, %20 : vector<1x256xf32>
      %cst_19 = arith.constant 0.000000e+00 : f32
      %22 = vector.broadcast %cst_19 : f32 to vector<8x256xf32>
      %23 = arith.maximumf %18, %22 : vector<8x256xf32>
      %24 = vector.shape_cast %21 : vector<1x256xi1> to vector<1x256xi1>
      %25 = vector.broadcast %24 : vector<1x256xi1> to vector<8x256xi1>
      %26 = arith.select %25, %23, %18 : vector<8x256xi1>, vector<8x256xf32>
      %c0_20 = arith.constant 0 : index
      %c0_21 = arith.constant 0 : index
      %27 = vector.load %arg8[%c0_20, %c0_21] : memref<8x256xf32, #tpu.memory_space<vmem>>, vector<8x256xf32>
      tpu.vector_store %arg8[%c0_20, %c0_21], %26 {strides = array<i32>} : memref<8x256xf32, #tpu.memory_space<vmem>>, vector<8x256xf32>,
    } else {
    }
    return
  }
  func.func @transform_0(%arg0: i32, %arg1: i32, %arg2: i32) -> (i32, i32) {
    %c0_i32 = arith.constant 0 : i32
    return %arg0, %arg2 : i32, i32
  }
  func.func @transform_1(%arg0: i32, %arg1: i32, %arg2: i32) -> (i32, i32) {
    %c0_i32 = arith.constant 0 : i32
    return %arg2, %arg1 : i32, i32
  }
  func.func @transform_2(%arg0: i32, %arg1: i32, %arg2: i32) -> (i32, i32) {
    %c0_i32 = arith.constant 0 : i32
    %c0_i32_0 = arith.constant 0 : i32
    return %c0_i32, %arg1 : i32, i32
  }
  func.func @transform_3(%arg0: i32, %arg1: i32, %arg2: i32) -> (i32, i32) {
    %c0_i32 = arith.constant 0 : i32
    %c0_i32_0 = arith.constant 0 : i32
    return %c0_i32, %arg1 : i32, i32
  }
  func.func @transform_4(%arg0: i32, %arg1: i32, %arg2: i32) -> (i32, i32) {
    %c0_i32 = arith.constant 0 : i32
    %c0_i32_0 = arith.constant 0 : i32
    return %c0_i32, %arg1 : i32, i32
  }
  func.func @transform_5(%arg0: i32, %arg1: i32, %arg2: i32) -> (i32, i32) {
    %c0_i32 = arith.constant 0 : i32
    return %arg0, %arg1 : i32, i32
  }
}

module attributes {stable_mosaic.version = 11 : i64} {
  func.func @_gap_kernel(%arg0: i32, %arg1: memref<2x4x128xf32, #tpu.memory_space<vmem>>, %arg2: memref<2x128xf32, #tpu.memory_space<vmem>>) attributes {dimension_semantics = [#tpu.dimension_semantics<arbitrary>], iteration_bounds = array<i64: 1>, scalar_prefetch = 0 : i64, scratch_operands = 0 : i64, tpu.core_type = #tpu.core_type<tc>, window_params = [{pipeline_mode = #tpu.pipeline_mode<synchronous>, transform_indices = @transform_0, window_bounds = array<i64: 2, 4, 128>}, {pipeline_mode = #tpu.pipeline_mode<synchronous>, transform_indices = @transform_1, window_bounds = array<i64: 2, 128>}]} {
    %c0 = arith.constant 0 : index
    %c0_0 = arith.constant 0 : index
    %c0_1 = arith.constant 0 : index
    %0 = vector.load %arg1[%c0, %c0_0, %c0_1] : memref<2x4x128xf32, #tpu.memory_space<vmem>>, vector<2x4x128xf32>
    %cst = arith.constant dense<0.000000e+00> : vector<2x128xf32>
    %1 = vector.multi_reduction <add>, %0, %cst [1] : vector<2x4x128xf32> to vector<2x128xf32>
    %cst_2 = arith.constant 4.000000e+00 : f32
    %2 = vector.broadcast %cst_2 : f32 to vector<2x128xf32>
    %3 = arith.divf %1, %2 : vector<2x128xf32>
    %c0_3 = arith.constant 0 : index
    %c0_4 = arith.constant 0 : index
    %4 = vector.load %arg2[%c0_3, %c0_4] : memref<2x128xf32, #tpu.memory_space<vmem>>, vector<2x128xf32>
    tpu.vector_store %arg2[%c0_3, %c0_4], %3 {strides = array<i32>} : memref<2x128xf32, #tpu.memory_space<vmem>>, vector<2x128xf32>,
    return
  }
  func.func @transform_0(%arg0: i32) -> (i32, i32, i32) {
    %c0_i32 = arith.constant 0 : i32
    %c0_i32_0 = arith.constant 0 : i32
    %c0_i32_1 = arith.constant 0 : i32
    %c0_i32_2 = arith.constant 0 : i32
    return %c0_i32, %c0_i32_0, %c0_i32_1 : i32, i32, i32
  }
  func.func @transform_1(%arg0: i32) -> (i32, i32) {
    %c0_i32 = arith.constant 0 : i32
    %c0_i32_0 = arith.constant 0 : i32
    %c0_i32_1 = arith.constant 0 : i32
    return %c0_i32, %c0_i32_0 : i32, i32
  }
}

module attributes {stable_mosaic.version = 11 : i64} {
  func.func @_fused_matmul_kernel(%arg0: i32, %arg1: i32, %arg2: i32, %arg3: memref<8x128xbf16, #tpu.memory_space<vmem>>, %arg4: memref<128x128xbf16, #tpu.memory_space<vmem>>, %arg5: memref<1x128xf32, #tpu.memory_space<vmem>>, %arg6: memref<1x128xf32, #tpu.memory_space<vmem>>, %arg7: memref<1x128xf32, #tpu.memory_space<vmem>>, %arg8: memref<8x128xf32, #tpu.memory_space<vmem>>, %arg9: memref<8x128xf32, #tpu.memory_space<vmem>>, %arg10: memref<8x128xf32, #tpu.memory_space<vmem>>) attributes {dimension_semantics = [#tpu.dimension_semantics<parallel>, #tpu.dimension_semantics<parallel>, #tpu.dimension_semantics<arbitrary>], iteration_bounds = array<i64: 1, 1, 9>, scalar_prefetch = 0 : i64, scratch_operands = 1 : i64, tpu.core_type = #tpu.core_type<tc>, window_params = [{transform_indices = @transform_0, window_bounds = array<i64: 8, 128>}, {transform_indices = @transform_1, window_bounds = array<i64: 128, 128>}, {transform_indices = @transform_2, window_bounds = array<i64: 1, 128>}, {transform_indices = @transform_3, window_bounds = array<i64: 1, 128>}, {transform_indices = @transform_4, window_bounds = array<i64: 1, 128>}, {transform_indices = @transform_5, window_bounds = array<i64: 8, 128>}, {transform_indices = @transform_6, window_bounds = array<i64: 8, 128>}]} {
    %c0_i32 = arith.constant 0 : i32
    %0 = arith.cmpi eq, %arg2, %c0_i32 : i32
    %1 = arith.extui %0 : i1 to i32
    %c0_i32_0 = arith.constant 0 : i32
    %2 = arith.cmpi ne, %1, %c0_i32_0 : i32
    scf.if %2 {
      %cst_9 = arith.constant 0.000000e+00 : f32
      %12 = vector.broadcast %cst_9 : f32 to vector<8x128xf32>
      %c0_10 = arith.constant 0 : index
      %c0_11 = arith.constant 0 : index
      %13 = vector.load %arg10[%c0_10, %c0_11] : memref<8x128xf32, #tpu.memory_space<vmem>>, vector<8x128xf32>
      tpu.vector_store %arg10[%c0_10, %c0_11], %12 {strides = array<i32>} : memref<8x128xf32, #tpu.memory_space<vmem>>, vector<8x128xf32>,
    } else {
    }
    %c0 = arith.constant 0 : index
    %c0_1 = arith.constant 0 : index
    %3 = vector.load %arg10[%c0, %c0_1] : memref<8x128xf32, #tpu.memory_space<vmem>>, vector<8x128xf32>
    %c0_2 = arith.constant 0 : index
    %c0_3 = arith.constant 0 : index
    %4 = vector.load %arg3[%c0_2, %c0_3] : memref<8x128xbf16, #tpu.memory_space<vmem>>, vector<8x128xbf16>
    %c0_4 = arith.constant 0 : index
    %c0_5 = arith.constant 0 : index
    %5 = vector.load %arg4[%c0_4, %c0_5] : memref<128x128xbf16, #tpu.memory_space<vmem>>, vector<128x128xbf16>
    %cst = arith.constant dense<0.000000e+00> : vector<8x128xf32>
    %6 = tpu.matmul %4, %5, %cst {dimension_numbers = #tpu.dot_dimension_numbers<[1], [0], [0], [1], [0, 0, 1, 1], [], []>} : vector<8x128xbf16>, vector<128x128xbf16>, vector<8x128xf32> -> vector<8x128xf32>
    %7 = arith.addf %3, %6 : vector<8x128xf32>
    %c0_6 = arith.constant 0 : index
    %c0_7 = arith.constant 0 : index
    %8 = vector.load %arg10[%c0_6, %c0_7] : memref<8x128xf32, #tpu.memory_space<vmem>>, vector<8x128xf32>
    tpu.vector_store %arg10[%c0_6, %c0_7], %7 {strides = array<i32>} : memref<8x128xf32, #tpu.memory_space<vmem>>, vector<8x128xf32>,
    %c8_i32 = arith.constant 8 : i32
    %9 = arith.cmpi eq, %arg2, %c8_i32 : i32
    %10 = arith.extui %9 : i1 to i32
    %c0_i32_8 = arith.constant 0 : i32
    %11 = arith.cmpi ne, %10, %c0_i32_8 : i32
    scf.if %11 {
      %c0_9 = arith.constant 0 : index
      %c0_10 = arith.constant 0 : index
      %12 = vector.load %arg10[%c0_9, %c0_10] : memref<8x128xf32, #tpu.memory_space<vmem>>, vector<8x128xf32>
      %c0_11 = arith.constant 0 : index
      %c0_12 = arith.constant 0 : index
      %13 = vector.load %arg5[%c0_11, %c0_12] : memref<1x128xf32, #tpu.memory_space<vmem>>, vector<1x128xf32>
      %14 = vector.broadcast %13 : vector<1x128xf32> to vector<8x128xf32>
      %15 = arith.mulf %12, %14 : vector<8x128xf32>
      %c0_13 = arith.constant 0 : index
      %c0_14 = arith.constant 0 : index
      %16 = vector.load %arg6[%c0_13, %c0_14] : memref<1x128xf32, #tpu.memory_space<vmem>>, vector<1x128xf32>
      %17 = vector.broadcast %16 : vector<1x128xf32> to vector<8x128xf32>
      %18 = arith.addf %15, %17 : vector<8x128xf32>
      %c0_15 = arith.constant 0 : index
      %c0_16 = arith.constant 0 : index
      %19 = vector.load %arg8[%c0_15, %c0_16] : memref<8x128xf32, #tpu.memory_space<vmem>>, vector<8x128xf32>
      %20 = arith.addf %18, %19 : vector<8x128xf32>
      %c0_17 = arith.constant 0 : index
      %c0_18 = arith.constant 0 : index
      %21 = vector.load %arg7[%c0_17, %c0_18] : memref<1x128xf32, #tpu.memory_space<vmem>>, vector<1x128xf32>
      %cst_19 = arith.constant 0.000000e+00 : f32
      %22 = vector.broadcast %cst_19 : f32 to vector<1x128xf32>
      %23 = arith.cmpf ogt, %21, %22 : vector<1x128xf32>
      %cst_20 = arith.constant 0.000000e+00 : f32
      %24 = vector.broadcast %cst_20 : f32 to vector<8x128xf32>
      %25 = arith.maximumf %20, %24 : vector<8x128xf32>
      %26 = vector.shape_cast %23 : vector<1x128xi1> to vector<1x128xi1>
      %27 = vector.broadcast %26 : vector<1x128xi1> to vector<8x128xi1>
      %28 = arith.select %27, %25, %20 : vector<8x128xi1>, vector<8x128xf32>
      %c0_21 = arith.constant 0 : index
      %c0_22 = arith.constant 0 : index
      %29 = vector.load %arg9[%c0_21, %c0_22] : memref<8x128xf32, #tpu.memory_space<vmem>>, vector<8x128xf32>
      tpu.vector_store %arg9[%c0_21, %c0_22], %28 {strides = array<i32>} : memref<8x128xf32, #tpu.memory_space<vmem>>, vector<8x128xf32>,
    } else {
    }
    return
  }
  func.func @transform_0(%arg0: i32, %arg1: i32, %arg2: i32) -> (i32, i32) {
    %c0_i32 = arith.constant 0 : i32
    return %arg0, %arg2 : i32, i32
  }
  func.func @transform_1(%arg0: i32, %arg1: i32, %arg2: i32) -> (i32, i32) {
    %c0_i32 = arith.constant 0 : i32
    return %arg2, %arg1 : i32, i32
  }
  func.func @transform_2(%arg0: i32, %arg1: i32, %arg2: i32) -> (i32, i32) {
    %c0_i32 = arith.constant 0 : i32
    %c0_i32_0 = arith.constant 0 : i32
    return %c0_i32, %arg1 : i32, i32
  }
  func.func @transform_3(%arg0: i32, %arg1: i32, %arg2: i32) -> (i32, i32) {
    %c0_i32 = arith.constant 0 : i32
    %c0_i32_0 = arith.constant 0 : i32
    return %c0_i32, %arg1 : i32, i32
  }
  func.func @transform_4(%arg0: i32, %arg1: i32, %arg2: i32) -> (i32, i32) {
    %c0_i32 = arith.constant 0 : i32
    %c0_i32_0 = arith.constant 0 : i32
    return %c0_i32, %arg1 : i32, i32
  }
  func.func @transform_5(%arg0: i32, %arg1: i32, %arg2: i32) -> (i32, i32) {
    %c0_i32 = arith.constant 0 : i32
    return %arg0, %arg1 : i32, i32
  }
  func.func @transform_6(%arg0: i32, %arg1: i32, %arg2: i32) -> (i32, i32) {
    %c0_i32 = arith.constant 0 : i32
    return %arg0, %arg1 : i32, i32
  }
}

module attributes {stable_mosaic.version = 11 : i64} {
  func.func @_fused_matmul_kernel(%arg0: i32, %arg1: i32, %arg2: i32, %arg3: memref<2x128xbf16, #tpu.memory_space<vmem>>, %arg4: memref<128x7xbf16, #tpu.memory_space<vmem>>, %arg5: memref<1x7xf32, #tpu.memory_space<vmem>>, %arg6: memref<1x7xf32, #tpu.memory_space<vmem>>, %arg7: memref<1x7xf32, #tpu.memory_space<vmem>>, %arg8: memref<2x7xf32, #tpu.memory_space<vmem>>, %arg9: memref<2x7xf32, #tpu.memory_space<vmem>>) attributes {dimension_semantics = [#tpu.dimension_semantics<parallel>, #tpu.dimension_semantics<parallel>, #tpu.dimension_semantics<arbitrary>], iteration_bounds = array<i64: 1, 1, 1>, scalar_prefetch = 0 : i64, scratch_operands = 1 : i64, tpu.core_type = #tpu.core_type<tc>, window_params = [{transform_indices = @transform_0, window_bounds = array<i64: 2, 128>}, {transform_indices = @transform_1, window_bounds = array<i64: 128, 7>}, {transform_indices = @transform_2, window_bounds = array<i64: 1, 7>}, {transform_indices = @transform_3, window_bounds = array<i64: 1, 7>}, {transform_indices = @transform_4, window_bounds = array<i64: 1, 7>}, {transform_indices = @transform_5, window_bounds = array<i64: 2, 7>}]} {
    %c0_i32 = arith.constant 0 : i32
    %0 = arith.cmpi eq, %arg2, %c0_i32 : i32
    %1 = arith.extui %0 : i1 to i32
    %c0_i32_0 = arith.constant 0 : i32
    %2 = arith.cmpi ne, %1, %c0_i32_0 : i32
    scf.if %2 {
      %cst_10 = arith.constant 0.000000e+00 : f32
      %12 = vector.broadcast %cst_10 : f32 to vector<2x7xf32>
      %c0_11 = arith.constant 0 : index
      %c0_12 = arith.constant 0 : index
      %13 = vector.load %arg9[%c0_11, %c0_12] : memref<2x7xf32, #tpu.memory_space<vmem>>, vector<2x7xf32>
      tpu.vector_store %arg9[%c0_11, %c0_12], %12 {strides = array<i32>} : memref<2x7xf32, #tpu.memory_space<vmem>>, vector<2x7xf32>,
    } else {
    }
    %c0 = arith.constant 0 : index
    %c0_1 = arith.constant 0 : index
    %3 = vector.load %arg9[%c0, %c0_1] : memref<2x7xf32, #tpu.memory_space<vmem>>, vector<2x7xf32>
    %c0_2 = arith.constant 0 : index
    %c0_3 = arith.constant 0 : index
    %4 = vector.load %arg3[%c0_2, %c0_3] : memref<2x128xbf16, #tpu.memory_space<vmem>>, vector<2x128xbf16>
    %c0_4 = arith.constant 0 : index
    %c0_5 = arith.constant 0 : index
    %5 = vector.load %arg4[%c0_4, %c0_5] : memref<128x7xbf16, #tpu.memory_space<vmem>>, vector<128x7xbf16>
    %cst = arith.constant dense<0.000000e+00> : vector<2x7xf32>
    %6 = tpu.matmul %4, %5, %cst {dimension_numbers = #tpu.dot_dimension_numbers<[1], [0], [0], [1], [0, 0, 1, 1], [], []>} : vector<2x128xbf16>, vector<128x7xbf16>, vector<2x7xf32> -> vector<2x7xf32>
    %7 = arith.addf %3, %6 : vector<2x7xf32>
    %c0_6 = arith.constant 0 : index
    %c0_7 = arith.constant 0 : index
    %8 = vector.load %arg9[%c0_6, %c0_7] : memref<2x7xf32, #tpu.memory_space<vmem>>, vector<2x7xf32>
    tpu.vector_store %arg9[%c0_6, %c0_7], %7 {strides = array<i32>} : memref<2x7xf32, #tpu.memory_space<vmem>>, vector<2x7xf32>,
    %c0_i32_8 = arith.constant 0 : i32
    %9 = arith.cmpi eq, %arg2, %c0_i32_8 : i32
    %10 = arith.extui %9 : i1 to i32
    %c0_i32_9 = arith.constant 0 : i32
    %11 = arith.cmpi ne, %10, %c0_i32_9 : i32
    scf.if %11 {
      %c0_10 = arith.constant 0 : index
      %c0_11 = arith.constant 0 : index
      %12 = vector.load %arg9[%c0_10, %c0_11] : memref<2x7xf32, #tpu.memory_space<vmem>>, vector<2x7xf32>
      %c0_12 = arith.constant 0 : index
      %c0_13 = arith.constant 0 : index
      %13 = vector.load %arg5[%c0_12, %c0_13] : memref<1x7xf32, #tpu.memory_space<vmem>>, vector<1x7xf32>
      %14 = vector.broadcast %13 : vector<1x7xf32> to vector<2x7xf32>
      %15 = arith.mulf %12, %14 : vector<2x7xf32>
      %c0_14 = arith.constant 0 : index
      %c0_15 = arith.constant 0 : index
      %16 = vector.load %arg6[%c0_14, %c0_15] : memref<1x7xf32, #tpu.memory_space<vmem>>, vector<1x7xf32>
      %17 = vector.broadcast %16 : vector<1x7xf32> to vector<2x7xf32>
      %18 = arith.addf %15, %17 : vector<2x7xf32>
      %c0_16 = arith.constant 0 : index
      %c0_17 = arith.constant 0 : index
      %19 = vector.load %arg7[%c0_16, %c0_17] : memref<1x7xf32, #tpu.memory_space<vmem>>, vector<1x7xf32>
      %cst_18 = arith.constant 0.000000e+00 : f32
      %20 = vector.broadcast %cst_18 : f32 to vector<1x7xf32>
      %21 = arith.cmpf ogt, %19, %20 : vector<1x7xf32>
      %cst_19 = arith.constant 0.000000e+00 : f32
      %22 = vector.broadcast %cst_19 : f32 to vector<2x7xf32>
      %23 = arith.maximumf %18, %22 : vector<2x7xf32>
      %24 = vector.shape_cast %21 : vector<1x7xi1> to vector<1x7xi1>
      %25 = vector.broadcast %24 : vector<1x7xi1> to vector<2x7xi1>
      %26 = arith.select %25, %23, %18 : vector<2x7xi1>, vector<2x7xf32>
      %c0_20 = arith.constant 0 : index
      %c0_21 = arith.constant 0 : index
      %27 = vector.load %arg8[%c0_20, %c0_21] : memref<2x7xf32, #tpu.memory_space<vmem>>, vector<2x7xf32>
      tpu.vector_store %arg8[%c0_20, %c0_21], %26 {strides = array<i32>} : memref<2x7xf32, #tpu.memory_space<vmem>>, vector<2x7xf32>,
    } else {
    }
    return
  }
  func.func @transform_0(%arg0: i32, %arg1: i32, %arg2: i32) -> (i32, i32) {
    %c0_i32 = arith.constant 0 : i32
    return %arg0, %arg2 : i32, i32
  }
  func.func @transform_1(%arg0: i32, %arg1: i32, %arg2: i32) -> (i32, i32) {
    %c0_i32 = arith.constant 0 : i32
    return %arg2, %arg1 : i32, i32
  }
  func.func @transform_2(%arg0: i32, %arg1: i32, %arg2: i32) -> (i32, i32) {
    %c0_i32 = arith.constant 0 : i32
    %c0_i32_0 = arith.constant 0 : i32
    return %c0_i32, %arg1 : i32, i32
  }
  func.func @transform_3(%arg0: i32, %arg1: i32, %arg2: i32) -> (i32, i32) {
    %c0_i32 = arith.constant 0 : i32
    %c0_i32_0 = arith.constant 0 : i32
    return %c0_i32, %arg1 : i32, i32
  }
  func.func @transform_4(%arg0: i32, %arg1: i32, %arg2: i32) -> (i32, i32) {
    %c0_i32 = arith.constant 0 : i32
    %c0_i32_0 = arith.constant 0 : i32
    return %c0_i32, %arg1 : i32, i32
  }
  func.func @transform_5(%arg0: i32, %arg1: i32, %arg2: i32) -> (i32, i32) {
    %c0_i32 = arith.constant 0 : i32
    return %arg0, %arg1 : i32, i32
  }
}

</mosaic_0001>

<llo_original>
// kernel: urresnet_forward.12
$region0: #{urresnet_forward.12}
  #allocation0 [shape = 'u32[]', space=smem, size = 0x4, offset = 0x4, fixed_abs, tag = 'smem constant byte address 0x4 - core index']
  #allocation1 [shape = 'u32[144,128]{1,0:T(1,128)}', space=vmem, size = 0x12000, scoped, tag = 'internal scratch']
  #allocation2 [shape = 'f32[256,16]{1,0:T(8,128)}', space=vmem, size = 0x20000, scoped, tag = 'scratch operand']
  %s0 = inlined_call_operand.vmem [shape: bf16[2048,27], index: 0, kind: input, shape index: {}]
  %s1 = inlined_call_operand.vmem [shape: bf16[27,16], index: 1, kind: input, shape index: {}]
  %s2 = inlined_call_operand.vmem [shape: f32[1,16], index: 2, kind: input, shape index: {}]
  %s3 = inlined_call_operand.vmem [shape: f32[1,16], index: 3, kind: input, shape index: {}]
  %s4 = inlined_call_operand.vmem [shape: f32[1,16], index: 4, kind: input, shape index: {}]
  %s5 = inlined_call_operand.vmem [shape: f32[2048,16], index: 5, kind: output, shape index: {}]
  %s6 = sld [smem:[#allocation0]]
  $region61: #{urresnet_forward.12} parent=0
    _
  %s8 = ssub.s32 1, %s6
  %s9 = scalar_select 0, %s8, %s6
  loop: start=0, step=1, limit=10
  $region2: #{urresnet_forward.12} parent=0 // loop_pre_header
    _
  $region3: #{urresnet_forward.12} parent=0 // loop_header
    %s11 = sphi 0, %s15
    %p12 = scmp.ge.s32.totalorder %s11, 10
    %s18 = sphi 0, %s37
    %s19 = sphi 0, %s33
    %s20 = sphi 0, %s29
    %s21 = sphi 0, %s18
    %s22 = sphi 0, %s19
    %s23 = sphi 0, %s20
    %s24 = sphi 0, %s21
    %s25 = sphi 0, %s22
    %s26 = sphi 0, %s23
    %s42 = sphi 0, %s44
    %s45 = sphi 0, %s42
    %s46 = sphi 0, %s45
    %s62 = sphi 0, %s46
    %s70 = sphi 0, %s72
    %s73 = sphi 0, %s70
    %s74 = sphi 0, %s73
    %s90 = sphi 0, %s74
    %s96 = sphi 0, %s98
    %s99 = sphi 0, %s96
    %s100 = sphi 0, %s99
    %s116 = sphi 0, %s100
    %s122 = sphi 0, %s124
    %s125 = sphi 0, %s122
    %s126 = sphi 0, %s125
    %s142 = sphi 0, %s126
    %s148 = sphi 0, %s150
    %s151 = sphi 0, %s148
    %s152 = sphi 0, %s151
    %s168 = sphi 0, %s152
    %s176 = sphi 0, %s178
    %s179 = sphi 0, %s176
    %s180 = sphi 0, %s179
    %s196 = sphi 0, %s180
  $region4: #{urresnet_forward.12} parent=0 // loop_header_branch
    %14 = sbr.rel (%p12) target = $region8
  $region5: #{urresnet_forward.12} parent=0 // loop_body
    %s16 = ssub.s32 %s11, 1
    %s17 = ssub.s32 %s11, 2
    %s27 = sadd.s32 1, %s20
    %p28 = scmp.ge.s32.totalorder %s27, 1
    %s29 = scalar_select %p28, 0, %s27
    %s30 = sadd.s32 1, %s19
    %s31 = scalar_select %p28, %s30, %s19
    %p32 = scmp.ge.s32.totalorder %s31, 1
    %s33 = scalar_select %p32, 0, %s31
    %s34 = sadd.s32 1, %s18
    %s35 = scalar_select %p32, %s34, %s18
    %p36 = scmp.ge.s32.totalorder %s35, 8
    %s37 = scalar_select %p36, 0, %s35
    %s38 = ssub.s32 %s18, %s37
    %s39 = ssub.s32 %s20, %s29
    %s40 = sor.u32 %s38, %s39
    %p41 = scmp.eq.s32.totalorder %s40, 0
    %s43 = sadd.s32 %s42, 1
    %s44 = scalar_select %p41, %s42, %s43
    %p47 = pneg %p41
    %p48 = scmp.eq.s32.totalorder %s11, 7
    %p49 = por %p47, %p48
    %p50 = scmp.ne.s32.totalorder %s42, %s45
    %p51 = scmp.eq.s32.totalorder %s11, 0
    %p52 = por %p50, %p51
    %p53 = scmp.ne.s32.totalorder %s42, %s45
    %p54 = scmp.eq.s32.totalorder %s16, 7
    %p55 = por %p53, %p54
    %p56 = scmp.ne.s32.totalorder %s45, %s46
    %p57 = scmp.eq.s32.totalorder %s16, 0
    %p58 = por %p56, %p57
    %p59 = scmp.ne.s32.totalorder %s45, %s46
    %p60 = scmp.eq.s32.totalorder %s17, 7
    %p61 = por %p59, %p60
    %p63 = scmp.ne.s32.totalorder %s46, %s62
    %p64 = scmp.eq.s32.totalorder %s17, 0
    %p65 = por %p63, %p64
    %s66 = ssub.s32 %s20, %s29
    %s67 = ssub.s32 %s19, %s33
    %s68 = sor.u32 %s66, %s67
    %p69 = scmp.eq.s32.totalorder %s68, 0
    %s71 = sadd.s32 %s70, 1
    %s72 = scalar_select %p69, %s70, %s71
    %p75 = pneg %p69
    %p76 = scmp.eq.s32.totalorder %s11, 7
    %p77 = por %p75, %p76
    %p78 = scmp.ne.s32.totalorder %s70, %s73
    %p79 = scmp.eq.s32.totalorder %s11, 0
    %p80 = por %p78, %p79
    %p81 = scmp.ne.s32.totalorder %s70, %s73
    %p82 = scmp.eq.s32.totalorder %s16, 7
    %p83 = por %p81, %p82
    %p84 = scmp.ne.s32.totalorder %s73, %s74
    %p85 = scmp.eq.s32.totalorder %s16, 0
    %p86 = por %p84, %p85
    %p87 = scmp.ne.s32.totalorder %s73, %s74
    %p88 = scmp.eq.s32.totalorder %s17, 7
    %p89 = por %p87, %p88
    %p91 = scmp.ne.s32.totalorder %s74, %s90
    %p92 = scmp.eq.s32.totalorder %s17, 0
    %p93 = por %p91, %p92
    %s94 = ssub.s32 %s19, %s33
    %p95 = scmp.eq.s32.totalorder %s94, 0
    %s97 = sadd.s32 %s96, 1
    %s98 = scalar_select %p95, %s96, %s97
    %p101 = pneg %p95
    %p102 = scmp.eq.s32.totalorder %s11, 7
    %p103 = por %p101, %p102
    %p104 = scmp.ne.s32.totalorder %s96, %s99
    %p105 = scmp.eq.s32.totalorder %s11, 0
    %p106 = por %p104, %p105
    %p107 = scmp.ne.s32.totalorder %s96, %s99
    %p108 = scmp.eq.s32.totalorder %s16, 7
    %p109 = por %p107, %p108
    %p110 = scmp.ne.s32.totalorder %s99, %s100
    %p111 = scmp.eq.s32.totalorder %s16, 0
    %p112 = por %p110, %p111
    %p113 = scmp.ne.s32.totalorder %s99, %s100
    %p114 = scmp.eq.s32.totalorder %s17, 7
    %p115 = por %p113, %p114
    %p117 = scmp.ne.s32.totalorder %s100, %s116
    %p118 = scmp.eq.s32.totalorder %s17, 0
    %p119 = por %p117, %p118
    %s120 = ssub.s32 %s19, %s33
    %p121 = scmp.eq.s32.totalorder %s120, 0
    %s123 = sadd.s32 %s122, 1
    %s124 = scalar_select %p121, %s122, %s123
    %p127 = pneg %p121
    %p128 = scmp.eq.s32.totalorder %s11, 7
    %p129 = por %p127, %p128
    %p130 = scmp.ne.s32.totalorder %s122, %s125
    %p131 = scmp.eq.s32.totalorder %s11, 0
    %p132 = por %p130, %p131
    %p133 = scmp.ne.s32.totalorder %s122, %s125
    %p134 = scmp.eq.s32.totalorder %s16, 7
    %p135 = por %p133, %p134
    %p136 = scmp.ne.s32.totalorder %s125, %s126
    %p137 = scmp.eq.s32.totalorder %s16, 0
    %p138 = por %p136, %p137
    %p139 = scmp.ne.s32.totalorder %s125, %s126
    %p140 = scmp.eq.s32.totalorder %s17, 7
    %p141 = por %p139, %p140
    %p143 = scmp.ne.s32.totalorder %s126, %s142
    %p144 = scmp.eq.s32.totalorder %s17, 0
    %p145 = por %p143, %p144
    %s146 = ssub.s32 %s19, %s33
    %p147 = scmp.eq.s32.totalorder %s146, 0
    %s149 = sadd.s32 %s148, 1
    %s150 = scalar_select %p147, %s148, %s149
    %p153 = pneg %p147
    %p154 = scmp.eq.s32.totalorder %s11, 7
    %p155 = por %p153, %p154
    %p156 = scmp.ne.s32.totalorder %s148, %s151
    %p157 = scmp.eq.s32.totalorder %s11, 0
    %p158 = por %p156, %p157
    %p159 = scmp.ne.s32.totalorder %s148, %s151
    %p160 = scmp.eq.s32.totalorder %s16, 7
    %p161 = por %p159, %p160
    %p162 = scmp.ne.s32.totalorder %s151, %s152
    %p163 = scmp.eq.s32.totalorder %s16, 0
    %p164 = por %p162, %p163
    %p165 = scmp.ne.s32.totalorder %s151, %s152
    %p166 = scmp.eq.s32.totalorder %s17, 7
    %p167 = por %p165, %p166
    %p169 = scmp.ne.s32.totalorder %s152, %s168
    %p170 = scmp.eq.s32.totalorder %s17, 0
    %p171 = por %p169, %p170
    %s172 = ssub.s32 %s18, %s37
    %s173 = ssub.s32 %s19, %s33
    %s174 = sor.u32 %s172, %s173
    %p175 = scmp.eq.s32.totalorder %s174, 0
    %s177 = sadd.s32 %s176, 1
    %s178 = scalar_select %p175, %s176, %s177
    %p181 = pneg %p175
    %p182 = scmp.eq.s32.totalorder %s11, 7
    %p183 = por %p181, %p182
    %p184 = scmp.ne.s32.totalorder %s176, %s179
    %p185 = scmp.eq.s32.totalorder %s11, 0
    %p186 = por %p184, %p185
    %p187 = scmp.ne.s32.totalorder %s176, %s179
    %p188 = scmp.eq.s32.totalorder %s16, 7
    %p189 = por %p187, %p188
    %p190 = scmp.ne.s32.totalorder %s179, %s180
    %p191 = scmp.eq.s32.totalorder %s16, 0
    %p192 = por %p190, %p191
    %p193 = scmp.ne.s32.totalorder %s179, %s180
    %p194 = scmp.eq.s32.totalorder %s17, 7
    %p195 = por %p193, %p194
    %p197 = scmp.ne.s32.totalorder %s180, %s196
    %p198 = scmp.eq.s32.totalorder %s17, 0
    %p199 = por %p197, %p198
    %p200 = scmp.le.s32.totalorder 1, %s11
    %p201 = scmp.lt.s32.totalorder %s11, 9
    %p202 = pnand %p200, %p201
    %p203 = pneg %p202
    // Predicated region
    $region9: #{urresnet_forward.12} parent=5 // pred_check
      _
    $region10: #{urresnet_forward.12} parent=5 // pred_check_branch
      %205 = sbr.rel (%p202) target = $region12
    $region11: #{urresnet_forward.12} parent=5 // pred_region
      %s206 = ssub.s32 %s11, 1
      // Predicated region
      $region13: #{urresnet_forward.12} parent=11 // pred_check
        %p207 = pneg %p86
      $region14: #{urresnet_forward.12} parent=11 // pred_check_branch
        %209 = sbr.rel (%p207) target = $region16
      $region15: #{urresnet_forward.12} parent=11 // pred_region
        %s210 = smul.u32 4, %s23
        %p211 = scmp.lt.s32.totalorder %s210, 3
        %s212 = scalar_select %p211, %s210, 3
        %p213 = scmp.lt.s32.totalorder %s22, 0
        %s214 = scalar_select %p213, %s22, 0
        %s215 = sadd.s32 %s214, %s212
        %s216 = smul.addr %s215, 4
        %s217 = scalar_lea.vmem %s1, %s216
        %s218 = smul.u32 4, %s23
      $region16: #{urresnet_forward.12} parent=11 // pred_fallthru
        _
      // Predicated region
      $region17: #{urresnet_forward.12} parent=11 // pred_check
        %p219 = pneg %p112
      $region18: #{urresnet_forward.12} parent=11 // pred_check_branch
        %221 = sbr.rel (%p219) target = $region20
      $region19: #{urresnet_forward.12} parent=11 // pred_region
        %p222 = scmp.lt.s32.totalorder %s22, 0
        %s223 = scalar_select %p222, %s22, 0
        %s224 = scalar_lea.vmem %s2, %s223
      $region20: #{urresnet_forward.12} parent=11 // pred_fallthru
        _
      // Predicated region
      $region21: #{urresnet_forward.12} parent=11 // pred_check
        %p225 = pneg %p138
      $region22: #{urresnet_forward.12} parent=11 // pred_check_branch
        %227 = sbr.rel (%p225) target = $region24
      $region23: #{urresnet_forward.12} parent=11 // pred_region
        %p228 = scmp.lt.s32.totalorder %s22, 0
        %s229 = scalar_select %p228, %s22, 0
        %s230 = scalar_lea.vmem %s3, %s229
      $region24: #{urresnet_forward.12} parent=11 // pred_fallthru
        _
      // Predicated region
      $region25: #{urresnet_forward.12} parent=11 // pred_check
        %p231 = pneg %p164
      $region26: #{urresnet_forward.12} parent=11 // pred_check_branch
        %233 = sbr.rel (%p231) target = $region28
      $region27: #{urresnet_forward.12} parent=11 // pred_region
        %p234 = scmp.lt.s32.totalorder %s22, 0
        %s235 = scalar_select %p234, %s22, 0
        %s236 = scalar_lea.vmem %s4, %s235
      $region28: #{urresnet_forward.12} parent=11 // pred_fallthru
        _
    $region12: #{urresnet_forward.12} parent=5 // pred_fallthru
      _
    %p237 = scmp.lt.s32.totalorder %s11, 8
    // Predicated region
    $region29: #{urresnet_forward.12} parent=5 // pred_check
      %p238 = pneg %p237
    $region30: #{urresnet_forward.12} parent=5 // pred_check_branch
      %240 = sbr.rel (%p238) target = $region32
    $region31: #{urresnet_forward.12} parent=5 // pred_region
      // Predicated region
      $region33: #{urresnet_forward.12} parent=31 // pred_check
        %p241 = pneg %p52
      $region34: #{urresnet_forward.12} parent=31 // pred_check_branch
        %243 = sbr.rel (%p241) target = $region36
      $region35: #{urresnet_forward.12} parent=31 // pred_region
        %s244 = smul.u32 32, %s18
        %p245 = scmp.lt.s32.totalorder %s244, 255
        %s246 = scalar_select %p245, %s244, 255
        %p247 = scmp.lt.s32.totalorder %s20, 0
        %s248 = scalar_select %p247, %s20, 0
        %s249 = sadd.s32 %s248, %s246
        %s250 = smul.addr %s249, 4
        %s251 = scalar_lea.vmem %s0, %s250
        %s252 = smul.u32 32, %s18
      $region36: #{urresnet_forward.12} parent=31 // pred_fallthru
        _
    $region32: #{urresnet_forward.12} parent=5 // pred_fallthru
      _
    %p253 = scmp.le.s32.totalorder 1, %s11
    %p254 = scmp.lt.s32.totalorder %s11, 9
    %p255 = pnand %p253, %p254
    %p256 = pneg %p255
    // Predicated region
    $region37: #{urresnet_forward.12} parent=5 // pred_check
      _
    $region38: #{urresnet_forward.12} parent=5 // pred_check_branch
      %258 = sbr.rel (%p255) target = $region40
    $region39: #{urresnet_forward.12} parent=5 // pred_region
      %s259 = ssub.s32 %s11, 1
      %s260 = smul.u32 32, %s21
      %p261 = scmp.lt.s32.totalorder %s260, 255
      %s262 = scalar_select %p261, %s260, 255
      %p263 = scmp.lt.s32.totalorder %s23, 0
      %s264 = scalar_select %p263, %s23, 0
      %s265 = sadd.s32 %s264, %s262
      %s266 = smul.addr %s265, 4
      %s267 = scalar_lea.vmem %s0, %s266
      %p268 = pneg %p58
      %p269 = pneg %p55
      %s270 = smul.u32 4, %s23
      %p271 = scmp.lt.s32.totalorder %s270, 3
      %s272 = scalar_select %p271, %s270, 3
      %p273 = scmp.lt.s32.totalorder %s22, 0
      %s274 = scalar_select %p273, %s22, 0
      %s275 = sadd.s32 %s274, %s272
      %s276 = smul.addr %s275, 4
      %s277 = scalar_lea.vmem %s1, %s276
      %p278 = pneg %p86
      %p279 = pneg %p83
      %p280 = scmp.lt.s32.totalorder %s22, 0
      %s281 = scalar_select %p280, %s22, 0
      %s282 = scalar_lea.vmem %s2, %s281
      %p283 = pneg %p112
      %p284 = pneg %p109
      %p285 = scmp.lt.s32.totalorder %s22, 0
      %s286 = scalar_select %p285, %s22, 0
      %s287 = scalar_lea.vmem %s3, %s286
      %p288 = pneg %p138
      %p289 = pneg %p135
      %p290 = scmp.lt.s32.totalorder %s22, 0
      %s291 = scalar_select %p290, %s22, 0
      %s292 = scalar_lea.vmem %s4, %s291
      %p293 = pneg %p164
      %p294 = pneg %p161
      %p295 = pneg %p192
      %p296 = pneg %p189
      %s297 = smul.u32 32, %s21
      %p298 = scmp.lt.s32.totalorder %s297, 255
      %s299 = scalar_select %p298, %s297, 255
      %p300 = scmp.lt.s32.totalorder %s22, 0
      %s301 = scalar_select %p300, %s22, 0
      %s302 = sadd.s32 %s301, %s299
      %s303 = smul.addr %s302, 8
      %s304 = scalar_lea.vmem %s5, %s303
      %s305 = smul.u32 32, %s21
      %p306 = scmp.lt.s32.totalorder %s305, 255
      %s307 = scalar_select %p306, %s305, 255
      %p308 = scmp.lt.s32.totalorder %s23, 0
      %s309 = scalar_select %p308, %s23, 0
      %s310 = sadd.s32 %s309, %s307
      %s311 = smul.addr %s310, 4
      %s312 = scalar_lea.vmem %s0, %s311
      %s313 = smul.u32 32, %s21
      %s314 = smul.u32 4, %s23
      %p315 = scmp.lt.s32.totalorder %s314, 3
      %s316 = scalar_select %p315, %s314, 3
      %p317 = scmp.lt.s32.totalorder %s22, 0
      %s318 = scalar_select %p317, %s22, 0
      %s319 = sadd.s32 %s318, %s316
      %s320 = smul.addr %s319, 4
      %s321 = scalar_lea.vmem %s1, %s320
      %s322 = smul.u32 4, %s23
      %p323 = scmp.lt.s32.totalorder %s22, 0
      %s324 = scalar_select %p323, %s22, 0
      %s325 = scalar_lea.vmem %s2, %s324
      %p326 = scmp.lt.s32.totalorder %s22, 0
      %s327 = scalar_select %p326, %s22, 0
      %s328 = scalar_lea.vmem %s3, %s327
      %p329 = scmp.lt.s32.totalorder %s22, 0
      %s330 = scalar_select %p329, %s22, 0
      %s331 = scalar_lea.vmem %s4, %s330
      %s332 = smul.u32 32, %s21
      %p333 = scmp.lt.s32.totalorder %s332, 255
      %s334 = scalar_select %p333, %s332, 255
      %p335 = scmp.lt.s32.totalorder %s22, 0
      %s336 = scalar_select %p335, %s22, 0
      %s337 = sadd.s32 %s336, %s334
      %s338 = smul.addr %s337, 8
      %s339 = scalar_lea.vmem %s5, %s338
      %s340 = smul.u32 32, %s21
      %p342 = scmp.eq.s32.totalorder %s23, 0
      // Predicated region
      $region41: #{urresnet_forward.12} parent=39 // pred_check
        %p343 = pneg %p342
      $region42: #{urresnet_forward.12} parent=39 // pred_check_branch
        %345 = sbr.rel (%p343) target = $region44
      $region43: #{urresnet_forward.12} parent=39 // pred_region
        %vm346 = vcmask 130048
        %347 = vst.msk [vmem:[#allocation2] sm:$0xff] %vm346, 0.0
        %348 = vst.msk [vmem:[#allocation2 + $0x8] sm:$0xff] %vm346, 0.0
        %349 = vst.msk [vmem:[#allocation2 + $0x10] sm:$0xff] %vm346, 0.0
        %350 = vst.msk [vmem:[#allocation2 + $0x18] sm:$0xff] %vm346, 0.0
        %351 = vst.msk [vmem:[#allocation2 + $0x20] sm:$0xff] %vm346, 0.0
        %352 = vst.msk [vmem:[#allocation2 + $0x28] sm:$0xff] %vm346, 0.0
        %353 = vst.msk [vmem:[#allocation2 + $0x30] sm:$0xff] %vm346, 0.0
        %354 = vst.msk [vmem:[#allocation2 + $0x38] sm:$0xff] %vm346, 0.0
        %355 = vst.msk [vmem:[#allocation2 + $0x40] sm:$0xff] %vm346, 0.0
        %356 = vst.msk [vmem:[#allocation2 + $0x48] sm:$0xff] %vm346, 0.0
        %357 = vst.msk [vmem:[#allocation2 + $0x50] sm:$0xff] %vm346, 0.0
        %358 = vst.msk [vmem:[#allocation2 + $0x58] sm:$0xff] %vm346, 0.0
        %359 = vst.msk [vmem:[#allocation2 + $0x60] sm:$0xff] %vm346, 0.0
        %360 = vst.msk [vmem:[#allocation2 + $0x68] sm:$0xff] %vm346, 0.0
        %361 = vst.msk [vmem:[#allocation2 + $0x70] sm:$0xff] %vm346, 0.0
        %362 = vst.msk [vmem:[#allocation2 + $0x78] sm:$0xff] %vm346, 0.0
        %363 = vst.msk [vmem:[#allocation2 + $0x80] sm:$0xff] %vm346, 0.0
        %364 = vst.msk [vmem:[#allocation2 + $0x88] sm:$0xff] %vm346, 0.0
        %365 = vst.msk [vmem:[#allocation2 + $0x90] sm:$0xff] %vm346, 0.0
        %366 = vst.msk [vmem:[#allocation2 + $0x98] sm:$0xff] %vm346, 0.0
        %367 = vst.msk [vmem:[#allocation2 + $0xa0] sm:$0xff] %vm346, 0.0
        %368 = vst.msk [vmem:[#allocation2 + $0xa8] sm:$0xff] %vm346, 0.0
        %369 = vst.msk [vmem:[#allocation2 + $0xb0] sm:$0xff] %vm346, 0.0
        %370 = vst.msk [vmem:[#allocation2 + $0xb8] sm:$0xff] %vm346, 0.0
        %371 = vst.msk [vmem:[#allocation2 + $0xc0] sm:$0xff] %vm346, 0.0
        %372 = vst.msk [vmem:[#allocation2 + $0xc8] sm:$0xff] %vm346, 0.0
        %373 = vst.msk [vmem:[#allocation2 + $0xd0] sm:$0xff] %vm346, 0.0
        %374 = vst.msk [vmem:[#allocation2 + $0xd8] sm:$0xff] %vm346, 0.0
        %375 = vst.msk [vmem:[#allocation2 + $0xe0] sm:$0xff] %vm346, 0.0
        %376 = vst.msk [vmem:[#allocation2 + $0xe8] sm:$0xff] %vm346, 0.0
        %377 = vst.msk [vmem:[#allocation2 + $0xf0] sm:$0xff] %vm346, 0.0
        %378 = vst.msk [vmem:[#allocation2 + $0xf8] sm:$0xff] %vm346, 0.0
      $region44: #{urresnet_forward.12} parent=39 // pred_fallthru
        _
      %v379 = vld [vmem:[#allocation2] sm:$0xff]
      %v380 = vld [vmem:[#allocation2 + $0x8] sm:$0xff]
      %v381 = vld [vmem:[#allocation2 + $0x10] sm:$0xff]
      %v382 = vld [vmem:[#allocation2 + $0x18] sm:$0xff]
      %v383 = vld [vmem:[#allocation2 + $0x20] sm:$0xff]
      %v384 = vld [vmem:[#allocation2 + $0x28] sm:$0xff]
      %v385 = vld [vmem:[#allocation2 + $0x30] sm:$0xff]
      %v386 = vld [vmem:[#allocation2 + $0x38] sm:$0xff]
      %v387 = vld [vmem:[#allocation2 + $0x40] sm:$0xff]
      %v388 = vld [vmem:[#allocation2 + $0x48] sm:$0xff]
      %v389 = vld [vmem:[#allocation2 + $0x50] sm:$0xff]
      %v390 = vld [vmem:[#allocation2 + $0x58] sm:$0xff]
      %v391 = vld [vmem:[#allocation2 + $0x60] sm:$0xff]
      %v392 = vld [vmem:[#allocation2 + $0x68] sm:$0xff]
      %v393 = vld [vmem:[#allocation2 + $0x70] sm:$0xff]
      %v394 = vld [vmem:[#allocation2 + $0x78] sm:$0xff]
      %v395 = vld [vmem:[#allocation2 + $0x80] sm:$0xff]
      %v396 = vld [vmem:[#allocation2 + $0x88] sm:$0xff]
      %v397 = vld [vmem:[#allocation2 + $0x90] sm:$0xff]
      %v398 = vld [vmem:[#allocation2 + $0x98] sm:$0xff]
      %v399 = vld [vmem:[#allocation2 + $0xa0] sm:$0xff]
      %v400 = vld [vmem:[#allocation2 + $0xa8] sm:$0xff]
      %v401 = vld [vmem:[#allocation2 + $0xb0] sm:$0xff]
      %v402 = vld [vmem:[#allocation2 + $0xb8] sm:$0xff]
      %v403 = vld [vmem:[#allocation2 + $0xc0] sm:$0xff]
      %v404 = vld [vmem:[#allocation2 + $0xc8] sm:$0xff]
      %v405 = vld [vmem:[#allocation2 + $0xd0] sm:$0xff]
      %v406 = vld [vmem:[#allocation2 + $0xd8] sm:$0xff]
      %v407 = vld [vmem:[#allocation2 + $0xe0] sm:$0xff]
      %v408 = vld [vmem:[#allocation2 + $0xe8] sm:$0xff]
      %v409 = vld [vmem:[#allocation2 + $0xf0] sm:$0xff]
      %v410 = vld [vmem:[#allocation2 + $0xf8] sm:$0xff]
      %v411 = vld [vmem:[%s312] sm:$0xf]
      %v412 = vld [vmem:[%s312 + $0x4] sm:$0xf]
      %v413 = vld [vmem:[%s312 + $0x8] sm:$0xf]
      %v414 = vld [vmem:[%s312 + $0xc] sm:$0xf]
      %v415 = vld [vmem:[%s312 + $0x10] sm:$0xf]
      %v416 = vld [vmem:[%s312 + $0x14] sm:$0xf]
      %v417 = vld [vmem:[%s312 + $0x18] sm:$0xf]
      %v418 = vld [vmem:[%s312 + $0x1c] sm:$0xf]
      %v419 = vld [vmem:[%s312 + $0x20] sm:$0xf]
      %v420 = vld [vmem:[%s312 + $0x24] sm:$0xf]
      %v421 = vld [vmem:[%s312 + $0x28] sm:$0xf]
      %v422 = vld [vmem:[%s312 + $0x2c] sm:$0xf]
      %v423 = vld [vmem:[%s312 + $0x30] sm:$0xf]
      %v424 = vld [vmem:[%s312 + $0x34] sm:$0xf]
      %v425 = vld [vmem:[%s312 + $0x38] sm:$0xf]
      %v426 = vld [vmem:[%s312 + $0x3c] sm:$0xf]
      %v427 = vld [vmem:[%s312 + $0x40] sm:$0xf]
      %v428 = vld [vmem:[%s312 + $0x44] sm:$0xf]
      %v429 = vld [vmem:[%s312 + $0x48] sm:$0xf]
      %v430 = vld [vmem:[%s312 + $0x4c] sm:$0xf]
      %v431 = vld [vmem:[%s312 + $0x50] sm:$0xf]
      %v432 = vld [vmem:[%s312 + $0x54] sm:$0xf]
      %v433 = vld [vmem:[%s312 + $0x58] sm:$0xf]
      %v434 = vld [vmem:[%s312 + $0x5c] sm:$0xf]
      %v435 = vld [vmem:[%s312 + $0x60] sm:$0xf]
      %v436 = vld [vmem:[%s312 + $0x64] sm:$0xf]
      %v437 = vld [vmem:[%s312 + $0x68] sm:$0xf]
      %v438 = vld [vmem:[%s312 + $0x6c] sm:$0xf]
      %v439 = vld [vmem:[%s312 + $0x70] sm:$0xf]
      %v440 = vld [vmem:[%s312 + $0x74] sm:$0xf]
      %v441 = vld [vmem:[%s312 + $0x78] sm:$0xf]
      %v442 = vld [vmem:[%s312 + $0x7c] sm:$0xf]
      %v443 = vld [vmem:[%s321] sm:$0xf]
      %v444 = vld [vmem:[%s321 + $0x4] sm:$0xf]
      %v445 = vld [vmem:[%s321 + $0x8] sm:$0xf]
      %v446 = vld [vmem:[%s321 + $0xc] sm:$0x3]
      %v479 = vunpack.c.l.b16 %v411
      %v480 = vunpack.c.l.b16 %v412
      %v481 = vunpack.c.l.b16 %v413
      %v482 = vunpack.c.l.b16 %v414
      %v483 = vunpack.c.l.b16 %v415
      %v484 = vunpack.c.l.b16 %v416
      %v485 = vunpack.c.l.b16 %v417
      %v486 = vunpack.c.l.b16 %v418
      %v487 = vunpack.c.l.b16 %v419
      %v488 = vunpack.c.l.b16 %v420
      %v489 = vunpack.c.l.b16 %v421
      %v490 = vunpack.c.l.b16 %v422
      %v491 = vunpack.c.l.b16 %v423
      %v492 = vunpack.c.l.b16 %v424
      %v493 = vunpack.c.l.b16 %v425
      %v494 = vunpack.c.l.b16 %v426
      %v495 = vunpack.c.l.b16 %v427
      %v496 = vunpack.c.l.b16 %v428
      %v497 = vunpack.c.l.b16 %v429
      %v498 = vunpack.c.l.b16 %v430
      %v499 = vunpack.c.l.b16 %v431
      %v500 = vunpack.c.l.b16 %v432
      %v501 = vunpack.c.l.b16 %v433
      %v502 = vunpack.c.l.b16 %v434
      %v503 = vunpack.c.l.b16 %v435
      %v504 = vunpack.c.l.b16 %v436
      %v505 = vunpack.c.l.b16 %v437
      %v506 = vunpack.c.l.b16 %v438
      %v507 = vunpack.c.l.b16 %v439
      %v508 = vunpack.c.l.b16 %v440
      %v509 = vunpack.c.l.b16 %v441
      %v510 = vunpack.c.l.b16 %v442
      %v511 = vpack.c.b16 %v480, %v479
      %v512 = vpack.c.b16 %v482, %v481
      %v513 = vpack.c.b16 %v484, %v483
      %v514 = vpack.c.b16 %v486, %v485
      %v515 = vpack.c.b16 %v488, %v487
      %v516 = vpack.c.b16 %v490, %v489
      %v517 = vpack.c.b16 %v492, %v491
      %v518 = vpack.c.b16 %v494, %v493
      %v519 = vpack.c.b16 %v496, %v495
      %v520 = vpack.c.b16 %v498, %v497
      %v521 = vpack.c.b16 %v500, %v499
      %v522 = vpack.c.b16 %v502, %v501
      %v523 = vpack.c.b16 %v504, %v503
      %v524 = vpack.c.b16 %v506, %v505
      %v525 = vpack.c.b16 %v508, %v507
      %v526 = vpack.c.b16 %v510, %v509
      %v531 = vunpack.c.l.b16 %v443
      %v532 = vunpack.c.l.b16 %v444
      %v533 = vunpack.c.l.b16 %v445
      %v534 = vunpack.c.l.b16 %v446
      %v535 = vpack.c.b16 %v532, %v531
      %v536 = vpack.c.b16 %v534, %v533
      %vm538 = vcmask 220160
      %v540 = vsel %vm538, %v511, 0
      %v543 = vsel %vm538, %v512, 0
      %v546 = vsel %vm538, %v513, 0
      %v549 = vsel %vm538, %v514, 0
      %v552 = vsel %vm538, %v515, 0
      %v555 = vsel %vm538, %v516, 0
      %v558 = vsel %vm538, %v517, 0
      %v561 = vsel %vm538, %v518, 0
      %v564 = vsel %vm538, %v519, 0
      %v567 = vsel %vm538, %v520, 0
      %v570 = vsel %vm538, %v521, 0
      %v573 = vsel %vm538, %v522, 0
      %v576 = vsel %vm538, %v523, 0
      %v579 = vsel %vm538, %v524, 0
      %v582 = vsel %vm538, %v525, 0
      %v585 = vsel %vm538, %v526, 0
      %vm587 = vcmask 1044480
      %vm588 = vcmask 1045504
      %v589 = vsel %vm587, 4294967295, 65535
      %v590 = vsel %vm588, %v589, 0
      %v592 = vand.u32 %v536, %v590
      %594 = vmatprep.subr.bf16.mxu0 0
      %595 = vmatpush1.bf16.msra.mxu0 %v535
      %596 = vmatprep.subr.bf16.mxu0 0
      %597 = vmatpush1.bf16.msra.mxu0 %v592
      %598 = vmatprep.subr.bf16.mxu0 0
      %599 = vmatpush1.bf16.msra.mxu0 0
      %600 = vmatprep.subr.bf16.mxu0 0
      %601 = vmatpush1.bf16.msra.mxu0 0
      %602 = vmatprep.subr.bf16.mxu0 0
      %603 = vmatpush1.bf16.msra.mxu0 0
      %604 = vmatprep.subr.bf16.mxu0 0
      %605 = vmatpush1.bf16.msra.mxu0 0
      %606 = vmatprep.subr.bf16.mxu0 0
      %607 = vmatpush1.bf16.msra.mxu0 0
      %608 = vmatprep.subr.bf16.mxu0 0
      %609 = vmatpush1.bf16.msra.mxu0 0
      %610 = vmatprep.subr.bf16.mxu0 0
      %611 = vmatpush1.bf16.msra.mxu0 0
      %612 = vmatprep.subr.bf16.mxu0 0
      %613 = vmatpush1.bf16.msra.mxu0 0
      %614 = vmatprep.subr.bf16.mxu0 0
      %615 = vmatpush1.bf16.msra.mxu0 0
      %616 = vmatprep.subr.bf16.mxu0 0
      %617 = vmatpush1.bf16.msra.mxu0 0
      %618 = vmatprep.subr.bf16.mxu0 0
      %619 = vmatpush1.bf16.msra.mxu0 0
      %620 = vmatprep.subr.bf16.mxu0 0
      %621 = vmatpush1.bf16.msra.mxu0 0
      %622 = vmatprep.subr.bf16.mxu0 0
      %623 = vmatpush1.bf16.msra.mxu0 0
      %624 = vmatprep.subr.bf16.mxu0 0
      %625 = vmatpush1.bf16.msra.mxu0 0
      %626 = vmatprep.mubr.bf16.mxu0 0
      %627 = vmatmul.mubr.bf16.gmra.mrb[0].mxu0 %v540
      %v628 = vpop.f32.mrb[0].mxu0
      %v629 = vadd.f32 0.0, %v628
      %v630 = vpop.f32.mrb[0].mxu0
      %v631 = vpop.f32.mrb[0].mxu0
      %v632 = vadd.f32 0.0, %v631
      %v633 = vpop.f32.mrb[0].mxu0
      %634 = vmatprep.mubr.bf16.mxu0 0
      %635 = vmatmul.mubr.bf16.gmra.mrb[0].mxu0 %v543
      %v636 = vpop.f32.mrb[0].mxu0
      %v637 = vadd.f32 0.0, %v636
      %v638 = vpop.f32.mrb[0].mxu0
      %v639 = vpop.f32.mrb[0].mxu0
      %v640 = vadd.f32 0.0, %v639
      %v641 = vpop.f32.mrb[0].mxu0
      %642 = vmatprep.mubr.bf16.mxu0 0
      %643 = vmatmul.mubr.bf16.gmra.mrb[0].mxu0 %v546
      %v644 = vpop.f32.mrb[0].mxu0
      %v645 = vadd.f32 0.0, %v644
      %v646 = vpop.f32.mrb[0].mxu0
      %v647 = vpop.f32.mrb[0].mxu0
      %v648 = vadd.f32 0.0, %v647
      %v649 = vpop.f32.mrb[0].mxu0
      %650 = vmatprep.mubr.bf16.mxu0 0
      %651 = vmatmul.mubr.bf16.gmra.mrb[0].mxu0 %v549
      %v652 = vpop.f32.mrb[0].mxu0
      %v653 = vadd.f32 0.0, %v652
      %v654 = vpop.f32.mrb[0].mxu0
      %v655 = vpop.f32.mrb[0].mxu0
      %v656 = vadd.f32 0.0, %v655
      %v657 = vpop.f32.mrb[0].mxu0
      %658 = vmatprep.mubr.bf16.mxu0 0
      %659 = vmatmul.mubr.bf16.gmra.mrb[0].mxu0 %v552
      %v660 = vpop.f32.mrb[0].mxu0
      %v661 = vadd.f32 0.0, %v660
      %v662 = vpop.f32.mrb[0].mxu0
      %v663 = vpop.f32.mrb[0].mxu0
      %v664 = vadd.f32 0.0, %v663
      %v665 = vpop.f32.mrb[0].mxu0
      %666 = vmatprep.mubr.bf16.mxu0 0
      %667 = vmatmul.mubr.bf16.gmra.mrb[0].mxu0 %v555
      %v668 = vpop.f32.mrb[0].mxu0
      %v669 = vadd.f32 0.0, %v668
      %v670 = vpop.f32.mrb[0].mxu0
      %v671 = vpop.f32.mrb[0].mxu0
      %v672 = vadd.f32 0.0, %v671
      %v673 = vpop.f32.mrb[0].mxu0
      %674 = vmatprep.mubr.bf16.mxu0 0
      %675 = vmatmul.mubr.bf16.gmra.mrb[0].mxu0 %v558
      %v676 = vpop.f32.mrb[0].mxu0
      %v677 = vadd.f32 0.0, %v676
      %v678 = vpop.f32.mrb[0].mxu0
      %v679 = vpop.f32.mrb[0].mxu0
      %v680 = vadd.f32 0.0, %v679
      %v681 = vpop.f32.mrb[0].mxu0
      %682 = vmatprep.mubr.bf16.mxu0 0
      %683 = vmatmul.mubr.bf16.gmra.mrb[0].mxu0 %v561
      %v684 = vpop.f32.mrb[0].mxu0
      %v685 = vadd.f32 0.0, %v684
      %v686 = vpop.f32.mrb[0].mxu0
      %v687 = vpop.f32.mrb[0].mxu0
      %v688 = vadd.f32 0.0, %v687
      %v689 = vpop.f32.mrb[0].mxu0
      %690 = vmatprep.mubr.bf16.mxu0 0
      %691 = vmatmul.mubr.bf16.gmra.mrb[0].mxu0 %v564
      %v692 = vpop.f32.mrb[0].mxu0
      %v693 = vadd.f32 0.0, %v692
      %v694 = vpop.f32.mrb[0].mxu0
      %v695 = vpop.f32.mrb[0].mxu0
      %v696 = vadd.f32 0.0, %v695
      %v697 = vpop.f32.mrb[0].mxu0
      %698 = vmatprep.mubr.bf16.mxu0 0
      %699 = vmatmul.mubr.bf16.gmra.mrb[0].mxu0 %v567
      %v700 = vpop.f32.mrb[0].mxu0
      %v701 = vadd.f32 0.0, %v700
      %v702 = vpop.f32.mrb[0].mxu0
      %v703 = vpop.f32.mrb[0].mxu0
      %v704 = vadd.f32 0.0, %v703
      %v705 = vpop.f32.mrb[0].mxu0
      %706 = vmatprep.mubr.bf16.mxu0 0
      %707 = vmatmul.mubr.bf16.gmra.mrb[0].mxu0 %v570
      %v708 = vpop.f32.mrb[0].mxu0
      %v709 = vadd.f32 0.0, %v708
      %v710 = vpop.f32.mrb[0].mxu0
      %v711 = vpop.f32.mrb[0].mxu0
      %v712 = vadd.f32 0.0, %v711
      %v713 = vpop.f32.mrb[0].mxu0
      %714 = vmatprep.mubr.bf16.mxu0 0
      %715 = vmatmul.mubr.bf16.gmra.mrb[0].mxu0 %v573
      %v716 = vpop.f32.mrb[0].mxu0
      %v717 = vadd.f32 0.0, %v716
      %v718 = vpop.f32.mrb[0].mxu0
      %v719 = vpop.f32.mrb[0].mxu0
      %v720 = vadd.f32 0.0, %v719
      %v721 = vpop.f32.mrb[0].mxu0
      %722 = vmatprep.mubr.bf16.mxu0 0
      %723 = vmatmul.mubr.bf16.gmra.mrb[0].mxu0 %v576
      %v724 = vpop.f32.mrb[0].mxu0
      %v725 = vadd.f32 0.0, %v724
      %v726 = vpop.f32.mrb[0].mxu0
      %v727 = vpop.f32.mrb[0].mxu0
      %v728 = vadd.f32 0.0, %v727
      %v729 = vpop.f32.mrb[0].mxu0
      %730 = vmatprep.mubr.bf16.mxu0 0
      %731 = vmatmul.mubr.bf16.gmra.mrb[0].mxu0 %v579
      %v732 = vpop.f32.mrb[0].mxu0
      %v733 = vadd.f32 0.0, %v732
      %v734 = vpop.f32.mrb[0].mxu0
      %v735 = vpop.f32.mrb[0].mxu0
      %v736 = vadd.f32 0.0, %v735
      %v737 = vpop.f32.mrb[0].mxu0
      %738 = vmatprep.mubr.bf16.mxu0 0
      %739 = vmatmul.mubr.bf16.gmra.mrb[0].mxu0 %v582
      %v740 = vpop.f32.mrb[0].mxu0
      %v741 = vadd.f32 0.0, %v740
      %v742 = vpop.f32.mrb[0].mxu0
      %v743 = vpop.f32.mrb[0].mxu0
      %v744 = vadd.f32 0.0, %v743
      %v745 = vpop.f32.mrb[0].mxu0
      %746 = vmatprep.mubr.bf16.mxu0 0
      %747 = vmatmul.mubr.bf16.gmra.mrb[0].mxu0 %v585
      %v748 = vpop.f32.mrb[0].mxu0
      %v749 = vadd.f32 0.0, %v748
      %v750 = vpop.f32.mrb[0].mxu0
      %v751 = vpop.f32.mrb[0].mxu0
      %v752 = vadd.f32 0.0, %v751
      %v753 = vpop.f32.mrb[0].mxu0
      %754 = vdwg.mxu0
      %v755 = vadd.f32 %v379, %v629
      %v756 = vadd.f32 %v380, %v632
      %v757 = vadd.f32 %v381, %v637
      %v758 = vadd.f32 %v382, %v640
      %v759 = vadd.f32 %v383, %v645
      %v760 = vadd.f32 %v384, %v648
      %v761 = vadd.f32 %v385, %v653
      %v762 = vadd.f32 %v386, %v656
      %v763 = vadd.f32 %v387, %v661
      %v764 = vadd.f32 %v388, %v664
      %v765 = vadd.f32 %v389, %v669
      %v766 = vadd.f32 %v390, %v672
      %v767 = vadd.f32 %v391, %v677
      %v768 = vadd.f32 %v392, %v680
      %v769 = vadd.f32 %v393, %v685
      %v770 = vadd.f32 %v394, %v688
      %v771 = vadd.f32 %v395, %v693
      %v772 = vadd.f32 %v396, %v696
      %v773 = vadd.f32 %v397, %v701
      %v774 = vadd.f32 %v398, %v704
      %v775 = vadd.f32 %v399, %v709
      %v776 = vadd.f32 %v400, %v712
      %v777 = vadd.f32 %v401, %v717
      %v778 = vadd.f32 %v402, %v720
      %v779 = vadd.f32 %v403, %v725
      %v780 = vadd.f32 %v404, %v728
      %v781 = vadd.f32 %v405, %v733
      %v782 = vadd.f32 %v406, %v736
      %v783 = vadd.f32 %v407, %v741
      %v784 = vadd.f32 %v408, %v744
      %v785 = vadd.f32 %v409, %v749
      %v786 = vadd.f32 %v410, %v752
      %vm787 = vcmask 130048
      %788 = vst.msk [vmem:[#allocation2] sm:$0xff] %vm787, %v755
      %789 = vst.msk [vmem:[#allocation2 + $0x8] sm:$0xff] %vm787, %v756
      %790 = vst.msk [vmem:[#allocation2 + $0x10] sm:$0xff] %vm787, %v757
      %791 = vst.msk [vmem:[#allocation2 + $0x18] sm:$0xff] %vm787, %v758
      %792 = vst.msk [vmem:[#allocation2 + $0x20] sm:$0xff] %vm787, %v759
      %793 = vst.msk [vmem:[#allocation2 + $0x28] sm:$0xff] %vm787, %v760
      %794 = vst.msk [vmem:[#allocation2 + $0x30] sm:$0xff] %vm787, %v761
      %795 = vst.msk [vmem:[#allocation2 + $0x38] sm:$0xff] %vm787, %v762
      %796 = vst.msk [vmem:[#allocation2 + $0x40] sm:$0xff] %vm787, %v763
      %797 = vst.msk [vmem:[#allocation2 + $0x48] sm:$0xff] %vm787, %v764
      %798 = vst.msk [vmem:[#allocation2 + $0x50] sm:$0xff] %vm787, %v765
      %799 = vst.msk [vmem:[#allocation2 + $0x58] sm:$0xff] %vm787, %v766
      %800 = vst.msk [vmem:[#allocation2 + $0x60] sm:$0xff] %vm787, %v767
      %801 = vst.msk [vmem:[#allocation2 + $0x68] sm:$0xff] %vm787, %v768
      %802 = vst.msk [vmem:[#allocation2 + $0x70] sm:$0xff] %vm787, %v769
      %803 = vst.msk [vmem:[#allocation2 + $0x78] sm:$0xff] %vm787, %v770
      %804 = vst.msk [vmem:[#allocation2 + $0x80] sm:$0xff] %vm787, %v771
      %805 = vst.msk [vmem:[#allocation2 + $0x88] sm:$0xff] %vm787, %v772
      %806 = vst.msk [vmem:[#allocation2 + $0x90] sm:$0xff] %vm787, %v773
      %807 = vst.msk [vmem:[#allocation2 + $0x98] sm:$0xff] %vm787, %v774
      %808 = vst.msk [vmem:[#allocation2 + $0xa0] sm:$0xff] %vm787, %v775
      %809 = vst.msk [vmem:[#allocation2 + $0xa8] sm:$0xff] %vm787, %v776
      %810 = vst.msk [vmem:[#allocation2 + $0xb0] sm:$0xff] %vm787, %v777
      %811 = vst.msk [vmem:[#allocation2 + $0xb8] sm:$0xff] %vm787, %v778
      %812 = vst.msk [vmem:[#allocation2 + $0xc0] sm:$0xff] %vm787, %v779
      %813 = vst.msk [vmem:[#allocation2 + $0xc8] sm:$0xff] %vm787, %v780
      %814 = vst.msk [vmem:[#allocation2 + $0xd0] sm:$0xff] %vm787, %v781
      %815 = vst.msk [vmem:[#allocation2 + $0xd8] sm:$0xff] %vm787, %v782
      %816 = vst.msk [vmem:[#allocation2 + $0xe0] sm:$0xff] %vm787, %v783
      %817 = vst.msk [vmem:[#allocation2 + $0xe8] sm:$0xff] %vm787, %v784
      %818 = vst.msk [vmem:[#allocation2 + $0xf0] sm:$0xff] %vm787, %v785
      %819 = vst.msk [vmem:[#allocation2 + $0xf8] sm:$0xff] %vm787, %v786
      // Predicated region
      $region45: #{urresnet_forward.12} parent=39 // pred_check
        %p820 = pneg %p342
      $region46: #{urresnet_forward.12} parent=39 // pred_check_branch
        %822 = sbr.rel (%p820) target = $region48
      $region47: #{urresnet_forward.12} parent=39 // pred_region
        %v823 = vld [vmem:[#allocation2] sm:$0xff]
        %v824 = vld [vmem:[#allocation2 + $0x8] sm:$0xff]
        %v825 = vld [vmem:[#allocation2 + $0x10] sm:$0xff]
        %v826 = vld [vmem:[#allocation2 + $0x18] sm:$0xff]
        %v827 = vld [vmem:[#allocation2 + $0x20] sm:$0xff]
        %v828 = vld [vmem:[#allocation2 + $0x28] sm:$0xff]
        %v829 = vld [vmem:[#allocation2 + $0x30] sm:$0xff]
        %v830 = vld [vmem:[#allocation2 + $0x38] sm:$0xff]
        %v831 = vld [vmem:[#allocation2 + $0x40] sm:$0xff]
        %v832 = vld [vmem:[#allocation2 + $0x48] sm:$0xff]
        %v833 = vld [vmem:[#allocation2 + $0x50] sm:$0xff]
        %v834 = vld [vmem:[#allocation2 + $0x58] sm:$0xff]
        %v835 = vld [vmem:[#allocation2 + $0x60] sm:$0xff]
        %v836 = vld [vmem:[#allocation2 + $0x68] sm:$0xff]
        %v837 = vld [vmem:[#allocation2 + $0x70] sm:$0xff]
        %v838 = vld [vmem:[#allocation2 + $0x78] sm:$0xff]
        %v839 = vld [vmem:[#allocation2 + $0x80] sm:$0xff]
        %v840 = vld [vmem:[#allocation2 + $0x88] sm:$0xff]
        %v841 = vld [vmem:[#allocation2 + $0x90] sm:$0xff]
        %v842 = vld [vmem:[#allocation2 + $0x98] sm:$0xff]
        %v843 = vld [vmem:[#allocation2 + $0xa0] sm:$0xff]
        %v844 = vld [vmem:[#allocation2 + $0xa8] sm:$0xff]
        %v845 = vld [vmem:[#allocation2 + $0xb0] sm:$0xff]
        %v846 = vld [vmem:[#allocation2 + $0xb8] sm:$0xff]
        %v847 = vld [vmem:[#allocation2 + $0xc0] sm:$0xff]
        %v848 = vld [vmem:[#allocation2 + $0xc8] sm:$0xff]
        %v849 = vld [vmem:[#allocation2 + $0xd0] sm:$0xff]
        %v850 = vld [vmem:[#allocation2 + $0xd8] sm:$0xff]
        %v851 = vld [vmem:[#allocation2 + $0xe0] sm:$0xff]
        %v852 = vld [vmem:[#allocation2 + $0xe8] sm:$0xff]
        %v853 = vld [vmem:[#allocation2 + $0xf0] sm:$0xff]
        %v854 = vld [vmem:[#allocation2 + $0xf8] sm:$0xff]
        %v855 = vld [vmem:[%s325] sm:$0x1]
        %v857 = vlaneseq
        %v858 = vshrl.u32 %v857, 7
        %v859 = vsub.s32 0, %v858
        %v860 = vrot.slane %v855, %v859
        %v862 = vmul.f32 %v823, %v860
        %v863 = vmul.f32 %v824, %v860
        %v864 = vmul.f32 %v825, %v860
        %v865 = vmul.f32 %v826, %v860
        %v866 = vmul.f32 %v827, %v860
        %v867 = vmul.f32 %v828, %v860
        %v868 = vmul.f32 %v829, %v860
        %v869 = vmul.f32 %v830, %v860
        %v870 = vmul.f32 %v831, %v860
        %v871 = vmul.f32 %v832, %v860
        %v872 = vmul.f32 %v833, %v860
        %v873 = vmul.f32 %v834, %v860
        %v874 = vmul.f32 %v835, %v860
        %v875 = vmul.f32 %v836, %v860
        %v876 = vmul.f32 %v837, %v860
        %v877 = vmul.f32 %v838, %v860
        %v878 = vmul.f32 %v839, %v860
        %v879 = vmul.f32 %v840, %v860
        %v880 = vmul.f32 %v841, %v860
        %v881 = vmul.f32 %v842, %v860
        %v882 = vmul.f32 %v843, %v860
        %v883 = vmul.f32 %v844, %v860
        %v884 = vmul.f32 %v845, %v860
        %v885 = vmul.f32 %v846, %v860
        %v886 = vmul.f32 %v847, %v860
        %v887 = vmul.f32 %v848, %v860
        %v888 = vmul.f32 %v849, %v860
        %v889 = vmul.f32 %v850, %v860
        %v890 = vmul.f32 %v851, %v860
        %v891 = vmul.f32 %v852, %v860
        %v892 = vmul.f32 %v853, %v860
        %v893 = vmul.f32 %v854, %v860
        %v894 = vld [vmem:[%s328] sm:$0x1]
        %v896 = vlaneseq
        %v897 = vshrl.u32 %v896, 7
        %v898 = vsub.s32 0, %v897
        %v899 = vrot.slane %v894, %v898
        %v901 = vadd.f32 %v862, %v899
        %v902 = vadd.f32 %v863, %v899
        %v903 = vadd.f32 %v864, %v899
        %v904 = vadd.f32 %v865, %v899
        %v905 = vadd.f32 %v866, %v899
        %v906 = vadd.f32 %v867, %v899
        %v907 = vadd.f32 %v868, %v899
        %v908 = vadd.f32 %v869, %v899
        %v909 = vadd.f32 %v870, %v899
        %v910 = vadd.f32 %v871, %v899
        %v911 = vadd.f32 %v872, %v899
        %v912 = vadd.f32 %v873, %v899
        %v913 = vadd.f32 %v874, %v899
        %v914 = vadd.f32 %v875, %v899
        %v915 = vadd.f32 %v876, %v899
        %v916 = vadd.f32 %v877, %v899
        %v917 = vadd.f32 %v878, %v899
        %v918 = vadd.f32 %v879, %v899
        %v919 = vadd.f32 %v880, %v899
        %v920 = vadd.f32 %v881, %v899
        %v921 = vadd.f32 %v882, %v899
        %v922 = vadd.f32 %v883, %v899
        %v923 = vadd.f32 %v884, %v899
        %v924 = vadd.f32 %v885, %v899
        %v925 = vadd.f32 %v886, %v899
        %v926 = vadd.f32 %v887, %v899
        %v927 = vadd.f32 %v888, %v899
        %v928 = vadd.f32 %v889, %v899
        %v929 = vadd.f32 %v890, %v899
        %v930 = vadd.f32 %v891, %v899
        %v931 = vadd.f32 %v892, %v899
        %v932 = vadd.f32 %v893, %v899
        %v933 = vld [vmem:[%s331] sm:$0x1]
        %vm934 = vcmp.gt.f32.partialorder %v933, 0.0
        %v935 = vmax.f32 %v901, 0.0
        %v936 = vmax.f32 %v902, 0.0
        %v937 = vmax.f32 %v903, 0.0
        %v938 = vmax.f32 %v904, 0.0
        %v939 = vmax.f32 %v905, 0.0
        %v940 = vmax.f32 %v906, 0.0
        %v941 = vmax.f32 %v907, 0.0
        %v942 = vmax.f32 %v908, 0.0
        %v943 = vmax.f32 %v909, 0.0
        %v944 = vmax.f32 %v910, 0.0
        %v945 = vmax.f32 %v911, 0.0
        %v946 = vmax.f32 %v912, 0.0
        %v947 = vmax.f32 %v913, 0.0
        %v948 = vmax.f32 %v914, 0.0
        %v949 = vmax.f32 %v915, 0.0
        %v950 = vmax.f32 %v916, 0.0
        %v951 = vmax.f32 %v917, 0.0
        %v952 = vmax.f32 %v918, 0.0
        %v953 = vmax.f32 %v919, 0.0
        %v954 = vmax.f32 %v920, 0.0
        %v955 = vmax.f32 %v921, 0.0
        %v956 = vmax.f32 %v922, 0.0
        %v957 = vmax.f32 %v923, 0.0
        %v958 = vmax.f32 %v924, 0.0
        %v959 = vmax.f32 %v925, 0.0
        %v960 = vmax.f32 %v926, 0.0
        %v961 = vmax.f32 %v927, 0.0
        %v962 = vmax.f32 %v928, 0.0
        %v963 = vmax.f32 %v929, 0.0
        %v964 = vmax.f32 %v930, 0.0
        %v965 = vmax.f32 %v931, 0.0
        %v966 = vmax.f32 %v932, 0.0
        %v967 = vsel %vm934, 1, 0
        %v968 = vlaneseq
        %v969 = vshrl.u32 %v968, 7
        %v970 = vsub.s32 0, %v969
        %v971 = vrot.slane %v967, %v970
        %vm972 = vcmp.eq.s32.totalorder %v971, 1
        %v973 = vsel %vm972, %v935, %v901
        %v974 = vsel %vm972, %v936, %v902
        %v975 = vsel %vm972, %v937, %v903
        %v976 = vsel %vm972, %v938, %v904
        %v977 = vsel %vm972, %v939, %v905
        %v978 = vsel %vm972, %v940, %v906
        %v979 = vsel %vm972, %v941, %v907
        %v980 = vsel %vm972, %v942, %v908
        %v981 = vsel %vm972, %v943, %v909
        %v982 = vsel %vm972, %v944, %v910
        %v983 = vsel %vm972, %v945, %v911
        %v984 = vsel %vm972, %v946, %v912
        %v985 = vsel %vm972, %v947, %v913
        %v986 = vsel %vm972, %v948, %v914
        %v987 = vsel %vm972, %v949, %v915
        %v988 = vsel %vm972, %v950, %v916
        %v989 = vsel %vm972, %v951, %v917
        %v990 = vsel %vm972, %v952, %v918
        %v991 = vsel %vm972, %v953, %v919
        %v992 = vsel %vm972, %v954, %v920
        %v993 = vsel %vm972, %v955, %v921
        %v994 = vsel %vm972, %v956, %v922
        %v995 = vsel %vm972, %v957, %v923
        %v996 = vsel %vm972, %v958, %v924
        %v997 = vsel %vm972, %v959, %v925
        %v998 = vsel %vm972, %v960, %v926
        %v999 = vsel %vm972, %v961, %v927
        %v1000 = vsel %vm972, %v962, %v928
        %v1001 = vsel %vm972, %v963, %v929
        %v1002 = vsel %vm972, %v964, %v930
        %v1003 = vsel %vm972, %v965, %v931
        %v1004 = vsel %vm972, %v966, %v932
        %1005 = vst.msk [vmem:[%s339] sm:$0xff] %vm787, %v973
        %1006 = vst.msk [vmem:[%s339 + $0x8] sm:$0xff] %vm787, %v974
        %1007 = vst.msk [vmem:[%s339 + $0x10] sm:$0xff] %vm787, %v975
        %1008 = vst.msk [vmem:[%s339 + $0x18] sm:$0xff] %vm787, %v976
        %1009 = vst.msk [vmem:[%s339 + $0x20] sm:$0xff] %vm787, %v977
        %1010 = vst.msk [vmem:[%s339 + $0x28] sm:$0xff] %vm787, %v978
        %1011 = vst.msk [vmem:[%s339 + $0x30] sm:$0xff] %vm787, %v979
        %1012 = vst.msk [vmem:[%s339 + $0x38] sm:$0xff] %vm787, %v980
        %1013 = vst.msk [vmem:[%s339 + $0x40] sm:$0xff] %vm787, %v981
        %1014 = vst.msk [vmem:[%s339 + $0x48] sm:$0xff] %vm787, %v982
        %1015 = vst.msk [vmem:[%s339 + $0x50] sm:$0xff] %vm787, %v983
        %1016 = vst.msk [vmem:[%s339 + $0x58] sm:$0xff] %vm787, %v984
        %1017 = vst.msk [vmem:[%s339 + $0x60] sm:$0xff] %vm787, %v985
        %1018 = vst.msk [vmem:[%s339 + $0x68] sm:$0xff] %vm787, %v986
        %1019 = vst.msk [vmem:[%s339 + $0x70] sm:$0xff] %vm787, %v987
        %1020 = vst.msk [vmem:[%s339 + $0x78] sm:$0xff] %vm787, %v988
        %1021 = vst.msk [vmem:[%s339 + $0x80] sm:$0xff] %vm787, %v989
        %1022 = vst.msk [vmem:[%s339 + $0x88] sm:$0xff] %vm787, %v990
        %1023 = vst.msk [vmem:[%s339 + $0x90] sm:$0xff] %vm787, %v991
        %1024 = vst.msk [vmem:[%s339 + $0x98] sm:$0xff] %vm787, %v992
        %1025 = vst.msk [vmem:[%s339 + $0xa0] sm:$0xff] %vm787, %v993
        %1026 = vst.msk [vmem:[%s339 + $0xa8] sm:$0xff] %vm787, %v994
        %1027 = vst.msk [vmem:[%s339 + $0xb0] sm:$0xff] %vm787, %v995
        %1028 = vst.msk [vmem:[%s339 + $0xb8] sm:$0xff] %vm787, %v996
        %1029 = vst.msk [vmem:[%s339 + $0xc0] sm:$0xff] %vm787, %v997
        %1030 = vst.msk [vmem:[%s339 + $0xc8] sm:$0xff] %vm787, %v998
        %1031 = vst.msk [vmem:[%s339 + $0xd0] sm:$0xff] %vm787, %v999
        %1032 = vst.msk [vmem:[%s339 + $0xd8] sm:$0xff] %vm787, %v1000
        %1033 = vst.msk [vmem:[%s339 + $0xe0] sm:$0xff] %vm787, %v1001
        %1034 = vst.msk [vmem:[%s339 + $0xe8] sm:$0xff] %vm787, %v1002
        %1035 = vst.msk [vmem:[%s339 + $0xf0] sm:$0xff] %vm787, %v1003
        %1036 = vst.msk [vmem:[%s339 + $0xf8] sm:$0xff] %vm787, %v1004
      $region48: #{urresnet_forward.12} parent=39 // pred_fallthru
        _
      %s1037 = smul.u32 32, %s21
      %p1038 = scmp.lt.s32.totalorder %s1037, 255
      %s1039 = scalar_select %p1038, %s1037, 255
      %p1040 = scmp.lt.s32.totalorder %s22, 0
      %s1041 = scalar_select %p1040, %s22, 0
      %s1042 = sadd.s32 %s1041, %s1039
      %s1043 = smul.addr %s1042, 8
      %s1044 = scalar_lea.vmem %s5, %s1043
      // Predicated region
      $region49: #{urresnet_forward.12} parent=39 // pred_check
        %p1045 = pneg %p189
      $region50: #{urresnet_forward.12} parent=39 // pred_check_branch
        %1047 = sbr.rel (%p1045) target = $region52
      $region51: #{urresnet_forward.12} parent=39 // pred_region
        %s1048 = smul.u32 32, %s21
      $region52: #{urresnet_forward.12} parent=39 // pred_fallthru
        _
    $region40: #{urresnet_forward.12} parent=5 // pred_fallthru
      _
    %p1049 = scmp.le.s32.totalorder 2, %s11
    // Predicated region
    $region53: #{urresnet_forward.12} parent=5 // pred_check
      %p1050 = pneg %p1049
    $region54: #{urresnet_forward.12} parent=5 // pred_check_branch
      %1052 = sbr.rel (%p1050) target = $region56
    $region55: #{urresnet_forward.12} parent=5 // pred_region
      %s1053 = ssub.s32 %s11, 2
      // Predicated region
      $region57: #{urresnet_forward.12} parent=55 // pred_check
        %p1054 = pneg %p195
      $region58: #{urresnet_forward.12} parent=55 // pred_check_branch
        %1056 = sbr.rel (%p1054) target = $region60
      $region59: #{urresnet_forward.12} parent=55 // pred_region
        %s1057 = smul.u32 32, %s24
        %p1058 = scmp.lt.s32.totalorder %s1057, 255
        %s1059 = scalar_select %p1058, %s1057, 255
        %p1060 = scmp.lt.s32.totalorder %s25, 0
        %s1061 = scalar_select %p1060, %s25, 0
        %s1062 = sadd.s32 %s1061, %s1059
        %s1063 = smul.addr %s1062, 8
        %s1064 = scalar_lea.vmem %s5, %s1063
      $region60: #{urresnet_forward.12} parent=55 // pred_fallthru
        _
    $region56: #{urresnet_forward.12} parent=5 // pred_fallthru
      _
  $region6: #{urresnet_forward.12} parent=0 // loop_footer
    %s15 = sadd.s32 1, %s11
  $region7: #{urresnet_forward.12} parent=0 // loop_footer_branch
    %10 = sbr.rel target = $region3
  $region8: #{urresnet_forward.12} parent=0 // loop_exit
    _

// kernel: urresnet_forward.13
$region0: #{urresnet_forward.13}
  #allocation0 [shape = 'u32[]', space=smem, size = 0x4, offset = 0x4, fixed_abs, tag = 'smem constant byte address 0x4 - core index']
  #allocation1 [shape = 'u32[144,128]{1,0:T(1,128)}', space=vmem, size = 0x12000, scoped, tag = 'internal scratch']
  %s0 = inlined_call_operand.vmem [shape: f32[9,512,16], index: 0, kind: input, shape index: {}]
  %s1 = inlined_call_operand.vmem [shape: f32[512,16], index: 1, kind: output, shape index: {}]
  %s2 = sld [smem:[#allocation0]]
  $region45: #{urresnet_forward.13} parent=0
    _
  %s4 = ssub.s32 1, %s2
  %s5 = scalar_select 0, %s4, %s2
  loop: start=0, step=1, limit=11
  $region2: #{urresnet_forward.13} parent=0 // loop_pre_header
    _
  $region3: #{urresnet_forward.13} parent=0 // loop_header
    %s7 = sphi 0, %s11
    %p8 = scmp.ge.s32.totalorder %s7, 11
    %s14 = sphi 0, %s26
    %s15 = sphi 0, %s22
    %s16 = sphi 0, %s14
    %s17 = sphi 0, %s15
    %s18 = sphi 0, %s16
    %s19 = sphi 0, %s17
    %s31 = sphi 0, %s33
    %s34 = sphi 0, %s31
    %s35 = sphi 0, %s34
    %s51 = sphi 0, %s35
    %s57 = sphi 0, %s59
    %s60 = sphi 0, %s57
    %s61 = sphi 0, %s60
    %s77 = sphi 0, %s61
  $region4: #{urresnet_forward.13} parent=0 // loop_header_branch
    %10 = sbr.rel (%p8) target = $region8
  $region5: #{urresnet_forward.13} parent=0 // loop_body
    %s12 = ssub.s32 %s7, 1
    %s13 = ssub.s32 %s7, 2
    %s20 = sadd.s32 1, %s15
    %p21 = scmp.ge.s32.totalorder %s20, 9
    %s22 = scalar_select %p21, 0, %s20
    %s23 = sadd.s32 1, %s14
    %s24 = scalar_select %p21, %s23, %s14
    %p25 = scmp.ge.s32.totalorder %s24, 1
    %s26 = scalar_select %p25, 0, %s24
    %s27 = ssub.s32 %s15, %s22
    %s28 = ssub.s32 %s14, %s26
    %s29 = sor.u32 %s27, %s28
    %p30 = scmp.eq.s32.totalorder %s29, 0
    %s32 = sadd.s32 %s31, 1
    %s33 = scalar_select %p30, %s31, %s32
    %p36 = pneg %p30
    %p37 = scmp.eq.s32.totalorder %s7, 8
    %p38 = por %p36, %p37
    %p39 = scmp.ne.s32.totalorder %s31, %s34
    %p40 = scmp.eq.s32.totalorder %s7, 0
    %p41 = por %p39, %p40
    %p42 = scmp.ne.s32.totalorder %s31, %s34
    %p43 = scmp.eq.s32.totalorder %s12, 8
    %p44 = por %p42, %p43
    %p45 = scmp.ne.s32.totalorder %s34, %s35
    %p46 = scmp.eq.s32.totalorder %s12, 0
    %p47 = por %p45, %p46
    %p48 = scmp.ne.s32.totalorder %s34, %s35
    %p49 = scmp.eq.s32.totalorder %s13, 8
    %p50 = por %p48, %p49
    %p52 = scmp.ne.s32.totalorder %s35, %s51
    %p53 = scmp.eq.s32.totalorder %s13, 0
    %p54 = por %p52, %p53
    %s55 = ssub.s32 %s14, %s26
    %p56 = scmp.eq.s32.totalorder %s55, 0
    %s58 = sadd.s32 %s57, 1
    %s59 = scalar_select %p56, %s57, %s58
    %p62 = pneg %p56
    %p63 = scmp.eq.s32.totalorder %s7, 8
    %p64 = por %p62, %p63
    %p65 = scmp.ne.s32.totalorder %s57, %s60
    %p66 = scmp.eq.s32.totalorder %s7, 0
    %p67 = por %p65, %p66
    %p68 = scmp.ne.s32.totalorder %s57, %s60
    %p69 = scmp.eq.s32.totalorder %s12, 8
    %p70 = por %p68, %p69
    %p71 = scmp.ne.s32.totalorder %s60, %s61
    %p72 = scmp.eq.s32.totalorder %s12, 0
    %p73 = por %p71, %p72
    %p74 = scmp.ne.s32.totalorder %s60, %s61
    %p75 = scmp.eq.s32.totalorder %s13, 8
    %p76 = por %p74, %p75
    %p78 = scmp.ne.s32.totalorder %s61, %s77
    %p79 = scmp.eq.s32.totalorder %s13, 0
    %p80 = por %p78, %p79
    %p81 = scmp.le.s32.totalorder 1, %s7
    %p82 = scmp.lt.s32.totalorder %s7, 10
    %p83 = pnand %p81, %p82
    %p84 = pneg %p83
    // Predicated region
    $region9: #{urresnet_forward.13} parent=5 // pred_check
      _
    $region10: #{urresnet_forward.13} parent=5 // pred_check_branch
      %86 = sbr.rel (%p83) target = $region12
    $region11: #{urresnet_forward.13} parent=5 // pred_region
      %s87 = ssub.s32 %s7, 1
    $region12: #{urresnet_forward.13} parent=5 // pred_fallthru
      _
    %p88 = scmp.lt.s32.totalorder %s7, 9
    // Predicated region
    $region13: #{urresnet_forward.13} parent=5 // pred_check
      %p89 = pneg %p88
    $region14: #{urresnet_forward.13} parent=5 // pred_check_branch
      %91 = sbr.rel (%p89) target = $region16
    $region15: #{urresnet_forward.13} parent=5 // pred_region
      // Predicated region
      $region17: #{urresnet_forward.13} parent=15 // pred_check
        %p92 = pneg %p41
      $region18: #{urresnet_forward.13} parent=15 // pred_check_branch
        %94 = sbr.rel (%p92) target = $region20
      $region19: #{urresnet_forward.13} parent=15 // pred_region
        %s95 = smul.u32 64, %s14
        %p96 = scmp.lt.s32.totalorder %s15, 8
        %s97 = scalar_select %p96, %s15, 8
        %p98 = scmp.lt.s32.totalorder %s95, 63
        %s99 = scalar_select %p98, %s95, 63
        %s100 = smul.addr %s97, 64
        %s101 = sadd.s32 %s99, %s100
        %s102 = smul.addr %s101, 8
        %s103 = scalar_lea.vmem %s0, %s102
        %s104 = smul.u32 64, %s14
      $region20: #{urresnet_forward.13} parent=15 // pred_fallthru
        _
    $region16: #{urresnet_forward.13} parent=5 // pred_fallthru
      _
    %p105 = scmp.le.s32.totalorder 1, %s7
    %p106 = scmp.lt.s32.totalorder %s7, 10
    %p107 = pnand %p105, %p106
    %p108 = pneg %p107
    // Predicated region
    $region21: #{urresnet_forward.13} parent=5 // pred_check
      _
    $region22: #{urresnet_forward.13} parent=5 // pred_check_branch
      %110 = sbr.rel (%p107) target = $region24
    $region23: #{urresnet_forward.13} parent=5 // pred_region
      %s111 = ssub.s32 %s7, 1
      %s112 = smul.u32 64, %s16
      %p113 = scmp.lt.s32.totalorder %s17, 8
      %s114 = scalar_select %p113, %s17, 8
      %p115 = scmp.lt.s32.totalorder %s112, 63
      %s116 = scalar_select %p115, %s112, 63
      %s117 = smul.addr %s114, 64
      %s118 = sadd.s32 %s116, %s117
      %s119 = smul.addr %s118, 8
      %s120 = scalar_lea.vmem %s0, %s119
      %p121 = pneg %p47
      %p122 = pneg %p44
      %p123 = pneg %p73
      %p124 = pneg %p70
      %s125 = smul.u32 64, %s16
      %p126 = scmp.lt.s32.totalorder %s125, 63
      %s127 = scalar_select %p126, %s125, 63
      %s128 = smul.addr %s127, 8
      %s129 = scalar_lea.vmem %s1, %s128
      %s130 = smul.u32 64, %s16
      %p131 = scmp.lt.s32.totalorder %s17, 8
      %s132 = scalar_select %p131, %s17, 8
      %p133 = scmp.lt.s32.totalorder %s130, 63
      %s134 = scalar_select %p133, %s130, 63
      %s135 = smul.addr %s132, 64
      %s136 = sadd.s32 %s134, %s135
      %s137 = smul.addr %s136, 8
      %s138 = scalar_lea.vmem %s0, %s137
      %s139 = smul.u32 64, %s16
      %s140 = smul.u32 64, %s16
      %p141 = scmp.lt.s32.totalorder %s140, 63
      %s142 = scalar_select %p141, %s140, 63
      %s143 = smul.addr %s142, 8
      %s144 = scalar_lea.vmem %s1, %s143
      %s145 = smul.u32 64, %s16
      %p146 = scmp.eq.s32.totalorder %s17, 0
      // Predicated region
      $region25: #{urresnet_forward.13} parent=23 // pred_check
        %p147 = pneg %p146
      $region26: #{urresnet_forward.13} parent=23 // pred_check_branch
        %149 = sbr.rel (%p147) target = $region28
      $region27: #{urresnet_forward.13} parent=23 // pred_region
        %v150 = vld [vmem:[%s138] sm:$0xff]
        %v151 = vld [vmem:[%s138 + $0x8] sm:$0xff]
        %v152 = vld [vmem:[%s138 + $0x10] sm:$0xff]
        %v153 = vld [vmem:[%s138 + $0x18] sm:$0xff]
        %v154 = vld [vmem:[%s138 + $0x20] sm:$0xff]
        %v155 = vld [vmem:[%s138 + $0x28] sm:$0xff]
        %v156 = vld [vmem:[%s138 + $0x30] sm:$0xff]
        %v157 = vld [vmem:[%s138 + $0x38] sm:$0xff]
        %v158 = vld [vmem:[%s138 + $0x40] sm:$0xff]
        %v159 = vld [vmem:[%s138 + $0x48] sm:$0xff]
        %v160 = vld [vmem:[%s138 + $0x50] sm:$0xff]
        %v161 = vld [vmem:[%s138 + $0x58] sm:$0xff]
        %v162 = vld [vmem:[%s138 + $0x60] sm:$0xff]
        %v163 = vld [vmem:[%s138 + $0x68] sm:$0xff]
        %v164 = vld [vmem:[%s138 + $0x70] sm:$0xff]
        %v165 = vld [vmem:[%s138 + $0x78] sm:$0xff]
        %v166 = vld [vmem:[%s138 + $0x80] sm:$0xff]
        %v167 = vld [vmem:[%s138 + $0x88] sm:$0xff]
        %v168 = vld [vmem:[%s138 + $0x90] sm:$0xff]
        %v169 = vld [vmem:[%s138 + $0x98] sm:$0xff]
        %v170 = vld [vmem:[%s138 + $0xa0] sm:$0xff]
        %v171 = vld [vmem:[%s138 + $0xa8] sm:$0xff]
        %v172 = vld [vmem:[%s138 + $0xb0] sm:$0xff]
        %v173 = vld [vmem:[%s138 + $0xb8] sm:$0xff]
        %v174 = vld [vmem:[%s138 + $0xc0] sm:$0xff]
        %v175 = vld [vmem:[%s138 + $0xc8] sm:$0xff]
        %v176 = vld [vmem:[%s138 + $0xd0] sm:$0xff]
        %v177 = vld [vmem:[%s138 + $0xd8] sm:$0xff]
        %v178 = vld [vmem:[%s138 + $0xe0] sm:$0xff]
        %v179 = vld [vmem:[%s138 + $0xe8] sm:$0xff]
        %v180 = vld [vmem:[%s138 + $0xf0] sm:$0xff]
        %v181 = vld [vmem:[%s138 + $0xf8] sm:$0xff]
        %v182 = vld [vmem:[%s138 + $0x100] sm:$0xff]
        %v183 = vld [vmem:[%s138 + $0x108] sm:$0xff]
        %v184 = vld [vmem:[%s138 + $0x110] sm:$0xff]
        %v185 = vld [vmem:[%s138 + $0x118] sm:$0xff]
        %v186 = vld [vmem:[%s138 + $0x120] sm:$0xff]
        %v187 = vld [vmem:[%s138 + $0x128] sm:$0xff]
        %v188 = vld [vmem:[%s138 + $0x130] sm:$0xff]
        %v189 = vld [vmem:[%s138 + $0x138] sm:$0xff]
        %v190 = vld [vmem:[%s138 + $0x140] sm:$0xff]
        %v191 = vld [vmem:[%s138 + $0x148] sm:$0xff]
        %v192 = vld [vmem:[%s138 + $0x150] sm:$0xff]
        %v193 = vld [vmem:[%s138 + $0x158] sm:$0xff]
        %v194 = vld [vmem:[%s138 + $0x160] sm:$0xff]
        %v195 = vld [vmem:[%s138 + $0x168] sm:$0xff]
        %v196 = vld [vmem:[%s138 + $0x170] sm:$0xff]
        %v197 = vld [vmem:[%s138 + $0x178] sm:$0xff]
        %v198 = vld [vmem:[%s138 + $0x180] sm:$0xff]
        %v199 = vld [vmem:[%s138 + $0x188] sm:$0xff]
        %v200 = vld [vmem:[%s138 + $0x190] sm:$0xff]
        %v201 = vld [vmem:[%s138 + $0x198] sm:$0xff]
        %v202 = vld [vmem:[%s138 + $0x1a0] sm:$0xff]
        %v203 = vld [vmem:[%s138 + $0x1a8] sm:$0xff]
        %v204 = vld [vmem:[%s138 + $0x1b0] sm:$0xff]
        %v205 = vld [vmem:[%s138 + $0x1b8] sm:$0xff]
        %v206 = vld [vmem:[%s138 + $0x1c0] sm:$0xff]
        %v207 = vld [vmem:[%s138 + $0x1c8] sm:$0xff]
        %v208 = vld [vmem:[%s138 + $0x1d0] sm:$0xff]
        %v209 = vld [vmem:[%s138 + $0x1d8] sm:$0xff]
        %v210 = vld [vmem:[%s138 + $0x1e0] sm:$0xff]
        %v211 = vld [vmem:[%s138 + $0x1e8] sm:$0xff]
        %v212 = vld [vmem:[%s138 + $0x1f0] sm:$0xff]
        %v213 = vld [vmem:[%s138 + $0x1f8] sm:$0xff]
        %vm214 = vcmask 130048
        %215 = vst.msk [vmem:[%s144] sm:$0xff] %vm214, %v150
        %216 = vst.msk [vmem:[%s144 + $0x8] sm:$0xff] %vm214, %v151
        %217 = vst.msk [vmem:[%s144 + $0x10] sm:$0xff] %vm214, %v152
        %218 = vst.msk [vmem:[%s144 + $0x18] sm:$0xff] %vm214, %v153
        %219 = vst.msk [vmem:[%s144 + $0x20] sm:$0xff] %vm214, %v154
        %220 = vst.msk [vmem:[%s144 + $0x28] sm:$0xff] %vm214, %v155
        %221 = vst.msk [vmem:[%s144 + $0x30] sm:$0xff] %vm214, %v156
        %222 = vst.msk [vmem:[%s144 + $0x38] sm:$0xff] %vm214, %v157
        %223 = vst.msk [vmem:[%s144 + $0x40] sm:$0xff] %vm214, %v158
        %224 = vst.msk [vmem:[%s144 + $0x48] sm:$0xff] %vm214, %v159
        %225 = vst.msk [vmem:[%s144 + $0x50] sm:$0xff] %vm214, %v160
        %226 = vst.msk [vmem:[%s144 + $0x58] sm:$0xff] %vm214, %v161
        %227 = vst.msk [vmem:[%s144 + $0x60] sm:$0xff] %vm214, %v162
        %228 = vst.msk [vmem:[%s144 + $0x68] sm:$0xff] %vm214, %v163
        %229 = vst.msk [vmem:[%s144 + $0x70] sm:$0xff] %vm214, %v164
        %230 = vst.msk [vmem:[%s144 + $0x78] sm:$0xff] %vm214, %v165
        %231 = vst.msk [vmem:[%s144 + $0x80] sm:$0xff] %vm214, %v166
        %232 = vst.msk [vmem:[%s144 + $0x88] sm:$0xff] %vm214, %v167
        %233 = vst.msk [vmem:[%s144 + $0x90] sm:$0xff] %vm214, %v168
        %234 = vst.msk [vmem:[%s144 + $0x98] sm:$0xff] %vm214, %v169
        %235 = vst.msk [vmem:[%s144 + $0xa0] sm:$0xff] %vm214, %v170
        %236 = vst.msk [vmem:[%s144 + $0xa8] sm:$0xff] %vm214, %v171
        %237 = vst.msk [vmem:[%s144 + $0xb0] sm:$0xff] %vm214, %v172
        %238 = vst.msk [vmem:[%s144 + $0xb8] sm:$0xff] %vm214, %v173
        %239 = vst.msk [vmem:[%s144 + $0xc0] sm:$0xff] %vm214, %v174
        %240 = vst.msk [vmem:[%s144 + $0xc8] sm:$0xff] %vm214, %v175
        %241 = vst.msk [vmem:[%s144 + $0xd0] sm:$0xff] %vm214, %v176
        %242 = vst.msk [vmem:[%s144 + $0xd8] sm:$0xff] %vm214, %v177
        %243 = vst.msk [vmem:[%s144 + $0xe0] sm:$0xff] %vm214, %v178
        %244 = vst.msk [vmem:[%s144 + $0xe8] sm:$0xff] %vm214, %v179
        %245 = vst.msk [vmem:[%s144 + $0xf0] sm:$0xff] %vm214, %v180
        %246 = vst.msk [vmem:[%s144 + $0xf8] sm:$0xff] %vm214, %v181
        %247 = vst.msk [vmem:[%s144 + $0x100] sm:$0xff] %vm214, %v182
        %248 = vst.msk [vmem:[%s144 + $0x108] sm:$0xff] %vm214, %v183
        %249 = vst.msk [vmem:[%s144 + $0x110] sm:$0xff] %vm214, %v184
        %250 = vst.msk [vmem:[%s144 + $0x118] sm:$0xff] %vm214, %v185
        %251 = vst.msk [vmem:[%s144 + $0x120] sm:$0xff] %vm214, %v186
        %252 = vst.msk [vmem:[%s144 + $0x128] sm:$0xff] %vm214, %v187
        %253 = vst.msk [vmem:[%s144 + $0x130] sm:$0xff] %vm214, %v188
        %254 = vst.msk [vmem:[%s144 + $0x138] sm:$0xff] %vm214, %v189
        %255 = vst.msk [vmem:[%s144 + $0x140] sm:$0xff] %vm214, %v190
        %256 = vst.msk [vmem:[%s144 + $0x148] sm:$0xff] %vm214, %v191
        %257 = vst.msk [vmem:[%s144 + $0x150] sm:$0xff] %vm214, %v192
        %258 = vst.msk [vmem:[%s144 + $0x158] sm:$0xff] %vm214, %v193
        %259 = vst.msk [vmem:[%s144 + $0x160] sm:$0xff] %vm214, %v194
        %260 = vst.msk [vmem:[%s144 + $0x168] sm:$0xff] %vm214, %v195
        %261 = vst.msk [vmem:[%s144 + $0x170] sm:$0xff] %vm214, %v196
        %262 = vst.msk [vmem:[%s144 + $0x178] sm:$0xff] %vm214, %v197
        %263 = vst.msk [vmem:[%s144 + $0x180] sm:$0xff] %vm214, %v198
        %264 = vst.msk [vmem:[%s144 + $0x188] sm:$0xff] %vm214, %v199
        %265 = vst.msk [vmem:[%s144 + $0x190] sm:$0xff] %vm214, %v200
        %266 = vst.msk [vmem:[%s144 + $0x198] sm:$0xff] %vm214, %v201
        %267 = vst.msk [vmem:[%s144 + $0x1a0] sm:$0xff] %vm214, %v202
        %268 = vst.msk [vmem:[%s144 + $0x1a8] sm:$0xff] %vm214, %v203
        %269 = vst.msk [vmem:[%s144 + $0x1b0] sm:$0xff] %vm214, %v204
        %270 = vst.msk [vmem:[%s144 + $0x1b8] sm:$0xff] %vm214, %v205
        %271 = vst.msk [vmem:[%s144 + $0x1c0] sm:$0xff] %vm214, %v206
        %272 = vst.msk [vmem:[%s144 + $0x1c8] sm:$0xff] %vm214, %v207
        %273 = vst.msk [vmem:[%s144 + $0x1d0] sm:$0xff] %vm214, %v208
        %274 = vst.msk [vmem:[%s144 + $0x1d8] sm:$0xff] %vm214, %v209
        %275 = vst.msk [vmem:[%s144 + $0x1e0] sm:$0xff] %vm214, %v210
        %276 = vst.msk [vmem:[%s144 + $0x1e8] sm:$0xff] %vm214, %v211
        %277 = vst.msk [vmem:[%s144 + $0x1f0] sm:$0xff] %vm214, %v212
        %278 = vst.msk [vmem:[%s144 + $0x1f8] sm:$0xff] %vm214, %v213
      $region28: #{urresnet_forward.13} parent=23 // pred_fallthru
        _
      %p279 = scmp.ne.s32.totalorder %s17, 0
      // Predicated region
      $region29: #{urresnet_forward.13} parent=23 // pred_check
        %p280 = pneg %p279
      $region30: #{urresnet_forward.13} parent=23 // pred_check_branch
        %282 = sbr.rel (%p280) target = $region32
      $region31: #{urresnet_forward.13} parent=23 // pred_region
        %v283 = vld [vmem:[%s144] sm:$0xff]
        %v284 = vld [vmem:[%s144 + $0x8] sm:$0xff]
        %v285 = vld [vmem:[%s144 + $0x10] sm:$0xff]
        %v286 = vld [vmem:[%s144 + $0x18] sm:$0xff]
        %v287 = vld [vmem:[%s144 + $0x20] sm:$0xff]
        %v288 = vld [vmem:[%s144 + $0x28] sm:$0xff]
        %v289 = vld [vmem:[%s144 + $0x30] sm:$0xff]
        %v290 = vld [vmem:[%s144 + $0x38] sm:$0xff]
        %v291 = vld [vmem:[%s144 + $0x40] sm:$0xff]
        %v292 = vld [vmem:[%s144 + $0x48] sm:$0xff]
        %v293 = vld [vmem:[%s144 + $0x50] sm:$0xff]
        %v294 = vld [vmem:[%s144 + $0x58] sm:$0xff]
        %v295 = vld [vmem:[%s144 + $0x60] sm:$0xff]
        %v296 = vld [vmem:[%s144 + $0x68] sm:$0xff]
        %v297 = vld [vmem:[%s144 + $0x70] sm:$0xff]
        %v298 = vld [vmem:[%s144 + $0x78] sm:$0xff]
        %v299 = vld [vmem:[%s144 + $0x80] sm:$0xff]
        %v300 = vld [vmem:[%s144 + $0x88] sm:$0xff]
        %v301 = vld [vmem:[%s144 + $0x90] sm:$0xff]
        %v302 = vld [vmem:[%s144 + $0x98] sm:$0xff]
        %v303 = vld [vmem:[%s144 + $0xa0] sm:$0xff]
        %v304 = vld [vmem:[%s144 + $0xa8] sm:$0xff]
        %v305 = vld [vmem:[%s144 + $0xb0] sm:$0xff]
        %v306 = vld [vmem:[%s144 + $0xb8] sm:$0xff]
        %v307 = vld [vmem:[%s144 + $0xc0] sm:$0xff]
        %v308 = vld [vmem:[%s144 + $0xc8] sm:$0xff]
        %v309 = vld [vmem:[%s144 + $0xd0] sm:$0xff]
        %v310 = vld [vmem:[%s144 + $0xd8] sm:$0xff]
        %v311 = vld [vmem:[%s144 + $0xe0] sm:$0xff]
        %v312 = vld [vmem:[%s144 + $0xe8] sm:$0xff]
        %v313 = vld [vmem:[%s144 + $0xf0] sm:$0xff]
        %v314 = vld [vmem:[%s144 + $0xf8] sm:$0xff]
        %v315 = vld [vmem:[%s144 + $0x100] sm:$0xff]
        %v316 = vld [vmem:[%s144 + $0x108] sm:$0xff]
        %v317 = vld [vmem:[%s144 + $0x110] sm:$0xff]
        %v318 = vld [vmem:[%s144 + $0x118] sm:$0xff]
        %v319 = vld [vmem:[%s144 + $0x120] sm:$0xff]
        %v320 = vld [vmem:[%s144 + $0x128] sm:$0xff]
        %v321 = vld [vmem:[%s144 + $0x130] sm:$0xff]
        %v322 = vld [vmem:[%s144 + $0x138] sm:$0xff]
        %v323 = vld [vmem:[%s144 + $0x140] sm:$0xff]
        %v324 = vld [vmem:[%s144 + $0x148] sm:$0xff]
        %v325 = vld [vmem:[%s144 + $0x150] sm:$0xff]
        %v326 = vld [vmem:[%s144 + $0x158] sm:$0xff]
        %v327 = vld [vmem:[%s144 + $0x160] sm:$0xff]
        %v328 = vld [vmem:[%s144 + $0x168] sm:$0xff]
        %v329 = vld [vmem:[%s144 + $0x170] sm:$0xff]
        %v330 = vld [vmem:[%s144 + $0x178] sm:$0xff]
        %v331 = vld [vmem:[%s144 + $0x180] sm:$0xff]
        %v332 = vld [vmem:[%s144 + $0x188] sm:$0xff]
        %v333 = vld [vmem:[%s144 + $0x190] sm:$0xff]
        %v334 = vld [vmem:[%s144 + $0x198] sm:$0xff]
        %v335 = vld [vmem:[%s144 + $0x1a0] sm:$0xff]
        %v336 = vld [vmem:[%s144 + $0x1a8] sm:$0xff]
        %v337 = vld [vmem:[%s144 + $0x1b0] sm:$0xff]
        %v338 = vld [vmem:[%s144 + $0x1b8] sm:$0xff]
        %v339 = vld [vmem:[%s144 + $0x1c0] sm:$0xff]
        %v340 = vld [vmem:[%s144 + $0x1c8] sm:$0xff]
        %v341 = vld [vmem:[%s144 + $0x1d0] sm:$0xff]
        %v342 = vld [vmem:[%s144 + $0x1d8] sm:$0xff]
        %v343 = vld [vmem:[%s144 + $0x1e0] sm:$0xff]
        %v344 = vld [vmem:[%s144 + $0x1e8] sm:$0xff]
        %v345 = vld [vmem:[%s144 + $0x1f0] sm:$0xff]
        %v346 = vld [vmem:[%s144 + $0x1f8] sm:$0xff]
        %v347 = vld [vmem:[%s138] sm:$0xff]
        %v348 = vld [vmem:[%s138 + $0x8] sm:$0xff]
        %v349 = vld [vmem:[%s138 + $0x10] sm:$0xff]
        %v350 = vld [vmem:[%s138 + $0x18] sm:$0xff]
        %v351 = vld [vmem:[%s138 + $0x20] sm:$0xff]
        %v352 = vld [vmem:[%s138 + $0x28] sm:$0xff]
        %v353 = vld [vmem:[%s138 + $0x30] sm:$0xff]
        %v354 = vld [vmem:[%s138 + $0x38] sm:$0xff]
        %v355 = vld [vmem:[%s138 + $0x40] sm:$0xff]
        %v356 = vld [vmem:[%s138 + $0x48] sm:$0xff]
        %v357 = vld [vmem:[%s138 + $0x50] sm:$0xff]
        %v358 = vld [vmem:[%s138 + $0x58] sm:$0xff]
        %v359 = vld [vmem:[%s138 + $0x60] sm:$0xff]
        %v360 = vld [vmem:[%s138 + $0x68] sm:$0xff]
        %v361 = vld [vmem:[%s138 + $0x70] sm:$0xff]
        %v362 = vld [vmem:[%s138 + $0x78] sm:$0xff]
        %v363 = vld [vmem:[%s138 + $0x80] sm:$0xff]
        %v364 = vld [vmem:[%s138 + $0x88] sm:$0xff]
        %v365 = vld [vmem:[%s138 + $0x90] sm:$0xff]
        %v366 = vld [vmem:[%s138 + $0x98] sm:$0xff]
        %v367 = vld [vmem:[%s138 + $0xa0] sm:$0xff]
        %v368 = vld [vmem:[%s138 + $0xa8] sm:$0xff]
        %v369 = vld [vmem:[%s138 + $0xb0] sm:$0xff]
        %v370 = vld [vmem:[%s138 + $0xb8] sm:$0xff]
        %v371 = vld [vmem:[%s138 + $0xc0] sm:$0xff]
        %v372 = vld [vmem:[%s138 + $0xc8] sm:$0xff]
        %v373 = vld [vmem:[%s138 + $0xd0] sm:$0xff]
        %v374 = vld [vmem:[%s138 + $0xd8] sm:$0xff]
        %v375 = vld [vmem:[%s138 + $0xe0] sm:$0xff]
        %v376 = vld [vmem:[%s138 + $0xe8] sm:$0xff]
        %v377 = vld [vmem:[%s138 + $0xf0] sm:$0xff]
        %v378 = vld [vmem:[%s138 + $0xf8] sm:$0xff]
        %v379 = vld [vmem:[%s138 + $0x100] sm:$0xff]
        %v380 = vld [vmem:[%s138 + $0x108] sm:$0xff]
        %v381 = vld [vmem:[%s138 + $0x110] sm:$0xff]
        %v382 = vld [vmem:[%s138 + $0x118] sm:$0xff]
        %v383 = vld [vmem:[%s138 + $0x120] sm:$0xff]
        %v384 = vld [vmem:[%s138 + $0x128] sm:$0xff]
        %v385 = vld [vmem:[%s138 + $0x130] sm:$0xff]
        %v386 = vld [vmem:[%s138 + $0x138] sm:$0xff]
        %v387 = vld [vmem:[%s138 + $0x140] sm:$0xff]
        %v388 = vld [vmem:[%s138 + $0x148] sm:$0xff]
        %v389 = vld [vmem:[%s138 + $0x150] sm:$0xff]
        %v390 = vld [vmem:[%s138 + $0x158] sm:$0xff]
        %v391 = vld [vmem:[%s138 + $0x160] sm:$0xff]
        %v392 = vld [vmem:[%s138 + $0x168] sm:$0xff]
        %v393 = vld [vmem:[%s138 + $0x170] sm:$0xff]
        %v394 = vld [vmem:[%s138 + $0x178] sm:$0xff]
        %v395 = vld [vmem:[%s138 + $0x180] sm:$0xff]
        %v396 = vld [vmem:[%s138 + $0x188] sm:$0xff]
        %v397 = vld [vmem:[%s138 + $0x190] sm:$0xff]
        %v398 = vld [vmem:[%s138 + $0x198] sm:$0xff]
        %v399 = vld [vmem:[%s138 + $0x1a0] sm:$0xff]
        %v400 = vld [vmem:[%s138 + $0x1a8] sm:$0xff]
        %v401 = vld [vmem:[%s138 + $0x1b0] sm:$0xff]
        %v402 = vld [vmem:[%s138 + $0x1b8] sm:$0xff]
        %v403 = vld [vmem:[%s138 + $0x1c0] sm:$0xff]
        %v404 = vld [vmem:[%s138 + $0x1c8] sm:$0xff]
        %v405 = vld [vmem:[%s138 + $0x1d0] sm:$0xff]
        %v406 = vld [vmem:[%s138 + $0x1d8] sm:$0xff]
        %v407 = vld [vmem:[%s138 + $0x1e0] sm:$0xff]
        %v408 = vld [vmem:[%s138 + $0x1e8] sm:$0xff]
        %v409 = vld [vmem:[%s138 + $0x1f0] sm:$0xff]
        %v410 = vld [vmem:[%s138 + $0x1f8] sm:$0xff]
        %v411 = vmax.f32 %v283, %v347
        %v412 = vmax.f32 %v284, %v348
        %v413 = vmax.f32 %v285, %v349
        %v414 = vmax.f32 %v286, %v350
        %v415 = vmax.f32 %v287, %v351
        %v416 = vmax.f32 %v288, %v352
        %v417 = vmax.f32 %v289, %v353
        %v418 = vmax.f32 %v290, %v354
        %v419 = vmax.f32 %v291, %v355
        %v420 = vmax.f32 %v292, %v356
        %v421 = vmax.f32 %v293, %v357
        %v422 = vmax.f32 %v294, %v358
        %v423 = vmax.f32 %v295, %v359
        %v424 = vmax.f32 %v296, %v360
        %v425 = vmax.f32 %v297, %v361
        %v426 = vmax.f32 %v298, %v362
        %v427 = vmax.f32 %v299, %v363
        %v428 = vmax.f32 %v300, %v364
        %v429 = vmax.f32 %v301, %v365
        %v430 = vmax.f32 %v302, %v366
        %v431 = vmax.f32 %v303, %v367
        %v432 = vmax.f32 %v304, %v368
        %v433 = vmax.f32 %v305, %v369
        %v434 = vmax.f32 %v306, %v370
        %v435 = vmax.f32 %v307, %v371
        %v436 = vmax.f32 %v308, %v372
        %v437 = vmax.f32 %v309, %v373
        %v438 = vmax.f32 %v310, %v374
        %v439 = vmax.f32 %v311, %v375
        %v440 = vmax.f32 %v312, %v376
        %v441 = vmax.f32 %v313, %v377
        %v442 = vmax.f32 %v314, %v378
        %v443 = vmax.f32 %v315, %v379
        %v444 = vmax.f32 %v316, %v380
        %v445 = vmax.f32 %v317, %v381
        %v446 = vmax.f32 %v318, %v382
        %v447 = vmax.f32 %v319, %v383
        %v448 = vmax.f32 %v320, %v384
        %v449 = vmax.f32 %v321, %v385
        %v450 = vmax.f32 %v322, %v386
        %v451 = vmax.f32 %v323, %v387
        %v452 = vmax.f32 %v324, %v388
        %v453 = vmax.f32 %v325, %v389
        %v454 = vmax.f32 %v326, %v390
        %v455 = vmax.f32 %v327, %v391
        %v456 = vmax.f32 %v328, %v392
        %v457 = vmax.f32 %v329, %v393
        %v458 = vmax.f32 %v330, %v394
        %v459 = vmax.f32 %v331, %v395
        %v460 = vmax.f32 %v332, %v396
        %v461 = vmax.f32 %v333, %v397
        %v462 = vmax.f32 %v334, %v398
        %v463 = vmax.f32 %v335, %v399
        %v464 = vmax.f32 %v336, %v400
        %v465 = vmax.f32 %v337, %v401
        %v466 = vmax.f32 %v338, %v402
        %v467 = vmax.f32 %v339, %v403
        %v468 = vmax.f32 %v340, %v404
        %v469 = vmax.f32 %v341, %v405
        %v470 = vmax.f32 %v342, %v406
        %v471 = vmax.f32 %v343, %v407
        %v472 = vmax.f32 %v344, %v408
        %v473 = vmax.f32 %v345, %v409
        %v474 = vmax.f32 %v346, %v410
        %vm475 = vcmask 130048
        %476 = vst.msk [vmem:[%s144] sm:$0xff] %vm475, %v411
        %477 = vst.msk [vmem:[%s144 + $0x8] sm:$0xff] %vm475, %v412
        %478 = vst.msk [vmem:[%s144 + $0x10] sm:$0xff] %vm475, %v413
        %479 = vst.msk [vmem:[%s144 + $0x18] sm:$0xff] %vm475, %v414
        %480 = vst.msk [vmem:[%s144 + $0x20] sm:$0xff] %vm475, %v415
        %481 = vst.msk [vmem:[%s144 + $0x28] sm:$0xff] %vm475, %v416
        %482 = vst.msk [vmem:[%s144 + $0x30] sm:$0xff] %vm475, %v417
        %483 = vst.msk [vmem:[%s144 + $0x38] sm:$0xff] %vm475, %v418
        %484 = vst.msk [vmem:[%s144 + $0x40] sm:$0xff] %vm475, %v419
        %485 = vst.msk [vmem:[%s144 + $0x48] sm:$0xff] %vm475, %v420
        %486 = vst.msk [vmem:[%s144 + $0x50] sm:$0xff] %vm475, %v421
        %487 = vst.msk [vmem:[%s144 + $0x58] sm:$0xff] %vm475, %v422
        %488 = vst.msk [vmem:[%s144 + $0x60] sm:$0xff] %vm475, %v423
        %489 = vst.msk [vmem:[%s144 + $0x68] sm:$0xff] %vm475, %v424
        %490 = vst.msk [vmem:[%s144 + $0x70] sm:$0xff] %vm475, %v425
        %491 = vst.msk [vmem:[%s144 + $0x78] sm:$0xff] %vm475, %v426
        %492 = vst.msk [vmem:[%s144 + $0x80] sm:$0xff] %vm475, %v427
        %493 = vst.msk [vmem:[%s144 + $0x88] sm:$0xff] %vm475, %v428
        %494 = vst.msk [vmem:[%s144 + $0x90] sm:$0xff] %vm475, %v429
        %495 = vst.msk [vmem:[%s144 + $0x98] sm:$0xff] %vm475, %v430
        %496 = vst.msk [vmem:[%s144 + $0xa0] sm:$0xff] %vm475, %v431
        %497 = vst.msk [vmem:[%s144 + $0xa8] sm:$0xff] %vm475, %v432
        %498 = vst.msk [vmem:[%s144 + $0xb0] sm:$0xff] %vm475, %v433
        %499 = vst.msk [vmem:[%s144 + $0xb8] sm:$0xff] %vm475, %v434
        %500 = vst.msk [vmem:[%s144 + $0xc0] sm:$0xff] %vm475, %v435
        %501 = vst.msk [vmem:[%s144 + $0xc8] sm:$0xff] %vm475, %v436
        %502 = vst.msk [vmem:[%s144 + $0xd0] sm:$0xff] %vm475, %v437
        %503 = vst.msk [vmem:[%s144 + $0xd8] sm:$0xff] %vm475, %v438
        %504 = vst.msk [vmem:[%s144 + $0xe0] sm:$0xff] %vm475, %v439
        %505 = vst.msk [vmem:[%s144 + $0xe8] sm:$0xff] %vm475, %v440
        %506 = vst.msk [vmem:[%s144 + $0xf0] sm:$0xff] %vm475, %v441
        %507 = vst.msk [vmem:[%s144 + $0xf8] sm:$0xff] %vm475, %v442
        %508 = vst.msk [vmem:[%s144 + $0x100] sm:$0xff] %vm475, %v443
        %509 = vst.msk [vmem:[%s144 + $0x108] sm:$0xff] %vm475, %v444
        %510 = vst.msk [vmem:[%s144 + $0x110] sm:$0xff] %vm475, %v445
        %511 = vst.msk [vmem:[%s144 + $0x118] sm:$0xff] %vm475, %v446
        %512 = vst.msk [vmem:[%s144 + $0x120] sm:$0xff] %vm475, %v447
        %513 = vst.msk [vmem:[%s144 + $0x128] sm:$0xff] %vm475, %v448
        %514 = vst.msk [vmem:[%s144 + $0x130] sm:$0xff] %vm475, %v449
        %515 = vst.msk [vmem:[%s144 + $0x138] sm:$0xff] %vm475, %v450
        %516 = vst.msk [vmem:[%s144 + $0x140] sm:$0xff] %vm475, %v451
        %517 = vst.msk [vmem:[%s144 + $0x148] sm:$0xff] %vm475, %v452
        %518 = vst.msk [vmem:[%s144 + $0x150] sm:$0xff] %vm475, %v453
        %519 = vst.msk [vmem:[%s144 + $0x158] sm:$0xff] %vm475, %v454
        %520 = vst.msk [vmem:[%s144 + $0x160] sm:$0xff] %vm475, %v455
        %521 = vst.msk [vmem:[%s144 + $0x168] sm:$0xff] %vm475, %v456
        %522 = vst.msk [vmem:[%s144 + $0x170] sm:$0xff] %vm475, %v457
        %523 = vst.msk [vmem:[%s144 + $0x178] sm:$0xff] %vm475, %v458
        %524 = vst.msk [vmem:[%s144 + $0x180] sm:$0xff] %vm475, %v459
        %525 = vst.msk [vmem:[%s144 + $0x188] sm:$0xff] %vm475, %v460
        %526 = vst.msk [vmem:[%s144 + $0x190] sm:$0xff] %vm475, %v461
        %527 = vst.msk [vmem:[%s144 + $0x198] sm:$0xff] %vm475, %v462
        %528 = vst.msk [vmem:[%s144 + $0x1a0] sm:$0xff] %vm475, %v463
        %529 = vst.msk [vmem:[%s144 + $0x1a8] sm:$0xff] %vm475, %v464
        %530 = vst.msk [vmem:[%s144 + $0x1b0] sm:$0xff] %vm475, %v465
        %531 = vst.msk [vmem:[%s144 + $0x1b8] sm:$0xff] %vm475, %v466
        %532 = vst.msk [vmem:[%s144 + $0x1c0] sm:$0xff] %vm475, %v467
        %533 = vst.msk [vmem:[%s144 + $0x1c8] sm:$0xff] %vm475, %v468
        %534 = vst.msk [vmem:[%s144 + $0x1d0] sm:$0xff] %vm475, %v469
        %535 = vst.msk [vmem:[%s144 + $0x1d8] sm:$0xff] %vm475, %v470
        %536 = vst.msk [vmem:[%s144 + $0x1e0] sm:$0xff] %vm475, %v471
        %537 = vst.msk [vmem:[%s144 + $0x1e8] sm:$0xff] %vm475, %v472
        %538 = vst.msk [vmem:[%s144 + $0x1f0] sm:$0xff] %vm475, %v473
        %539 = vst.msk [vmem:[%s144 + $0x1f8] sm:$0xff] %vm475, %v474
      $region32: #{urresnet_forward.13} parent=23 // pred_fallthru
        _
      %s540 = smul.u32 64, %s16
      %p541 = scmp.lt.s32.totalorder %s540, 63
      %s542 = scalar_select %p541, %s540, 63
      %s543 = smul.addr %s542, 8
      %s544 = scalar_lea.vmem %s1, %s543
      // Predicated region
      $region33: #{urresnet_forward.13} parent=23 // pred_check
        %p545 = pneg %p70
      $region34: #{urresnet_forward.13} parent=23 // pred_check_branch
        %547 = sbr.rel (%p545) target = $region36
      $region35: #{urresnet_forward.13} parent=23 // pred_region
        %s548 = smul.u32 64, %s16
      $region36: #{urresnet_forward.13} parent=23 // pred_fallthru
        _
      // Predicated region
      $region37: #{urresnet_forward.13} parent=23 // pred_check
        %p549 = pneg %p70
      $region38: #{urresnet_forward.13} parent=23 // pred_check_branch
        %551 = sbr.rel (%p549) target = $region40
      $region39: #{urresnet_forward.13} parent=23 // pred_region
        %s552 = smul.u32 64, %s16
        %p553 = scmp.lt.s32.totalorder %s552, 63
        %s554 = scalar_select %p553, %s552, 63
        %s555 = smul.addr %s554, 8
        %s556 = scalar_lea.vmem %s1, %s555
      $region40: #{urresnet_forward.13} parent=23 // pred_fallthru
        _
    $region24: #{urresnet_forward.13} parent=5 // pred_fallthru
      _
    %p557 = scmp.le.s32.totalorder 2, %s7
    // Predicated region
    $region41: #{urresnet_forward.13} parent=5 // pred_check
      %p558 = pneg %p557
    $region42: #{urresnet_forward.13} parent=5 // pred_check_branch
      %560 = sbr.rel (%p558) target = $region44
    $region43: #{urresnet_forward.13} parent=5 // pred_region
      %s561 = ssub.s32 %s7, 2
    $region44: #{urresnet_forward.13} parent=5 // pred_fallthru
      _
  $region6: #{urresnet_forward.13} parent=0 // loop_footer
    %s11 = sadd.s32 1, %s7
  $region7: #{urresnet_forward.13} parent=0 // loop_footer_branch
    %6 = sbr.rel target = $region3
  $region8: #{urresnet_forward.13} parent=0 // loop_exit
    _

// kernel: urresnet_forward.14
$region0: #{urresnet_forward.14}
  #allocation0 [shape = 'u32[]', space=smem, size = 0x4, offset = 0x4, fixed_abs, tag = 'smem constant byte address 0x4 - core index']
  #allocation1 [shape = 'u32[144,128]{1,0:T(1,128)}', space=vmem, size = 0x12000, scoped, tag = 'internal scratch']
  #allocation2 [shape = 'f32[256,16]{1,0:T(8,128)}', space=vmem, size = 0x20000, scoped, tag = 'scratch operand']
  %s0 = inlined_call_operand.vmem [shape: bf16[512,144], index: 0, kind: input, shape index: {}]
  %s1 = inlined_call_operand.vmem [shape: bf16[144,16], index: 1, kind: input, shape index: {}]
  %s2 = inlined_call_operand.vmem [shape: f32[1,16], index: 2, kind: input, shape index: {}]
  %s3 = inlined_call_operand.vmem [shape: f32[1,16], index: 3, kind: input, shape index: {}]
  %s4 = inlined_call_operand.vmem [shape: f32[1,16], index: 4, kind: input, shape index: {}]
  %s5 = inlined_call_operand.vmem [shape: f32[512,16], index: 5, kind: output, shape index: {}]
  %s6 = sld [smem:[#allocation0]]
  $region61: #{urresnet_forward.14} parent=0
    _
  %s8 = ssub.s32 1, %s6
  %s9 = scalar_select 0, %s8, %s6
  loop: start=0, step=1, limit=4
  $region2: #{urresnet_forward.14} parent=0 // loop_pre_header
    _
  $region3: #{urresnet_forward.14} parent=0 // loop_header
    %s11 = sphi 0, %s15
    %p12 = scmp.ge.s32.totalorder %s11, 4
    %s18 = sphi 0, %s37
    %s19 = sphi 0, %s33
    %s20 = sphi 0, %s29
    %s21 = sphi 0, %s18
    %s22 = sphi 0, %s19
    %s23 = sphi 0, %s20
    %s24 = sphi 0, %s21
    %s25 = sphi 0, %s22
    %s26 = sphi 0, %s23
    %s42 = sphi 0, %s44
    %s45 = sphi 0, %s42
    %s46 = sphi 0, %s45
    %s62 = sphi 0, %s46
    %s70 = sphi 0, %s72
    %s73 = sphi 0, %s70
    %s74 = sphi 0, %s73
    %s90 = sphi 0, %s74
    %s96 = sphi 0, %s98
    %s99 = sphi 0, %s96
    %s100 = sphi 0, %s99
    %s116 = sphi 0, %s100
    %s122 = sphi 0, %s124
    %s125 = sphi 0, %s122
    %s126 = sphi 0, %s125
    %s142 = sphi 0, %s126
    %s148 = sphi 0, %s150
    %s151 = sphi 0, %s148
    %s152 = sphi 0, %s151
    %s168 = sphi 0, %s152
    %s176 = sphi 0, %s178
    %s179 = sphi 0, %s176
    %s180 = sphi 0, %s179
    %s196 = sphi 0, %s180
  $region4: #{urresnet_forward.14} parent=0 // loop_header_branch
    %14 = sbr.rel (%p12) target = $region8
  $region5: #{urresnet_forward.14} parent=0 // loop_body
    %s16 = ssub.s32 %s11, 1
    %s17 = ssub.s32 %s11, 2
    %s27 = sadd.s32 1, %s20
    %p28 = scmp.ge.s32.totalorder %s27, 1
    %s29 = scalar_select %p28, 0, %s27
    %s30 = sadd.s32 1, %s19
    %s31 = scalar_select %p28, %s30, %s19
    %p32 = scmp.ge.s32.totalorder %s31, 1
    %s33 = scalar_select %p32, 0, %s31
    %s34 = sadd.s32 1, %s18
    %s35 = scalar_select %p32, %s34, %s18
    %p36 = scmp.ge.s32.totalorder %s35, 2
    %s37 = scalar_select %p36, 0, %s35
    %s38 = ssub.s32 %s18, %s37
    %s39 = ssub.s32 %s20, %s29
    %s40 = sor.u32 %s38, %s39
    %p41 = scmp.eq.s32.totalorder %s40, 0
    %s43 = sadd.s32 %s42, 1
    %s44 = scalar_select %p41, %s42, %s43
    %p47 = pneg %p41
    %p48 = scmp.eq.s32.totalorder %s11, 1
    %p49 = por %p47, %p48
    %p50 = scmp.ne.s32.totalorder %s42, %s45
    %p51 = scmp.eq.s32.totalorder %s11, 0
    %p52 = por %p50, %p51
    %p53 = scmp.ne.s32.totalorder %s42, %s45
    %p54 = scmp.eq.s32.totalorder %s16, 1
    %p55 = por %p53, %p54
    %p56 = scmp.ne.s32.totalorder %s45, %s46
    %p57 = scmp.eq.s32.totalorder %s16, 0
    %p58 = por %p56, %p57
    %p59 = scmp.ne.s32.totalorder %s45, %s46
    %p60 = scmp.eq.s32.totalorder %s17, 1
    %p61 = por %p59, %p60
    %p63 = scmp.ne.s32.totalorder %s46, %s62
    %p64 = scmp.eq.s32.totalorder %s17, 0
    %p65 = por %p63, %p64
    %s66 = ssub.s32 %s20, %s29
    %s67 = ssub.s32 %s19, %s33
    %s68 = sor.u32 %s66, %s67
    %p69 = scmp.eq.s32.totalorder %s68, 0
    %s71 = sadd.s32 %s70, 1
    %s72 = scalar_select %p69, %s70, %s71
    %p75 = pneg %p69
    %p76 = scmp.eq.s32.totalorder %s11, 1
    %p77 = por %p75, %p76
    %p78 = scmp.ne.s32.totalorder %s70, %s73
    %p79 = scmp.eq.s32.totalorder %s11, 0
    %p80 = por %p78, %p79
    %p81 = scmp.ne.s32.totalorder %s70, %s73
    %p82 = scmp.eq.s32.totalorder %s16, 1
    %p83 = por %p81, %p82
    %p84 = scmp.ne.s32.totalorder %s73, %s74
    %p85 = scmp.eq.s32.totalorder %s16, 0
    %p86 = por %p84, %p85
    %p87 = scmp.ne.s32.totalorder %s73, %s74
    %p88 = scmp.eq.s32.totalorder %s17, 1
    %p89 = por %p87, %p88
    %p91 = scmp.ne.s32.totalorder %s74, %s90
    %p92 = scmp.eq.s32.totalorder %s17, 0
    %p93 = por %p91, %p92
    %s94 = ssub.s32 %s19, %s33
    %p95 = scmp.eq.s32.totalorder %s94, 0
    %s97 = sadd.s32 %s96, 1
    %s98 = scalar_select %p95, %s96, %s97
    %p101 = pneg %p95
    %p102 = scmp.eq.s32.totalorder %s11, 1
    %p103 = por %p101, %p102
    %p104 = scmp.ne.s32.totalorder %s96, %s99
    %p105 = scmp.eq.s32.totalorder %s11, 0
    %p106 = por %p104, %p105
    %p107 = scmp.ne.s32.totalorder %s96, %s99
    %p108 = scmp.eq.s32.totalorder %s16, 1
    %p109 = por %p107, %p108
    %p110 = scmp.ne.s32.totalorder %s99, %s100
    %p111 = scmp.eq.s32.totalorder %s16, 0
    %p112 = por %p110, %p111
    %p113 = scmp.ne.s32.totalorder %s99, %s100
    %p114 = scmp.eq.s32.totalorder %s17, 1
    %p115 = por %p113, %p114
    %p117 = scmp.ne.s32.totalorder %s100, %s116
    %p118 = scmp.eq.s32.totalorder %s17, 0
    %p119 = por %p117, %p118
    %s120 = ssub.s32 %s19, %s33
    %p121 = scmp.eq.s32.totalorder %s120, 0
    %s123 = sadd.s32 %s122, 1
    %s124 = scalar_select %p121, %s122, %s123
    %p127 = pneg %p121
    %p128 = scmp.eq.s32.totalorder %s11, 1
    %p129 = por %p127, %p128
    %p130 = scmp.ne.s32.totalorder %s122, %s125
    %p131 = scmp.eq.s32.totalorder %s11, 0
    %p132 = por %p130, %p131
    %p133 = scmp.ne.s32.totalorder %s122, %s125
    %p134 = scmp.eq.s32.totalorder %s16, 1
    %p135 = por %p133, %p134
    %p136 = scmp.ne.s32.totalorder %s125, %s126
    %p137 = scmp.eq.s32.totalorder %s16, 0
    %p138 = por %p136, %p137
    %p139 = scmp.ne.s32.totalorder %s125, %s126
    %p140 = scmp.eq.s32.totalorder %s17, 1
    %p141 = por %p139, %p140
    %p143 = scmp.ne.s32.totalorder %s126, %s142
    %p144 = scmp.eq.s32.totalorder %s17, 0
    %p145 = por %p143, %p144
    %s146 = ssub.s32 %s19, %s33
    %p147 = scmp.eq.s32.totalorder %s146, 0
    %s149 = sadd.s32 %s148, 1
    %s150 = scalar_select %p147, %s148, %s149
    %p153 = pneg %p147
    %p154 = scmp.eq.s32.totalorder %s11, 1
    %p155 = por %p153, %p154
    %p156 = scmp.ne.s32.totalorder %s148, %s151
    %p157 = scmp.eq.s32.totalorder %s11, 0
    %p158 = por %p156, %p157
    %p159 = scmp.ne.s32.totalorder %s148, %s151
    %p160 = scmp.eq.s32.totalorder %s16, 1
    %p161 = por %p159, %p160
    %p162 = scmp.ne.s32.totalorder %s151, %s152
    %p163 = scmp.eq.s32.totalorder %s16, 0
    %p164 = por %p162, %p163
    %p165 = scmp.ne.s32.totalorder %s151, %s152
    %p166 = scmp.eq.s32.totalorder %s17, 1
    %p167 = por %p165, %p166
    %p169 = scmp.ne.s32.totalorder %s152, %s168
    %p170 = scmp.eq.s32.totalorder %s17, 0
    %p171 = por %p169, %p170
    %s172 = ssub.s32 %s18, %s37
    %s173 = ssub.s32 %s19, %s33
    %s174 = sor.u32 %s172, %s173
    %p175 = scmp.eq.s32.totalorder %s174, 0
    %s177 = sadd.s32 %s176, 1
    %s178 = scalar_select %p175, %s176, %s177
    %p181 = pneg %p175
    %p182 = scmp.eq.s32.totalorder %s11, 1
    %p183 = por %p181, %p182
    %p184 = scmp.ne.s32.totalorder %s176, %s179
    %p185 = scmp.eq.s32.totalorder %s11, 0
    %p186 = por %p184, %p185
    %p187 = scmp.ne.s32.totalorder %s176, %s179
    %p188 = scmp.eq.s32.totalorder %s16, 1
    %p189 = por %p187, %p188
    %p190 = scmp.ne.s32.totalorder %s179, %s180
    %p191 = scmp.eq.s32.totalorder %s16, 0
    %p192 = por %p190, %p191
    %p193 = scmp.ne.s32.totalorder %s179, %s180
    %p194 = scmp.eq.s32.totalorder %s17, 1
    %p195 = por %p193, %p194
    %p197 = scmp.ne.s32.totalorder %s180, %s196
    %p198 = scmp.eq.s32.totalorder %s17, 0
    %p199 = por %p197, %p198
    %p200 = scmp.le.s32.totalorder 1, %s11
    %p201 = scmp.lt.s32.totalorder %s11, 3
    %p202 = pnand %p200, %p201
    %p203 = pneg %p202
    // Predicated region
    $region9: #{urresnet_forward.14} parent=5 // pred_check
      _
    $region10: #{urresnet_forward.14} parent=5 // pred_check_branch
      %205 = sbr.rel (%p202) target = $region12
    $region11: #{urresnet_forward.14} parent=5 // pred_region
      %s206 = ssub.s32 %s11, 1
      // Predicated region
      $region13: #{urresnet_forward.14} parent=11 // pred_check
        %p207 = pneg %p86
      $region14: #{urresnet_forward.14} parent=11 // pred_check_branch
        %209 = sbr.rel (%p207) target = $region16
      $region15: #{urresnet_forward.14} parent=11 // pred_region
        %s210 = smul.u32 18, %s23
        %p211 = scmp.lt.s32.totalorder %s210, 17
        %s212 = scalar_select %p211, %s210, 17
        %p213 = scmp.lt.s32.totalorder %s22, 0
        %s214 = scalar_select %p213, %s22, 0
        %s215 = sadd.s32 %s214, %s212
        %s216 = smul.addr %s215, 4
        %s217 = scalar_lea.vmem %s1, %s216
        %s218 = smul.u32 18, %s23
      $region16: #{urresnet_forward.14} parent=11 // pred_fallthru
        _
      // Predicated region
      $region17: #{urresnet_forward.14} parent=11 // pred_check
        %p219 = pneg %p112
      $region18: #{urresnet_forward.14} parent=11 // pred_check_branch
        %221 = sbr.rel (%p219) target = $region20
      $region19: #{urresnet_forward.14} parent=11 // pred_region
        %p222 = scmp.lt.s32.totalorder %s22, 0
        %s223 = scalar_select %p222, %s22, 0
        %s224 = scalar_lea.vmem %s2, %s223
      $region20: #{urresnet_forward.14} parent=11 // pred_fallthru
        _
      // Predicated region
      $region21: #{urresnet_forward.14} parent=11 // pred_check
        %p225 = pneg %p138
      $region22: #{urresnet_forward.14} parent=11 // pred_check_branch
        %227 = sbr.rel (%p225) target = $region24
      $region23: #{urresnet_forward.14} parent=11 // pred_region
        %p228 = scmp.lt.s32.totalorder %s22, 0
        %s229 = scalar_select %p228, %s22, 0
        %s230 = scalar_lea.vmem %s3, %s229
      $region24: #{urresnet_forward.14} parent=11 // pred_fallthru
        _
      // Predicated region
      $region25: #{urresnet_forward.14} parent=11 // pred_check
        %p231 = pneg %p164
      $region26: #{urresnet_forward.14} parent=11 // pred_check_branch
        %233 = sbr.rel (%p231) target = $region28
      $region27: #{urresnet_forward.14} parent=11 // pred_region
        %p234 = scmp.lt.s32.totalorder %s22, 0
        %s235 = scalar_select %p234, %s22, 0
        %s236 = scalar_lea.vmem %s4, %s235
      $region28: #{urresnet_forward.14} parent=11 // pred_fallthru
        _
    $region12: #{urresnet_forward.14} parent=5 // pred_fallthru
      _
    %p237 = scmp.lt.s32.totalorder %s11, 2
    // Predicated region
    $region29: #{urresnet_forward.14} parent=5 // pred_check
      %p238 = pneg %p237
    $region30: #{urresnet_forward.14} parent=5 // pred_check_branch
      %240 = sbr.rel (%p238) target = $region32
    $region31: #{urresnet_forward.14} parent=5 // pred_region
      // Predicated region
      $region33: #{urresnet_forward.14} parent=31 // pred_check
        %p241 = pneg %p52
      $region34: #{urresnet_forward.14} parent=31 // pred_check_branch
        %243 = sbr.rel (%p241) target = $region36
      $region35: #{urresnet_forward.14} parent=31 // pred_region
        %s244 = smul.u32 32, %s18
        %s245 = smul.u32 2, %s20
        %p246 = scmp.lt.s32.totalorder %s244, 63
        %s247 = scalar_select %p246, %s244, 63
        %p248 = scmp.lt.s32.totalorder %s245, 1
        %s249 = scalar_select %p248, %s245, 1
        %s250 = smul.addr %s247, 2
        %s251 = sadd.s32 %s249, %s250
        %s252 = smul.addr %s251, 4
        %s253 = scalar_lea.vmem %s0, %s252
        %s254 = smul.u32 32, %s18
        %s255 = smul.u32 2, %s20
      $region36: #{urresnet_forward.14} parent=31 // pred_fallthru
        _
    $region32: #{urresnet_forward.14} parent=5 // pred_fallthru
      _
    %p256 = scmp.le.s32.totalorder 1, %s11
    %p257 = scmp.lt.s32.totalorder %s11, 3
    %p258 = pnand %p256, %p257
    %p259 = pneg %p258
    // Predicated region
    $region37: #{urresnet_forward.14} parent=5 // pred_check
      _
    $region38: #{urresnet_forward.14} parent=5 // pred_check_branch
      %261 = sbr.rel (%p258) target = $region40
    $region39: #{urresnet_forward.14} parent=5 // pred_region
      %s262 = ssub.s32 %s11, 1
      %s263 = smul.u32 32, %s21
      %s264 = smul.u32 2, %s23
      %p265 = scmp.lt.s32.totalorder %s263, 63
      %s266 = scalar_select %p265, %s263, 63
      %p267 = scmp.lt.s32.totalorder %s264, 1
      %s268 = scalar_select %p267, %s264, 1
      %s269 = smul.addr %s266, 2
      %s270 = sadd.s32 %s268, %s269
      %s271 = smul.addr %s270, 4
      %s272 = scalar_lea.vmem %s0, %s271
      %p273 = pneg %p58
      %p274 = pneg %p55
      %s275 = smul.u32 18, %s23
      %p276 = scmp.lt.s32.totalorder %s275, 17
      %s277 = scalar_select %p276, %s275, 17
      %p278 = scmp.lt.s32.totalorder %s22, 0
      %s279 = scalar_select %p278, %s22, 0
      %s280 = sadd.s32 %s279, %s277
      %s281 = smul.addr %s280, 4
      %s282 = scalar_lea.vmem %s1, %s281
      %p283 = pneg %p86
      %p284 = pneg %p83
      %p285 = scmp.lt.s32.totalorder %s22, 0
      %s286 = scalar_select %p285, %s22, 0
      %s287 = scalar_lea.vmem %s2, %s286
      %p288 = pneg %p112
      %p289 = pneg %p109
      %p290 = scmp.lt.s32.totalorder %s22, 0
      %s291 = scalar_select %p290, %s22, 0
      %s292 = scalar_lea.vmem %s3, %s291
      %p293 = pneg %p138
      %p294 = pneg %p135
      %p295 = scmp.lt.s32.totalorder %s22, 0
      %s296 = scalar_select %p295, %s22, 0
      %s297 = scalar_lea.vmem %s4, %s296
      %p298 = pneg %p164
      %p299 = pneg %p161
      %p300 = pneg %p192
      %p301 = pneg %p189
      %s302 = smul.u32 32, %s21
      %p303 = scmp.lt.s32.totalorder %s302, 63
      %s304 = scalar_select %p303, %s302, 63
      %p305 = scmp.lt.s32.totalorder %s22, 0
      %s306 = scalar_select %p305, %s22, 0
      %s307 = sadd.s32 %s306, %s304
      %s308 = smul.addr %s307, 8
      %s309 = scalar_lea.vmem %s5, %s308
      %s310 = smul.u32 32, %s21
      %s311 = smul.u32 2, %s23
      %p312 = scmp.lt.s32.totalorder %s310, 63
      %s313 = scalar_select %p312, %s310, 63
      %p314 = scmp.lt.s32.totalorder %s311, 1
      %s315 = scalar_select %p314, %s311, 1
      %s316 = smul.addr %s313, 2
      %s317 = sadd.s32 %s315, %s316
      %s318 = smul.addr %s317, 4
      %s319 = scalar_lea.vmem %s0, %s318
      %s320 = smul.u32 32, %s21
      %s321 = smul.u32 2, %s23
      %s322 = smul.u32 18, %s23
      %p323 = scmp.lt.s32.totalorder %s322, 17
      %s324 = scalar_select %p323, %s322, 17
      %p325 = scmp.lt.s32.totalorder %s22, 0
      %s326 = scalar_select %p325, %s22, 0
      %s327 = sadd.s32 %s326, %s324
      %s328 = smul.addr %s327, 4
      %s329 = scalar_lea.vmem %s1, %s328
      %s330 = smul.u32 18, %s23
      %p331 = scmp.lt.s32.totalorder %s22, 0
      %s332 = scalar_select %p331, %s22, 0
      %s333 = scalar_lea.vmem %s2, %s332
      %p334 = scmp.lt.s32.totalorder %s22, 0
      %s335 = scalar_select %p334, %s22, 0
      %s336 = scalar_lea.vmem %s3, %s335
      %p337 = scmp.lt.s32.totalorder %s22, 0
      %s338 = scalar_select %p337, %s22, 0
      %s339 = scalar_lea.vmem %s4, %s338
      %s340 = smul.u32 32, %s21
      %p341 = scmp.lt.s32.totalorder %s340, 63
      %s342 = scalar_select %p341, %s340, 63
      %p343 = scmp.lt.s32.totalorder %s22, 0
      %s344 = scalar_select %p343, %s22, 0
      %s345 = sadd.s32 %s344, %s342
      %s346 = smul.addr %s345, 8
      %s347 = scalar_lea.vmem %s5, %s346
      %s348 = smul.u32 32, %s21
      %p350 = scmp.eq.s32.totalorder %s23, 0
      // Predicated region
      $region41: #{urresnet_forward.14} parent=39 // pred_check
        %p351 = pneg %p350
      $region42: #{urresnet_forward.14} parent=39 // pred_check_branch
        %353 = sbr.rel (%p351) target = $region44
      $region43: #{urresnet_forward.14} parent=39 // pred_region
        %vm354 = vcmask 130048
        %355 = vst.msk [vmem:[#allocation2] sm:$0xff] %vm354, 0.0
        %356 = vst.msk [vmem:[#allocation2 + $0x8] sm:$0xff] %vm354, 0.0
        %357 = vst.msk [vmem:[#allocation2 + $0x10] sm:$0xff] %vm354, 0.0
        %358 = vst.msk [vmem:[#allocation2 + $0x18] sm:$0xff] %vm354, 0.0
        %359 = vst.msk [vmem:[#allocation2 + $0x20] sm:$0xff] %vm354, 0.0
        %360 = vst.msk [vmem:[#allocation2 + $0x28] sm:$0xff] %vm354, 0.0
        %361 = vst.msk [vmem:[#allocation2 + $0x30] sm:$0xff] %vm354, 0.0
        %362 = vst.msk [vmem:[#allocation2 + $0x38] sm:$0xff] %vm354, 0.0
        %363 = vst.msk [vmem:[#allocation2 + $0x40] sm:$0xff] %vm354, 0.0
        %364 = vst.msk [vmem:[#allocation2 + $0x48] sm:$0xff] %vm354, 0.0
        %365 = vst.msk [vmem:[#allocation2 + $0x50] sm:$0xff] %vm354, 0.0
        %366 = vst.msk [vmem:[#allocation2 + $0x58] sm:$0xff] %vm354, 0.0
        %367 = vst.msk [vmem:[#allocation2 + $0x60] sm:$0xff] %vm354, 0.0
        %368 = vst.msk [vmem:[#allocation2 + $0x68] sm:$0xff] %vm354, 0.0
        %369 = vst.msk [vmem:[#allocation2 + $0x70] sm:$0xff] %vm354, 0.0
        %370 = vst.msk [vmem:[#allocation2 + $0x78] sm:$0xff] %vm354, 0.0
        %371 = vst.msk [vmem:[#allocation2 + $0x80] sm:$0xff] %vm354, 0.0
        %372 = vst.msk [vmem:[#allocation2 + $0x88] sm:$0xff] %vm354, 0.0
        %373 = vst.msk [vmem:[#allocation2 + $0x90] sm:$0xff] %vm354, 0.0
        %374 = vst.msk [vmem:[#allocation2 + $0x98] sm:$0xff] %vm354, 0.0
        %375 = vst.msk [vmem:[#allocation2 + $0xa0] sm:$0xff] %vm354, 0.0
        %376 = vst.msk [vmem:[#allocation2 + $0xa8] sm:$0xff] %vm354, 0.0
        %377 = vst.msk [vmem:[#allocation2 + $0xb0] sm:$0xff] %vm354, 0.0
        %378 = vst.msk [vmem:[#allocation2 + $0xb8] sm:$0xff] %vm354, 0.0
        %379 = vst.msk [vmem:[#allocation2 + $0xc0] sm:$0xff] %vm354, 0.0
        %380 = vst.msk [vmem:[#allocation2 + $0xc8] sm:$0xff] %vm354, 0.0
        %381 = vst.msk [vmem:[#allocation2 + $0xd0] sm:$0xff] %vm354, 0.0
        %382 = vst.msk [vmem:[#allocation2 + $0xd8] sm:$0xff] %vm354, 0.0
        %383 = vst.msk [vmem:[#allocation2 + $0xe0] sm:$0xff] %vm354, 0.0
        %384 = vst.msk [vmem:[#allocation2 + $0xe8] sm:$0xff] %vm354, 0.0
        %385 = vst.msk [vmem:[#allocation2 + $0xf0] sm:$0xff] %vm354, 0.0
        %386 = vst.msk [vmem:[#allocation2 + $0xf8] sm:$0xff] %vm354, 0.0
      $region44: #{urresnet_forward.14} parent=39 // pred_fallthru
        _
      %v387 = vld [vmem:[#allocation2] sm:$0xff]
      %v388 = vld [vmem:[#allocation2 + $0x8] sm:$0xff]
      %v389 = vld [vmem:[#allocation2 + $0x10] sm:$0xff]
      %v390 = vld [vmem:[#allocation2 + $0x18] sm:$0xff]
      %v391 = vld [vmem:[#allocation2 + $0x20] sm:$0xff]
      %v392 = vld [vmem:[#allocation2 + $0x28] sm:$0xff]
      %v393 = vld [vmem:[#allocation2 + $0x30] sm:$0xff]
      %v394 = vld [vmem:[#allocation2 + $0x38] sm:$0xff]
      %v395 = vld [vmem:[#allocation2 + $0x40] sm:$0xff]
      %v396 = vld [vmem:[#allocation2 + $0x48] sm:$0xff]
      %v397 = vld [vmem:[#allocation2 + $0x50] sm:$0xff]
      %v398 = vld [vmem:[#allocation2 + $0x58] sm:$0xff]
      %v399 = vld [vmem:[#allocation2 + $0x60] sm:$0xff]
      %v400 = vld [vmem:[#allocation2 + $0x68] sm:$0xff]
      %v401 = vld [vmem:[#allocation2 + $0x70] sm:$0xff]
      %v402 = vld [vmem:[#allocation2 + $0x78] sm:$0xff]
      %v403 = vld [vmem:[#allocation2 + $0x80] sm:$0xff]
      %v404 = vld [vmem:[#allocation2 + $0x88] sm:$0xff]
      %v405 = vld [vmem:[#allocation2 + $0x90] sm:$0xff]
      %v406 = vld [vmem:[#allocation2 + $0x98] sm:$0xff]
      %v407 = vld [vmem:[#allocation2 + $0xa0] sm:$0xff]
      %v408 = vld [vmem:[#allocation2 + $0xa8] sm:$0xff]
      %v409 = vld [vmem:[#allocation2 + $0xb0] sm:$0xff]
      %v410 = vld [vmem:[#allocation2 + $0xb8] sm:$0xff]
      %v411 = vld [vmem:[#allocation2 + $0xc0] sm:$0xff]
      %v412 = vld [vmem:[#allocation2 + $0xc8] sm:$0xff]
      %v413 = vld [vmem:[#allocation2 + $0xd0] sm:$0xff]
      %v414 = vld [vmem:[#allocation2 + $0xd8] sm:$0xff]
      %v415 = vld [vmem:[#allocation2 + $0xe0] sm:$0xff]
      %v416 = vld [vmem:[#allocation2 + $0xe8] sm:$0xff]
      %v417 = vld [vmem:[#allocation2 + $0xf0] sm:$0xff]
      %v418 = vld [vmem:[#allocation2 + $0xf8] sm:$0xff]
      %v419 = vld [vmem:[%s319] sm:$0xff]
      %v420 = vld [vmem:[%s319 + $0x8] sm:$0xff]
      %v421 = vld [vmem:[%s319 + $0x10] sm:$0xff]
      %v422 = vld [vmem:[%s319 + $0x18] sm:$0xff]
      %v423 = vld [vmem:[%s319 + $0x20] sm:$0xff]
      %v424 = vld [vmem:[%s319 + $0x28] sm:$0xff]
      %v425 = vld [vmem:[%s319 + $0x30] sm:$0xff]
      %v426 = vld [vmem:[%s319 + $0x38] sm:$0xff]
      %v427 = vld [vmem:[%s319 + $0x40] sm:$0xff]
      %v428 = vld [vmem:[%s319 + $0x48] sm:$0xff]
      %v429 = vld [vmem:[%s319 + $0x50] sm:$0xff]
      %v430 = vld [vmem:[%s319 + $0x58] sm:$0xff]
      %v431 = vld [vmem:[%s319 + $0x60] sm:$0xff]
      %v432 = vld [vmem:[%s319 + $0x68] sm:$0xff]
      %v433 = vld [vmem:[%s319 + $0x70] sm:$0xff]
      %v434 = vld [vmem:[%s319 + $0x78] sm:$0xff]
      %v435 = vld [vmem:[%s319 + $0x80] sm:$0xff]
      %v436 = vld [vmem:[%s319 + $0x88] sm:$0xff]
      %v437 = vld [vmem:[%s319 + $0x90] sm:$0xff]
      %v438 = vld [vmem:[%s319 + $0x98] sm:$0xff]
      %v439 = vld [vmem:[%s319 + $0xa0] sm:$0xff]
      %v440 = vld [vmem:[%s319 + $0xa8] sm:$0xff]
      %v441 = vld [vmem:[%s319 + $0xb0] sm:$0xff]
      %v442 = vld [vmem:[%s319 + $0xb8] sm:$0xff]
      %v443 = vld [vmem:[%s319 + $0xc0] sm:$0xff]
      %v444 = vld [vmem:[%s319 + $0xc8] sm:$0xff]
      %v445 = vld [vmem:[%s319 + $0xd0] sm:$0xff]
      %v446 = vld [vmem:[%s319 + $0xd8] sm:$0xff]
      %v447 = vld [vmem:[%s319 + $0xe0] sm:$0xff]
      %v448 = vld [vmem:[%s319 + $0xe8] sm:$0xff]
      %v449 = vld [vmem:[%s319 + $0xf0] sm:$0xff]
      %v450 = vld [vmem:[%s319 + $0xf8] sm:$0xff]
      %v451 = vld [vmem:[%s329] sm:$0xf]
      %v452 = vld [vmem:[%s329 + $0x4] sm:$0xf]
      %v453 = vld [vmem:[%s329 + $0x8] sm:$0xf]
      %v454 = vld [vmem:[%s329 + $0xc] sm:$0xf]
      %v455 = vld [vmem:[%s329 + $0x10] sm:$0xf]
      %v456 = vld [vmem:[%s329 + $0x14] sm:$0xf]
      %v457 = vld [vmem:[%s329 + $0x18] sm:$0xf]
      %v458 = vld [vmem:[%s329 + $0x1c] sm:$0xf]
      %v459 = vld [vmem:[%s329 + $0x20] sm:$0xf]
      %v460 = vld [vmem:[%s329 + $0x24] sm:$0xf]
      %v461 = vld [vmem:[%s329 + $0x28] sm:$0xf]
      %v462 = vld [vmem:[%s329 + $0x2c] sm:$0xf]
      %v463 = vld [vmem:[%s329 + $0x30] sm:$0xf]
      %v464 = vld [vmem:[%s329 + $0x34] sm:$0xf]
      %v465 = vld [vmem:[%s329 + $0x38] sm:$0xf]
      %v466 = vld [vmem:[%s329 + $0x3c] sm:$0xf]
      %v467 = vld [vmem:[%s329 + $0x40] sm:$0xf]
      %v468 = vld [vmem:[%s329 + $0x44] sm:$0xf]
      %v501 = vunpack.c.l.b16 %v419
      %v502 = vunpack.c.h.b16 %v419
      %v503 = vunpack.c.l.b16 %v420
      %v504 = vunpack.c.h.b16 %v420
      %v505 = vunpack.c.l.b16 %v421
      %v506 = vunpack.c.h.b16 %v421
      %v507 = vunpack.c.l.b16 %v422
      %v508 = vunpack.c.h.b16 %v422
      %v509 = vunpack.c.l.b16 %v423
      %v510 = vunpack.c.h.b16 %v423
      %v511 = vunpack.c.l.b16 %v424
      %v512 = vunpack.c.h.b16 %v424
      %v513 = vunpack.c.l.b16 %v425
      %v514 = vunpack.c.h.b16 %v425
      %v515 = vunpack.c.l.b16 %v426
      %v516 = vunpack.c.h.b16 %v426
      %v517 = vunpack.c.l.b16 %v427
      %v518 = vunpack.c.h.b16 %v427
      %v519 = vunpack.c.l.b16 %v428
      %v520 = vunpack.c.h.b16 %v428
      %v521 = vunpack.c.l.b16 %v429
      %v522 = vunpack.c.h.b16 %v429
      %v523 = vunpack.c.l.b16 %v430
      %v524 = vunpack.c.h.b16 %v430
      %v525 = vunpack.c.l.b16 %v431
      %v526 = vunpack.c.h.b16 %v431
      %v527 = vunpack.c.l.b16 %v432
      %v528 = vunpack.c.h.b16 %v432
      %v529 = vunpack.c.l.b16 %v433
      %v530 = vunpack.c.h.b16 %v433
      %v531 = vunpack.c.l.b16 %v434
      %v532 = vunpack.c.h.b16 %v434
      %v533 = vunpack.c.l.b16 %v435
      %v534 = vunpack.c.h.b16 %v435
      %v535 = vunpack.c.l.b16 %v436
      %v536 = vunpack.c.h.b16 %v436
      %v537 = vunpack.c.l.b16 %v437
      %v538 = vunpack.c.h.b16 %v437
      %v539 = vunpack.c.l.b16 %v438
      %v540 = vunpack.c.h.b16 %v438
      %v541 = vunpack.c.l.b16 %v439
      %v542 = vunpack.c.h.b16 %v439
      %v543 = vunpack.c.l.b16 %v440
      %v544 = vunpack.c.h.b16 %v440
      %v545 = vunpack.c.l.b16 %v441
      %v546 = vunpack.c.h.b16 %v441
      %v547 = vunpack.c.l.b16 %v442
      %v548 = vunpack.c.h.b16 %v442
      %v549 = vunpack.c.l.b16 %v443
      %v550 = vunpack.c.h.b16 %v443
      %v551 = vunpack.c.l.b16 %v444
      %v552 = vunpack.c.h.b16 %v444
      %v553 = vunpack.c.l.b16 %v445
      %v554 = vunpack.c.h.b16 %v445
      %v555 = vunpack.c.l.b16 %v446
      %v556 = vunpack.c.h.b16 %v446
      %v557 = vunpack.c.l.b16 %v447
      %v558 = vunpack.c.h.b16 %v447
      %v559 = vunpack.c.l.b16 %v448
      %v560 = vunpack.c.h.b16 %v448
      %v561 = vunpack.c.l.b16 %v449
      %v562 = vunpack.c.h.b16 %v449
      %v563 = vunpack.c.l.b16 %v450
      %v564 = vunpack.c.h.b16 %v450
      %v565 = vpack.c.b16 %v503, %v501
      %v566 = vpack.c.b16 %v504, %v502
      %v567 = vpack.c.b16 %v507, %v505
      %v568 = vpack.c.b16 %v508, %v506
      %v569 = vpack.c.b16 %v511, %v509
      %v570 = vpack.c.b16 %v512, %v510
      %v571 = vpack.c.b16 %v515, %v513
      %v572 = vpack.c.b16 %v516, %v514
      %v573 = vpack.c.b16 %v519, %v517
      %v574 = vpack.c.b16 %v520, %v518
      %v575 = vpack.c.b16 %v523, %v521
      %v576 = vpack.c.b16 %v524, %v522
      %v577 = vpack.c.b16 %v527, %v525
      %v578 = vpack.c.b16 %v528, %v526
      %v579 = vpack.c.b16 %v531, %v529
      %v580 = vpack.c.b16 %v532, %v530
      %v581 = vpack.c.b16 %v535, %v533
      %v582 = vpack.c.b16 %v536, %v534
      %v583 = vpack.c.b16 %v539, %v537
      %v584 = vpack.c.b16 %v540, %v538
      %v585 = vpack.c.b16 %v543, %v541
      %v586 = vpack.c.b16 %v544, %v542
      %v587 = vpack.c.b16 %v547, %v545
      %v588 = vpack.c.b16 %v548, %v546
      %v589 = vpack.c.b16 %v551, %v549
      %v590 = vpack.c.b16 %v552, %v550
      %v591 = vpack.c.b16 %v555, %v553
      %v592 = vpack.c.b16 %v556, %v554
      %v593 = vpack.c.b16 %v559, %v557
      %v594 = vpack.c.b16 %v560, %v558
      %v595 = vpack.c.b16 %v563, %v561
      %v596 = vpack.c.b16 %v564, %v562
      %v631 = vunpack.c.l.b16 %v451
      %v632 = vunpack.c.l.b16 %v452
      %v633 = vunpack.c.l.b16 %v453
      %v634 = vunpack.c.l.b16 %v454
      %v635 = vunpack.c.l.b16 %v455
      %v636 = vunpack.c.l.b16 %v456
      %v637 = vunpack.c.l.b16 %v457
      %v638 = vunpack.c.l.b16 %v458
      %v639 = vunpack.c.l.b16 %v459
      %v640 = vunpack.c.l.b16 %v460
      %v641 = vunpack.c.l.b16 %v461
      %v642 = vunpack.c.l.b16 %v462
      %v643 = vunpack.c.l.b16 %v463
      %v644 = vunpack.c.l.b16 %v464
      %v645 = vunpack.c.l.b16 %v465
      %v646 = vunpack.c.l.b16 %v466
      %v647 = vunpack.c.l.b16 %v467
      %v648 = vunpack.c.l.b16 %v468
      %v649 = vpack.c.b16 %v632, %v631
      %v650 = vpack.c.b16 %v634, %v633
      %v651 = vpack.c.b16 %v636, %v635
      %v652 = vpack.c.b16 %v638, %v637
      %v653 = vpack.c.b16 %v640, %v639
      %v654 = vpack.c.b16 %v642, %v641
      %v655 = vpack.c.b16 %v644, %v643
      %v656 = vpack.c.b16 %v646, %v645
      %v657 = vpack.c.b16 %v648, %v647
      %vm667 = vcmask 130048
      %v669 = vsel %vm667, %v566, 0
      %v672 = vsel %vm667, %v568, 0
      %v675 = vsel %vm667, %v570, 0
      %v678 = vsel %vm667, %v572, 0
      %v681 = vsel %vm667, %v574, 0
      %v684 = vsel %vm667, %v576, 0
      %v687 = vsel %vm667, %v578, 0
      %v690 = vsel %vm667, %v580, 0
      %v693 = vsel %vm667, %v582, 0
      %v696 = vsel %vm667, %v584, 0
      %v699 = vsel %vm667, %v586, 0
      %v702 = vsel %vm667, %v588, 0
      %v705 = vsel %vm667, %v590, 0
      %v708 = vsel %vm667, %v592, 0
      %v711 = vsel %vm667, %v594, 0
      %v714 = vsel %vm667, %v596, 0
      %716 = vmatprep.subr.bf16.mxu0 0
      %717 = vmatpush1.bf16.msra.mxu0 %v649
      %718 = vmatprep.subr.bf16.mxu0 0
      %719 = vmatpush1.bf16.msra.mxu0 %v650
      %720 = vmatprep.subr.bf16.mxu0 0
      %721 = vmatpush1.bf16.msra.mxu0 %v651
      %722 = vmatprep.subr.bf16.mxu0 0
      %723 = vmatpush1.bf16.msra.mxu0 %v652
      %724 = vmatprep.subr.bf16.mxu0 0
      %725 = vmatpush1.bf16.msra.mxu0 %v653
      %726 = vmatprep.subr.bf16.mxu0 0
      %727 = vmatpush1.bf16.msra.mxu0 %v654
      %728 = vmatprep.subr.bf16.mxu0 0
      %729 = vmatpush1.bf16.msra.mxu0 %v655
      %730 = vmatprep.subr.bf16.mxu0 0
      %731 = vmatpush1.bf16.msra.mxu0 %v656
      %732 = vmatprep.subr.bf16.mxu0 0
      %733 = vmatpush1.bf16.msra.mxu0 %v657
      %734 = vmatprep.subr.bf16.mxu0 0
      %735 = vmatpush1.bf16.msra.mxu0 0
      %736 = vmatprep.subr.bf16.mxu0 0
      %737 = vmatpush1.bf16.msra.mxu0 0
      %738 = vmatprep.subr.bf16.mxu0 0
      %739 = vmatpush1.bf16.msra.mxu0 0
      %740 = vmatprep.subr.bf16.mxu0 0
      %741 = vmatpush1.bf16.msra.mxu0 0
      %742 = vmatprep.subr.bf16.mxu0 0
      %743 = vmatpush1.bf16.msra.mxu0 0
      %744 = vmatprep.subr.bf16.mxu0 0
      %745 = vmatpush1.bf16.msra.mxu0 0
      %746 = vmatprep.subr.bf16.mxu0 0
      %747 = vmatpush1.bf16.msra.mxu0 0
      %748 = vmatprep.mubr.bf16.mxu0 %v669
      %749 = vmatmul.mubr.bf16.gmra.mrb[0].mxu0 %v565
      %v750 = vpop.f32.mrb[0].mxu0
      %v751 = vadd.f32 0.0, %v750
      %v752 = vpop.f32.mrb[0].mxu0
      %v753 = vpop.f32.mrb[0].mxu0
      %v754 = vadd.f32 0.0, %v753
      %v755 = vpop.f32.mrb[0].mxu0
      %756 = vmatprep.mubr.bf16.mxu0 %v672
      %757 = vmatmul.mubr.bf16.gmra.mrb[0].mxu0 %v567
      %v758 = vpop.f32.mrb[0].mxu0
      %v759 = vadd.f32 0.0, %v758
      %v760 = vpop.f32.mrb[0].mxu0
      %v761 = vpop.f32.mrb[0].mxu0
      %v762 = vadd.f32 0.0, %v761
      %v763 = vpop.f32.mrb[0].mxu0
      %764 = vmatprep.mubr.bf16.mxu0 %v675
      %765 = vmatmul.mubr.bf16.gmra.mrb[0].mxu0 %v569
      %v766 = vpop.f32.mrb[0].mxu0
      %v767 = vadd.f32 0.0, %v766
      %v768 = vpop.f32.mrb[0].mxu0
      %v769 = vpop.f32.mrb[0].mxu0
      %v770 = vadd.f32 0.0, %v769
      %v771 = vpop.f32.mrb[0].mxu0
      %772 = vmatprep.mubr.bf16.mxu0 %v678
      %773 = vmatmul.mubr.bf16.gmra.mrb[0].mxu0 %v571
      %v774 = vpop.f32.mrb[0].mxu0
      %v775 = vadd.f32 0.0, %v774
      %v776 = vpop.f32.mrb[0].mxu0
      %v777 = vpop.f32.mrb[0].mxu0
      %v778 = vadd.f32 0.0, %v777
      %v779 = vpop.f32.mrb[0].mxu0
      %780 = vmatprep.mubr.bf16.mxu0 %v681
      %781 = vmatmul.mubr.bf16.gmra.mrb[0].mxu0 %v573
      %v782 = vpop.f32.mrb[0].mxu0
      %v783 = vadd.f32 0.0, %v782
      %v784 = vpop.f32.mrb[0].mxu0
      %v785 = vpop.f32.mrb[0].mxu0
      %v786 = vadd.f32 0.0, %v785
      %v787 = vpop.f32.mrb[0].mxu0
      %788 = vmatprep.mubr.bf16.mxu0 %v684
      %789 = vmatmul.mubr.bf16.gmra.mrb[0].mxu0 %v575
      %v790 = vpop.f32.mrb[0].mxu0
      %v791 = vadd.f32 0.0, %v790
      %v792 = vpop.f32.mrb[0].mxu0
      %v793 = vpop.f32.mrb[0].mxu0
      %v794 = vadd.f32 0.0, %v793
      %v795 = vpop.f32.mrb[0].mxu0
      %796 = vmatprep.mubr.bf16.mxu0 %v687
      %797 = vmatmul.mubr.bf16.gmra.mrb[0].mxu0 %v577
      %v798 = vpop.f32.mrb[0].mxu0
      %v799 = vadd.f32 0.0, %v798
      %v800 = vpop.f32.mrb[0].mxu0
      %v801 = vpop.f32.mrb[0].mxu0
      %v802 = vadd.f32 0.0, %v801
      %v803 = vpop.f32.mrb[0].mxu0
      %804 = vmatprep.mubr.bf16.mxu0 %v690
      %805 = vmatmul.mubr.bf16.gmra.mrb[0].mxu0 %v579
      %v806 = vpop.f32.mrb[0].mxu0
      %v807 = vadd.f32 0.0, %v806
      %v808 = vpop.f32.mrb[0].mxu0
      %v809 = vpop.f32.mrb[0].mxu0
      %v810 = vadd.f32 0.0, %v809
      %v811 = vpop.f32.mrb[0].mxu0
      %812 = vmatprep.mubr.bf16.mxu0 %v693
      %813 = vmatmul.mubr.bf16.gmra.mrb[0].mxu0 %v581
      %v814 = vpop.f32.mrb[0].mxu0
      %v815 = vadd.f32 0.0, %v814
      %v816 = vpop.f32.mrb[0].mxu0
      %v817 = vpop.f32.mrb[0].mxu0
      %v818 = vadd.f32 0.0, %v817
      %v819 = vpop.f32.mrb[0].mxu0
      %820 = vmatprep.mubr.bf16.mxu0 %v696
      %821 = vmatmul.mubr.bf16.gmra.mrb[0].mxu0 %v583
      %v822 = vpop.f32.mrb[0].mxu0
      %v823 = vadd.f32 0.0, %v822
      %v824 = vpop.f32.mrb[0].mxu0
      %v825 = vpop.f32.mrb[0].mxu0
      %v826 = vadd.f32 0.0, %v825
      %v827 = vpop.f32.mrb[0].mxu0
      %828 = vmatprep.mubr.bf16.mxu0 %v699
      %829 = vmatmul.mubr.bf16.gmra.mrb[0].mxu0 %v585
      %v830 = vpop.f32.mrb[0].mxu0
      %v831 = vadd.f32 0.0, %v830
      %v832 = vpop.f32.mrb[0].mxu0
      %v833 = vpop.f32.mrb[0].mxu0
      %v834 = vadd.f32 0.0, %v833
      %v835 = vpop.f32.mrb[0].mxu0
      %836 = vmatprep.mubr.bf16.mxu0 %v702
      %837 = vmatmul.mubr.bf16.gmra.mrb[0].mxu0 %v587
      %v838 = vpop.f32.mrb[0].mxu0
      %v839 = vadd.f32 0.0, %v838
      %v840 = vpop.f32.mrb[0].mxu0
      %v841 = vpop.f32.mrb[0].mxu0
      %v842 = vadd.f32 0.0, %v841
      %v843 = vpop.f32.mrb[0].mxu0
      %844 = vmatprep.mubr.bf16.mxu0 %v705
      %845 = vmatmul.mubr.bf16.gmra.mrb[0].mxu0 %v589
      %v846 = vpop.f32.mrb[0].mxu0
      %v847 = vadd.f32 0.0, %v846
      %v848 = vpop.f32.mrb[0].mxu0
      %v849 = vpop.f32.mrb[0].mxu0
      %v850 = vadd.f32 0.0, %v849
      %v851 = vpop.f32.mrb[0].mxu0
      %852 = vmatprep.mubr.bf16.mxu0 %v708
      %853 = vmatmul.mubr.bf16.gmra.mrb[0].mxu0 %v591
      %v854 = vpop.f32.mrb[0].mxu0
      %v855 = vadd.f32 0.0, %v854
      %v856 = vpop.f32.mrb[0].mxu0
      %v857 = vpop.f32.mrb[0].mxu0
      %v858 = vadd.f32 0.0, %v857
      %v859 = vpop.f32.mrb[0].mxu0
      %860 = vmatprep.mubr.bf16.mxu0 %v711
      %861 = vmatmul.mubr.bf16.gmra.mrb[0].mxu0 %v593
      %v862 = vpop.f32.mrb[0].mxu0
      %v863 = vadd.f32 0.0, %v862
      %v864 = vpop.f32.mrb[0].mxu0
      %v865 = vpop.f32.mrb[0].mxu0
      %v866 = vadd.f32 0.0, %v865
      %v867 = vpop.f32.mrb[0].mxu0
      %868 = vmatprep.mubr.bf16.mxu0 %v714
      %869 = vmatmul.mubr.bf16.gmra.mrb[0].mxu0 %v595
      %v870 = vpop.f32.mrb[0].mxu0
      %v871 = vadd.f32 0.0, %v870
      %v872 = vpop.f32.mrb[0].mxu0
      %v873 = vpop.f32.mrb[0].mxu0
      %v874 = vadd.f32 0.0, %v873
      %v875 = vpop.f32.mrb[0].mxu0
      %876 = vdwg.mxu0
      %v877 = vadd.f32 %v387, %v751
      %v878 = vadd.f32 %v388, %v754
      %v879 = vadd.f32 %v389, %v759
      %v880 = vadd.f32 %v390, %v762
      %v881 = vadd.f32 %v391, %v767
      %v882 = vadd.f32 %v392, %v770
      %v883 = vadd.f32 %v393, %v775
      %v884 = vadd.f32 %v394, %v778
      %v885 = vadd.f32 %v395, %v783
      %v886 = vadd.f32 %v396, %v786
      %v887 = vadd.f32 %v397, %v791
      %v888 = vadd.f32 %v398, %v794
      %v889 = vadd.f32 %v399, %v799
      %v890 = vadd.f32 %v400, %v802
      %v891 = vadd.f32 %v401, %v807
      %v892 = vadd.f32 %v402, %v810
      %v893 = vadd.f32 %v403, %v815
      %v894 = vadd.f32 %v404, %v818
      %v895 = vadd.f32 %v405, %v823
      %v896 = vadd.f32 %v406, %v826
      %v897 = vadd.f32 %v407, %v831
      %v898 = vadd.f32 %v408, %v834
      %v899 = vadd.f32 %v409, %v839
      %v900 = vadd.f32 %v410, %v842
      %v901 = vadd.f32 %v411, %v847
      %v902 = vadd.f32 %v412, %v850
      %v903 = vadd.f32 %v413, %v855
      %v904 = vadd.f32 %v414, %v858
      %v905 = vadd.f32 %v415, %v863
      %v906 = vadd.f32 %v416, %v866
      %v907 = vadd.f32 %v417, %v871
      %v908 = vadd.f32 %v418, %v874
      %909 = vst.msk [vmem:[#allocation2] sm:$0xff] %vm667, %v877
      %910 = vst.msk [vmem:[#allocation2 + $0x8] sm:$0xff] %vm667, %v878
      %911 = vst.msk [vmem:[#allocation2 + $0x10] sm:$0xff] %vm667, %v879
      %912 = vst.msk [vmem:[#allocation2 + $0x18] sm:$0xff] %vm667, %v880
      %913 = vst.msk [vmem:[#allocation2 + $0x20] sm:$0xff] %vm667, %v881
      %914 = vst.msk [vmem:[#allocation2 + $0x28] sm:$0xff] %vm667, %v882
      %915 = vst.msk [vmem:[#allocation2 + $0x30] sm:$0xff] %vm667, %v883
      %916 = vst.msk [vmem:[#allocation2 + $0x38] sm:$0xff] %vm667, %v884
      %917 = vst.msk [vmem:[#allocation2 + $0x40] sm:$0xff] %vm667, %v885
      %918 = vst.msk [vmem:[#allocation2 + $0x48] sm:$0xff] %vm667, %v886
      %919 = vst.msk [vmem:[#allocation2 + $0x50] sm:$0xff] %vm667, %v887
      %920 = vst.msk [vmem:[#allocation2 + $0x58] sm:$0xff] %vm667, %v888
      %921 = vst.msk [vmem:[#allocation2 + $0x60] sm:$0xff] %vm667, %v889
      %922 = vst.msk [vmem:[#allocation2 + $0x68] sm:$0xff] %vm667, %v890
      %923 = vst.msk [vmem:[#allocation2 + $0x70] sm:$0xff] %vm667, %v891
      %924 = vst.msk [vmem:[#allocation2 + $0x78] sm:$0xff] %vm667, %v892
      %925 = vst.msk [vmem:[#allocation2 + $0x80] sm:$0xff] %vm667, %v893
      %926 = vst.msk [vmem:[#allocation2 + $0x88] sm:$0xff] %vm667, %v894
      %927 = vst.msk [vmem:[#allocation2 + $0x90] sm:$0xff] %vm667, %v895
      %928 = vst.msk [vmem:[#allocation2 + $0x98] sm:$0xff] %vm667, %v896
      %929 = vst.msk [vmem:[#allocation2 + $0xa0] sm:$0xff] %vm667, %v897
      %930 = vst.msk [vmem:[#allocation2 + $0xa8] sm:$0xff] %vm667, %v898
      %931 = vst.msk [vmem:[#allocation2 + $0xb0] sm:$0xff] %vm667, %v899
      %932 = vst.msk [vmem:[#allocation2 + $0xb8] sm:$0xff] %vm667, %v900
      %933 = vst.msk [vmem:[#allocation2 + $0xc0] sm:$0xff] %vm667, %v901
      %934 = vst.msk [vmem:[#allocation2 + $0xc8] sm:$0xff] %vm667, %v902
      %935 = vst.msk [vmem:[#allocation2 + $0xd0] sm:$0xff] %vm667, %v903
      %936 = vst.msk [vmem:[#allocation2 + $0xd8] sm:$0xff] %vm667, %v904
      %937 = vst.msk [vmem:[#allocation2 + $0xe0] sm:$0xff] %vm667, %v905
      %938 = vst.msk [vmem:[#allocation2 + $0xe8] sm:$0xff] %vm667, %v906
      %939 = vst.msk [vmem:[#allocation2 + $0xf0] sm:$0xff] %vm667, %v907
      %940 = vst.msk [vmem:[#allocation2 + $0xf8] sm:$0xff] %vm667, %v908
      // Predicated region
      $region45: #{urresnet_forward.14} parent=39 // pred_check
        %p941 = pneg %p350
      $region46: #{urresnet_forward.14} parent=39 // pred_check_branch
        %943 = sbr.rel (%p941) target = $region48
      $region47: #{urresnet_forward.14} parent=39 // pred_region
        %v944 = vld [vmem:[#allocation2] sm:$0xff]
        %v945 = vld [vmem:[#allocation2 + $0x8] sm:$0xff]
        %v946 = vld [vmem:[#allocation2 + $0x10] sm:$0xff]
        %v947 = vld [vmem:[#allocation2 + $0x18] sm:$0xff]
        %v948 = vld [vmem:[#allocation2 + $0x20] sm:$0xff]
        %v949 = vld [vmem:[#allocation2 + $0x28] sm:$0xff]
        %v950 = vld [vmem:[#allocation2 + $0x30] sm:$0xff]
        %v951 = vld [vmem:[#allocation2 + $0x38] sm:$0xff]
        %v952 = vld [vmem:[#allocation2 + $0x40] sm:$0xff]
        %v953 = vld [vmem:[#allocation2 + $0x48] sm:$0xff]
        %v954 = vld [vmem:[#allocation2 + $0x50] sm:$0xff]
        %v955 = vld [vmem:[#allocation2 + $0x58] sm:$0xff]
        %v956 = vld [vmem:[#allocation2 + $0x60] sm:$0xff]
        %v957 = vld [vmem:[#allocation2 + $0x68] sm:$0xff]
        %v958 = vld [vmem:[#allocation2 + $0x70] sm:$0xff]
        %v959 = vld [vmem:[#allocation2 + $0x78] sm:$0xff]
        %v960 = vld [vmem:[#allocation2 + $0x80] sm:$0xff]
        %v961 = vld [vmem:[#allocation2 + $0x88] sm:$0xff]
        %v962 = vld [vmem:[#allocation2 + $0x90] sm:$0xff]
        %v963 = vld [vmem:[#allocation2 + $0x98] sm:$0xff]
        %v964 = vld [vmem:[#allocation2 + $0xa0] sm:$0xff]
        %v965 = vld [vmem:[#allocation2 + $0xa8] sm:$0xff]
        %v966 = vld [vmem:[#allocation2 + $0xb0] sm:$0xff]
        %v967 = vld [vmem:[#allocation2 + $0xb8] sm:$0xff]
        %v968 = vld [vmem:[#allocation2 + $0xc0] sm:$0xff]
        %v969 = vld [vmem:[#allocation2 + $0xc8] sm:$0xff]
        %v970 = vld [vmem:[#allocation2 + $0xd0] sm:$0xff]
        %v971 = vld [vmem:[#allocation2 + $0xd8] sm:$0xff]
        %v972 = vld [vmem:[#allocation2 + $0xe0] sm:$0xff]
        %v973 = vld [vmem:[#allocation2 + $0xe8] sm:$0xff]
        %v974 = vld [vmem:[#allocation2 + $0xf0] sm:$0xff]
        %v975 = vld [vmem:[#allocation2 + $0xf8] sm:$0xff]
        %v976 = vld [vmem:[%s333] sm:$0x1]
        %v978 = vlaneseq
        %v979 = vshrl.u32 %v978, 7
        %v980 = vsub.s32 0, %v979
        %v981 = vrot.slane %v976, %v980
        %v983 = vmul.f32 %v944, %v981
        %v984 = vmul.f32 %v945, %v981
        %v985 = vmul.f32 %v946, %v981
        %v986 = vmul.f32 %v947, %v981
        %v987 = vmul.f32 %v948, %v981
        %v988 = vmul.f32 %v949, %v981
        %v989 = vmul.f32 %v950, %v981
        %v990 = vmul.f32 %v951, %v981
        %v991 = vmul.f32 %v952, %v981
        %v992 = vmul.f32 %v953, %v981
        %v993 = vmul.f32 %v954, %v981
        %v994 = vmul.f32 %v955, %v981
        %v995 = vmul.f32 %v956, %v981
        %v996 = vmul.f32 %v957, %v981
        %v997 = vmul.f32 %v958, %v981
        %v998 = vmul.f32 %v959, %v981
        %v999 = vmul.f32 %v960, %v981
        %v1000 = vmul.f32 %v961, %v981
        %v1001 = vmul.f32 %v962, %v981
        %v1002 = vmul.f32 %v963, %v981
        %v1003 = vmul.f32 %v964, %v981
        %v1004 = vmul.f32 %v965, %v981
        %v1005 = vmul.f32 %v966, %v981
        %v1006 = vmul.f32 %v967, %v981
        %v1007 = vmul.f32 %v968, %v981
        %v1008 = vmul.f32 %v969, %v981
        %v1009 = vmul.f32 %v970, %v981
        %v1010 = vmul.f32 %v971, %v981
        %v1011 = vmul.f32 %v972, %v981
        %v1012 = vmul.f32 %v973, %v981
        %v1013 = vmul.f32 %v974, %v981
        %v1014 = vmul.f32 %v975, %v981
        %v1015 = vld [vmem:[%s336] sm:$0x1]
        %v1017 = vlaneseq
        %v1018 = vshrl.u32 %v1017, 7
        %v1019 = vsub.s32 0, %v1018
        %v1020 = vrot.slane %v1015, %v1019
        %v1022 = vadd.f32 %v983, %v1020
        %v1023 = vadd.f32 %v984, %v1020
        %v1024 = vadd.f32 %v985, %v1020
        %v1025 = vadd.f32 %v986, %v1020
        %v1026 = vadd.f32 %v987, %v1020
        %v1027 = vadd.f32 %v988, %v1020
        %v1028 = vadd.f32 %v989, %v1020
        %v1029 = vadd.f32 %v990, %v1020
        %v1030 = vadd.f32 %v991, %v1020
        %v1031 = vadd.f32 %v992, %v1020
        %v1032 = vadd.f32 %v993, %v1020
        %v1033 = vadd.f32 %v994, %v1020
        %v1034 = vadd.f32 %v995, %v1020
        %v1035 = vadd.f32 %v996, %v1020
        %v1036 = vadd.f32 %v997, %v1020
        %v1037 = vadd.f32 %v998, %v1020
        %v1038 = vadd.f32 %v999, %v1020
        %v1039 = vadd.f32 %v1000, %v1020
        %v1040 = vadd.f32 %v1001, %v1020
        %v1041 = vadd.f32 %v1002, %v1020
        %v1042 = vadd.f32 %v1003, %v1020
        %v1043 = vadd.f32 %v1004, %v1020
        %v1044 = vadd.f32 %v1005, %v1020
        %v1045 = vadd.f32 %v1006, %v1020
        %v1046 = vadd.f32 %v1007, %v1020
        %v1047 = vadd.f32 %v1008, %v1020
        %v1048 = vadd.f32 %v1009, %v1020
        %v1049 = vadd.f32 %v1010, %v1020
        %v1050 = vadd.f32 %v1011, %v1020
        %v1051 = vadd.f32 %v1012, %v1020
        %v1052 = vadd.f32 %v1013, %v1020
        %v1053 = vadd.f32 %v1014, %v1020
        %v1054 = vld [vmem:[%s339] sm:$0x1]
        %vm1055 = vcmp.gt.f32.partialorder %v1054, 0.0
        %v1056 = vmax.f32 %v1022, 0.0
        %v1057 = vmax.f32 %v1023, 0.0
        %v1058 = vmax.f32 %v1024, 0.0
        %v1059 = vmax.f32 %v1025, 0.0
        %v1060 = vmax.f32 %v1026, 0.0
        %v1061 = vmax.f32 %v1027, 0.0
        %v1062 = vmax.f32 %v1028, 0.0
        %v1063 = vmax.f32 %v1029, 0.0
        %v1064 = vmax.f32 %v1030, 0.0
        %v1065 = vmax.f32 %v1031, 0.0
        %v1066 = vmax.f32 %v1032, 0.0
        %v1067 = vmax.f32 %v1033, 0.0
        %v1068 = vmax.f32 %v1034, 0.0
        %v1069 = vmax.f32 %v1035, 0.0
        %v1070 = vmax.f32 %v1036, 0.0
        %v1071 = vmax.f32 %v1037, 0.0
        %v1072 = vmax.f32 %v1038, 0.0
        %v1073 = vmax.f32 %v1039, 0.0
        %v1074 = vmax.f32 %v1040, 0.0
        %v1075 = vmax.f32 %v1041, 0.0
        %v1076 = vmax.f32 %v1042, 0.0
        %v1077 = vmax.f32 %v1043, 0.0
        %v1078 = vmax.f32 %v1044, 0.0
        %v1079 = vmax.f32 %v1045, 0.0
        %v1080 = vmax.f32 %v1046, 0.0
        %v1081 = vmax.f32 %v1047, 0.0
        %v1082 = vmax.f32 %v1048, 0.0
        %v1083 = vmax.f32 %v1049, 0.0
        %v1084 = vmax.f32 %v1050, 0.0
        %v1085 = vmax.f32 %v1051, 0.0
        %v1086 = vmax.f32 %v1052, 0.0
        %v1087 = vmax.f32 %v1053, 0.0
        %v1088 = vsel %vm1055, 1, 0
        %v1089 = vlaneseq
        %v1090 = vshrl.u32 %v1089, 7
        %v1091 = vsub.s32 0, %v1090
        %v1092 = vrot.slane %v1088, %v1091
        %vm1093 = vcmp.eq.s32.totalorder %v1092, 1
        %v1094 = vsel %vm1093, %v1056, %v1022
        %v1095 = vsel %vm1093, %v1057, %v1023
        %v1096 = vsel %vm1093, %v1058, %v1024
        %v1097 = vsel %vm1093, %v1059, %v1025
        %v1098 = vsel %vm1093, %v1060, %v1026
        %v1099 = vsel %vm1093, %v1061, %v1027
        %v1100 = vsel %vm1093, %v1062, %v1028
        %v1101 = vsel %vm1093, %v1063, %v1029
        %v1102 = vsel %vm1093, %v1064, %v1030
        %v1103 = vsel %vm1093, %v1065, %v1031
        %v1104 = vsel %vm1093, %v1066, %v1032
        %v1105 = vsel %vm1093, %v1067, %v1033
        %v1106 = vsel %vm1093, %v1068, %v1034
        %v1107 = vsel %vm1093, %v1069, %v1035
        %v1108 = vsel %vm1093, %v1070, %v1036
        %v1109 = vsel %vm1093, %v1071, %v1037
        %v1110 = vsel %vm1093, %v1072, %v1038
        %v1111 = vsel %vm1093, %v1073, %v1039
        %v1112 = vsel %vm1093, %v1074, %v1040
        %v1113 = vsel %vm1093, %v1075, %v1041
        %v1114 = vsel %vm1093, %v1076, %v1042
        %v1115 = vsel %vm1093, %v1077, %v1043
        %v1116 = vsel %vm1093, %v1078, %v1044
        %v1117 = vsel %vm1093, %v1079, %v1045
        %v1118 = vsel %vm1093, %v1080, %v1046
        %v1119 = vsel %vm1093, %v1081, %v1047
        %v1120 = vsel %vm1093, %v1082, %v1048
        %v1121 = vsel %vm1093, %v1083, %v1049
        %v1122 = vsel %vm1093, %v1084, %v1050
        %v1123 = vsel %vm1093, %v1085, %v1051
        %v1124 = vsel %vm1093, %v1086, %v1052
        %v1125 = vsel %vm1093, %v1087, %v1053
        %1126 = vst.msk [vmem:[%s347] sm:$0xff] %vm667, %v1094
        %1127 = vst.msk [vmem:[%s347 + $0x8] sm:$0xff] %vm667, %v1095
        %1128 = vst.msk [vmem:[%s347 + $0x10] sm:$0xff] %vm667, %v1096
        %1129 = vst.msk [vmem:[%s347 + $0x18] sm:$0xff] %vm667, %v1097
        %1130 = vst.msk [vmem:[%s347 + $0x20] sm:$0xff] %vm667, %v1098
        %1131 = vst.msk [vmem:[%s347 + $0x28] sm:$0xff] %vm667, %v1099
        %1132 = vst.msk [vmem:[%s347 + $0x30] sm:$0xff] %vm667, %v1100
        %1133 = vst.msk [vmem:[%s347 + $0x38] sm:$0xff] %vm667, %v1101
        %1134 = vst.msk [vmem:[%s347 + $0x40] sm:$0xff] %vm667, %v1102
        %1135 = vst.msk [vmem:[%s347 + $0x48] sm:$0xff] %vm667, %v1103
        %1136 = vst.msk [vmem:[%s347 + $0x50] sm:$0xff] %vm667, %v1104
        %1137 = vst.msk [vmem:[%s347 + $0x58] sm:$0xff] %vm667, %v1105
        %1138 = vst.msk [vmem:[%s347 + $0x60] sm:$0xff] %vm667, %v1106
        %1139 = vst.msk [vmem:[%s347 + $0x68] sm:$0xff] %vm667, %v1107
        %1140 = vst.msk [vmem:[%s347 + $0x70] sm:$0xff] %vm667, %v1108
        %1141 = vst.msk [vmem:[%s347 + $0x78] sm:$0xff] %vm667, %v1109
        %1142 = vst.msk [vmem:[%s347 + $0x80] sm:$0xff] %vm667, %v1110
        %1143 = vst.msk [vmem:[%s347 + $0x88] sm:$0xff] %vm667, %v1111
        %1144 = vst.msk [vmem:[%s347 + $0x90] sm:$0xff] %vm667, %v1112
        %1145 = vst.msk [vmem:[%s347 + $0x98] sm:$0xff] %vm667, %v1113
        %1146 = vst.msk [vmem:[%s347 + $0xa0] sm:$0xff] %vm667, %v1114
        %1147 = vst.msk [vmem:[%s347 + $0xa8] sm:$0xff] %vm667, %v1115
        %1148 = vst.msk [vmem:[%s347 + $0xb0] sm:$0xff] %vm667, %v1116
        %1149 = vst.msk [vmem:[%s347 + $0xb8] sm:$0xff] %vm667, %v1117
        %1150 = vst.msk [vmem:[%s347 + $0xc0] sm:$0xff] %vm667, %v1118
        %1151 = vst.msk [vmem:[%s347 + $0xc8] sm:$0xff] %vm667, %v1119
        %1152 = vst.msk [vmem:[%s347 + $0xd0] sm:$0xff] %vm667, %v1120
        %1153 = vst.msk [vmem:[%s347 + $0xd8] sm:$0xff] %vm667, %v1121
        %1154 = vst.msk [vmem:[%s347 + $0xe0] sm:$0xff] %vm667, %v1122
        %1155 = vst.msk [vmem:[%s347 + $0xe8] sm:$0xff] %vm667, %v1123
        %1156 = vst.msk [vmem:[%s347 + $0xf0] sm:$0xff] %vm667, %v1124
        %1157 = vst.msk [vmem:[%s347 + $0xf8] sm:$0xff] %vm667, %v1125
      $region48: #{urresnet_forward.14} parent=39 // pred_fallthru
        _
      %s1158 = smul.u32 32, %s21
      %p1159 = scmp.lt.s32.totalorder %s1158, 63
      %s1160 = scalar_select %p1159, %s1158, 63
      %p1161 = scmp.lt.s32.totalorder %s22, 0
      %s1162 = scalar_select %p1161, %s22, 0
      %s1163 = sadd.s32 %s1162, %s1160
      %s1164 = smul.addr %s1163, 8
      %s1165 = scalar_lea.vmem %s5, %s1164
      // Predicated region
      $region49: #{urresnet_forward.14} parent=39 // pred_check
        %p1166 = pneg %p189
      $region50: #{urresnet_forward.14} parent=39 // pred_check_branch
        %1168 = sbr.rel (%p1166) target = $region52
      $region51: #{urresnet_forward.14} parent=39 // pred_region
        %s1169 = smul.u32 32, %s21
      $region52: #{urresnet_forward.14} parent=39 // pred_fallthru
        _
    $region40: #{urresnet_forward.14} parent=5 // pred_fallthru
      _
    %p1170 = scmp.le.s32.totalorder 2, %s11
    // Predicated region
    $region53: #{urresnet_forward.14} parent=5 // pred_check
      %p1171 = pneg %p1170
    $region54: #{urresnet_forward.14} parent=5 // pred_check_branch
      %1173 = sbr.rel (%p1171) target = $region56
    $region55: #{urresnet_forward.14} parent=5 // pred_region
      %s1174 = ssub.s32 %s11, 2
      // Predicated region
      $region57: #{urresnet_forward.14} parent=55 // pred_check
        %p1175 = pneg %p195
      $region58: #{urresnet_forward.14} parent=55 // pred_check_branch
        %1177 = sbr.rel (%p1175) target = $region60
      $region59: #{urresnet_forward.14} parent=55 // pred_region
        %s1178 = smul.u32 32, %s24
        %p1179 = scmp.lt.s32.totalorder %s1178, 63
        %s1180 = scalar_select %p1179, %s1178, 63
        %p1181 = scmp.lt.s32.totalorder %s25, 0
        %s1182 = scalar_select %p1181, %s25, 0
        %s1183 = sadd.s32 %s1182, %s1180
        %s1184 = smul.addr %s1183, 8
        %s1185 = scalar_lea.vmem %s5, %s1184
      $region60: #{urresnet_forward.14} parent=55 // pred_fallthru
        _
    $region56: #{urresnet_forward.14} parent=5 // pred_fallthru
      _
  $region6: #{urresnet_forward.14} parent=0 // loop_footer
    %s15 = sadd.s32 1, %s11
  $region7: #{urresnet_forward.14} parent=0 // loop_footer_branch
    %10 = sbr.rel target = $region3
  $region8: #{urresnet_forward.14} parent=0 // loop_exit
    _

// kernel: urresnet_forward.15
$region0: #{urresnet_forward.15}
  #allocation0 [shape = 'u32[]', space=smem, size = 0x4, offset = 0x4, fixed_abs, tag = 'smem constant byte address 0x4 - core index']
  #allocation1 [shape = 'u32[144,128]{1,0:T(1,128)}', space=vmem, size = 0x12000, scoped, tag = 'internal scratch']
  #allocation2 [shape = 'f32[256,16]{1,0:T(8,128)}', space=vmem, size = 0x20000, scoped, tag = 'scratch operand']
  %s0 = inlined_call_operand.vmem [shape: bf16[512,144], index: 0, kind: input, shape index: {}]
  %s1 = inlined_call_operand.vmem [shape: bf16[144,16], index: 1, kind: input, shape index: {}]
  %s2 = inlined_call_operand.vmem [shape: f32[1,16], index: 2, kind: input, shape index: {}]
  %s3 = inlined_call_operand.vmem [shape: f32[1,16], index: 3, kind: input, shape index: {}]
  %s4 = inlined_call_operand.vmem [shape: f32[1,16], index: 4, kind: input, shape index: {}]
  %s5 = inlined_call_operand.vmem [shape: f32[512,16], index: 5, kind: input, shape index: {}]
  %s6 = inlined_call_operand.vmem [shape: f32[512,16], index: 6, kind: output, shape index: {}]
  %s7 = sld [smem:[#allocation0]]
  $region65: #{urresnet_forward.15} parent=0
    _
  %s9 = ssub.s32 1, %s7
  %s10 = scalar_select 0, %s9, %s7
  loop: start=0, step=1, limit=4
  $region2: #{urresnet_forward.15} parent=0 // loop_pre_header
    _
  $region3: #{urresnet_forward.15} parent=0 // loop_header
    %s12 = sphi 0, %s16
    %p13 = scmp.ge.s32.totalorder %s12, 4
    %s19 = sphi 0, %s38
    %s20 = sphi 0, %s34
    %s21 = sphi 0, %s30
    %s22 = sphi 0, %s19
    %s23 = sphi 0, %s20
    %s24 = sphi 0, %s21
    %s25 = sphi 0, %s22
    %s26 = sphi 0, %s23
    %s27 = sphi 0, %s24
    %s43 = sphi 0, %s45
    %s46 = sphi 0, %s43
    %s47 = sphi 0, %s46
    %s63 = sphi 0, %s47
    %s71 = sphi 0, %s73
    %s74 = sphi 0, %s71
    %s75 = sphi 0, %s74
    %s91 = sphi 0, %s75
    %s97 = sphi 0, %s99
    %s100 = sphi 0, %s97
    %s101 = sphi 0, %s100
    %s117 = sphi 0, %s101
    %s123 = sphi 0, %s125
    %s126 = sphi 0, %s123
    %s127 = sphi 0, %s126
    %s143 = sphi 0, %s127
    %s149 = sphi 0, %s151
    %s152 = sphi 0, %s149
    %s153 = sphi 0, %s152
    %s169 = sphi 0, %s153
    %s177 = sphi 0, %s179
    %s180 = sphi 0, %s177
    %s181 = sphi 0, %s180
    %s197 = sphi 0, %s181
    %s205 = sphi 0, %s207
    %s208 = sphi 0, %s205
    %s209 = sphi 0, %s208
    %s225 = sphi 0, %s209
  $region4: #{urresnet_forward.15} parent=0 // loop_header_branch
    %15 = sbr.rel (%p13) target = $region8
  $region5: #{urresnet_forward.15} parent=0 // loop_body
    %s17 = ssub.s32 %s12, 1
    %s18 = ssub.s32 %s12, 2
    %s28 = sadd.s32 1, %s21
    %p29 = scmp.ge.s32.totalorder %s28, 1
    %s30 = scalar_select %p29, 0, %s28
    %s31 = sadd.s32 1, %s20
    %s32 = scalar_select %p29, %s31, %s20
    %p33 = scmp.ge.s32.totalorder %s32, 1
    %s34 = scalar_select %p33, 0, %s32
    %s35 = sadd.s32 1, %s19
    %s36 = scalar_select %p33, %s35, %s19
    %p37 = scmp.ge.s32.totalorder %s36, 2
    %s38 = scalar_select %p37, 0, %s36
    %s39 = ssub.s32 %s19, %s38
    %s40 = ssub.s32 %s21, %s30
    %s41 = sor.u32 %s39, %s40
    %p42 = scmp.eq.s32.totalorder %s41, 0
    %s44 = sadd.s32 %s43, 1
    %s45 = scalar_select %p42, %s43, %s44
    %p48 = pneg %p42
    %p49 = scmp.eq.s32.totalorder %s12, 1
    %p50 = por %p48, %p49
    %p51 = scmp.ne.s32.totalorder %s43, %s46
    %p52 = scmp.eq.s32.totalorder %s12, 0
    %p53 = por %p51, %p52
    %p54 = scmp.ne.s32.totalorder %s43, %s46
    %p55 = scmp.eq.s32.totalorder %s17, 1
    %p56 = por %p54, %p55
    %p57 = scmp.ne.s32.totalorder %s46, %s47
    %p58 = scmp.eq.s32.totalorder %s17, 0
    %p59 = por %p57, %p58
    %p60 = scmp.ne.s32.totalorder %s46, %s47
    %p61 = scmp.eq.s32.totalorder %s18, 1
    %p62 = por %p60, %p61
    %p64 = scmp.ne.s32.totalorder %s47, %s63
    %p65 = scmp.eq.s32.totalorder %s18, 0
    %p66 = por %p64, %p65
    %s67 = ssub.s32 %s21, %s30
    %s68 = ssub.s32 %s20, %s34
    %s69 = sor.u32 %s67, %s68
    %p70 = scmp.eq.s32.totalorder %s69, 0
    %s72 = sadd.s32 %s71, 1
    %s73 = scalar_select %p70, %s71, %s72
    %p76 = pneg %p70
    %p77 = scmp.eq.s32.totalorder %s12, 1
    %p78 = por %p76, %p77
    %p79 = scmp.ne.s32.totalorder %s71, %s74
    %p80 = scmp.eq.s32.totalorder %s12, 0
    %p81 = por %p79, %p80
    %p82 = scmp.ne.s32.totalorder %s71, %s74
    %p83 = scmp.eq.s32.totalorder %s17, 1
    %p84 = por %p82, %p83
    %p85 = scmp.ne.s32.totalorder %s74, %s75
    %p86 = scmp.eq.s32.totalorder %s17, 0
    %p87 = por %p85, %p86
    %p88 = scmp.ne.s32.totalorder %s74, %s75
    %p89 = scmp.eq.s32.totalorder %s18, 1
    %p90 = por %p88, %p89
    %p92 = scmp.ne.s32.totalorder %s75, %s91
    %p93 = scmp.eq.s32.totalorder %s18, 0
    %p94 = por %p92, %p93
    %s95 = ssub.s32 %s20, %s34
    %p96 = scmp.eq.s32.totalorder %s95, 0
    %s98 = sadd.s32 %s97, 1
    %s99 = scalar_select %p96, %s97, %s98
    %p102 = pneg %p96
    %p103 = scmp.eq.s32.totalorder %s12, 1
    %p104 = por %p102, %p103
    %p105 = scmp.ne.s32.totalorder %s97, %s100
    %p106 = scmp.eq.s32.totalorder %s12, 0
    %p107 = por %p105, %p106
    %p108 = scmp.ne.s32.totalorder %s97, %s100
    %p109 = scmp.eq.s32.totalorder %s17, 1
    %p110 = por %p108, %p109
    %p111 = scmp.ne.s32.totalorder %s100, %s101
    %p112 = scmp.eq.s32.totalorder %s17, 0
    %p113 = por %p111, %p112
    %p114 = scmp.ne.s32.totalorder %s100, %s101
    %p115 = scmp.eq.s32.totalorder %s18, 1
    %p116 = por %p114, %p115
    %p118 = scmp.ne.s32.totalorder %s101, %s117
    %p119 = scmp.eq.s32.totalorder %s18, 0
    %p120 = por %p118, %p119
    %s121 = ssub.s32 %s20, %s34
    %p122 = scmp.eq.s32.totalorder %s121, 0
    %s124 = sadd.s32 %s123, 1
    %s125 = scalar_select %p122, %s123, %s124
    %p128 = pneg %p122
    %p129 = scmp.eq.s32.totalorder %s12, 1
    %p130 = por %p128, %p129
    %p131 = scmp.ne.s32.totalorder %s123, %s126
    %p132 = scmp.eq.s32.totalorder %s12, 0
    %p133 = por %p131, %p132
    %p134 = scmp.ne.s32.totalorder %s123, %s126
    %p135 = scmp.eq.s32.totalorder %s17, 1
    %p136 = por %p134, %p135
    %p137 = scmp.ne.s32.totalorder %s126, %s127
    %p138 = scmp.eq.s32.totalorder %s17, 0
    %p139 = por %p137, %p138
    %p140 = scmp.ne.s32.totalorder %s126, %s127
    %p141 = scmp.eq.s32.totalorder %s18, 1
    %p142 = por %p140, %p141
    %p144 = scmp.ne.s32.totalorder %s127, %s143
    %p145 = scmp.eq.s32.totalorder %s18, 0
    %p146 = por %p144, %p145
    %s147 = ssub.s32 %s20, %s34
    %p148 = scmp.eq.s32.totalorder %s147, 0
    %s150 = sadd.s32 %s149, 1
    %s151 = scalar_select %p148, %s149, %s150
    %p154 = pneg %p148
    %p155 = scmp.eq.s32.totalorder %s12, 1
    %p156 = por %p154, %p155
    %p157 = scmp.ne.s32.totalorder %s149, %s152
    %p158 = scmp.eq.s32.totalorder %s12, 0
    %p159 = por %p157, %p158
    %p160 = scmp.ne.s32.totalorder %s149, %s152
    %p161 = scmp.eq.s32.totalorder %s17, 1
    %p162 = por %p160, %p161
    %p163 = scmp.ne.s32.totalorder %s152, %s153
    %p164 = scmp.eq.s32.totalorder %s17, 0
    %p165 = por %p163, %p164
    %p166 = scmp.ne.s32.totalorder %s152, %s153
    %p167 = scmp.eq.s32.totalorder %s18, 1
    %p168 = por %p166, %p167
    %p170 = scmp.ne.s32.totalorder %s153, %s169
    %p171 = scmp.eq.s32.totalorder %s18, 0
    %p172 = por %p170, %p171
    %s173 = ssub.s32 %s19, %s38
    %s174 = ssub.s32 %s20, %s34
    %s175 = sor.u32 %s173, %s174
    %p176 = scmp.eq.s32.totalorder %s175, 0
    %s178 = sadd.s32 %s177, 1
    %s179 = scalar_select %p176, %s177, %s178
    %p182 = pneg %p176
    %p183 = scmp.eq.s32.totalorder %s12, 1
    %p184 = por %p182, %p183
    %p185 = scmp.ne.s32.totalorder %s177, %s180
    %p186 = scmp.eq.s32.totalorder %s12, 0
    %p187 = por %p185, %p186
    %p188 = scmp.ne.s32.totalorder %s177, %s180
    %p189 = scmp.eq.s32.totalorder %s17, 1
    %p190 = por %p188, %p189
    %p191 = scmp.ne.s32.totalorder %s180, %s181
    %p192 = scmp.eq.s32.totalorder %s17, 0
    %p193 = por %p191, %p192
    %p194 = scmp.ne.s32.totalorder %s180, %s181
    %p195 = scmp.eq.s32.totalorder %s18, 1
    %p196 = por %p194, %p195
    %p198 = scmp.ne.s32.totalorder %s181, %s197
    %p199 = scmp.eq.s32.totalorder %s18, 0
    %p200 = por %p198, %p199
    %s201 = ssub.s32 %s19, %s38
    %s202 = ssub.s32 %s20, %s34
    %s203 = sor.u32 %s201, %s202
    %p204 = scmp.eq.s32.totalorder %s203, 0
    %s206 = sadd.s32 %s205, 1
    %s207 = scalar_select %p204, %s205, %s206
    %p210 = pneg %p204
    %p211 = scmp.eq.s32.totalorder %s12, 1
    %p212 = por %p210, %p211
    %p213 = scmp.ne.s32.totalorder %s205, %s208
    %p214 = scmp.eq.s32.totalorder %s12, 0
    %p215 = por %p213, %p214
    %p216 = scmp.ne.s32.totalorder %s205, %s208
    %p217 = scmp.eq.s32.totalorder %s17, 1
    %p218 = por %p216, %p217
    %p219 = scmp.ne.s32.totalorder %s208, %s209
    %p220 = scmp.eq.s32.totalorder %s17, 0
    %p221 = por %p219, %p220
    %p222 = scmp.ne.s32.totalorder %s208, %s209
    %p223 = scmp.eq.s32.totalorder %s18, 1
    %p224 = por %p222, %p223
    %p226 = scmp.ne.s32.totalorder %s209, %s225
    %p227 = scmp.eq.s32.totalorder %s18, 0
    %p228 = por %p226, %p227
    %p229 = scmp.le.s32.totalorder 1, %s12
    %p230 = scmp.lt.s32.totalorder %s12, 3
    %p231 = pnand %p229, %p230
    %p232 = pneg %p231
    // Predicated region
    $region9: #{urresnet_forward.15} parent=5 // pred_check
      _
    $region10: #{urresnet_forward.15} parent=5 // pred_check_branch
      %234 = sbr.rel (%p231) target = $region12
    $region11: #{urresnet_forward.15} parent=5 // pred_region
      %s235 = ssub.s32 %s12, 1
      // Predicated region
      $region13: #{urresnet_forward.15} parent=11 // pred_check
        %p236 = pneg %p87
      $region14: #{urresnet_forward.15} parent=11 // pred_check_branch
        %238 = sbr.rel (%p236) target = $region16
      $region15: #{urresnet_forward.15} parent=11 // pred_region
        %s239 = smul.u32 18, %s24
        %p240 = scmp.lt.s32.totalorder %s239, 17
        %s241 = scalar_select %p240, %s239, 17
        %p242 = scmp.lt.s32.totalorder %s23, 0
        %s243 = scalar_select %p242, %s23, 0
        %s244 = sadd.s32 %s243, %s241
        %s245 = smul.addr %s244, 4
        %s246 = scalar_lea.vmem %s1, %s245
        %s247 = smul.u32 18, %s24
      $region16: #{urresnet_forward.15} parent=11 // pred_fallthru
        _
      // Predicated region
      $region17: #{urresnet_forward.15} parent=11 // pred_check
        %p248 = pneg %p113
      $region18: #{urresnet_forward.15} parent=11 // pred_check_branch
        %250 = sbr.rel (%p248) target = $region20
      $region19: #{urresnet_forward.15} parent=11 // pred_region
        %p251 = scmp.lt.s32.totalorder %s23, 0
        %s252 = scalar_select %p251, %s23, 0
        %s253 = scalar_lea.vmem %s2, %s252
      $region20: #{urresnet_forward.15} parent=11 // pred_fallthru
        _
      // Predicated region
      $region21: #{urresnet_forward.15} parent=11 // pred_check
        %p254 = pneg %p139
      $region22: #{urresnet_forward.15} parent=11 // pred_check_branch
        %256 = sbr.rel (%p254) target = $region24
      $region23: #{urresnet_forward.15} parent=11 // pred_region
        %p257 = scmp.lt.s32.totalorder %s23, 0
        %s258 = scalar_select %p257, %s23, 0
        %s259 = scalar_lea.vmem %s3, %s258
      $region24: #{urresnet_forward.15} parent=11 // pred_fallthru
        _
      // Predicated region
      $region25: #{urresnet_forward.15} parent=11 // pred_check
        %p260 = pneg %p165
      $region26: #{urresnet_forward.15} parent=11 // pred_check_branch
        %262 = sbr.rel (%p260) target = $region28
      $region27: #{urresnet_forward.15} parent=11 // pred_region
        %p263 = scmp.lt.s32.totalorder %s23, 0
        %s264 = scalar_select %p263, %s23, 0
        %s265 = scalar_lea.vmem %s4, %s264
      $region28: #{urresnet_forward.15} parent=11 // pred_fallthru
        _
    $region12: #{urresnet_forward.15} parent=5 // pred_fallthru
      _
    %p266 = scmp.lt.s32.totalorder %s12, 2
    // Predicated region
    $region29: #{urresnet_forward.15} parent=5 // pred_check
      %p267 = pneg %p266
    $region30: #{urresnet_forward.15} parent=5 // pred_check_branch
      %269 = sbr.rel (%p267) target = $region32
    $region31: #{urresnet_forward.15} parent=5 // pred_region
      // Predicated region
      $region33: #{urresnet_forward.15} parent=31 // pred_check
        %p270 = pneg %p53
      $region34: #{urresnet_forward.15} parent=31 // pred_check_branch
        %272 = sbr.rel (%p270) target = $region36
      $region35: #{urresnet_forward.15} parent=31 // pred_region
        %s273 = smul.u32 32, %s19
        %s274 = smul.u32 2, %s21
        %p275 = scmp.lt.s32.totalorder %s273, 63
        %s276 = scalar_select %p275, %s273, 63
        %p277 = scmp.lt.s32.totalorder %s274, 1
        %s278 = scalar_select %p277, %s274, 1
        %s279 = smul.addr %s276, 2
        %s280 = sadd.s32 %s278, %s279
        %s281 = smul.addr %s280, 4
        %s282 = scalar_lea.vmem %s0, %s281
        %s283 = smul.u32 32, %s19
        %s284 = smul.u32 2, %s21
      $region36: #{urresnet_forward.15} parent=31 // pred_fallthru
        _
      // Predicated region
      $region37: #{urresnet_forward.15} parent=31 // pred_check
        %p285 = pneg %p187
      $region38: #{urresnet_forward.15} parent=31 // pred_check_branch
        %287 = sbr.rel (%p285) target = $region40
      $region39: #{urresnet_forward.15} parent=31 // pred_region
        %s288 = smul.u32 32, %s19
        %p289 = scmp.lt.s32.totalorder %s288, 63
        %s290 = scalar_select %p289, %s288, 63
        %p291 = scmp.lt.s32.totalorder %s20, 0
        %s292 = scalar_select %p291, %s20, 0
        %s293 = sadd.s32 %s292, %s290
        %s294 = smul.addr %s293, 8
        %s295 = scalar_lea.vmem %s5, %s294
        %s296 = smul.u32 32, %s19
      $region40: #{urresnet_forward.15} parent=31 // pred_fallthru
        _
    $region32: #{urresnet_forward.15} parent=5 // pred_fallthru
      _
    %p297 = scmp.le.s32.totalorder 1, %s12
    %p298 = scmp.lt.s32.totalorder %s12, 3
    %p299 = pnand %p297, %p298
    %p300 = pneg %p299
    // Predicated region
    $region41: #{urresnet_forward.15} parent=5 // pred_check
      _
    $region42: #{urresnet_forward.15} parent=5 // pred_check_branch
      %302 = sbr.rel (%p299) target = $region44
    $region43: #{urresnet_forward.15} parent=5 // pred_region
      %s303 = ssub.s32 %s12, 1
      %s304 = smul.u32 32, %s22
      %s305 = smul.u32 2, %s24
      %p306 = scmp.lt.s32.totalorder %s304, 63
      %s307 = scalar_select %p306, %s304, 63
      %p308 = scmp.lt.s32.totalorder %s305, 1
      %s309 = scalar_select %p308, %s305, 1
      %s310 = smul.addr %s307, 2
      %s311 = sadd.s32 %s309, %s310
      %s312 = smul.addr %s311, 4
      %s313 = scalar_lea.vmem %s0, %s312
      %p314 = pneg %p59
      %p315 = pneg %p56
      %s316 = smul.u32 18, %s24
      %p317 = scmp.lt.s32.totalorder %s316, 17
      %s318 = scalar_select %p317, %s316, 17
      %p319 = scmp.lt.s32.totalorder %s23, 0
      %s320 = scalar_select %p319, %s23, 0
      %s321 = sadd.s32 %s320, %s318
      %s322 = smul.addr %s321, 4
      %s323 = scalar_lea.vmem %s1, %s322
      %p324 = pneg %p87
      %p325 = pneg %p84
      %p326 = scmp.lt.s32.totalorder %s23, 0
      %s327 = scalar_select %p326, %s23, 0
      %s328 = scalar_lea.vmem %s2, %s327
      %p329 = pneg %p113
      %p330 = pneg %p110
      %p331 = scmp.lt.s32.totalorder %s23, 0
      %s332 = scalar_select %p331, %s23, 0
      %s333 = scalar_lea.vmem %s3, %s332
      %p334 = pneg %p139
      %p335 = pneg %p136
      %p336 = scmp.lt.s32.totalorder %s23, 0
      %s337 = scalar_select %p336, %s23, 0
      %s338 = scalar_lea.vmem %s4, %s337
      %p339 = pneg %p165
      %p340 = pneg %p162
      %s341 = smul.u32 32, %s22
      %p342 = scmp.lt.s32.totalorder %s341, 63
      %s343 = scalar_select %p342, %s341, 63
      %p344 = scmp.lt.s32.totalorder %s23, 0
      %s345 = scalar_select %p344, %s23, 0
      %s346 = sadd.s32 %s345, %s343
      %s347 = smul.addr %s346, 8
      %s348 = scalar_lea.vmem %s5, %s347
      %p349 = pneg %p193
      %p350 = pneg %p190
      %p351 = pneg %p221
      %p352 = pneg %p218
      %s353 = smul.u32 32, %s22
      %p354 = scmp.lt.s32.totalorder %s353, 63
      %s355 = scalar_select %p354, %s353, 63
      %p356 = scmp.lt.s32.totalorder %s23, 0
      %s357 = scalar_select %p356, %s23, 0
      %s358 = sadd.s32 %s357, %s355
      %s359 = smul.addr %s358, 8
      %s360 = scalar_lea.vmem %s6, %s359
      %s361 = smul.u32 32, %s22
      %s362 = smul.u32 2, %s24
      %p363 = scmp.lt.s32.totalorder %s361, 63
      %s364 = scalar_select %p363, %s361, 63
      %p365 = scmp.lt.s32.totalorder %s362, 1
      %s366 = scalar_select %p365, %s362, 1
      %s367 = smul.addr %s364, 2
      %s368 = sadd.s32 %s366, %s367
      %s369 = smul.addr %s368, 4
      %s370 = scalar_lea.vmem %s0, %s369
      %s371 = smul.u32 32, %s22
      %s372 = smul.u32 2, %s24
      %s373 = smul.u32 18, %s24
      %p374 = scmp.lt.s32.totalorder %s373, 17
      %s375 = scalar_select %p374, %s373, 17
      %p376 = scmp.lt.s32.totalorder %s23, 0
      %s377 = scalar_select %p376, %s23, 0
      %s378 = sadd.s32 %s377, %s375
      %s379 = smul.addr %s378, 4
      %s380 = scalar_lea.vmem %s1, %s379
      %s381 = smul.u32 18, %s24
      %p382 = scmp.lt.s32.totalorder %s23, 0
      %s383 = scalar_select %p382, %s23, 0
      %s384 = scalar_lea.vmem %s2, %s383
      %p385 = scmp.lt.s32.totalorder %s23, 0
      %s386 = scalar_select %p385, %s23, 0
      %s387 = scalar_lea.vmem %s3, %s386
      %p388 = scmp.lt.s32.totalorder %s23, 0
      %s389 = scalar_select %p388, %s23, 0
      %s390 = scalar_lea.vmem %s4, %s389
      %s391 = smul.u32 32, %s22
      %p392 = scmp.lt.s32.totalorder %s391, 63
      %s393 = scalar_select %p392, %s391, 63
      %p394 = scmp.lt.s32.totalorder %s23, 0
      %s395 = scalar_select %p394, %s23, 0
      %s396 = sadd.s32 %s395, %s393
      %s397 = smul.addr %s396, 8
      %s398 = scalar_lea.vmem %s5, %s397
      %s399 = smul.u32 32, %s22
      %s400 = smul.u32 32, %s22
      %p401 = scmp.lt.s32.totalorder %s400, 63
      %s402 = scalar_select %p401, %s400, 63
      %p403 = scmp.lt.s32.totalorder %s23, 0
      %s404 = scalar_select %p403, %s23, 0
      %s405 = sadd.s32 %s404, %s402
      %s406 = smul.addr %s405, 8
      %s407 = scalar_lea.vmem %s6, %s406
      %s408 = smul.u32 32, %s22
      %p410 = scmp.eq.s32.totalorder %s24, 0
      // Predicated region
      $region45: #{urresnet_forward.15} parent=43 // pred_check
        %p411 = pneg %p410
      $region46: #{urresnet_forward.15} parent=43 // pred_check_branch
        %413 = sbr.rel (%p411) target = $region48
      $region47: #{urresnet_forward.15} parent=43 // pred_region
        %vm414 = vcmask 130048
        %415 = vst.msk [vmem:[#allocation2] sm:$0xff] %vm414, 0.0
        %416 = vst.msk [vmem:[#allocation2 + $0x8] sm:$0xff] %vm414, 0.0
        %417 = vst.msk [vmem:[#allocation2 + $0x10] sm:$0xff] %vm414, 0.0
        %418 = vst.msk [vmem:[#allocation2 + $0x18] sm:$0xff] %vm414, 0.0
        %419 = vst.msk [vmem:[#allocation2 + $0x20] sm:$0xff] %vm414, 0.0
        %420 = vst.msk [vmem:[#allocation2 + $0x28] sm:$0xff] %vm414, 0.0
        %421 = vst.msk [vmem:[#allocation2 + $0x30] sm:$0xff] %vm414, 0.0
        %422 = vst.msk [vmem:[#allocation2 + $0x38] sm:$0xff] %vm414, 0.0
        %423 = vst.msk [vmem:[#allocation2 + $0x40] sm:$0xff] %vm414, 0.0
        %424 = vst.msk [vmem:[#allocation2 + $0x48] sm:$0xff] %vm414, 0.0
        %425 = vst.msk [vmem:[#allocation2 + $0x50] sm:$0xff] %vm414, 0.0
        %426 = vst.msk [vmem:[#allocation2 + $0x58] sm:$0xff] %vm414, 0.0
        %427 = vst.msk [vmem:[#allocation2 + $0x60] sm:$0xff] %vm414, 0.0
        %428 = vst.msk [vmem:[#allocation2 + $0x68] sm:$0xff] %vm414, 0.0
        %429 = vst.msk [vmem:[#allocation2 + $0x70] sm:$0xff] %vm414, 0.0
        %430 = vst.msk [vmem:[#allocation2 + $0x78] sm:$0xff] %vm414, 0.0
        %431 = vst.msk [vmem:[#allocation2 + $0x80] sm:$0xff] %vm414, 0.0
        %432 = vst.msk [vmem:[#allocation2 + $0x88] sm:$0xff] %vm414, 0.0
        %433 = vst.msk [vmem:[#allocation2 + $0x90] sm:$0xff] %vm414, 0.0
        %434 = vst.msk [vmem:[#allocation2 + $0x98] sm:$0xff] %vm414, 0.0
        %435 = vst.msk [vmem:[#allocation2 + $0xa0] sm:$0xff] %vm414, 0.0
        %436 = vst.msk [vmem:[#allocation2 + $0xa8] sm:$0xff] %vm414, 0.0
        %437 = vst.msk [vmem:[#allocation2 + $0xb0] sm:$0xff] %vm414, 0.0
        %438 = vst.msk [vmem:[#allocation2 + $0xb8] sm:$0xff] %vm414, 0.0
        %439 = vst.msk [vmem:[#allocation2 + $0xc0] sm:$0xff] %vm414, 0.0
        %440 = vst.msk [vmem:[#allocation2 + $0xc8] sm:$0xff] %vm414, 0.0
        %441 = vst.msk [vmem:[#allocation2 + $0xd0] sm:$0xff] %vm414, 0.0
        %442 = vst.msk [vmem:[#allocation2 + $0xd8] sm:$0xff] %vm414, 0.0
        %443 = vst.msk [vmem:[#allocation2 + $0xe0] sm:$0xff] %vm414, 0.0
        %444 = vst.msk [vmem:[#allocation2 + $0xe8] sm:$0xff] %vm414, 0.0
        %445 = vst.msk [vmem:[#allocation2 + $0xf0] sm:$0xff] %vm414, 0.0
        %446 = vst.msk [vmem:[#allocation2 + $0xf8] sm:$0xff] %vm414, 0.0
      $region48: #{urresnet_forward.15} parent=43 // pred_fallthru
        _
      %v447 = vld [vmem:[#allocation2] sm:$0xff]
      %v448 = vld [vmem:[#allocation2 + $0x8] sm:$0xff]
      %v449 = vld [vmem:[#allocation2 + $0x10] sm:$0xff]
      %v450 = vld [vmem:[#allocation2 + $0x18] sm:$0xff]
      %v451 = vld [vmem:[#allocation2 + $0x20] sm:$0xff]
      %v452 = vld [vmem:[#allocation2 + $0x28] sm:$0xff]
      %v453 = vld [vmem:[#allocation2 + $0x30] sm:$0xff]
      %v454 = vld [vmem:[#allocation2 + $0x38] sm:$0xff]
      %v455 = vld [vmem:[#allocation2 + $0x40] sm:$0xff]
      %v456 = vld [vmem:[#allocation2 + $0x48] sm:$0xff]
      %v457 = vld [vmem:[#allocation2 + $0x50] sm:$0xff]
      %v458 = vld [vmem:[#allocation2 + $0x58] sm:$0xff]
      %v459 = vld [vmem:[#allocation2 + $0x60] sm:$0xff]
      %v460 = vld [vmem:[#allocation2 + $0x68] sm:$0xff]
      %v461 = vld [vmem:[#allocation2 + $0x70] sm:$0xff]
      %v462 = vld [vmem:[#allocation2 + $0x78] sm:$0xff]
      %v463 = vld [vmem:[#allocation2 + $0x80] sm:$0xff]
      %v464 = vld [vmem:[#allocation2 + $0x88] sm:$0xff]
      %v465 = vld [vmem:[#allocation2 + $0x90] sm:$0xff]
      %v466 = vld [vmem:[#allocation2 + $0x98] sm:$0xff]
      %v467 = vld [vmem:[#allocation2 + $0xa0] sm:$0xff]
      %v468 = vld [vmem:[#allocation2 + $0xa8] sm:$0xff]
      %v469 = vld [vmem:[#allocation2 + $0xb0] sm:$0xff]
      %v470 = vld [vmem:[#allocation2 + $0xb8] sm:$0xff]
      %v471 = vld [vmem:[#allocation2 + $0xc0] sm:$0xff]
      %v472 = vld [vmem:[#allocation2 + $0xc8] sm:$0xff]
      %v473 = vld [vmem:[#allocation2 + $0xd0] sm:$0xff]
      %v474 = vld [vmem:[#allocation2 + $0xd8] sm:$0xff]
      %v475 = vld [vmem:[#allocation2 + $0xe0] sm:$0xff]
      %v476 = vld [vmem:[#allocation2 + $0xe8] sm:$0xff]
      %v477 = vld [vmem:[#allocation2 + $0xf0] sm:$0xff]
      %v478 = vld [vmem:[#allocation2 + $0xf8] sm:$0xff]
      %v479 = vld [vmem:[%s370] sm:$0xff]
      %v480 = vld [vmem:[%s370 + $0x8] sm:$0xff]
      %v481 = vld [vmem:[%s370 + $0x10] sm:$0xff]
      %v482 = vld [vmem:[%s370 + $0x18] sm:$0xff]
      %v483 = vld [vmem:[%s370 + $0x20] sm:$0xff]
      %v484 = vld [vmem:[%s370 + $0x28] sm:$0xff]
      %v485 = vld [vmem:[%s370 + $0x30] sm:$0xff]
      %v486 = vld [vmem:[%s370 + $0x38] sm:$0xff]
      %v487 = vld [vmem:[%s370 + $0x40] sm:$0xff]
      %v488 = vld [vmem:[%s370 + $0x48] sm:$0xff]
      %v489 = vld [vmem:[%s370 + $0x50] sm:$0xff]
      %v490 = vld [vmem:[%s370 + $0x58] sm:$0xff]
      %v491 = vld [vmem:[%s370 + $0x60] sm:$0xff]
      %v492 = vld [vmem:[%s370 + $0x68] sm:$0xff]
      %v493 = vld [vmem:[%s370 + $0x70] sm:$0xff]
      %v494 = vld [vmem:[%s370 + $0x78] sm:$0xff]
      %v495 = vld [vmem:[%s370 + $0x80] sm:$0xff]
      %v496 = vld [vmem:[%s370 + $0x88] sm:$0xff]
      %v497 = vld [vmem:[%s370 + $0x90] sm:$0xff]
      %v498 = vld [vmem:[%s370 + $0x98] sm:$0xff]
      %v499 = vld [vmem:[%s370 + $0xa0] sm:$0xff]
      %v500 = vld [vmem:[%s370 + $0xa8] sm:$0xff]
      %v501 = vld [vmem:[%s370 + $0xb0] sm:$0xff]
      %v502 = vld [vmem:[%s370 + $0xb8] sm:$0xff]
      %v503 = vld [vmem:[%s370 + $0xc0] sm:$0xff]
      %v504 = vld [vmem:[%s370 + $0xc8] sm:$0xff]
      %v505 = vld [vmem:[%s370 + $0xd0] sm:$0xff]
      %v506 = vld [vmem:[%s370 + $0xd8] sm:$0xff]
      %v507 = vld [vmem:[%s370 + $0xe0] sm:$0xff]
      %v508 = vld [vmem:[%s370 + $0xe8] sm:$0xff]
      %v509 = vld [vmem:[%s370 + $0xf0] sm:$0xff]
      %v510 = vld [vmem:[%s370 + $0xf8] sm:$0xff]
      %v511 = vld [vmem:[%s380] sm:$0xf]
      %v512 = vld [vmem:[%s380 + $0x4] sm:$0xf]
      %v513 = vld [vmem:[%s380 + $0x8] sm:$0xf]
      %v514 = vld [vmem:[%s380 + $0xc] sm:$0xf]
      %v515 = vld [vmem:[%s380 + $0x10] sm:$0xf]
      %v516 = vld [vmem:[%s380 + $0x14] sm:$0xf]
      %v517 = vld [vmem:[%s380 + $0x18] sm:$0xf]
      %v518 = vld [vmem:[%s380 + $0x1c] sm:$0xf]
      %v519 = vld [vmem:[%s380 + $0x20] sm:$0xf]
      %v520 = vld [vmem:[%s380 + $0x24] sm:$0xf]
      %v521 = vld [vmem:[%s380 + $0x28] sm:$0xf]
      %v522 = vld [vmem:[%s380 + $0x2c] sm:$0xf]
      %v523 = vld [vmem:[%s380 + $0x30] sm:$0xf]
      %v524 = vld [vmem:[%s380 + $0x34] sm:$0xf]
      %v525 = vld [vmem:[%s380 + $0x38] sm:$0xf]
      %v526 = vld [vmem:[%s380 + $0x3c] sm:$0xf]
      %v527 = vld [vmem:[%s380 + $0x40] sm:$0xf]
      %v528 = vld [vmem:[%s380 + $0x44] sm:$0xf]
      %v561 = vunpack.c.l.b16 %v479
      %v562 = vunpack.c.h.b16 %v479
      %v563 = vunpack.c.l.b16 %v480
      %v564 = vunpack.c.h.b16 %v480
      %v565 = vunpack.c.l.b16 %v481
      %v566 = vunpack.c.h.b16 %v481
      %v567 = vunpack.c.l.b16 %v482
      %v568 = vunpack.c.h.b16 %v482
      %v569 = vunpack.c.l.b16 %v483
      %v570 = vunpack.c.h.b16 %v483
      %v571 = vunpack.c.l.b16 %v484
      %v572 = vunpack.c.h.b16 %v484
      %v573 = vunpack.c.l.b16 %v485
      %v574 = vunpack.c.h.b16 %v485
      %v575 = vunpack.c.l.b16 %v486
      %v576 = vunpack.c.h.b16 %v486
      %v577 = vunpack.c.l.b16 %v487
      %v578 = vunpack.c.h.b16 %v487
      %v579 = vunpack.c.l.b16 %v488
      %v580 = vunpack.c.h.b16 %v488
      %v581 = vunpack.c.l.b16 %v489
      %v582 = vunpack.c.h.b16 %v489
      %v583 = vunpack.c.l.b16 %v490
      %v584 = vunpack.c.h.b16 %v490
      %v585 = vunpack.c.l.b16 %v491
      %v586 = vunpack.c.h.b16 %v491
      %v587 = vunpack.c.l.b16 %v492
      %v588 = vunpack.c.h.b16 %v492
      %v589 = vunpack.c.l.b16 %v493
      %v590 = vunpack.c.h.b16 %v493
      %v591 = vunpack.c.l.b16 %v494
      %v592 = vunpack.c.h.b16 %v494
      %v593 = vunpack.c.l.b16 %v495
      %v594 = vunpack.c.h.b16 %v495
      %v595 = vunpack.c.l.b16 %v496
      %v596 = vunpack.c.h.b16 %v496
      %v597 = vunpack.c.l.b16 %v497
      %v598 = vunpack.c.h.b16 %v497
      %v599 = vunpack.c.l.b16 %v498
      %v600 = vunpack.c.h.b16 %v498
      %v601 = vunpack.c.l.b16 %v499
      %v602 = vunpack.c.h.b16 %v499
      %v603 = vunpack.c.l.b16 %v500
      %v604 = vunpack.c.h.b16 %v500
      %v605 = vunpack.c.l.b16 %v501
      %v606 = vunpack.c.h.b16 %v501
      %v607 = vunpack.c.l.b16 %v502
      %v608 = vunpack.c.h.b16 %v502
      %v609 = vunpack.c.l.b16 %v503
      %v610 = vunpack.c.h.b16 %v503
      %v611 = vunpack.c.l.b16 %v504
      %v612 = vunpack.c.h.b16 %v504
      %v613 = vunpack.c.l.b16 %v505
      %v614 = vunpack.c.h.b16 %v505
      %v615 = vunpack.c.l.b16 %v506
      %v616 = vunpack.c.h.b16 %v506
      %v617 = vunpack.c.l.b16 %v507
      %v618 = vunpack.c.h.b16 %v507
      %v619 = vunpack.c.l.b16 %v508
      %v620 = vunpack.c.h.b16 %v508
      %v621 = vunpack.c.l.b16 %v509
      %v622 = vunpack.c.h.b16 %v509
      %v623 = vunpack.c.l.b16 %v510
      %v624 = vunpack.c.h.b16 %v510
      %v625 = vpack.c.b16 %v563, %v561
      %v626 = vpack.c.b16 %v564, %v562
      %v627 = vpack.c.b16 %v567, %v565
      %v628 = vpack.c.b16 %v568, %v566
      %v629 = vpack.c.b16 %v571, %v569
      %v630 = vpack.c.b16 %v572, %v570
      %v631 = vpack.c.b16 %v575, %v573
      %v632 = vpack.c.b16 %v576, %v574
      %v633 = vpack.c.b16 %v579, %v577
      %v634 = vpack.c.b16 %v580, %v578
      %v635 = vpack.c.b16 %v583, %v581
      %v636 = vpack.c.b16 %v584, %v582
      %v637 = vpack.c.b16 %v587, %v585
      %v638 = vpack.c.b16 %v588, %v586
      %v639 = vpack.c.b16 %v591, %v589
      %v640 = vpack.c.b16 %v592, %v590
      %v641 = vpack.c.b16 %v595, %v593
      %v642 = vpack.c.b16 %v596, %v594
      %v643 = vpack.c.b16 %v599, %v597
      %v644 = vpack.c.b16 %v600, %v598
      %v645 = vpack.c.b16 %v603, %v601
      %v646 = vpack.c.b16 %v604, %v602
      %v647 = vpack.c.b16 %v607, %v605
      %v648 = vpack.c.b16 %v608, %v606
      %v649 = vpack.c.b16 %v611, %v609
      %v650 = vpack.c.b16 %v612, %v610
      %v651 = vpack.c.b16 %v615, %v613
      %v652 = vpack.c.b16 %v616, %v614
      %v653 = vpack.c.b16 %v619, %v617
      %v654 = vpack.c.b16 %v620, %v618
      %v655 = vpack.c.b16 %v623, %v621
      %v656 = vpack.c.b16 %v624, %v622
      %v691 = vunpack.c.l.b16 %v511
      %v692 = vunpack.c.l.b16 %v512
      %v693 = vunpack.c.l.b16 %v513
      %v694 = vunpack.c.l.b16 %v514
      %v695 = vunpack.c.l.b16 %v515
      %v696 = vunpack.c.l.b16 %v516
      %v697 = vunpack.c.l.b16 %v517
      %v698 = vunpack.c.l.b16 %v518
      %v699 = vunpack.c.l.b16 %v519
      %v700 = vunpack.c.l.b16 %v520
      %v701 = vunpack.c.l.b16 %v521
      %v702 = vunpack.c.l.b16 %v522
      %v703 = vunpack.c.l.b16 %v523
      %v704 = vunpack.c.l.b16 %v524
      %v705 = vunpack.c.l.b16 %v525
      %v706 = vunpack.c.l.b16 %v526
      %v707 = vunpack.c.l.b16 %v527
      %v708 = vunpack.c.l.b16 %v528
      %v709 = vpack.c.b16 %v692, %v691
      %v710 = vpack.c.b16 %v694, %v693
      %v711 = vpack.c.b16 %v696, %v695
      %v712 = vpack.c.b16 %v698, %v697
      %v713 = vpack.c.b16 %v700, %v699
      %v714 = vpack.c.b16 %v702, %v701
      %v715 = vpack.c.b16 %v704, %v703
      %v716 = vpack.c.b16 %v706, %v705
      %v717 = vpack.c.b16 %v708, %v707
      %vm727 = vcmask 130048
      %v729 = vsel %vm727, %v626, 0
      %v732 = vsel %vm727, %v628, 0
      %v735 = vsel %vm727, %v630, 0
      %v738 = vsel %vm727, %v632, 0
      %v741 = vsel %vm727, %v634, 0
      %v744 = vsel %vm727, %v636, 0
      %v747 = vsel %vm727, %v638, 0
      %v750 = vsel %vm727, %v640, 0
      %v753 = vsel %vm727, %v642, 0
      %v756 = vsel %vm727, %v644, 0
      %v759 = vsel %vm727, %v646, 0
      %v762 = vsel %vm727, %v648, 0
      %v765 = vsel %vm727, %v650, 0
      %v768 = vsel %vm727, %v652, 0
      %v771 = vsel %vm727, %v654, 0
      %v774 = vsel %vm727, %v656, 0
      %776 = vmatprep.subr.bf16.mxu0 0
      %777 = vmatpush1.bf16.msra.mxu0 %v709
      %778 = vmatprep.subr.bf16.mxu0 0
      %779 = vmatpush1.bf16.msra.mxu0 %v710
      %780 = vmatprep.subr.bf16.mxu0 0
      %781 = vmatpush1.bf16.msra.mxu0 %v711
      %782 = vmatprep.subr.bf16.mxu0 0
      %783 = vmatpush1.bf16.msra.mxu0 %v712
      %784 = vmatprep.subr.bf16.mxu0 0
      %785 = vmatpush1.bf16.msra.mxu0 %v713
      %786 = vmatprep.subr.bf16.mxu0 0
      %787 = vmatpush1.bf16.msra.mxu0 %v714
      %788 = vmatprep.subr.bf16.mxu0 0
      %789 = vmatpush1.bf16.msra.mxu0 %v715
      %790 = vmatprep.subr.bf16.mxu0 0
      %791 = vmatpush1.bf16.msra.mxu0 %v716
      %792 = vmatprep.subr.bf16.mxu0 0
      %793 = vmatpush1.bf16.msra.mxu0 %v717
      %794 = vmatprep.subr.bf16.mxu0 0
      %795 = vmatpush1.bf16.msra.mxu0 0
      %796 = vmatprep.subr.bf16.mxu0 0
      %797 = vmatpush1.bf16.msra.mxu0 0
      %798 = vmatprep.subr.bf16.mxu0 0
      %799 = vmatpush1.bf16.msra.mxu0 0
      %800 = vmatprep.subr.bf16.mxu0 0
      %801 = vmatpush1.bf16.msra.mxu0 0
      %802 = vmatprep.subr.bf16.mxu0 0
      %803 = vmatpush1.bf16.msra.mxu0 0
      %804 = vmatprep.subr.bf16.mxu0 0
      %805 = vmatpush1.bf16.msra.mxu0 0
      %806 = vmatprep.subr.bf16.mxu0 0
      %807 = vmatpush1.bf16.msra.mxu0 0
      %808 = vmatprep.mubr.bf16.mxu0 %v729
      %809 = vmatmul.mubr.bf16.gmra.mrb[0].mxu0 %v625
      %v810 = vpop.f32.mrb[0].mxu0
      %v811 = vadd.f32 0.0, %v810
      %v812 = vpop.f32.mrb[0].mxu0
      %v813 = vpop.f32.mrb[0].mxu0
      %v814 = vadd.f32 0.0, %v813
      %v815 = vpop.f32.mrb[0].mxu0
      %816 = vmatprep.mubr.bf16.mxu0 %v732
      %817 = vmatmul.mubr.bf16.gmra.mrb[0].mxu0 %v627
      %v818 = vpop.f32.mrb[0].mxu0
      %v819 = vadd.f32 0.0, %v818
      %v820 = vpop.f32.mrb[0].mxu0
      %v821 = vpop.f32.mrb[0].mxu0
      %v822 = vadd.f32 0.0, %v821
      %v823 = vpop.f32.mrb[0].mxu0
      %824 = vmatprep.mubr.bf16.mxu0 %v735
      %825 = vmatmul.mubr.bf16.gmra.mrb[0].mxu0 %v629
      %v826 = vpop.f32.mrb[0].mxu0
      %v827 = vadd.f32 0.0, %v826
      %v828 = vpop.f32.mrb[0].mxu0
      %v829 = vpop.f32.mrb[0].mxu0
      %v830 = vadd.f32 0.0, %v829
      %v831 = vpop.f32.mrb[0].mxu0
      %832 = vmatprep.mubr.bf16.mxu0 %v738
      %833 = vmatmul.mubr.bf16.gmra.mrb[0].mxu0 %v631
      %v834 = vpop.f32.mrb[0].mxu0
      %v835 = vadd.f32 0.0, %v834
      %v836 = vpop.f32.mrb[0].mxu0
      %v837 = vpop.f32.mrb[0].mxu0
      %v838 = vadd.f32 0.0, %v837
      %v839 = vpop.f32.mrb[0].mxu0
      %840 = vmatprep.mubr.bf16.mxu0 %v741
      %841 = vmatmul.mubr.bf16.gmra.mrb[0].mxu0 %v633
      %v842 = vpop.f32.mrb[0].mxu0
      %v843 = vadd.f32 0.0, %v842
      %v844 = vpop.f32.mrb[0].mxu0
      %v845 = vpop.f32.mrb[0].mxu0
      %v846 = vadd.f32 0.0, %v845
      %v847 = vpop.f32.mrb[0].mxu0
      %848 = vmatprep.mubr.bf16.mxu0 %v744
      %849 = vmatmul.mubr.bf16.gmra.mrb[0].mxu0 %v635
      %v850 = vpop.f32.mrb[0].mxu0
      %v851 = vadd.f32 0.0, %v850
      %v852 = vpop.f32.mrb[0].mxu0
      %v853 = vpop.f32.mrb[0].mxu0
      %v854 = vadd.f32 0.0, %v853
      %v855 = vpop.f32.mrb[0].mxu0
      %856 = vmatprep.mubr.bf16.mxu0 %v747
      %857 = vmatmul.mubr.bf16.gmra.mrb[0].mxu0 %v637
      %v858 = vpop.f32.mrb[0].mxu0
      %v859 = vadd.f32 0.0, %v858
      %v860 = vpop.f32.mrb[0].mxu0
      %v861 = vpop.f32.mrb[0].mxu0
      %v862 = vadd.f32 0.0, %v861
      %v863 = vpop.f32.mrb[0].mxu0
      %864 = vmatprep.mubr.bf16.mxu0 %v750
      %865 = vmatmul.mubr.bf16.gmra.mrb[0].mxu0 %v639
      %v866 = vpop.f32.mrb[0].mxu0
      %v867 = vadd.f32 0.0, %v866
      %v868 = vpop.f32.mrb[0].mxu0
      %v869 = vpop.f32.mrb[0].mxu0
      %v870 = vadd.f32 0.0, %v869
      %v871 = vpop.f32.mrb[0].mxu0
      %872 = vmatprep.mubr.bf16.mxu0 %v753
      %873 = vmatmul.mubr.bf16.gmra.mrb[0].mxu0 %v641
      %v874 = vpop.f32.mrb[0].mxu0
      %v875 = vadd.f32 0.0, %v874
      %v876 = vpop.f32.mrb[0].mxu0
      %v877 = vpop.f32.mrb[0].mxu0
      %v878 = vadd.f32 0.0, %v877
      %v879 = vpop.f32.mrb[0].mxu0
      %880 = vmatprep.mubr.bf16.mxu0 %v756
      %881 = vmatmul.mubr.bf16.gmra.mrb[0].mxu0 %v643
      %v882 = vpop.f32.mrb[0].mxu0
      %v883 = vadd.f32 0.0, %v882
      %v884 = vpop.f32.mrb[0].mxu0
      %v885 = vpop.f32.mrb[0].mxu0
      %v886 = vadd.f32 0.0, %v885
      %v887 = vpop.f32.mrb[0].mxu0
      %888 = vmatprep.mubr.bf16.mxu0 %v759
      %889 = vmatmul.mubr.bf16.gmra.mrb[0].mxu0 %v645
      %v890 = vpop.f32.mrb[0].mxu0
      %v891 = vadd.f32 0.0, %v890
      %v892 = vpop.f32.mrb[0].mxu0
      %v893 = vpop.f32.mrb[0].mxu0
      %v894 = vadd.f32 0.0, %v893
      %v895 = vpop.f32.mrb[0].mxu0
      %896 = vmatprep.mubr.bf16.mxu0 %v762
      %897 = vmatmul.mubr.bf16.gmra.mrb[0].mxu0 %v647
      %v898 = vpop.f32.mrb[0].mxu0
      %v899 = vadd.f32 0.0, %v898
      %v900 = vpop.f32.mrb[0].mxu0
      %v901 = vpop.f32.mrb[0].mxu0
      %v902 = vadd.f32 0.0, %v901
      %v903 = vpop.f32.mrb[0].mxu0
      %904 = vmatprep.mubr.bf16.mxu0 %v765
      %905 = vmatmul.mubr.bf16.gmra.mrb[0].mxu0 %v649
      %v906 = vpop.f32.mrb[0].mxu0
      %v907 = vadd.f32 0.0, %v906
      %v908 = vpop.f32.mrb[0].mxu0
      %v909 = vpop.f32.mrb[0].mxu0
      %v910 = vadd.f32 0.0, %v909
      %v911 = vpop.f32.mrb[0].mxu0
      %912 = vmatprep.mubr.bf16.mxu0 %v768
      %913 = vmatmul.mubr.bf16.gmra.mrb[0].mxu0 %v651
      %v914 = vpop.f32.mrb[0].mxu0
      %v915 = vadd.f32 0.0, %v914
      %v916 = vpop.f32.mrb[0].mxu0
      %v917 = vpop.f32.mrb[0].mxu0
      %v918 = vadd.f32 0.0, %v917
      %v919 = vpop.f32.mrb[0].mxu0
      %920 = vmatprep.mubr.bf16.mxu0 %v771
      %921 = vmatmul.mubr.bf16.gmra.mrb[0].mxu0 %v653
      %v922 = vpop.f32.mrb[0].mxu0
      %v923 = vadd.f32 0.0, %v922
      %v924 = vpop.f32.mrb[0].mxu0
      %v925 = vpop.f32.mrb[0].mxu0
      %v926 = vadd.f32 0.0, %v925
      %v927 = vpop.f32.mrb[0].mxu0
      %928 = vmatprep.mubr.bf16.mxu0 %v774
      %929 = vmatmul.mubr.bf16.gmra.mrb[0].mxu0 %v655
      %v930 = vpop.f32.mrb[0].mxu0
      %v931 = vadd.f32 0.0, %v930
      %v932 = vpop.f32.mrb[0].mxu0
      %v933 = vpop.f32.mrb[0].mxu0
      %v934 = vadd.f32 0.0, %v933
      %v935 = vpop.f32.mrb[0].mxu0
      %936 = vdwg.mxu0
      %v937 = vadd.f32 %v447, %v811
      %v938 = vadd.f32 %v448, %v814
      %v939 = vadd.f32 %v449, %v819
      %v940 = vadd.f32 %v450, %v822
      %v941 = vadd.f32 %v451, %v827
      %v942 = vadd.f32 %v452, %v830
      %v943 = vadd.f32 %v453, %v835
      %v944 = vadd.f32 %v454, %v838
      %v945 = vadd.f32 %v455, %v843
      %v946 = vadd.f32 %v456, %v846
      %v947 = vadd.f32 %v457, %v851
      %v948 = vadd.f32 %v458, %v854
      %v949 = vadd.f32 %v459, %v859
      %v950 = vadd.f32 %v460, %v862
      %v951 = vadd.f32 %v461, %v867
      %v952 = vadd.f32 %v462, %v870
      %v953 = vadd.f32 %v463, %v875
      %v954 = vadd.f32 %v464, %v878
      %v955 = vadd.f32 %v465, %v883
      %v956 = vadd.f32 %v466, %v886
      %v957 = vadd.f32 %v467, %v891
      %v958 = vadd.f32 %v468, %v894
      %v959 = vadd.f32 %v469, %v899
      %v960 = vadd.f32 %v470, %v902
      %v961 = vadd.f32 %v471, %v907
      %v962 = vadd.f32 %v472, %v910
      %v963 = vadd.f32 %v473, %v915
      %v964 = vadd.f32 %v474, %v918
      %v965 = vadd.f32 %v475, %v923
      %v966 = vadd.f32 %v476, %v926
      %v967 = vadd.f32 %v477, %v931
      %v968 = vadd.f32 %v478, %v934
      %969 = vst.msk [vmem:[#allocation2] sm:$0xff] %vm727, %v937
      %970 = vst.msk [vmem:[#allocation2 + $0x8] sm:$0xff] %vm727, %v938
      %971 = vst.msk [vmem:[#allocation2 + $0x10] sm:$0xff] %vm727, %v939
      %972 = vst.msk [vmem:[#allocation2 + $0x18] sm:$0xff] %vm727, %v940
      %973 = vst.msk [vmem:[#allocation2 + $0x20] sm:$0xff] %vm727, %v941
      %974 = vst.msk [vmem:[#allocation2 + $0x28] sm:$0xff] %vm727, %v942
      %975 = vst.msk [vmem:[#allocation2 + $0x30] sm:$0xff] %vm727, %v943
      %976 = vst.msk [vmem:[#allocation2 + $0x38] sm:$0xff] %vm727, %v944
      %977 = vst.msk [vmem:[#allocation2 + $0x40] sm:$0xff] %vm727, %v945
      %978 = vst.msk [vmem:[#allocation2 + $0x48] sm:$0xff] %vm727, %v946
      %979 = vst.msk [vmem:[#allocation2 + $0x50] sm:$0xff] %vm727, %v947
      %980 = vst.msk [vmem:[#allocation2 + $0x58] sm:$0xff] %vm727, %v948
      %981 = vst.msk [vmem:[#allocation2 + $0x60] sm:$0xff] %vm727, %v949
      %982 = vst.msk [vmem:[#allocation2 + $0x68] sm:$0xff] %vm727, %v950
      %983 = vst.msk [vmem:[#allocation2 + $0x70] sm:$0xff] %vm727, %v951
      %984 = vst.msk [vmem:[#allocation2 + $0x78] sm:$0xff] %vm727, %v952
      %985 = vst.msk [vmem:[#allocation2 + $0x80] sm:$0xff] %vm727, %v953
      %986 = vst.msk [vmem:[#allocation2 + $0x88] sm:$0xff] %vm727, %v954
      %987 = vst.msk [vmem:[#allocation2 + $0x90] sm:$0xff] %vm727, %v955
      %988 = vst.msk [vmem:[#allocation2 + $0x98] sm:$0xff] %vm727, %v956
      %989 = vst.msk [vmem:[#allocation2 + $0xa0] sm:$0xff] %vm727, %v957
      %990 = vst.msk [vmem:[#allocation2 + $0xa8] sm:$0xff] %vm727, %v958
      %991 = vst.msk [vmem:[#allocation2 + $0xb0] sm:$0xff] %vm727, %v959
      %992 = vst.msk [vmem:[#allocation2 + $0xb8] sm:$0xff] %vm727, %v960
      %993 = vst.msk [vmem:[#allocation2 + $0xc0] sm:$0xff] %vm727, %v961
      %994 = vst.msk [vmem:[#allocation2 + $0xc8] sm:$0xff] %vm727, %v962
      %995 = vst.msk [vmem:[#allocation2 + $0xd0] sm:$0xff] %vm727, %v963
      %996 = vst.msk [vmem:[#allocation2 + $0xd8] sm:$0xff] %vm727, %v964
      %997 = vst.msk [vmem:[#allocation2 + $0xe0] sm:$0xff] %vm727, %v965
      %998 = vst.msk [vmem:[#allocation2 + $0xe8] sm:$0xff] %vm727, %v966
      %999 = vst.msk [vmem:[#allocation2 + $0xf0] sm:$0xff] %vm727, %v967
      %1000 = vst.msk [vmem:[#allocation2 + $0xf8] sm:$0xff] %vm727, %v968
      // Predicated region
      $region49: #{urresnet_forward.15} parent=43 // pred_check
        %p1001 = pneg %p410
      $region50: #{urresnet_forward.15} parent=43 // pred_check_branch
        %1003 = sbr.rel (%p1001) target = $region52
      $region51: #{urresnet_forward.15} parent=43 // pred_region
        %v1004 = vld [vmem:[#allocation2] sm:$0xff]
        %v1005 = vld [vmem:[#allocation2 + $0x8] sm:$0xff]
        %v1006 = vld [vmem:[#allocation2 + $0x10] sm:$0xff]
        %v1007 = vld [vmem:[#allocation2 + $0x18] sm:$0xff]
        %v1008 = vld [vmem:[#allocation2 + $0x20] sm:$0xff]
        %v1009 = vld [vmem:[#allocation2 + $0x28] sm:$0xff]
        %v1010 = vld [vmem:[#allocation2 + $0x30] sm:$0xff]
        %v1011 = vld [vmem:[#allocation2 + $0x38] sm:$0xff]
        %v1012 = vld [vmem:[#allocation2 + $0x40] sm:$0xff]
        %v1013 = vld [vmem:[#allocation2 + $0x48] sm:$0xff]
        %v1014 = vld [vmem:[#allocation2 + $0x50] sm:$0xff]
        %v1015 = vld [vmem:[#allocation2 + $0x58] sm:$0xff]
        %v1016 = vld [vmem:[#allocation2 + $0x60] sm:$0xff]
        %v1017 = vld [vmem:[#allocation2 + $0x68] sm:$0xff]
        %v1018 = vld [vmem:[#allocation2 + $0x70] sm:$0xff]
        %v1019 = vld [vmem:[#allocation2 + $0x78] sm:$0xff]
        %v1020 = vld [vmem:[#allocation2 + $0x80] sm:$0xff]
        %v1021 = vld [vmem:[#allocation2 + $0x88] sm:$0xff]
        %v1022 = vld [vmem:[#allocation2 + $0x90] sm:$0xff]
        %v1023 = vld [vmem:[#allocation2 + $0x98] sm:$0xff]
        %v1024 = vld [vmem:[#allocation2 + $0xa0] sm:$0xff]
        %v1025 = vld [vmem:[#allocation2 + $0xa8] sm:$0xff]
        %v1026 = vld [vmem:[#allocation2 + $0xb0] sm:$0xff]
        %v1027 = vld [vmem:[#allocation2 + $0xb8] sm:$0xff]
        %v1028 = vld [vmem:[#allocation2 + $0xc0] sm:$0xff]
        %v1029 = vld [vmem:[#allocation2 + $0xc8] sm:$0xff]
        %v1030 = vld [vmem:[#allocation2 + $0xd0] sm:$0xff]
        %v1031 = vld [vmem:[#allocation2 + $0xd8] sm:$0xff]
        %v1032 = vld [vmem:[#allocation2 + $0xe0] sm:$0xff]
        %v1033 = vld [vmem:[#allocation2 + $0xe8] sm:$0xff]
        %v1034 = vld [vmem:[#allocation2 + $0xf0] sm:$0xff]
        %v1035 = vld [vmem:[#allocation2 + $0xf8] sm:$0xff]
        %v1036 = vld [vmem:[%s384] sm:$0x1]
        %v1038 = vlaneseq
        %v1039 = vshrl.u32 %v1038, 7
        %v1040 = vsub.s32 0, %v1039
        %v1041 = vrot.slane %v1036, %v1040
        %v1043 = vmul.f32 %v1004, %v1041
        %v1044 = vmul.f32 %v1005, %v1041
        %v1045 = vmul.f32 %v1006, %v1041
        %v1046 = vmul.f32 %v1007, %v1041
        %v1047 = vmul.f32 %v1008, %v1041
        %v1048 = vmul.f32 %v1009, %v1041
        %v1049 = vmul.f32 %v1010, %v1041
        %v1050 = vmul.f32 %v1011, %v1041
        %v1051 = vmul.f32 %v1012, %v1041
        %v1052 = vmul.f32 %v1013, %v1041
        %v1053 = vmul.f32 %v1014, %v1041
        %v1054 = vmul.f32 %v1015, %v1041
        %v1055 = vmul.f32 %v1016, %v1041
        %v1056 = vmul.f32 %v1017, %v1041
        %v1057 = vmul.f32 %v1018, %v1041
        %v1058 = vmul.f32 %v1019, %v1041
        %v1059 = vmul.f32 %v1020, %v1041
        %v1060 = vmul.f32 %v1021, %v1041
        %v1061 = vmul.f32 %v1022, %v1041
        %v1062 = vmul.f32 %v1023, %v1041
        %v1063 = vmul.f32 %v1024, %v1041
        %v1064 = vmul.f32 %v1025, %v1041
        %v1065 = vmul.f32 %v1026, %v1041
        %v1066 = vmul.f32 %v1027, %v1041
        %v1067 = vmul.f32 %v1028, %v1041
        %v1068 = vmul.f32 %v1029, %v1041
        %v1069 = vmul.f32 %v1030, %v1041
        %v1070 = vmul.f32 %v1031, %v1041
        %v1071 = vmul.f32 %v1032, %v1041
        %v1072 = vmul.f32 %v1033, %v1041
        %v1073 = vmul.f32 %v1034, %v1041
        %v1074 = vmul.f32 %v1035, %v1041
        %v1075 = vld [vmem:[%s387] sm:$0x1]
        %v1077 = vlaneseq
        %v1078 = vshrl.u32 %v1077, 7
        %v1079 = vsub.s32 0, %v1078
        %v1080 = vrot.slane %v1075, %v1079
        %v1082 = vadd.f32 %v1043, %v1080
        %v1083 = vadd.f32 %v1044, %v1080
        %v1084 = vadd.f32 %v1045, %v1080
        %v1085 = vadd.f32 %v1046, %v1080
        %v1086 = vadd.f32 %v1047, %v1080
        %v1087 = vadd.f32 %v1048, %v1080
        %v1088 = vadd.f32 %v1049, %v1080
        %v1089 = vadd.f32 %v1050, %v1080
        %v1090 = vadd.f32 %v1051, %v1080
        %v1091 = vadd.f32 %v1052, %v1080
        %v1092 = vadd.f32 %v1053, %v1080
        %v1093 = vadd.f32 %v1054, %v1080
        %v1094 = vadd.f32 %v1055, %v1080
        %v1095 = vadd.f32 %v1056, %v1080
        %v1096 = vadd.f32 %v1057, %v1080
        %v1097 = vadd.f32 %v1058, %v1080
        %v1098 = vadd.f32 %v1059, %v1080
        %v1099 = vadd.f32 %v1060, %v1080
        %v1100 = vadd.f32 %v1061, %v1080
        %v1101 = vadd.f32 %v1062, %v1080
        %v1102 = vadd.f32 %v1063, %v1080
        %v1103 = vadd.f32 %v1064, %v1080
        %v1104 = vadd.f32 %v1065, %v1080
        %v1105 = vadd.f32 %v1066, %v1080
        %v1106 = vadd.f32 %v1067, %v1080
        %v1107 = vadd.f32 %v1068, %v1080
        %v1108 = vadd.f32 %v1069, %v1080
        %v1109 = vadd.f32 %v1070, %v1080
        %v1110 = vadd.f32 %v1071, %v1080
        %v1111 = vadd.f32 %v1072, %v1080
        %v1112 = vadd.f32 %v1073, %v1080
        %v1113 = vadd.f32 %v1074, %v1080
        %v1114 = vld [vmem:[%s398] sm:$0xff]
        %v1115 = vld [vmem:[%s398 + $0x8] sm:$0xff]
        %v1116 = vld [vmem:[%s398 + $0x10] sm:$0xff]
        %v1117 = vld [vmem:[%s398 + $0x18] sm:$0xff]
        %v1118 = vld [vmem:[%s398 + $0x20] sm:$0xff]
        %v1119 = vld [vmem:[%s398 + $0x28] sm:$0xff]
        %v1120 = vld [vmem:[%s398 + $0x30] sm:$0xff]
        %v1121 = vld [vmem:[%s398 + $0x38] sm:$0xff]
        %v1122 = vld [vmem:[%s398 + $0x40] sm:$0xff]
        %v1123 = vld [vmem:[%s398 + $0x48] sm:$0xff]
        %v1124 = vld [vmem:[%s398 + $0x50] sm:$0xff]
        %v1125 = vld [vmem:[%s398 + $0x58] sm:$0xff]
        %v1126 = vld [vmem:[%s398 + $0x60] sm:$0xff]
        %v1127 = vld [vmem:[%s398 + $0x68] sm:$0xff]
        %v1128 = vld [vmem:[%s398 + $0x70] sm:$0xff]
        %v1129 = vld [vmem:[%s398 + $0x78] sm:$0xff]
        %v1130 = vld [vmem:[%s398 + $0x80] sm:$0xff]
        %v1131 = vld [vmem:[%s398 + $0x88] sm:$0xff]
        %v1132 = vld [vmem:[%s398 + $0x90] sm:$0xff]
        %v1133 = vld [vmem:[%s398 + $0x98] sm:$0xff]
        %v1134 = vld [vmem:[%s398 + $0xa0] sm:$0xff]
        %v1135 = vld [vmem:[%s398 + $0xa8] sm:$0xff]
        %v1136 = vld [vmem:[%s398 + $0xb0] sm:$0xff]
        %v1137 = vld [vmem:[%s398 + $0xb8] sm:$0xff]
        %v1138 = vld [vmem:[%s398 + $0xc0] sm:$0xff]
        %v1139 = vld [vmem:[%s398 + $0xc8] sm:$0xff]
        %v1140 = vld [vmem:[%s398 + $0xd0] sm:$0xff]
        %v1141 = vld [vmem:[%s398 + $0xd8] sm:$0xff]
        %v1142 = vld [vmem:[%s398 + $0xe0] sm:$0xff]
        %v1143 = vld [vmem:[%s398 + $0xe8] sm:$0xff]
        %v1144 = vld [vmem:[%s398 + $0xf0] sm:$0xff]
        %v1145 = vld [vmem:[%s398 + $0xf8] sm:$0xff]
        %v1146 = vadd.f32 %v1082, %v1114
        %v1147 = vadd.f32 %v1083, %v1115
        %v1148 = vadd.f32 %v1084, %v1116
        %v1149 = vadd.f32 %v1085, %v1117
        %v1150 = vadd.f32 %v1086, %v1118
        %v1151 = vadd.f32 %v1087, %v1119
        %v1152 = vadd.f32 %v1088, %v1120
        %v1153 = vadd.f32 %v1089, %v1121
        %v1154 = vadd.f32 %v1090, %v1122
        %v1155 = vadd.f32 %v1091, %v1123
        %v1156 = vadd.f32 %v1092, %v1124
        %v1157 = vadd.f32 %v1093, %v1125
        %v1158 = vadd.f32 %v1094, %v1126
        %v1159 = vadd.f32 %v1095, %v1127
        %v1160 = vadd.f32 %v1096, %v1128
        %v1161 = vadd.f32 %v1097, %v1129
        %v1162 = vadd.f32 %v1098, %v1130
        %v1163 = vadd.f32 %v1099, %v1131
        %v1164 = vadd.f32 %v1100, %v1132
        %v1165 = vadd.f32 %v1101, %v1133
        %v1166 = vadd.f32 %v1102, %v1134
        %v1167 = vadd.f32 %v1103, %v1135
        %v1168 = vadd.f32 %v1104, %v1136
        %v1169 = vadd.f32 %v1105, %v1137
        %v1170 = vadd.f32 %v1106, %v1138
        %v1171 = vadd.f32 %v1107, %v1139
        %v1172 = vadd.f32 %v1108, %v1140
        %v1173 = vadd.f32 %v1109, %v1141
        %v1174 = vadd.f32 %v1110, %v1142
        %v1175 = vadd.f32 %v1111, %v1143
        %v1176 = vadd.f32 %v1112, %v1144
        %v1177 = vadd.f32 %v1113, %v1145
        %v1178 = vld [vmem:[%s390] sm:$0x1]
        %vm1179 = vcmp.gt.f32.partialorder %v1178, 0.0
        %v1180 = vmax.f32 %v1146, 0.0
        %v1181 = vmax.f32 %v1147, 0.0
        %v1182 = vmax.f32 %v1148, 0.0
        %v1183 = vmax.f32 %v1149, 0.0
        %v1184 = vmax.f32 %v1150, 0.0
        %v1185 = vmax.f32 %v1151, 0.0
        %v1186 = vmax.f32 %v1152, 0.0
        %v1187 = vmax.f32 %v1153, 0.0
        %v1188 = vmax.f32 %v1154, 0.0
        %v1189 = vmax.f32 %v1155, 0.0
        %v1190 = vmax.f32 %v1156, 0.0
        %v1191 = vmax.f32 %v1157, 0.0
        %v1192 = vmax.f32 %v1158, 0.0
        %v1193 = vmax.f32 %v1159, 0.0
        %v1194 = vmax.f32 %v1160, 0.0
        %v1195 = vmax.f32 %v1161, 0.0
        %v1196 = vmax.f32 %v1162, 0.0
        %v1197 = vmax.f32 %v1163, 0.0
        %v1198 = vmax.f32 %v1164, 0.0
        %v1199 = vmax.f32 %v1165, 0.0
        %v1200 = vmax.f32 %v1166, 0.0
        %v1201 = vmax.f32 %v1167, 0.0
        %v1202 = vmax.f32 %v1168, 0.0
        %v1203 = vmax.f32 %v1169, 0.0
        %v1204 = vmax.f32 %v1170, 0.0
        %v1205 = vmax.f32 %v1171, 0.0
        %v1206 = vmax.f32 %v1172, 0.0
        %v1207 = vmax.f32 %v1173, 0.0
        %v1208 = vmax.f32 %v1174, 0.0
        %v1209 = vmax.f32 %v1175, 0.0
        %v1210 = vmax.f32 %v1176, 0.0
        %v1211 = vmax.f32 %v1177, 0.0
        %v1212 = vsel %vm1179, 1, 0
        %v1213 = vlaneseq
        %v1214 = vshrl.u32 %v1213, 7
        %v1215 = vsub.s32 0, %v1214
        %v1216 = vrot.slane %v1212, %v1215
        %vm1217 = vcmp.eq.s32.totalorder %v1216, 1
        %v1218 = vsel %vm1217, %v1180, %v1146
        %v1219 = vsel %vm1217, %v1181, %v1147
        %v1220 = vsel %vm1217, %v1182, %v1148
        %v1221 = vsel %vm1217, %v1183, %v1149
        %v1222 = vsel %vm1217, %v1184, %v1150
        %v1223 = vsel %vm1217, %v1185, %v1151
        %v1224 = vsel %vm1217, %v1186, %v1152
        %v1225 = vsel %vm1217, %v1187, %v1153
        %v1226 = vsel %vm1217, %v1188, %v1154
        %v1227 = vsel %vm1217, %v1189, %v1155
        %v1228 = vsel %vm1217, %v1190, %v1156
        %v1229 = vsel %vm1217, %v1191, %v1157
        %v1230 = vsel %vm1217, %v1192, %v1158
        %v1231 = vsel %vm1217, %v1193, %v1159
        %v1232 = vsel %vm1217, %v1194, %v1160
        %v1233 = vsel %vm1217, %v1195, %v1161
        %v1234 = vsel %vm1217, %v1196, %v1162
        %v1235 = vsel %vm1217, %v1197, %v1163
        %v1236 = vsel %vm1217, %v1198, %v1164
        %v1237 = vsel %vm1217, %v1199, %v1165
        %v1238 = vsel %vm1217, %v1200, %v1166
        %v1239 = vsel %vm1217, %v1201, %v1167
        %v1240 = vsel %vm1217, %v1202, %v1168
        %v1241 = vsel %vm1217, %v1203, %v1169
        %v1242 = vsel %vm1217, %v1204, %v1170
        %v1243 = vsel %vm1217, %v1205, %v1171
        %v1244 = vsel %vm1217, %v1206, %v1172
        %v1245 = vsel %vm1217, %v1207, %v1173
        %v1246 = vsel %vm1217, %v1208, %v1174
        %v1247 = vsel %vm1217, %v1209, %v1175
        %v1248 = vsel %vm1217, %v1210, %v1176
        %v1249 = vsel %vm1217, %v1211, %v1177
        %1250 = vst.msk [vmem:[%s407] sm:$0xff] %vm727, %v1218
        %1251 = vst.msk [vmem:[%s407 + $0x8] sm:$0xff] %vm727, %v1219
        %1252 = vst.msk [vmem:[%s407 + $0x10] sm:$0xff] %vm727, %v1220
        %1253 = vst.msk [vmem:[%s407 + $0x18] sm:$0xff] %vm727, %v1221
        %1254 = vst.msk [vmem:[%s407 + $0x20] sm:$0xff] %vm727, %v1222
        %1255 = vst.msk [vmem:[%s407 + $0x28] sm:$0xff] %vm727, %v1223
        %1256 = vst.msk [vmem:[%s407 + $0x30] sm:$0xff] %vm727, %v1224
        %1257 = vst.msk [vmem:[%s407 + $0x38] sm:$0xff] %vm727, %v1225
        %1258 = vst.msk [vmem:[%s407 + $0x40] sm:$0xff] %vm727, %v1226
        %1259 = vst.msk [vmem:[%s407 + $0x48] sm:$0xff] %vm727, %v1227
        %1260 = vst.msk [vmem:[%s407 + $0x50] sm:$0xff] %vm727, %v1228
        %1261 = vst.msk [vmem:[%s407 + $0x58] sm:$0xff] %vm727, %v1229
        %1262 = vst.msk [vmem:[%s407 + $0x60] sm:$0xff] %vm727, %v1230
        %1263 = vst.msk [vmem:[%s407 + $0x68] sm:$0xff] %vm727, %v1231
        %1264 = vst.msk [vmem:[%s407 + $0x70] sm:$0xff] %vm727, %v1232
        %1265 = vst.msk [vmem:[%s407 + $0x78] sm:$0xff] %vm727, %v1233
        %1266 = vst.msk [vmem:[%s407 + $0x80] sm:$0xff] %vm727, %v1234
        %1267 = vst.msk [vmem:[%s407 + $0x88] sm:$0xff] %vm727, %v1235
        %1268 = vst.msk [vmem:[%s407 + $0x90] sm:$0xff] %vm727, %v1236
        %1269 = vst.msk [vmem:[%s407 + $0x98] sm:$0xff] %vm727, %v1237
        %1270 = vst.msk [vmem:[%s407 + $0xa0] sm:$0xff] %vm727, %v1238
        %1271 = vst.msk [vmem:[%s407 + $0xa8] sm:$0xff] %vm727, %v1239
        %1272 = vst.msk [vmem:[%s407 + $0xb0] sm:$0xff] %vm727, %v1240
        %1273 = vst.msk [vmem:[%s407 + $0xb8] sm:$0xff] %vm727, %v1241
        %1274 = vst.msk [vmem:[%s407 + $0xc0] sm:$0xff] %vm727, %v1242
        %1275 = vst.msk [vmem:[%s407 + $0xc8] sm:$0xff] %vm727, %v1243
        %1276 = vst.msk [vmem:[%s407 + $0xd0] sm:$0xff] %vm727, %v1244
        %1277 = vst.msk [vmem:[%s407 + $0xd8] sm:$0xff] %vm727, %v1245
        %1278 = vst.msk [vmem:[%s407 + $0xe0] sm:$0xff] %vm727, %v1246
        %1279 = vst.msk [vmem:[%s407 + $0xe8] sm:$0xff] %vm727, %v1247
        %1280 = vst.msk [vmem:[%s407 + $0xf0] sm:$0xff] %vm727, %v1248
        %1281 = vst.msk [vmem:[%s407 + $0xf8] sm:$0xff] %vm727, %v1249
      $region52: #{urresnet_forward.15} parent=43 // pred_fallthru
        _
      %s1282 = smul.u32 32, %s22
      %p1283 = scmp.lt.s32.totalorder %s1282, 63
      %s1284 = scalar_select %p1283, %s1282, 63
      %p1285 = scmp.lt.s32.totalorder %s23, 0
      %s1286 = scalar_select %p1285, %s23, 0
      %s1287 = sadd.s32 %s1286, %s1284
      %s1288 = smul.addr %s1287, 8
      %s1289 = scalar_lea.vmem %s6, %s1288
      // Predicated region
      $region53: #{urresnet_forward.15} parent=43 // pred_check
        %p1290 = pneg %p218
      $region54: #{urresnet_forward.15} parent=43 // pred_check_branch
        %1292 = sbr.rel (%p1290) target = $region56
      $region55: #{urresnet_forward.15} parent=43 // pred_region
        %s1293 = smul.u32 32, %s22
      $region56: #{urresnet_forward.15} parent=43 // pred_fallthru
        _
    $region44: #{urresnet_forward.15} parent=5 // pred_fallthru
      _
    %p1294 = scmp.le.s32.totalorder 2, %s12
    // Predicated region
    $region57: #{urresnet_forward.15} parent=5 // pred_check
      %p1295 = pneg %p1294
    $region58: #{urresnet_forward.15} parent=5 // pred_check_branch
      %1297 = sbr.rel (%p1295) target = $region60
    $region59: #{urresnet_forward.15} parent=5 // pred_region
      %s1298 = ssub.s32 %s12, 2
      // Predicated region
      $region61: #{urresnet_forward.15} parent=59 // pred_check
        %p1299 = pneg %p224
      $region62: #{urresnet_forward.15} parent=59 // pred_check_branch
        %1301 = sbr.rel (%p1299) target = $region64
      $region63: #{urresnet_forward.15} parent=59 // pred_region
        %s1302 = smul.u32 32, %s25
        %p1303 = scmp.lt.s32.totalorder %s1302, 63
        %s1304 = scalar_select %p1303, %s1302, 63
        %p1305 = scmp.lt.s32.totalorder %s26, 0
        %s1306 = scalar_select %p1305, %s26, 0
        %s1307 = sadd.s32 %s1306, %s1304
        %s1308 = smul.addr %s1307, 8
        %s1309 = scalar_lea.vmem %s6, %s1308
      $region64: #{urresnet_forward.15} parent=59 // pred_fallthru
        _
    $region60: #{urresnet_forward.15} parent=5 // pred_fallthru
      _
  $region6: #{urresnet_forward.15} parent=0 // loop_footer
    %s16 = sadd.s32 1, %s12
  $region7: #{urresnet_forward.15} parent=0 // loop_footer_branch
    %11 = sbr.rel target = $region3
  $region8: #{urresnet_forward.15} parent=0 // loop_exit
    _

// kernel: urresnet_forward.16
$region0: #{urresnet_forward.16}
  #allocation0 [shape = 'u32[]', space=smem, size = 0x4, offset = 0x4, fixed_abs, tag = 'smem constant byte address 0x4 - core index']
  #allocation1 [shape = 'u32[144,128]{1,0:T(1,128)}', space=vmem, size = 0x12000, scoped, tag = 'internal scratch']
  #allocation2 [shape = 'f32[128,64]{1,0:T(8,128)}', space=vmem, size = 0x10000, scoped, tag = 'scratch operand']
  %s0 = inlined_call_operand.vmem [shape: bf16[128,144], index: 0, kind: input, shape index: {}]
  %s1 = inlined_call_operand.vmem [shape: bf16[144,64], index: 1, kind: input, shape index: {}]
  %s2 = inlined_call_operand.vmem [shape: f32[1,64], index: 2, kind: input, shape index: {}]
  %s3 = inlined_call_operand.vmem [shape: f32[1,64], index: 3, kind: input, shape index: {}]
  %s4 = inlined_call_operand.vmem [shape: f32[1,64], index: 4, kind: input, shape index: {}]
  %s5 = inlined_call_operand.vmem [shape: f32[128,64], index: 5, kind: output, shape index: {}]
  %s6 = sld [smem:[#allocation0]]
  $region38: #{urresnet_forward.16} parent=0
    _
  %s8 = ssub.s32 1, %s6
  %s9 = scalar_select 0, %s8, %s6
  // Predicated region
  $region2: #{urresnet_forward.16} parent=0 // pred_check
    _
  $region3: #{urresnet_forward.16} parent=0 // pred_check_branch
    %11 = sbr.rel (0) target = $region5
  $region4: #{urresnet_forward.16} parent=0 // pred_region
    _
  $region5: #{urresnet_forward.16} parent=0 // pred_fallthru
    _
  // Predicated region
  $region6: #{urresnet_forward.16} parent=0 // pred_check
    _
  $region7: #{urresnet_forward.16} parent=0 // pred_check_branch
    %13 = sbr.rel (0) target = $region9
  $region8: #{urresnet_forward.16} parent=0 // pred_region
    _
  $region9: #{urresnet_forward.16} parent=0 // pred_fallthru
    _
  // Predicated region
  $region10: #{urresnet_forward.16} parent=0 // pred_check
    _
  $region11: #{urresnet_forward.16} parent=0 // pred_check_branch
    %15 = sbr.rel (0) target = $region13
  $region12: #{urresnet_forward.16} parent=0 // pred_region
    _
  $region13: #{urresnet_forward.16} parent=0 // pred_fallthru
    _
  // Predicated region
  $region14: #{urresnet_forward.16} parent=0 // pred_check
    _
  $region15: #{urresnet_forward.16} parent=0 // pred_check_branch
    %17 = sbr.rel (0) target = $region17
  $region16: #{urresnet_forward.16} parent=0 // pred_region
    _
  $region17: #{urresnet_forward.16} parent=0 // pred_fallthru
    _
  // Predicated region
  $region18: #{urresnet_forward.16} parent=0 // pred_check
    _
  $region19: #{urresnet_forward.16} parent=0 // pred_check_branch
    %19 = sbr.rel (0) target = $region21
  $region20: #{urresnet_forward.16} parent=0 // pred_region
    _
  $region21: #{urresnet_forward.16} parent=0 // pred_fallthru
    _
  %p21 = scmp.eq.s32.totalorder 0, 0
  // Predicated region
  $region22: #{urresnet_forward.16} parent=0 // pred_check
    %p22 = pneg %p21
  $region23: #{urresnet_forward.16} parent=0 // pred_check_branch
    %24 = sbr.rel (%p22) target = $region25
  $region24: #{urresnet_forward.16} parent=0 // pred_region
    %vm25 = vcmask 523264
    %26 = vst.msk [vmem:[#allocation2] sm:$0xff] %vm25, 0.0
    %27 = vst.msk [vmem:[#allocation2 + $0x8] sm:$0xff] %vm25, 0.0
    %28 = vst.msk [vmem:[#allocation2 + $0x10] sm:$0xff] %vm25, 0.0
    %29 = vst.msk [vmem:[#allocation2 + $0x18] sm:$0xff] %vm25, 0.0
    %30 = vst.msk [vmem:[#allocation2 + $0x20] sm:$0xff] %vm25, 0.0
    %31 = vst.msk [vmem:[#allocation2 + $0x28] sm:$0xff] %vm25, 0.0
    %32 = vst.msk [vmem:[#allocation2 + $0x30] sm:$0xff] %vm25, 0.0
    %33 = vst.msk [vmem:[#allocation2 + $0x38] sm:$0xff] %vm25, 0.0
    %34 = vst.msk [vmem:[#allocation2 + $0x40] sm:$0xff] %vm25, 0.0
    %35 = vst.msk [vmem:[#allocation2 + $0x48] sm:$0xff] %vm25, 0.0
    %36 = vst.msk [vmem:[#allocation2 + $0x50] sm:$0xff] %vm25, 0.0
    %37 = vst.msk [vmem:[#allocation2 + $0x58] sm:$0xff] %vm25, 0.0
    %38 = vst.msk [vmem:[#allocation2 + $0x60] sm:$0xff] %vm25, 0.0
    %39 = vst.msk [vmem:[#allocation2 + $0x68] sm:$0xff] %vm25, 0.0
    %40 = vst.msk [vmem:[#allocation2 + $0x70] sm:$0xff] %vm25, 0.0
    %41 = vst.msk [vmem:[#allocation2 + $0x78] sm:$0xff] %vm25, 0.0
  $region25: #{urresnet_forward.16} parent=0 // pred_fallthru
    _
  %v42 = vld [vmem:[#allocation2] sm:$0xff]
  %v43 = vld [vmem:[#allocation2 + $0x8] sm:$0xff]
  %v44 = vld [vmem:[#allocation2 + $0x10] sm:$0xff]
  %v45 = vld [vmem:[#allocation2 + $0x18] sm:$0xff]
  %v46 = vld [vmem:[#allocation2 + $0x20] sm:$0xff]
  %v47 = vld [vmem:[#allocation2 + $0x28] sm:$0xff]
  %v48 = vld [vmem:[#allocation2 + $0x30] sm:$0xff]
  %v49 = vld [vmem:[#allocation2 + $0x38] sm:$0xff]
  %v50 = vld [vmem:[#allocation2 + $0x40] sm:$0xff]
  %v51 = vld [vmem:[#allocation2 + $0x48] sm:$0xff]
  %v52 = vld [vmem:[#allocation2 + $0x50] sm:$0xff]
  %v53 = vld [vmem:[#allocation2 + $0x58] sm:$0xff]
  %v54 = vld [vmem:[#allocation2 + $0x60] sm:$0xff]
  %v55 = vld [vmem:[#allocation2 + $0x68] sm:$0xff]
  %v56 = vld [vmem:[#allocation2 + $0x70] sm:$0xff]
  %v57 = vld [vmem:[#allocation2 + $0x78] sm:$0xff]
  %v58 = vld [vmem:[%s0] sm:$0xff]
  %v59 = vld [vmem:[%s0 + $0x8] sm:$0xff]
  %v60 = vld [vmem:[%s0 + $0x10] sm:$0xff]
  %v61 = vld [vmem:[%s0 + $0x18] sm:$0xff]
  %v62 = vld [vmem:[%s0 + $0x20] sm:$0xff]
  %v63 = vld [vmem:[%s0 + $0x28] sm:$0xff]
  %v64 = vld [vmem:[%s0 + $0x30] sm:$0xff]
  %v65 = vld [vmem:[%s0 + $0x38] sm:$0xff]
  %v66 = vld [vmem:[%s0 + $0x40] sm:$0xff]
  %v67 = vld [vmem:[%s0 + $0x48] sm:$0xff]
  %v68 = vld [vmem:[%s0 + $0x50] sm:$0xff]
  %v69 = vld [vmem:[%s0 + $0x58] sm:$0xff]
  %v70 = vld [vmem:[%s0 + $0x60] sm:$0xff]
  %v71 = vld [vmem:[%s0 + $0x68] sm:$0xff]
  %v72 = vld [vmem:[%s0 + $0x70] sm:$0xff]
  %v73 = vld [vmem:[%s0 + $0x78] sm:$0xff]
  %v74 = vld [vmem:[%s1] sm:$0xf]
  %v75 = vld [vmem:[%s1 + $0x4] sm:$0xf]
  %v76 = vld [vmem:[%s1 + $0x8] sm:$0xf]
  %v77 = vld [vmem:[%s1 + $0xc] sm:$0xf]
  %v78 = vld [vmem:[%s1 + $0x10] sm:$0xf]
  %v79 = vld [vmem:[%s1 + $0x14] sm:$0xf]
  %v80 = vld [vmem:[%s1 + $0x18] sm:$0xf]
  %v81 = vld [vmem:[%s1 + $0x1c] sm:$0xf]
  %v82 = vld [vmem:[%s1 + $0x20] sm:$0xf]
  %v83 = vld [vmem:[%s1 + $0x24] sm:$0xf]
  %v84 = vld [vmem:[%s1 + $0x28] sm:$0xf]
  %v85 = vld [vmem:[%s1 + $0x2c] sm:$0xf]
  %v86 = vld [vmem:[%s1 + $0x30] sm:$0xf]
  %v87 = vld [vmem:[%s1 + $0x34] sm:$0xf]
  %v88 = vld [vmem:[%s1 + $0x38] sm:$0xf]
  %v89 = vld [vmem:[%s1 + $0x3c] sm:$0xf]
  %v90 = vld [vmem:[%s1 + $0x40] sm:$0xf]
  %v91 = vld [vmem:[%s1 + $0x44] sm:$0xf]
  %v108 = vunpack.c.l.b16 %v58
  %v109 = vunpack.c.h.b16 %v58
  %v110 = vunpack.c.l.b16 %v59
  %v111 = vunpack.c.h.b16 %v59
  %v112 = vunpack.c.l.b16 %v60
  %v113 = vunpack.c.h.b16 %v60
  %v114 = vunpack.c.l.b16 %v61
  %v115 = vunpack.c.h.b16 %v61
  %v116 = vunpack.c.l.b16 %v62
  %v117 = vunpack.c.h.b16 %v62
  %v118 = vunpack.c.l.b16 %v63
  %v119 = vunpack.c.h.b16 %v63
  %v120 = vunpack.c.l.b16 %v64
  %v121 = vunpack.c.h.b16 %v64
  %v122 = vunpack.c.l.b16 %v65
  %v123 = vunpack.c.h.b16 %v65
  %v124 = vunpack.c.l.b16 %v66
  %v125 = vunpack.c.h.b16 %v66
  %v126 = vunpack.c.l.b16 %v67
  %v127 = vunpack.c.h.b16 %v67
  %v128 = vunpack.c.l.b16 %v68
  %v129 = vunpack.c.h.b16 %v68
  %v130 = vunpack.c.l.b16 %v69
  %v131 = vunpack.c.h.b16 %v69
  %v132 = vunpack.c.l.b16 %v70
  %v133 = vunpack.c.h.b16 %v70
  %v134 = vunpack.c.l.b16 %v71
  %v135 = vunpack.c.h.b16 %v71
  %v136 = vunpack.c.l.b16 %v72
  %v137 = vunpack.c.h.b16 %v72
  %v138 = vunpack.c.l.b16 %v73
  %v139 = vunpack.c.h.b16 %v73
  %v140 = vpack.c.b16 %v110, %v108
  %v141 = vpack.c.b16 %v111, %v109
  %v142 = vpack.c.b16 %v114, %v112
  %v143 = vpack.c.b16 %v115, %v113
  %v144 = vpack.c.b16 %v118, %v116
  %v145 = vpack.c.b16 %v119, %v117
  %v146 = vpack.c.b16 %v122, %v120
  %v147 = vpack.c.b16 %v123, %v121
  %v148 = vpack.c.b16 %v126, %v124
  %v149 = vpack.c.b16 %v127, %v125
  %v150 = vpack.c.b16 %v130, %v128
  %v151 = vpack.c.b16 %v131, %v129
  %v152 = vpack.c.b16 %v134, %v132
  %v153 = vpack.c.b16 %v135, %v133
  %v154 = vpack.c.b16 %v138, %v136
  %v155 = vpack.c.b16 %v139, %v137
  %v182 = vunpack.c.l.b16 %v74
  %v183 = vunpack.c.l.b16 %v75
  %v184 = vunpack.c.l.b16 %v76
  %v185 = vunpack.c.l.b16 %v77
  %v186 = vunpack.c.l.b16 %v78
  %v187 = vunpack.c.l.b16 %v79
  %v188 = vunpack.c.l.b16 %v80
  %v189 = vunpack.c.l.b16 %v81
  %v190 = vunpack.c.l.b16 %v82
  %v191 = vunpack.c.l.b16 %v83
  %v192 = vunpack.c.l.b16 %v84
  %v193 = vunpack.c.l.b16 %v85
  %v194 = vunpack.c.l.b16 %v86
  %v195 = vunpack.c.l.b16 %v87
  %v196 = vunpack.c.l.b16 %v88
  %v197 = vunpack.c.l.b16 %v89
  %v198 = vunpack.c.l.b16 %v90
  %v199 = vunpack.c.l.b16 %v91
  %v200 = vpack.c.b16 %v183, %v182
  %v201 = vpack.c.b16 %v185, %v184
  %v202 = vpack.c.b16 %v187, %v186
  %v203 = vpack.c.b16 %v189, %v188
  %v204 = vpack.c.b16 %v191, %v190
  %v205 = vpack.c.b16 %v193, %v192
  %v206 = vpack.c.b16 %v195, %v194
  %v207 = vpack.c.b16 %v197, %v196
  %v208 = vpack.c.b16 %v199, %v198
  %vm218 = vcmask 130048
  %v220 = vsel %vm218, %v141, 0
  %v223 = vsel %vm218, %v143, 0
  %v226 = vsel %vm218, %v145, 0
  %v229 = vsel %vm218, %v147, 0
  %v232 = vsel %vm218, %v149, 0
  %v235 = vsel %vm218, %v151, 0
  %v238 = vsel %vm218, %v153, 0
  %v241 = vsel %vm218, %v155, 0
  %243 = vmatprep.subr.bf16.mxu0 0
  %244 = vmatpush1.bf16.msra.mxu0 %v200
  %245 = vmatprep.subr.bf16.mxu0 0
  %246 = vmatpush1.bf16.msra.mxu0 %v201
  %247 = vmatprep.subr.bf16.mxu0 0
  %248 = vmatpush1.bf16.msra.mxu0 %v202
  %249 = vmatprep.subr.bf16.mxu0 0
  %250 = vmatpush1.bf16.msra.mxu0 %v203
  %251 = vmatprep.subr.bf16.mxu0 0
  %252 = vmatpush1.bf16.msra.mxu0 %v204
  %253 = vmatprep.subr.bf16.mxu0 0
  %254 = vmatpush1.bf16.msra.mxu0 %v205
  %255 = vmatprep.subr.bf16.mxu0 0
  %256 = vmatpush1.bf16.msra.mxu0 %v206
  %257 = vmatprep.subr.bf16.mxu0 0
  %258 = vmatpush1.bf16.msra.mxu0 %v207
  %259 = vmatprep.subr.bf16.mxu0 0
  %260 = vmatpush1.bf16.msra.mxu0 %v208
  %261 = vmatprep.subr.bf16.mxu0 0
  %262 = vmatpush1.bf16.msra.mxu0 0
  %263 = vmatprep.subr.bf16.mxu0 0
  %264 = vmatpush1.bf16.msra.mxu0 0
  %265 = vmatprep.subr.bf16.mxu0 0
  %266 = vmatpush1.bf16.msra.mxu0 0
  %267 = vmatprep.subr.bf16.mxu0 0
  %268 = vmatpush1.bf16.msra.mxu0 0
  %269 = vmatprep.subr.bf16.mxu0 0
  %270 = vmatpush1.bf16.msra.mxu0 0
  %271 = vmatprep.subr.bf16.mxu0 0
  %272 = vmatpush1.bf16.msra.mxu0 0
  %273 = vmatprep.subr.bf16.mxu0 0
  %274 = vmatpush1.bf16.msra.mxu0 0
  %275 = vmatprep.mubr.bf16.mxu0 %v220
  %276 = vmatmul.mubr.bf16.gmra.mrb[0].mxu0 %v140
  %v277 = vpop.f32.mrb[0].mxu0
  %v278 = vadd.f32 0.0, %v277
  %v279 = vpop.f32.mrb[0].mxu0
  %v280 = vpop.f32.mrb[0].mxu0
  %v281 = vadd.f32 0.0, %v280
  %v282 = vpop.f32.mrb[0].mxu0
  %283 = vmatprep.mubr.bf16.mxu0 %v223
  %284 = vmatmul.mubr.bf16.gmra.mrb[0].mxu0 %v142
  %v285 = vpop.f32.mrb[0].mxu0
  %v286 = vadd.f32 0.0, %v285
  %v287 = vpop.f32.mrb[0].mxu0
  %v288 = vpop.f32.mrb[0].mxu0
  %v289 = vadd.f32 0.0, %v288
  %v290 = vpop.f32.mrb[0].mxu0
  %291 = vmatprep.mubr.bf16.mxu0 %v226
  %292 = vmatmul.mubr.bf16.gmra.mrb[0].mxu0 %v144
  %v293 = vpop.f32.mrb[0].mxu0
  %v294 = vadd.f32 0.0, %v293
  %v295 = vpop.f32.mrb[0].mxu0
  %v296 = vpop.f32.mrb[0].mxu0
  %v297 = vadd.f32 0.0, %v296
  %v298 = vpop.f32.mrb[0].mxu0
  %299 = vmatprep.mubr.bf16.mxu0 %v229
  %300 = vmatmul.mubr.bf16.gmra.mrb[0].mxu0 %v146
  %v301 = vpop.f32.mrb[0].mxu0
  %v302 = vadd.f32 0.0, %v301
  %v303 = vpop.f32.mrb[0].mxu0
  %v304 = vpop.f32.mrb[0].mxu0
  %v305 = vadd.f32 0.0, %v304
  %v306 = vpop.f32.mrb[0].mxu0
  %307 = vmatprep.mubr.bf16.mxu0 %v232
  %308 = vmatmul.mubr.bf16.gmra.mrb[0].mxu0 %v148
  %v309 = vpop.f32.mrb[0].mxu0
  %v310 = vadd.f32 0.0, %v309
  %v311 = vpop.f32.mrb[0].mxu0
  %v312 = vpop.f32.mrb[0].mxu0
  %v313 = vadd.f32 0.0, %v312
  %v314 = vpop.f32.mrb[0].mxu0
  %315 = vmatprep.mubr.bf16.mxu0 %v235
  %316 = vmatmul.mubr.bf16.gmra.mrb[0].mxu0 %v150
  %v317 = vpop.f32.mrb[0].mxu0
  %v318 = vadd.f32 0.0, %v317
  %v319 = vpop.f32.mrb[0].mxu0
  %v320 = vpop.f32.mrb[0].mxu0
  %v321 = vadd.f32 0.0, %v320
  %v322 = vpop.f32.mrb[0].mxu0
  %323 = vmatprep.mubr.bf16.mxu0 %v238
  %324 = vmatmul.mubr.bf16.gmra.mrb[0].mxu0 %v152
  %v325 = vpop.f32.mrb[0].mxu0
  %v326 = vadd.f32 0.0, %v325
  %v327 = vpop.f32.mrb[0].mxu0
  %v328 = vpop.f32.mrb[0].mxu0
  %v329 = vadd.f32 0.0, %v328
  %v330 = vpop.f32.mrb[0].mxu0
  %331 = vmatprep.mubr.bf16.mxu0 %v241
  %332 = vmatmul.mubr.bf16.gmra.mrb[0].mxu0 %v154
  %v333 = vpop.f32.mrb[0].mxu0
  %v334 = vadd.f32 0.0, %v333
  %v335 = vpop.f32.mrb[0].mxu0
  %v336 = vpop.f32.mrb[0].mxu0
  %v337 = vadd.f32 0.0, %v336
  %v338 = vpop.f32.mrb[0].mxu0
  %339 = vdwg.mxu0
  %v340 = vadd.f32 %v42, %v278
  %v341 = vadd.f32 %v43, %v281
  %v342 = vadd.f32 %v44, %v286
  %v343 = vadd.f32 %v45, %v289
  %v344 = vadd.f32 %v46, %v294
  %v345 = vadd.f32 %v47, %v297
  %v346 = vadd.f32 %v48, %v302
  %v347 = vadd.f32 %v49, %v305
  %v348 = vadd.f32 %v50, %v310
  %v349 = vadd.f32 %v51, %v313
  %v350 = vadd.f32 %v52, %v318
  %v351 = vadd.f32 %v53, %v321
  %v352 = vadd.f32 %v54, %v326
  %v353 = vadd.f32 %v55, %v329
  %v354 = vadd.f32 %v56, %v334
  %v355 = vadd.f32 %v57, %v337
  %vm356 = vcmask 523264
  %357 = vst.msk [vmem:[#allocation2] sm:$0xff] %vm356, %v340
  %358 = vst.msk [vmem:[#allocation2 + $0x8] sm:$0xff] %vm356, %v341
  %359 = vst.msk [vmem:[#allocation2 + $0x10] sm:$0xff] %vm356, %v342
  %360 = vst.msk [vmem:[#allocation2 + $0x18] sm:$0xff] %vm356, %v343
  %361 = vst.msk [vmem:[#allocation2 + $0x20] sm:$0xff] %vm356, %v344
  %362 = vst.msk [vmem:[#allocation2 + $0x28] sm:$0xff] %vm356, %v345
  %363 = vst.msk [vmem:[#allocation2 + $0x30] sm:$0xff] %vm356, %v346
  %364 = vst.msk [vmem:[#allocation2 + $0x38] sm:$0xff] %vm356, %v347
  %365 = vst.msk [vmem:[#allocation2 + $0x40] sm:$0xff] %vm356, %v348
  %366 = vst.msk [vmem:[#allocation2 + $0x48] sm:$0xff] %vm356, %v349
  %367 = vst.msk [vmem:[#allocation2 + $0x50] sm:$0xff] %vm356, %v350
  %368 = vst.msk [vmem:[#allocation2 + $0x58] sm:$0xff] %vm356, %v351
  %369 = vst.msk [vmem:[#allocation2 + $0x60] sm:$0xff] %vm356, %v352
  %370 = vst.msk [vmem:[#allocation2 + $0x68] sm:$0xff] %vm356, %v353
  %371 = vst.msk [vmem:[#allocation2 + $0x70] sm:$0xff] %vm356, %v354
  %372 = vst.msk [vmem:[#allocation2 + $0x78] sm:$0xff] %vm356, %v355
  // Predicated region
  $region26: #{urresnet_forward.16} parent=0 // pred_check
    %p373 = pneg %p21
  $region27: #{urresnet_forward.16} parent=0 // pred_check_branch
    %375 = sbr.rel (%p373) target = $region29
  $region28: #{urresnet_forward.16} parent=0 // pred_region
    %v376 = vld [vmem:[#allocation2] sm:$0xff]
    %v377 = vld [vmem:[#allocation2 + $0x8] sm:$0xff]
    %v378 = vld [vmem:[#allocation2 + $0x10] sm:$0xff]
    %v379 = vld [vmem:[#allocation2 + $0x18] sm:$0xff]
    %v380 = vld [vmem:[#allocation2 + $0x20] sm:$0xff]
    %v381 = vld [vmem:[#allocation2 + $0x28] sm:$0xff]
    %v382 = vld [vmem:[#allocation2 + $0x30] sm:$0xff]
    %v383 = vld [vmem:[#allocation2 + $0x38] sm:$0xff]
    %v384 = vld [vmem:[#allocation2 + $0x40] sm:$0xff]
    %v385 = vld [vmem:[#allocation2 + $0x48] sm:$0xff]
    %v386 = vld [vmem:[#allocation2 + $0x50] sm:$0xff]
    %v387 = vld [vmem:[#allocation2 + $0x58] sm:$0xff]
    %v388 = vld [vmem:[#allocation2 + $0x60] sm:$0xff]
    %v389 = vld [vmem:[#allocation2 + $0x68] sm:$0xff]
    %v390 = vld [vmem:[#allocation2 + $0x70] sm:$0xff]
    %v391 = vld [vmem:[#allocation2 + $0x78] sm:$0xff]
    %v392 = vld [vmem:[%s2] sm:$0x1]
    %v394 = vlaneseq
    %v395 = vshrl.u32 %v394, 7
    %v396 = vsub.s32 0, %v395
    %v397 = vrot.slane %v392, %v396
    %v399 = vmul.f32 %v376, %v397
    %v400 = vmul.f32 %v377, %v397
    %v401 = vmul.f32 %v378, %v397
    %v402 = vmul.f32 %v379, %v397
    %v403 = vmul.f32 %v380, %v397
    %v404 = vmul.f32 %v381, %v397
    %v405 = vmul.f32 %v382, %v397
    %v406 = vmul.f32 %v383, %v397
    %v407 = vmul.f32 %v384, %v397
    %v408 = vmul.f32 %v385, %v397
    %v409 = vmul.f32 %v386, %v397
    %v410 = vmul.f32 %v387, %v397
    %v411 = vmul.f32 %v388, %v397
    %v412 = vmul.f32 %v389, %v397
    %v413 = vmul.f32 %v390, %v397
    %v414 = vmul.f32 %v391, %v397
    %v415 = vld [vmem:[%s3] sm:$0x1]
    %v417 = vlaneseq
    %v418 = vshrl.u32 %v417, 7
    %v419 = vsub.s32 0, %v418
    %v420 = vrot.slane %v415, %v419
    %v422 = vadd.f32 %v399, %v420
    %v423 = vadd.f32 %v400, %v420
    %v424 = vadd.f32 %v401, %v420
    %v425 = vadd.f32 %v402, %v420
    %v426 = vadd.f32 %v403, %v420
    %v427 = vadd.f32 %v404, %v420
    %v428 = vadd.f32 %v405, %v420
    %v429 = vadd.f32 %v406, %v420
    %v430 = vadd.f32 %v407, %v420
    %v431 = vadd.f32 %v408, %v420
    %v432 = vadd.f32 %v409, %v420
    %v433 = vadd.f32 %v410, %v420
    %v434 = vadd.f32 %v411, %v420
    %v435 = vadd.f32 %v412, %v420
    %v436 = vadd.f32 %v413, %v420
    %v437 = vadd.f32 %v414, %v420
    %v438 = vld [vmem:[%s4] sm:$0x1]
    %vm439 = vcmp.gt.f32.partialorder %v438, 0.0
    %v440 = vmax.f32 %v422, 0.0
    %v441 = vmax.f32 %v423, 0.0
    %v442 = vmax.f32 %v424, 0.0
    %v443 = vmax.f32 %v425, 0.0
    %v444 = vmax.f32 %v426, 0.0
    %v445 = vmax.f32 %v427, 0.0
    %v446 = vmax.f32 %v428, 0.0
    %v447 = vmax.f32 %v429, 0.0
    %v448 = vmax.f32 %v430, 0.0
    %v449 = vmax.f32 %v431, 0.0
    %v450 = vmax.f32 %v432, 0.0
    %v451 = vmax.f32 %v433, 0.0
    %v452 = vmax.f32 %v434, 0.0
    %v453 = vmax.f32 %v435, 0.0
    %v454 = vmax.f32 %v436, 0.0
    %v455 = vmax.f32 %v437, 0.0
    %v456 = vsel %vm439, 1, 0
    %v457 = vlaneseq
    %v458 = vshrl.u32 %v457, 7
    %v459 = vsub.s32 0, %v458
    %v460 = vrot.slane %v456, %v459
    %vm461 = vcmp.eq.s32.totalorder %v460, 1
    %v462 = vsel %vm461, %v440, %v422
    %v463 = vsel %vm461, %v441, %v423
    %v464 = vsel %vm461, %v442, %v424
    %v465 = vsel %vm461, %v443, %v425
    %v466 = vsel %vm461, %v444, %v426
    %v467 = vsel %vm461, %v445, %v427
    %v468 = vsel %vm461, %v446, %v428
    %v469 = vsel %vm461, %v447, %v429
    %v470 = vsel %vm461, %v448, %v430
    %v471 = vsel %vm461, %v449, %v431
    %v472 = vsel %vm461, %v450, %v432
    %v473 = vsel %vm461, %v451, %v433
    %v474 = vsel %vm461, %v452, %v434
    %v475 = vsel %vm461, %v453, %v435
    %v476 = vsel %vm461, %v454, %v436
    %v477 = vsel %vm461, %v455, %v437
    %478 = vst.msk [vmem:[%s5] sm:$0xff] %vm356, %v462
    %479 = vst.msk [vmem:[%s5 + $0x8] sm:$0xff] %vm356, %v463
    %480 = vst.msk [vmem:[%s5 + $0x10] sm:$0xff] %vm356, %v464
    %481 = vst.msk [vmem:[%s5 + $0x18] sm:$0xff] %vm356, %v465
    %482 = vst.msk [vmem:[%s5 + $0x20] sm:$0xff] %vm356, %v466
    %483 = vst.msk [vmem:[%s5 + $0x28] sm:$0xff] %vm356, %v467
    %484 = vst.msk [vmem:[%s5 + $0x30] sm:$0xff] %vm356, %v468
    %485 = vst.msk [vmem:[%s5 + $0x38] sm:$0xff] %vm356, %v469
    %486 = vst.msk [vmem:[%s5 + $0x40] sm:$0xff] %vm356, %v470
    %487 = vst.msk [vmem:[%s5 + $0x48] sm:$0xff] %vm356, %v471
    %488 = vst.msk [vmem:[%s5 + $0x50] sm:$0xff] %vm356, %v472
    %489 = vst.msk [vmem:[%s5 + $0x58] sm:$0xff] %vm356, %v473
    %490 = vst.msk [vmem:[%s5 + $0x60] sm:$0xff] %vm356, %v474
    %491 = vst.msk [vmem:[%s5 + $0x68] sm:$0xff] %vm356, %v475
    %492 = vst.msk [vmem:[%s5 + $0x70] sm:$0xff] %vm356, %v476
    %493 = vst.msk [vmem:[%s5 + $0x78] sm:$0xff] %vm356, %v477
  $region29: #{urresnet_forward.16} parent=0 // pred_fallthru
    _
  // Predicated region
  $region30: #{urresnet_forward.16} parent=0 // pred_check
    _
  $region31: #{urresnet_forward.16} parent=0 // pred_check_branch
    %495 = sbr.rel (0) target = $region33
  $region32: #{urresnet_forward.16} parent=0 // pred_region
    _
  $region33: #{urresnet_forward.16} parent=0 // pred_fallthru
    _
  // Predicated region
  $region34: #{urresnet_forward.16} parent=0 // pred_check
    _
  $region35: #{urresnet_forward.16} parent=0 // pred_check_branch
    %497 = sbr.rel (0) target = $region37
  $region36: #{urresnet_forward.16} parent=0 // pred_region
    _
  $region37: #{urresnet_forward.16} parent=0 // pred_fallthru
    _

// kernel: urresnet_forward.17
$region0: #{urresnet_forward.17}
  #allocation0 [shape = 'u32[]', space=smem, size = 0x4, offset = 0x4, fixed_abs, tag = 'smem constant byte address 0x4 - core index']
  #allocation1 [shape = 'u32[144,128]{1,0:T(1,128)}', space=vmem, size = 0x12000, scoped, tag = 'internal scratch']
  #allocation2 [shape = 'f32[128,32]{1,0:T(8,128)}', space=vmem, size = 0x10000, scoped, tag = 'scratch operand']
  %s0 = inlined_call_operand.vmem [shape: bf16[128,288], index: 0, kind: input, shape index: {}]
  %s1 = inlined_call_operand.vmem [shape: bf16[288,32], index: 1, kind: input, shape index: {}]
  %s2 = inlined_call_operand.vmem [shape: f32[1,32], index: 2, kind: input, shape index: {}]
  %s3 = inlined_call_operand.vmem [shape: f32[1,32], index: 3, kind: input, shape index: {}]
  %s4 = inlined_call_operand.vmem [shape: f32[1,32], index: 4, kind: input, shape index: {}]
  %s5 = inlined_call_operand.vmem [shape: f32[128,32], index: 5, kind: input, shape index: {}]
  %s6 = inlined_call_operand.vmem [shape: f32[128,32], index: 6, kind: output, shape index: {}]
  %s7 = sld [smem:[#allocation0]]
  $region42: #{urresnet_forward.17} parent=0
    _
  %s9 = ssub.s32 1, %s7
  %s10 = scalar_select 0, %s9, %s7
  // Predicated region
  $region2: #{urresnet_forward.17} parent=0 // pred_check
    _
  $region3: #{urresnet_forward.17} parent=0 // pred_check_branch
    %12 = sbr.rel (0) target = $region5
  $region4: #{urresnet_forward.17} parent=0 // pred_region
    _
  $region5: #{urresnet_forward.17} parent=0 // pred_fallthru
    _
  // Predicated region
  $region6: #{urresnet_forward.17} parent=0 // pred_check
    _
  $region7: #{urresnet_forward.17} parent=0 // pred_check_branch
    %14 = sbr.rel (0) target = $region9
  $region8: #{urresnet_forward.17} parent=0 // pred_region
    _
  $region9: #{urresnet_forward.17} parent=0 // pred_fallthru
    _
  // Predicated region
  $region10: #{urresnet_forward.17} parent=0 // pred_check
    _
  $region11: #{urresnet_forward.17} parent=0 // pred_check_branch
    %16 = sbr.rel (0) target = $region13
  $region12: #{urresnet_forward.17} parent=0 // pred_region
    _
  $region13: #{urresnet_forward.17} parent=0 // pred_fallthru
    _
  // Predicated region
  $region14: #{urresnet_forward.17} parent=0 // pred_check
    _
  $region15: #{urresnet_forward.17} parent=0 // pred_check_branch
    %18 = sbr.rel (0) target = $region17
  $region16: #{urresnet_forward.17} parent=0 // pred_region
    _
  $region17: #{urresnet_forward.17} parent=0 // pred_fallthru
    _
  // Predicated region
  $region18: #{urresnet_forward.17} parent=0 // pred_check
    _
  $region19: #{urresnet_forward.17} parent=0 // pred_check_branch
    %20 = sbr.rel (0) target = $region21
  $region20: #{urresnet_forward.17} parent=0 // pred_region
    _
  $region21: #{urresnet_forward.17} parent=0 // pred_fallthru
    _
  // Predicated region
  $region22: #{urresnet_forward.17} parent=0 // pred_check
    _
  $region23: #{urresnet_forward.17} parent=0 // pred_check_branch
    %22 = sbr.rel (0) target = $region25
  $region24: #{urresnet_forward.17} parent=0 // pred_region
    _
  $region25: #{urresnet_forward.17} parent=0 // pred_fallthru
    _
  %p24 = scmp.eq.s32.totalorder 0, 0
  // Predicated region
  $region26: #{urresnet_forward.17} parent=0 // pred_check
    %p25 = pneg %p24
  $region27: #{urresnet_forward.17} parent=0 // pred_check_branch
    %27 = sbr.rel (%p25) target = $region29
  $region28: #{urresnet_forward.17} parent=0 // pred_region
    %vm28 = vcmask 261120
    %29 = vst.msk [vmem:[#allocation2] sm:$0xff] %vm28, 0.0
    %30 = vst.msk [vmem:[#allocation2 + $0x8] sm:$0xff] %vm28, 0.0
    %31 = vst.msk [vmem:[#allocation2 + $0x10] sm:$0xff] %vm28, 0.0
    %32 = vst.msk [vmem:[#allocation2 + $0x18] sm:$0xff] %vm28, 0.0
    %33 = vst.msk [vmem:[#allocation2 + $0x20] sm:$0xff] %vm28, 0.0
    %34 = vst.msk [vmem:[#allocation2 + $0x28] sm:$0xff] %vm28, 0.0
    %35 = vst.msk [vmem:[#allocation2 + $0x30] sm:$0xff] %vm28, 0.0
    %36 = vst.msk [vmem:[#allocation2 + $0x38] sm:$0xff] %vm28, 0.0
    %37 = vst.msk [vmem:[#allocation2 + $0x40] sm:$0xff] %vm28, 0.0
    %38 = vst.msk [vmem:[#allocation2 + $0x48] sm:$0xff] %vm28, 0.0
    %39 = vst.msk [vmem:[#allocation2 + $0x50] sm:$0xff] %vm28, 0.0
    %40 = vst.msk [vmem:[#allocation2 + $0x58] sm:$0xff] %vm28, 0.0
    %41 = vst.msk [vmem:[#allocation2 + $0x60] sm:$0xff] %vm28, 0.0
    %42 = vst.msk [vmem:[#allocation2 + $0x68] sm:$0xff] %vm28, 0.0
    %43 = vst.msk [vmem:[#allocation2 + $0x70] sm:$0xff] %vm28, 0.0
    %44 = vst.msk [vmem:[#allocation2 + $0x78] sm:$0xff] %vm28, 0.0
  $region29: #{urresnet_forward.17} parent=0 // pred_fallthru
    _
  %v45 = vld [vmem:[#allocation2] sm:$0xff]
  %v46 = vld [vmem:[#allocation2 + $0x8] sm:$0xff]
  %v47 = vld [vmem:[#allocation2 + $0x10] sm:$0xff]
  %v48 = vld [vmem:[#allocation2 + $0x18] sm:$0xff]
  %v49 = vld [vmem:[#allocation2 + $0x20] sm:$0xff]
  %v50 = vld [vmem:[#allocation2 + $0x28] sm:$0xff]
  %v51 = vld [vmem:[#allocation2 + $0x30] sm:$0xff]
  %v52 = vld [vmem:[#allocation2 + $0x38] sm:$0xff]
  %v53 = vld [vmem:[#allocation2 + $0x40] sm:$0xff]
  %v54 = vld [vmem:[#allocation2 + $0x48] sm:$0xff]
  %v55 = vld [vmem:[#allocation2 + $0x50] sm:$0xff]
  %v56 = vld [vmem:[#allocation2 + $0x58] sm:$0xff]
  %v57 = vld [vmem:[#allocation2 + $0x60] sm:$0xff]
  %v58 = vld [vmem:[#allocation2 + $0x68] sm:$0xff]
  %v59 = vld [vmem:[#allocation2 + $0x70] sm:$0xff]
  %v60 = vld [vmem:[#allocation2 + $0x78] sm:$0xff]
  %v61 = vld [vmem:[%s0] sm:$0xff]
  %v62 = vld [vmem:[%s0 + $0x8] sm:$0xf]
  %v63 = vld [vmem:[%s0 + $0xc] sm:$0xff]
  %v64 = vld [vmem:[%s0 + $0x14] sm:$0xf]
  %v65 = vld [vmem:[%s0 + $0x18] sm:$0xff]
  %v66 = vld [vmem:[%s0 + $0x20] sm:$0xf]
  %v67 = vld [vmem:[%s0 + $0x24] sm:$0xff]
  %v68 = vld [vmem:[%s0 + $0x2c] sm:$0xf]
  %v69 = vld [vmem:[%s0 + $0x30] sm:$0xff]
  %v70 = vld [vmem:[%s0 + $0x38] sm:$0xf]
  %v71 = vld [vmem:[%s0 + $0x3c] sm:$0xff]
  %v72 = vld [vmem:[%s0 + $0x44] sm:$0xf]
  %v73 = vld [vmem:[%s0 + $0x48] sm:$0xff]
  %v74 = vld [vmem:[%s0 + $0x50] sm:$0xf]
  %v75 = vld [vmem:[%s0 + $0x54] sm:$0xff]
  %v76 = vld [vmem:[%s0 + $0x5c] sm:$0xf]
  %v77 = vld [vmem:[%s0 + $0x60] sm:$0xff]
  %v78 = vld [vmem:[%s0 + $0x68] sm:$0xf]
  %v79 = vld [vmem:[%s0 + $0x6c] sm:$0xff]
  %v80 = vld [vmem:[%s0 + $0x74] sm:$0xf]
  %v81 = vld [vmem:[%s0 + $0x78] sm:$0xff]
  %v82 = vld [vmem:[%s0 + $0x80] sm:$0xf]
  %v83 = vld [vmem:[%s0 + $0x84] sm:$0xff]
  %v84 = vld [vmem:[%s0 + $0x8c] sm:$0xf]
  %v85 = vld [vmem:[%s0 + $0x90] sm:$0xff]
  %v86 = vld [vmem:[%s0 + $0x98] sm:$0xf]
  %v87 = vld [vmem:[%s0 + $0x9c] sm:$0xff]
  %v88 = vld [vmem:[%s0 + $0xa4] sm:$0xf]
  %v89 = vld [vmem:[%s0 + $0xa8] sm:$0xff]
  %v90 = vld [vmem:[%s0 + $0xb0] sm:$0xf]
  %v91 = vld [vmem:[%s0 + $0xb4] sm:$0xff]
  %v92 = vld [vmem:[%s0 + $0xbc] sm:$0xf]
  %v93 = vld [vmem:[%s1] sm:$0xf]
  %v94 = vld [vmem:[%s1 + $0x4] sm:$0xf]
  %v95 = vld [vmem:[%s1 + $0x8] sm:$0xf]
  %v96 = vld [vmem:[%s1 + $0xc] sm:$0xf]
  %v97 = vld [vmem:[%s1 + $0x10] sm:$0xf]
  %v98 = vld [vmem:[%s1 + $0x14] sm:$0xf]
  %v99 = vld [vmem:[%s1 + $0x18] sm:$0xf]
  %v100 = vld [vmem:[%s1 + $0x1c] sm:$0xf]
  %v101 = vld [vmem:[%s1 + $0x20] sm:$0xf]
  %v102 = vld [vmem:[%s1 + $0x24] sm:$0xf]
  %v103 = vld [vmem:[%s1 + $0x28] sm:$0xf]
  %v104 = vld [vmem:[%s1 + $0x2c] sm:$0xf]
  %v105 = vld [vmem:[%s1 + $0x30] sm:$0xf]
  %v106 = vld [vmem:[%s1 + $0x34] sm:$0xf]
  %v107 = vld [vmem:[%s1 + $0x38] sm:$0xf]
  %v108 = vld [vmem:[%s1 + $0x3c] sm:$0xf]
  %v109 = vld [vmem:[%s1 + $0x40] sm:$0xf]
  %v110 = vld [vmem:[%s1 + $0x44] sm:$0xf]
  %v111 = vld [vmem:[%s1 + $0x48] sm:$0xf]
  %v112 = vld [vmem:[%s1 + $0x4c] sm:$0xf]
  %v113 = vld [vmem:[%s1 + $0x50] sm:$0xf]
  %v114 = vld [vmem:[%s1 + $0x54] sm:$0xf]
  %v115 = vld [vmem:[%s1 + $0x58] sm:$0xf]
  %v116 = vld [vmem:[%s1 + $0x5c] sm:$0xf]
  %v117 = vld [vmem:[%s1 + $0x60] sm:$0xf]
  %v118 = vld [vmem:[%s1 + $0x64] sm:$0xf]
  %v119 = vld [vmem:[%s1 + $0x68] sm:$0xf]
  %v120 = vld [vmem:[%s1 + $0x6c] sm:$0xf]
  %v121 = vld [vmem:[%s1 + $0x70] sm:$0xf]
  %v122 = vld [vmem:[%s1 + $0x74] sm:$0xf]
  %v123 = vld [vmem:[%s1 + $0x78] sm:$0xf]
  %v124 = vld [vmem:[%s1 + $0x7c] sm:$0xf]
  %v125 = vld [vmem:[%s1 + $0x80] sm:$0xf]
  %v126 = vld [vmem:[%s1 + $0x84] sm:$0xf]
  %v127 = vld [vmem:[%s1 + $0x88] sm:$0xf]
  %v128 = vld [vmem:[%s1 + $0x8c] sm:$0xf]
  %v161 = vunpack.c.l.b16 %v61
  %v162 = vunpack.c.h.b16 %v61
  %v163 = vunpack.c.l.b16 %v62
  %v164 = vunpack.c.l.b16 %v63
  %v165 = vunpack.c.h.b16 %v63
  %v166 = vunpack.c.l.b16 %v64
  %v167 = vunpack.c.l.b16 %v65
  %v168 = vunpack.c.h.b16 %v65
  %v169 = vunpack.c.l.b16 %v66
  %v170 = vunpack.c.l.b16 %v67
  %v171 = vunpack.c.h.b16 %v67
  %v172 = vunpack.c.l.b16 %v68
  %v173 = vunpack.c.l.b16 %v69
  %v174 = vunpack.c.h.b16 %v69
  %v175 = vunpack.c.l.b16 %v70
  %v176 = vunpack.c.l.b16 %v71
  %v177 = vunpack.c.h.b16 %v71
  %v178 = vunpack.c.l.b16 %v72
  %v179 = vunpack.c.l.b16 %v73
  %v180 = vunpack.c.h.b16 %v73
  %v181 = vunpack.c.l.b16 %v74
  %v182 = vunpack.c.l.b16 %v75
  %v183 = vunpack.c.h.b16 %v75
  %v184 = vunpack.c.l.b16 %v76
  %v185 = vunpack.c.l.b16 %v77
  %v186 = vunpack.c.h.b16 %v77
  %v187 = vunpack.c.l.b16 %v78
  %v188 = vunpack.c.l.b16 %v79
  %v189 = vunpack.c.h.b16 %v79
  %v190 = vunpack.c.l.b16 %v80
  %v191 = vunpack.c.l.b16 %v81
  %v192 = vunpack.c.h.b16 %v81
  %v193 = vunpack.c.l.b16 %v82
  %v194 = vunpack.c.l.b16 %v83
  %v195 = vunpack.c.h.b16 %v83
  %v196 = vunpack.c.l.b16 %v84
  %v197 = vunpack.c.l.b16 %v85
  %v198 = vunpack.c.h.b16 %v85
  %v199 = vunpack.c.l.b16 %v86
  %v200 = vunpack.c.l.b16 %v87
  %v201 = vunpack.c.h.b16 %v87
  %v202 = vunpack.c.l.b16 %v88
  %v203 = vunpack.c.l.b16 %v89
  %v204 = vunpack.c.h.b16 %v89
  %v205 = vunpack.c.l.b16 %v90
  %v206 = vunpack.c.l.b16 %v91
  %v207 = vunpack.c.h.b16 %v91
  %v208 = vunpack.c.l.b16 %v92
  %v209 = vpack.c.b16 %v164, %v161
  %v210 = vpack.c.b16 %v165, %v162
  %v211 = vpack.c.b16 %v166, %v163
  %v212 = vpack.c.b16 %v170, %v167
  %v213 = vpack.c.b16 %v171, %v168
  %v214 = vpack.c.b16 %v172, %v169
  %v215 = vpack.c.b16 %v176, %v173
  %v216 = vpack.c.b16 %v177, %v174
  %v217 = vpack.c.b16 %v178, %v175
  %v218 = vpack.c.b16 %v182, %v179
  %v219 = vpack.c.b16 %v183, %v180
  %v220 = vpack.c.b16 %v184, %v181
  %v221 = vpack.c.b16 %v188, %v185
  %v222 = vpack.c.b16 %v189, %v186
  %v223 = vpack.c.b16 %v190, %v187
  %v224 = vpack.c.b16 %v194, %v191
  %v225 = vpack.c.b16 %v195, %v192
  %v226 = vpack.c.b16 %v196, %v193
  %v227 = vpack.c.b16 %v200, %v197
  %v228 = vpack.c.b16 %v201, %v198
  %v229 = vpack.c.b16 %v202, %v199
  %v230 = vpack.c.b16 %v206, %v203
  %v231 = vpack.c.b16 %v207, %v204
  %v232 = vpack.c.b16 %v208, %v205
  %v285 = vunpack.c.l.b16 %v93
  %v286 = vunpack.c.l.b16 %v94
  %v287 = vunpack.c.l.b16 %v95
  %v288 = vunpack.c.l.b16 %v96
  %v289 = vunpack.c.l.b16 %v97
  %v290 = vunpack.c.l.b16 %v98
  %v291 = vunpack.c.l.b16 %v99
  %v292 = vunpack.c.l.b16 %v100
  %v293 = vunpack.c.l.b16 %v101
  %v294 = vunpack.c.l.b16 %v102
  %v295 = vunpack.c.l.b16 %v103
  %v296 = vunpack.c.l.b16 %v104
  %v297 = vunpack.c.l.b16 %v105
  %v298 = vunpack.c.l.b16 %v106
  %v299 = vunpack.c.l.b16 %v107
  %v300 = vunpack.c.l.b16 %v108
  %v301 = vunpack.c.l.b16 %v109
  %v302 = vunpack.c.l.b16 %v110
  %v303 = vunpack.c.l.b16 %v111
  %v304 = vunpack.c.l.b16 %v112
  %v305 = vunpack.c.l.b16 %v113
  %v306 = vunpack.c.l.b16 %v114
  %v307 = vunpack.c.l.b16 %v115
  %v308 = vunpack.c.l.b16 %v116
  %v309 = vunpack.c.l.b16 %v117
  %v310 = vunpack.c.l.b16 %v118
  %v311 = vunpack.c.l.b16 %v119
  %v312 = vunpack.c.l.b16 %v120
  %v313 = vunpack.c.l.b16 %v121
  %v314 = vunpack.c.l.b16 %v122
  %v315 = vunpack.c.l.b16 %v123
  %v316 = vunpack.c.l.b16 %v124
  %v317 = vunpack.c.l.b16 %v125
  %v318 = vunpack.c.l.b16 %v126
  %v319 = vunpack.c.l.b16 %v127
  %v320 = vunpack.c.l.b16 %v128
  %v321 = vpack.c.b16 %v286, %v285
  %v322 = vpack.c.b16 %v288, %v287
  %v323 = vpack.c.b16 %v290, %v289
  %v324 = vpack.c.b16 %v292, %v291
  %v325 = vpack.c.b16 %v294, %v293
  %v326 = vpack.c.b16 %v296, %v295
  %v327 = vpack.c.b16 %v298, %v297
  %v328 = vpack.c.b16 %v300, %v299
  %v329 = vpack.c.b16 %v302, %v301
  %v330 = vpack.c.b16 %v304, %v303
  %v331 = vpack.c.b16 %v306, %v305
  %v332 = vpack.c.b16 %v308, %v307
  %v333 = vpack.c.b16 %v310, %v309
  %v334 = vpack.c.b16 %v312, %v311
  %v335 = vpack.c.b16 %v314, %v313
  %v336 = vpack.c.b16 %v316, %v315
  %v337 = vpack.c.b16 %v318, %v317
  %v338 = vpack.c.b16 %v320, %v319
  %vm357 = vcmask 261120
  %v359 = vsel %vm357, %v211, 0
  %v362 = vsel %vm357, %v214, 0
  %v365 = vsel %vm357, %v217, 0
  %v368 = vsel %vm357, %v220, 0
  %v371 = vsel %vm357, %v223, 0
  %v374 = vsel %vm357, %v226, 0
  %v377 = vsel %vm357, %v229, 0
  %v380 = vsel %vm357, %v232, 0
  %382 = vmatprep.subr.bf16.mxu0 0
  %383 = vmatpush1.bf16.msra.mxu0 %v321
  %384 = vmatprep.subr.bf16.mxu0 0
  %385 = vmatpush1.bf16.msra.mxu0 %v322
  %386 = vmatprep.subr.bf16.mxu0 0
  %387 = vmatpush1.bf16.msra.mxu0 %v323
  %388 = vmatprep.subr.bf16.mxu0 0
  %389 = vmatpush1.bf16.msra.mxu0 %v324
  %390 = vmatprep.subr.bf16.mxu0 0
  %391 = vmatpush1.bf16.msra.mxu0 %v325
  %392 = vmatprep.subr.bf16.mxu0 0
  %393 = vmatpush1.bf16.msra.mxu0 %v326
  %394 = vmatprep.subr.bf16.mxu0 0
  %395 = vmatpush1.bf16.msra.mxu0 %v327
  %396 = vmatprep.subr.bf16.mxu0 0
  %397 = vmatpush1.bf16.msra.mxu0 %v328
  %398 = vmatprep.subr.bf16.mxu0 0
  %399 = vmatpush1.bf16.msra.mxu0 %v329
  %400 = vmatprep.subr.bf16.mxu0 0
  %401 = vmatpush1.bf16.msra.mxu0 %v330
  %402 = vmatprep.subr.bf16.mxu0 0
  %403 = vmatpush1.bf16.msra.mxu0 %v331
  %404 = vmatprep.subr.bf16.mxu0 0
  %405 = vmatpush1.bf16.msra.mxu0 %v332
  %406 = vmatprep.subr.bf16.mxu0 0
  %407 = vmatpush1.bf16.msra.mxu0 %v333
  %408 = vmatprep.subr.bf16.mxu0 0
  %409 = vmatpush1.bf16.msra.mxu0 %v334
  %410 = vmatprep.subr.bf16.mxu0 0
  %411 = vmatpush1.bf16.msra.mxu0 %v335
  %412 = vmatprep.subr.bf16.mxu0 0
  %413 = vmatpush1.bf16.msra.mxu0 %v336
  %414 = vmatprep.mubr.bf16.mxu0 %v210
  %415 = vmatmul.mubr.bf16.gmra.mrb[0].mxu0 %v209
  %v416 = vpop.f32.mrb[0].mxu0
  %v417 = vadd.f32 0.0, %v416
  %v418 = vpop.f32.mrb[0].mxu0
  %v419 = vpop.f32.mrb[0].mxu0
  %v420 = vadd.f32 0.0, %v419
  %v421 = vpop.f32.mrb[0].mxu0
  %422 = vmatprep.mubr.bf16.mxu0 %v213
  %423 = vmatmul.mubr.bf16.gmra.mrb[0].mxu0 %v212
  %v424 = vpop.f32.mrb[0].mxu0
  %v425 = vadd.f32 0.0, %v424
  %v426 = vpop.f32.mrb[0].mxu0
  %v427 = vpop.f32.mrb[0].mxu0
  %v428 = vadd.f32 0.0, %v427
  %v429 = vpop.f32.mrb[0].mxu0
  %430 = vmatprep.mubr.bf16.mxu0 %v216
  %431 = vmatmul.mubr.bf16.gmra.mrb[0].mxu0 %v215
  %v432 = vpop.f32.mrb[0].mxu0
  %v433 = vadd.f32 0.0, %v432
  %v434 = vpop.f32.mrb[0].mxu0
  %v435 = vpop.f32.mrb[0].mxu0
  %v436 = vadd.f32 0.0, %v435
  %v437 = vpop.f32.mrb[0].mxu0
  %438 = vmatprep.mubr.bf16.mxu0 %v219
  %439 = vmatmul.mubr.bf16.gmra.mrb[0].mxu0 %v218
  %v440 = vpop.f32.mrb[0].mxu0
  %v441 = vadd.f32 0.0, %v440
  %v442 = vpop.f32.mrb[0].mxu0
  %v443 = vpop.f32.mrb[0].mxu0
  %v444 = vadd.f32 0.0, %v443
  %v445 = vpop.f32.mrb[0].mxu0
  %446 = vmatprep.mubr.bf16.mxu0 %v222
  %447 = vmatmul.mubr.bf16.gmra.mrb[0].mxu0 %v221
  %v448 = vpop.f32.mrb[0].mxu0
  %v449 = vadd.f32 0.0, %v448
  %v450 = vpop.f32.mrb[0].mxu0
  %v451 = vpop.f32.mrb[0].mxu0
  %v452 = vadd.f32 0.0, %v451
  %v453 = vpop.f32.mrb[0].mxu0
  %454 = vmatprep.mubr.bf16.mxu0 %v225
  %455 = vmatmul.mubr.bf16.gmra.mrb[0].mxu0 %v224
  %v456 = vpop.f32.mrb[0].mxu0
  %v457 = vadd.f32 0.0, %v456
  %v458 = vpop.f32.mrb[0].mxu0
  %v459 = vpop.f32.mrb[0].mxu0
  %v460 = vadd.f32 0.0, %v459
  %v461 = vpop.f32.mrb[0].mxu0
  %462 = vmatprep.mubr.bf16.mxu0 %v228
  %463 = vmatmul.mubr.bf16.gmra.mrb[0].mxu0 %v227
  %v464 = vpop.f32.mrb[0].mxu0
  %v465 = vadd.f32 0.0, %v464
  %v466 = vpop.f32.mrb[0].mxu0
  %v467 = vpop.f32.mrb[0].mxu0
  %v468 = vadd.f32 0.0, %v467
  %v469 = vpop.f32.mrb[0].mxu0
  %470 = vmatprep.mubr.bf16.mxu0 %v231
  %471 = vmatmul.mubr.bf16.gmra.mrb[0].mxu0 %v230
  %v472 = vpop.f32.mrb[0].mxu0
  %v473 = vadd.f32 0.0, %v472
  %v474 = vpop.f32.mrb[0].mxu0
  %v475 = vpop.f32.mrb[0].mxu0
  %v476 = vadd.f32 0.0, %v475
  %v477 = vpop.f32.mrb[0].mxu0
  %478 = vdwg.mxu0
  %479 = vmatprep.subr.bf16.mxu0 0
  %480 = vmatpush1.bf16.msra.mxu0 %v337
  %481 = vmatprep.subr.bf16.mxu0 0
  %482 = vmatpush1.bf16.msra.mxu0 %v338
  %483 = vmatprep.subr.bf16.mxu0 0
  %484 = vmatpush1.bf16.msra.mxu0 0
  %485 = vmatprep.subr.bf16.mxu0 0
  %486 = vmatpush1.bf16.msra.mxu0 0
  %487 = vmatprep.subr.bf16.mxu0 0
  %488 = vmatpush1.bf16.msra.mxu0 0
  %489 = vmatprep.subr.bf16.mxu0 0
  %490 = vmatpush1.bf16.msra.mxu0 0
  %491 = vmatprep.subr.bf16.mxu0 0
  %492 = vmatpush1.bf16.msra.mxu0 0
  %493 = vmatprep.subr.bf16.mxu0 0
  %494 = vmatpush1.bf16.msra.mxu0 0
  %495 = vmatprep.subr.bf16.mxu0 0
  %496 = vmatpush1.bf16.msra.mxu0 0
  %497 = vmatprep.subr.bf16.mxu0 0
  %498 = vmatpush1.bf16.msra.mxu0 0
  %499 = vmatprep.subr.bf16.mxu0 0
  %500 = vmatpush1.bf16.msra.mxu0 0
  %501 = vmatprep.subr.bf16.mxu0 0
  %502 = vmatpush1.bf16.msra.mxu0 0
  %503 = vmatprep.subr.bf16.mxu0 0
  %504 = vmatpush1.bf16.msra.mxu0 0
  %505 = vmatprep.subr.bf16.mxu0 0
  %506 = vmatpush1.bf16.msra.mxu0 0
  %507 = vmatprep.subr.bf16.mxu0 0
  %508 = vmatpush1.bf16.msra.mxu0 0
  %509 = vmatprep.subr.bf16.mxu0 0
  %510 = vmatpush1.bf16.msra.mxu0 0
  %511 = vmatprep.mubr.bf16.mxu0 0
  %512 = vmatmul.mubr.bf16.gmra.mrb[0].mxu0 %v359
  %v513 = vpop.f32.mrb[0].mxu0
  %v514 = vadd.f32 %v417, %v513
  %v515 = vpop.f32.mrb[0].mxu0
  %v516 = vpop.f32.mrb[0].mxu0
  %v517 = vadd.f32 %v420, %v516
  %v518 = vpop.f32.mrb[0].mxu0
  %519 = vmatprep.mubr.bf16.mxu0 0
  %520 = vmatmul.mubr.bf16.gmra.mrb[0].mxu0 %v362
  %v521 = vpop.f32.mrb[0].mxu0
  %v522 = vadd.f32 %v425, %v521
  %v523 = vpop.f32.mrb[0].mxu0
  %v524 = vpop.f32.mrb[0].mxu0
  %v525 = vadd.f32 %v428, %v524
  %v526 = vpop.f32.mrb[0].mxu0
  %527 = vmatprep.mubr.bf16.mxu0 0
  %528 = vmatmul.mubr.bf16.gmra.mrb[0].mxu0 %v365
  %v529 = vpop.f32.mrb[0].mxu0
  %v530 = vadd.f32 %v433, %v529
  %v531 = vpop.f32.mrb[0].mxu0
  %v532 = vpop.f32.mrb[0].mxu0
  %v533 = vadd.f32 %v436, %v532
  %v534 = vpop.f32.mrb[0].mxu0
  %535 = vmatprep.mubr.bf16.mxu0 0
  %536 = vmatmul.mubr.bf16.gmra.mrb[0].mxu0 %v368
  %v537 = vpop.f32.mrb[0].mxu0
  %v538 = vadd.f32 %v441, %v537
  %v539 = vpop.f32.mrb[0].mxu0
  %v540 = vpop.f32.mrb[0].mxu0
  %v541 = vadd.f32 %v444, %v540
  %v542 = vpop.f32.mrb[0].mxu0
  %543 = vmatprep.mubr.bf16.mxu0 0
  %544 = vmatmul.mubr.bf16.gmra.mrb[0].mxu0 %v371
  %v545 = vpop.f32.mrb[0].mxu0
  %v546 = vadd.f32 %v449, %v545
  %v547 = vpop.f32.mrb[0].mxu0
  %v548 = vpop.f32.mrb[0].mxu0
  %v549 = vadd.f32 %v452, %v548
  %v550 = vpop.f32.mrb[0].mxu0
  %551 = vmatprep.mubr.bf16.mxu0 0
  %552 = vmatmul.mubr.bf16.gmra.mrb[0].mxu0 %v374
  %v553 = vpop.f32.mrb[0].mxu0
  %v554 = vadd.f32 %v457, %v553
  %v555 = vpop.f32.mrb[0].mxu0
  %v556 = vpop.f32.mrb[0].mxu0
  %v557 = vadd.f32 %v460, %v556
  %v558 = vpop.f32.mrb[0].mxu0
  %559 = vmatprep.mubr.bf16.mxu0 0
  %560 = vmatmul.mubr.bf16.gmra.mrb[0].mxu0 %v377
  %v561 = vpop.f32.mrb[0].mxu0
  %v562 = vadd.f32 %v465, %v561
  %v563 = vpop.f32.mrb[0].mxu0
  %v564 = vpop.f32.mrb[0].mxu0
  %v565 = vadd.f32 %v468, %v564
  %v566 = vpop.f32.mrb[0].mxu0
  %567 = vmatprep.mubr.bf16.mxu0 0
  %568 = vmatmul.mubr.bf16.gmra.mrb[0].mxu0 %v380
  %v569 = vpop.f32.mrb[0].mxu0
  %v570 = vadd.f32 %v473, %v569
  %v571 = vpop.f32.mrb[0].mxu0
  %v572 = vpop.f32.mrb[0].mxu0
  %v573 = vadd.f32 %v476, %v572
  %v574 = vpop.f32.mrb[0].mxu0
  %575 = vdwg.mxu0
  %v576 = vadd.f32 %v45, %v514
  %v577 = vadd.f32 %v46, %v517
  %v578 = vadd.f32 %v47, %v522
  %v579 = vadd.f32 %v48, %v525
  %v580 = vadd.f32 %v49, %v530
  %v581 = vadd.f32 %v50, %v533
  %v582 = vadd.f32 %v51, %v538
  %v583 = vadd.f32 %v52, %v541
  %v584 = vadd.f32 %v53, %v546
  %v585 = vadd.f32 %v54, %v549
  %v586 = vadd.f32 %v55, %v554
  %v587 = vadd.f32 %v56, %v557
  %v588 = vadd.f32 %v57, %v562
  %v589 = vadd.f32 %v58, %v565
  %v590 = vadd.f32 %v59, %v570
  %v591 = vadd.f32 %v60, %v573
  %592 = vst.msk [vmem:[#allocation2] sm:$0xff] %vm357, %v576
  %593 = vst.msk [vmem:[#allocation2 + $0x8] sm:$0xff] %vm357, %v577
  %594 = vst.msk [vmem:[#allocation2 + $0x10] sm:$0xff] %vm357, %v578
  %595 = vst.msk [vmem:[#allocation2 + $0x18] sm:$0xff] %vm357, %v579
  %596 = vst.msk [vmem:[#allocation2 + $0x20] sm:$0xff] %vm357, %v580
  %597 = vst.msk [vmem:[#allocation2 + $0x28] sm:$0xff] %vm357, %v581
  %598 = vst.msk [vmem:[#allocation2 + $0x30] sm:$0xff] %vm357, %v582
  %599 = vst.msk [vmem:[#allocation2 + $0x38] sm:$0xff] %vm357, %v583
  %600 = vst.msk [vmem:[#allocation2 + $0x40] sm:$0xff] %vm357, %v584
  %601 = vst.msk [vmem:[#allocation2 + $0x48] sm:$0xff] %vm357, %v585
  %602 = vst.msk [vmem:[#allocation2 + $0x50] sm:$0xff] %vm357, %v586
  %603 = vst.msk [vmem:[#allocation2 + $0x58] sm:$0xff] %vm357, %v587
  %604 = vst.msk [vmem:[#allocation2 + $0x60] sm:$0xff] %vm357, %v588
  %605 = vst.msk [vmem:[#allocation2 + $0x68] sm:$0xff] %vm357, %v589
  %606 = vst.msk [vmem:[#allocation2 + $0x70] sm:$0xff] %vm357, %v590
  %607 = vst.msk [vmem:[#allocation2 + $0x78] sm:$0xff] %vm357, %v591
  // Predicated region
  $region30: #{urresnet_forward.17} parent=0 // pred_check
    %p608 = pneg %p24
  $region31: #{urresnet_forward.17} parent=0 // pred_check_branch
    %610 = sbr.rel (%p608) target = $region33
  $region32: #{urresnet_forward.17} parent=0 // pred_region
    %v611 = vld [vmem:[#allocation2] sm:$0xff]
    %v612 = vld [vmem:[#allocation2 + $0x8] sm:$0xff]
    %v613 = vld [vmem:[#allocation2 + $0x10] sm:$0xff]
    %v614 = vld [vmem:[#allocation2 + $0x18] sm:$0xff]
    %v615 = vld [vmem:[#allocation2 + $0x20] sm:$0xff]
    %v616 = vld [vmem:[#allocation2 + $0x28] sm:$0xff]
    %v617 = vld [vmem:[#allocation2 + $0x30] sm:$0xff]
    %v618 = vld [vmem:[#allocation2 + $0x38] sm:$0xff]
    %v619 = vld [vmem:[#allocation2 + $0x40] sm:$0xff]
    %v620 = vld [vmem:[#allocation2 + $0x48] sm:$0xff]
    %v621 = vld [vmem:[#allocation2 + $0x50] sm:$0xff]
    %v622 = vld [vmem:[#allocation2 + $0x58] sm:$0xff]
    %v623 = vld [vmem:[#allocation2 + $0x60] sm:$0xff]
    %v624 = vld [vmem:[#allocation2 + $0x68] sm:$0xff]
    %v625 = vld [vmem:[#allocation2 + $0x70] sm:$0xff]
    %v626 = vld [vmem:[#allocation2 + $0x78] sm:$0xff]
    %v627 = vld [vmem:[%s2] sm:$0x1]
    %v629 = vlaneseq
    %v630 = vshrl.u32 %v629, 7
    %v631 = vsub.s32 0, %v630
    %v632 = vrot.slane %v627, %v631
    %v634 = vmul.f32 %v611, %v632
    %v635 = vmul.f32 %v612, %v632
    %v636 = vmul.f32 %v613, %v632
    %v637 = vmul.f32 %v614, %v632
    %v638 = vmul.f32 %v615, %v632
    %v639 = vmul.f32 %v616, %v632
    %v640 = vmul.f32 %v617, %v632
    %v641 = vmul.f32 %v618, %v632
    %v642 = vmul.f32 %v619, %v632
    %v643 = vmul.f32 %v620, %v632
    %v644 = vmul.f32 %v621, %v632
    %v645 = vmul.f32 %v622, %v632
    %v646 = vmul.f32 %v623, %v632
    %v647 = vmul.f32 %v624, %v632
    %v648 = vmul.f32 %v625, %v632
    %v649 = vmul.f32 %v626, %v632
    %v650 = vld [vmem:[%s3] sm:$0x1]
    %v652 = vlaneseq
    %v653 = vshrl.u32 %v652, 7
    %v654 = vsub.s32 0, %v653
    %v655 = vrot.slane %v650, %v654
    %v657 = vadd.f32 %v634, %v655
    %v658 = vadd.f32 %v635, %v655
    %v659 = vadd.f32 %v636, %v655
    %v660 = vadd.f32 %v637, %v655
    %v661 = vadd.f32 %v638, %v655
    %v662 = vadd.f32 %v639, %v655
    %v663 = vadd.f32 %v640, %v655
    %v664 = vadd.f32 %v641, %v655
    %v665 = vadd.f32 %v642, %v655
    %v666 = vadd.f32 %v643, %v655
    %v667 = vadd.f32 %v644, %v655
    %v668 = vadd.f32 %v645, %v655
    %v669 = vadd.f32 %v646, %v655
    %v670 = vadd.f32 %v647, %v655
    %v671 = vadd.f32 %v648, %v655
    %v672 = vadd.f32 %v649, %v655
    %v673 = vld [vmem:[%s5] sm:$0xff]
    %v674 = vld [vmem:[%s5 + $0x8] sm:$0xff]
    %v675 = vld [vmem:[%s5 + $0x10] sm:$0xff]
    %v676 = vld [vmem:[%s5 + $0x18] sm:$0xff]
    %v677 = vld [vmem:[%s5 + $0x20] sm:$0xff]
    %v678 = vld [vmem:[%s5 + $0x28] sm:$0xff]
    %v679 = vld [vmem:[%s5 + $0x30] sm:$0xff]
    %v680 = vld [vmem:[%s5 + $0x38] sm:$0xff]
    %v681 = vld [vmem:[%s5 + $0x40] sm:$0xff]
    %v682 = vld [vmem:[%s5 + $0x48] sm:$0xff]
    %v683 = vld [vmem:[%s5 + $0x50] sm:$0xff]
    %v684 = vld [vmem:[%s5 + $0x58] sm:$0xff]
    %v685 = vld [vmem:[%s5 + $0x60] sm:$0xff]
    %v686 = vld [vmem:[%s5 + $0x68] sm:$0xff]
    %v687 = vld [vmem:[%s5 + $0x70] sm:$0xff]
    %v688 = vld [vmem:[%s5 + $0x78] sm:$0xff]
    %v689 = vadd.f32 %v657, %v673
    %v690 = vadd.f32 %v658, %v674
    %v691 = vadd.f32 %v659, %v675
    %v692 = vadd.f32 %v660, %v676
    %v693 = vadd.f32 %v661, %v677
    %v694 = vadd.f32 %v662, %v678
    %v695 = vadd.f32 %v663, %v679
    %v696 = vadd.f32 %v664, %v680
    %v697 = vadd.f32 %v665, %v681
    %v698 = vadd.f32 %v666, %v682
    %v699 = vadd.f32 %v667, %v683
    %v700 = vadd.f32 %v668, %v684
    %v701 = vadd.f32 %v669, %v685
    %v702 = vadd.f32 %v670, %v686
    %v703 = vadd.f32 %v671, %v687
    %v704 = vadd.f32 %v672, %v688
    %v705 = vld [vmem:[%s4] sm:$0x1]
    %vm706 = vcmp.gt.f32.partialorder %v705, 0.0
    %v707 = vmax.f32 %v689, 0.0
    %v708 = vmax.f32 %v690, 0.0
    %v709 = vmax.f32 %v691, 0.0
    %v710 = vmax.f32 %v692, 0.0
    %v711 = vmax.f32 %v693, 0.0
    %v712 = vmax.f32 %v694, 0.0
    %v713 = vmax.f32 %v695, 0.0
    %v714 = vmax.f32 %v696, 0.0
    %v715 = vmax.f32 %v697, 0.0
    %v716 = vmax.f32 %v698, 0.0
    %v717 = vmax.f32 %v699, 0.0
    %v718 = vmax.f32 %v700, 0.0
    %v719 = vmax.f32 %v701, 0.0
    %v720 = vmax.f32 %v702, 0.0
    %v721 = vmax.f32 %v703, 0.0
    %v722 = vmax.f32 %v704, 0.0
    %v723 = vsel %vm706, 1, 0
    %v724 = vlaneseq
    %v725 = vshrl.u32 %v724, 7
    %v726 = vsub.s32 0, %v725
    %v727 = vrot.slane %v723, %v726
    %vm728 = vcmp.eq.s32.totalorder %v727, 1
    %v729 = vsel %vm728, %v707, %v689
    %v730 = vsel %vm728, %v708, %v690
    %v731 = vsel %vm728, %v709, %v691
    %v732 = vsel %vm728, %v710, %v692
    %v733 = vsel %vm728, %v711, %v693
    %v734 = vsel %vm728, %v712, %v694
    %v735 = vsel %vm728, %v713, %v695
    %v736 = vsel %vm728, %v714, %v696
    %v737 = vsel %vm728, %v715, %v697
    %v738 = vsel %vm728, %v716, %v698
    %v739 = vsel %vm728, %v717, %v699
    %v740 = vsel %vm728, %v718, %v700
    %v741 = vsel %vm728, %v719, %v701
    %v742 = vsel %vm728, %v720, %v702
    %v743 = vsel %vm728, %v721, %v703
    %v744 = vsel %vm728, %v722, %v704
    %745 = vst.msk [vmem:[%s6] sm:$0xff] %vm357, %v729
    %746 = vst.msk [vmem:[%s6 + $0x8] sm:$0xff] %vm357, %v730
    %747 = vst.msk [vmem:[%s6 + $0x10] sm:$0xff] %vm357, %v731
    %748 = vst.msk [vmem:[%s6 + $0x18] sm:$0xff] %vm357, %v732
    %749 = vst.msk [vmem:[%s6 + $0x20] sm:$0xff] %vm357, %v733
    %750 = vst.msk [vmem:[%s6 + $0x28] sm:$0xff] %vm357, %v734
    %751 = vst.msk [vmem:[%s6 + $0x30] sm:$0xff] %vm357, %v735
    %752 = vst.msk [vmem:[%s6 + $0x38] sm:$0xff] %vm357, %v736
    %753 = vst.msk [vmem:[%s6 + $0x40] sm:$0xff] %vm357, %v737
    %754 = vst.msk [vmem:[%s6 + $0x48] sm:$0xff] %vm357, %v738
    %755 = vst.msk [vmem:[%s6 + $0x50] sm:$0xff] %vm357, %v739
    %756 = vst.msk [vmem:[%s6 + $0x58] sm:$0xff] %vm357, %v740
    %757 = vst.msk [vmem:[%s6 + $0x60] sm:$0xff] %vm357, %v741
    %758 = vst.msk [vmem:[%s6 + $0x68] sm:$0xff] %vm357, %v742
    %759 = vst.msk [vmem:[%s6 + $0x70] sm:$0xff] %vm357, %v743
    %760 = vst.msk [vmem:[%s6 + $0x78] sm:$0xff] %vm357, %v744
  $region33: #{urresnet_forward.17} parent=0 // pred_fallthru
    _
  // Predicated region
  $region34: #{urresnet_forward.17} parent=0 // pred_check
    _
  $region35: #{urresnet_forward.17} parent=0 // pred_check_branch
    %762 = sbr.rel (0) target = $region37
  $region36: #{urresnet_forward.17} parent=0 // pred_region
    _
  $region37: #{urresnet_forward.17} parent=0 // pred_fallthru
    _
  // Predicated region
  $region38: #{urresnet_forward.17} parent=0 // pred_check
    _
  $region39: #{urresnet_forward.17} parent=0 // pred_check_branch
    %764 = sbr.rel (0) target = $region41
  $region40: #{urresnet_forward.17} parent=0 // pred_region
    _
  $region41: #{urresnet_forward.17} parent=0 // pred_fallthru
    _

// kernel: urresnet_forward.18
$region0: #{urresnet_forward.18}
  #allocation0 [shape = 'u32[]', space=smem, size = 0x4, offset = 0x4, fixed_abs, tag = 'smem constant byte address 0x4 - core index']
  #allocation1 [shape = 'u32[144,128]{1,0:T(1,128)}', space=vmem, size = 0x12000, scoped, tag = 'internal scratch']
  #allocation2 [shape = 'f32[32,128]{1,0:T(8,128)}', space=vmem, size = 0x4000, scoped, tag = 'scratch operand']
  %s0 = inlined_call_operand.vmem [shape: bf16[32,288], index: 0, kind: input, shape index: {}]
  %s1 = inlined_call_operand.vmem [shape: bf16[288,128], index: 1, kind: input, shape index: {}]
  %s2 = inlined_call_operand.vmem [shape: f32[1,128], index: 2, kind: input, shape index: {}]
  %s3 = inlined_call_operand.vmem [shape: f32[1,128], index: 3, kind: input, shape index: {}]
  %s4 = inlined_call_operand.vmem [shape: f32[1,128], index: 4, kind: input, shape index: {}]
  %s5 = inlined_call_operand.vmem [shape: f32[32,128], index: 5, kind: output, shape index: {}]
  %s6 = sld [smem:[#allocation0]]
  $region38: #{urresnet_forward.18} parent=0
    _
  %s8 = ssub.s32 1, %s6
  %s9 = scalar_select 0, %s8, %s6
  // Predicated region
  $region2: #{urresnet_forward.18} parent=0 // pred_check
    _
  $region3: #{urresnet_forward.18} parent=0 // pred_check_branch
    %11 = sbr.rel (0) target = $region5
  $region4: #{urresnet_forward.18} parent=0 // pred_region
    _
  $region5: #{urresnet_forward.18} parent=0 // pred_fallthru
    _
  // Predicated region
  $region6: #{urresnet_forward.18} parent=0 // pred_check
    _
  $region7: #{urresnet_forward.18} parent=0 // pred_check_branch
    %13 = sbr.rel (0) target = $region9
  $region8: #{urresnet_forward.18} parent=0 // pred_region
    _
  $region9: #{urresnet_forward.18} parent=0 // pred_fallthru
    _
  // Predicated region
  $region10: #{urresnet_forward.18} parent=0 // pred_check
    _
  $region11: #{urresnet_forward.18} parent=0 // pred_check_branch
    %15 = sbr.rel (0) target = $region13
  $region12: #{urresnet_forward.18} parent=0 // pred_region
    _
  $region13: #{urresnet_forward.18} parent=0 // pred_fallthru
    _
  // Predicated region
  $region14: #{urresnet_forward.18} parent=0 // pred_check
    _
  $region15: #{urresnet_forward.18} parent=0 // pred_check_branch
    %17 = sbr.rel (0) target = $region17
  $region16: #{urresnet_forward.18} parent=0 // pred_region
    _
  $region17: #{urresnet_forward.18} parent=0 // pred_fallthru
    _
  // Predicated region
  $region18: #{urresnet_forward.18} parent=0 // pred_check
    _
  $region19: #{urresnet_forward.18} parent=0 // pred_check_branch
    %19 = sbr.rel (0) target = $region21
  $region20: #{urresnet_forward.18} parent=0 // pred_region
    _
  $region21: #{urresnet_forward.18} parent=0 // pred_fallthru
    _
  %p21 = scmp.eq.s32.totalorder 0, 0
  // Predicated region
  $region22: #{urresnet_forward.18} parent=0 // pred_check
    %p22 = pneg %p21
  $region23: #{urresnet_forward.18} parent=0 // pred_check_branch
    %24 = sbr.rel (%p22) target = $region25
  $region24: #{urresnet_forward.18} parent=0 // pred_region
    %25 = vst [vmem:[#allocation2] sm:$0xff] 0.0
    %26 = vst [vmem:[#allocation2 + $0x8] sm:$0xff] 0.0
    %27 = vst [vmem:[#allocation2 + $0x10] sm:$0xff] 0.0
    %28 = vst [vmem:[#allocation2 + $0x18] sm:$0xff] 0.0
  $region25: #{urresnet_forward.18} parent=0 // pred_fallthru
    _
  %v29 = vld [vmem:[#allocation2] sm:$0xff]
  %v30 = vld [vmem:[#allocation2 + $0x8] sm:$0xff]
  %v31 = vld [vmem:[#allocation2 + $0x10] sm:$0xff]
  %v32 = vld [vmem:[#allocation2 + $0x18] sm:$0xff]
  %v33 = vld [vmem:[%s0] sm:$0xff]
  %v34 = vld [vmem:[%s0 + $0x8] sm:$0xf]
  %v35 = vld [vmem:[%s0 + $0xc] sm:$0xff]
  %v36 = vld [vmem:[%s0 + $0x14] sm:$0xf]
  %v37 = vld [vmem:[%s0 + $0x18] sm:$0xff]
  %v38 = vld [vmem:[%s0 + $0x20] sm:$0xf]
  %v39 = vld [vmem:[%s0 + $0x24] sm:$0xff]
  %v40 = vld [vmem:[%s0 + $0x2c] sm:$0xf]
  %v41 = vld [vmem:[%s1] sm:$0xf]
  %v42 = vld [vmem:[%s1 + $0x4] sm:$0xf]
  %v43 = vld [vmem:[%s1 + $0x8] sm:$0xf]
  %v44 = vld [vmem:[%s1 + $0xc] sm:$0xf]
  %v45 = vld [vmem:[%s1 + $0x10] sm:$0xf]
  %v46 = vld [vmem:[%s1 + $0x14] sm:$0xf]
  %v47 = vld [vmem:[%s1 + $0x18] sm:$0xf]
  %v48 = vld [vmem:[%s1 + $0x1c] sm:$0xf]
  %v49 = vld [vmem:[%s1 + $0x20] sm:$0xf]
  %v50 = vld [vmem:[%s1 + $0x24] sm:$0xf]
  %v51 = vld [vmem:[%s1 + $0x28] sm:$0xf]
  %v52 = vld [vmem:[%s1 + $0x2c] sm:$0xf]
  %v53 = vld [vmem:[%s1 + $0x30] sm:$0xf]
  %v54 = vld [vmem:[%s1 + $0x34] sm:$0xf]
  %v55 = vld [vmem:[%s1 + $0x38] sm:$0xf]
  %v56 = vld [vmem:[%s1 + $0x3c] sm:$0xf]
  %v57 = vld [vmem:[%s1 + $0x40] sm:$0xf]
  %v58 = vld [vmem:[%s1 + $0x44] sm:$0xf]
  %v59 = vld [vmem:[%s1 + $0x48] sm:$0xf]
  %v60 = vld [vmem:[%s1 + $0x4c] sm:$0xf]
  %v61 = vld [vmem:[%s1 + $0x50] sm:$0xf]
  %v62 = vld [vmem:[%s1 + $0x54] sm:$0xf]
  %v63 = vld [vmem:[%s1 + $0x58] sm:$0xf]
  %v64 = vld [vmem:[%s1 + $0x5c] sm:$0xf]
  %v65 = vld [vmem:[%s1 + $0x60] sm:$0xf]
  %v66 = vld [vmem:[%s1 + $0x64] sm:$0xf]
  %v67 = vld [vmem:[%s1 + $0x68] sm:$0xf]
  %v68 = vld [vmem:[%s1 + $0x6c] sm:$0xf]
  %v69 = vld [vmem:[%s1 + $0x70] sm:$0xf]
  %v70 = vld [vmem:[%s1 + $0x74] sm:$0xf]
  %v71 = vld [vmem:[%s1 + $0x78] sm:$0xf]
  %v72 = vld [vmem:[%s1 + $0x7c] sm:$0xf]
  %v73 = vld [vmem:[%s1 + $0x80] sm:$0xf]
  %v74 = vld [vmem:[%s1 + $0x84] sm:$0xf]
  %v75 = vld [vmem:[%s1 + $0x88] sm:$0xf]
  %v76 = vld [vmem:[%s1 + $0x8c] sm:$0xf]
  %v85 = vunpack.c.l.b16 %v33
  %v86 = vunpack.c.h.b16 %v33
  %v87 = vunpack.c.l.b16 %v34
  %v88 = vunpack.c.l.b16 %v35
  %v89 = vunpack.c.h.b16 %v35
  %v90 = vunpack.c.l.b16 %v36
  %v91 = vunpack.c.l.b16 %v37
  %v92 = vunpack.c.h.b16 %v37
  %v93 = vunpack.c.l.b16 %v38
  %v94 = vunpack.c.l.b16 %v39
  %v95 = vunpack.c.h.b16 %v39
  %v96 = vunpack.c.l.b16 %v40
  %v97 = vpack.c.b16 %v88, %v85
  %v98 = vpack.c.b16 %v89, %v86
  %v99 = vpack.c.b16 %v90, %v87
  %v100 = vpack.c.b16 %v94, %v91
  %v101 = vpack.c.b16 %v95, %v92
  %v102 = vpack.c.b16 %v96, %v93
  %v143 = vunpack.c.l.b16 %v41
  %v144 = vunpack.c.l.b16 %v42
  %v145 = vunpack.c.l.b16 %v43
  %v146 = vunpack.c.l.b16 %v44
  %v147 = vunpack.c.l.b16 %v45
  %v148 = vunpack.c.l.b16 %v46
  %v149 = vunpack.c.l.b16 %v47
  %v150 = vunpack.c.l.b16 %v48
  %v151 = vunpack.c.l.b16 %v49
  %v152 = vunpack.c.l.b16 %v50
  %v153 = vunpack.c.l.b16 %v51
  %v154 = vunpack.c.l.b16 %v52
  %v155 = vunpack.c.l.b16 %v53
  %v156 = vunpack.c.l.b16 %v54
  %v157 = vunpack.c.l.b16 %v55
  %v158 = vunpack.c.l.b16 %v56
  %v159 = vunpack.c.l.b16 %v57
  %v160 = vunpack.c.l.b16 %v58
  %v161 = vunpack.c.l.b16 %v59
  %v162 = vunpack.c.l.b16 %v60
  %v163 = vunpack.c.l.b16 %v61
  %v164 = vunpack.c.l.b16 %v62
  %v165 = vunpack.c.l.b16 %v63
  %v166 = vunpack.c.l.b16 %v64
  %v167 = vunpack.c.l.b16 %v65
  %v168 = vunpack.c.l.b16 %v66
  %v169 = vunpack.c.l.b16 %v67
  %v170 = vunpack.c.l.b16 %v68
  %v171 = vunpack.c.l.b16 %v69
  %v172 = vunpack.c.l.b16 %v70
  %v173 = vunpack.c.l.b16 %v71
  %v174 = vunpack.c.l.b16 %v72
  %v175 = vunpack.c.l.b16 %v73
  %v176 = vunpack.c.l.b16 %v74
  %v177 = vunpack.c.l.b16 %v75
  %v178 = vunpack.c.l.b16 %v76
  %v179 = vpack.c.b16 %v144, %v143
  %v180 = vpack.c.b16 %v146, %v145
  %v181 = vpack.c.b16 %v148, %v147
  %v182 = vpack.c.b16 %v150, %v149
  %v183 = vpack.c.b16 %v152, %v151
  %v184 = vpack.c.b16 %v154, %v153
  %v185 = vpack.c.b16 %v156, %v155
  %v186 = vpack.c.b16 %v158, %v157
  %v187 = vpack.c.b16 %v160, %v159
  %v188 = vpack.c.b16 %v162, %v161
  %v189 = vpack.c.b16 %v164, %v163
  %v190 = vpack.c.b16 %v166, %v165
  %v191 = vpack.c.b16 %v168, %v167
  %v192 = vpack.c.b16 %v170, %v169
  %v193 = vpack.c.b16 %v172, %v171
  %v194 = vpack.c.b16 %v174, %v173
  %v195 = vpack.c.b16 %v176, %v175
  %v196 = vpack.c.b16 %v178, %v177
  %vm215 = vcmask 261120
  %v217 = vsel %vm215, %v99, 0
  %v220 = vsel %vm215, %v102, 0
  %222 = vmatprep.subr.bf16.mxu0 0
  %223 = vmatpush1.bf16.msra.mxu0 %v179
  %224 = vmatprep.subr.bf16.mxu0 0
  %225 = vmatpush1.bf16.msra.mxu0 %v180
  %226 = vmatprep.subr.bf16.mxu0 0
  %227 = vmatpush1.bf16.msra.mxu0 %v181
  %228 = vmatprep.subr.bf16.mxu0 0
  %229 = vmatpush1.bf16.msra.mxu0 %v182
  %230 = vmatprep.subr.bf16.mxu0 0
  %231 = vmatpush1.bf16.msra.mxu0 %v183
  %232 = vmatprep.subr.bf16.mxu0 0
  %233 = vmatpush1.bf16.msra.mxu0 %v184
  %234 = vmatprep.subr.bf16.mxu0 0
  %235 = vmatpush1.bf16.msra.mxu0 %v185
  %236 = vmatprep.subr.bf16.mxu0 0
  %237 = vmatpush1.bf16.msra.mxu0 %v186
  %238 = vmatprep.subr.bf16.mxu0 0
  %239 = vmatpush1.bf16.msra.mxu0 %v187
  %240 = vmatprep.subr.bf16.mxu0 0
  %241 = vmatpush1.bf16.msra.mxu0 %v188
  %242 = vmatprep.subr.bf16.mxu0 0
  %243 = vmatpush1.bf16.msra.mxu0 %v189
  %244 = vmatprep.subr.bf16.mxu0 0
  %245 = vmatpush1.bf16.msra.mxu0 %v190
  %246 = vmatprep.subr.bf16.mxu0 0
  %247 = vmatpush1.bf16.msra.mxu0 %v191
  %248 = vmatprep.subr.bf16.mxu0 0
  %249 = vmatpush1.bf16.msra.mxu0 %v192
  %250 = vmatprep.subr.bf16.mxu0 0
  %251 = vmatpush1.bf16.msra.mxu0 %v193
  %252 = vmatprep.subr.bf16.mxu0 0
  %253 = vmatpush1.bf16.msra.mxu0 %v194
  %254 = vmatprep.mubr.bf16.mxu0 %v98
  %255 = vmatmul.mubr.bf16.gmra.mrb[0].mxu0 %v97
  %v256 = vpop.f32.mrb[0].mxu0
  %v257 = vadd.f32 0.0, %v256
  %v258 = vpop.f32.mrb[0].mxu0
  %v259 = vpop.f32.mrb[0].mxu0
  %v260 = vadd.f32 0.0, %v259
  %v261 = vpop.f32.mrb[0].mxu0
  %262 = vmatprep.mubr.bf16.mxu0 %v101
  %263 = vmatmul.mubr.bf16.gmra.mrb[0].mxu0 %v100
  %v264 = vpop.f32.mrb[0].mxu0
  %v265 = vadd.f32 0.0, %v264
  %v266 = vpop.f32.mrb[0].mxu0
  %v267 = vpop.f32.mrb[0].mxu0
  %v268 = vadd.f32 0.0, %v267
  %v269 = vpop.f32.mrb[0].mxu0
  %270 = vdwg.mxu0
  %271 = vmatprep.subr.bf16.mxu0 0
  %272 = vmatpush1.bf16.msra.mxu0 %v195
  %273 = vmatprep.subr.bf16.mxu0 0
  %274 = vmatpush1.bf16.msra.mxu0 %v196
  %275 = vmatprep.subr.bf16.mxu0 0
  %276 = vmatpush1.bf16.msra.mxu0 0
  %277 = vmatprep.subr.bf16.mxu0 0
  %278 = vmatpush1.bf16.msra.mxu0 0
  %279 = vmatprep.subr.bf16.mxu0 0
  %280 = vmatpush1.bf16.msra.mxu0 0
  %281 = vmatprep.subr.bf16.mxu0 0
  %282 = vmatpush1.bf16.msra.mxu0 0
  %283 = vmatprep.subr.bf16.mxu0 0
  %284 = vmatpush1.bf16.msra.mxu0 0
  %285 = vmatprep.subr.bf16.mxu0 0
  %286 = vmatpush1.bf16.msra.mxu0 0
  %287 = vmatprep.subr.bf16.mxu0 0
  %288 = vmatpush1.bf16.msra.mxu0 0
  %289 = vmatprep.subr.bf16.mxu0 0
  %290 = vmatpush1.bf16.msra.mxu0 0
  %291 = vmatprep.subr.bf16.mxu0 0
  %292 = vmatpush1.bf16.msra.mxu0 0
  %293 = vmatprep.subr.bf16.mxu0 0
  %294 = vmatpush1.bf16.msra.mxu0 0
  %295 = vmatprep.subr.bf16.mxu0 0
  %296 = vmatpush1.bf16.msra.mxu0 0
  %297 = vmatprep.subr.bf16.mxu0 0
  %298 = vmatpush1.bf16.msra.mxu0 0
  %299 = vmatprep.subr.bf16.mxu0 0
  %300 = vmatpush1.bf16.msra.mxu0 0
  %301 = vmatprep.subr.bf16.mxu0 0
  %302 = vmatpush1.bf16.msra.mxu0 0
  %303 = vmatprep.mubr.bf16.mxu0 0
  %304 = vmatmul.mubr.bf16.gmra.mrb[0].mxu0 %v217
  %v305 = vpop.f32.mrb[0].mxu0
  %v306 = vadd.f32 %v257, %v305
  %v307 = vpop.f32.mrb[0].mxu0
  %v308 = vpop.f32.mrb[0].mxu0
  %v309 = vadd.f32 %v260, %v308
  %v310 = vpop.f32.mrb[0].mxu0
  %311 = vmatprep.mubr.bf16.mxu0 0
  %312 = vmatmul.mubr.bf16.gmra.mrb[0].mxu0 %v220
  %v313 = vpop.f32.mrb[0].mxu0
  %v314 = vadd.f32 %v265, %v313
  %v315 = vpop.f32.mrb[0].mxu0
  %v316 = vpop.f32.mrb[0].mxu0
  %v317 = vadd.f32 %v268, %v316
  %v318 = vpop.f32.mrb[0].mxu0
  %319 = vdwg.mxu0
  %v320 = vadd.f32 %v29, %v306
  %v321 = vadd.f32 %v30, %v309
  %v322 = vadd.f32 %v31, %v314
  %v323 = vadd.f32 %v32, %v317
  %324 = vst [vmem:[#allocation2] sm:$0xff] %v320
  %325 = vst [vmem:[#allocation2 + $0x8] sm:$0xff] %v321
  %326 = vst [vmem:[#allocation2 + $0x10] sm:$0xff] %v322
  %327 = vst [vmem:[#allocation2 + $0x18] sm:$0xff] %v323
  // Predicated region
  $region26: #{urresnet_forward.18} parent=0 // pred_check
    %p328 = pneg %p21
  $region27: #{urresnet_forward.18} parent=0 // pred_check_branch
    %330 = sbr.rel (%p328) target = $region29
  $region28: #{urresnet_forward.18} parent=0 // pred_region
    %v331 = vld [vmem:[#allocation2] sm:$0xff]
    %v332 = vld [vmem:[#allocation2 + $0x8] sm:$0xff]
    %v333 = vld [vmem:[#allocation2 + $0x10] sm:$0xff]
    %v334 = vld [vmem:[#allocation2 + $0x18] sm:$0xff]
    %v335 = vld [vmem:[%s2] sm:$0x1]
    %v337 = vlaneseq
    %v338 = vshrl.u32 %v337, 7
    %v339 = vsub.s32 0, %v338
    %v340 = vrot.slane %v335, %v339
    %v342 = vmul.f32 %v331, %v340
    %v343 = vmul.f32 %v332, %v340
    %v344 = vmul.f32 %v333, %v340
    %v345 = vmul.f32 %v334, %v340
    %v346 = vld [vmem:[%s3] sm:$0x1]
    %v348 = vlaneseq
    %v349 = vshrl.u32 %v348, 7
    %v350 = vsub.s32 0, %v349
    %v351 = vrot.slane %v346, %v350
    %v353 = vadd.f32 %v342, %v351
    %v354 = vadd.f32 %v343, %v351
    %v355 = vadd.f32 %v344, %v351
    %v356 = vadd.f32 %v345, %v351
    %v357 = vld [vmem:[%s4] sm:$0x1]
    %vm358 = vcmp.gt.f32.partialorder %v357, 0.0
    %v359 = vmax.f32 %v353, 0.0
    %v360 = vmax.f32 %v354, 0.0
    %v361 = vmax.f32 %v355, 0.0
    %v362 = vmax.f32 %v356, 0.0
    %v363 = vsel %vm358, 1, 0
    %v364 = vlaneseq
    %v365 = vshrl.u32 %v364, 7
    %v366 = vsub.s32 0, %v365
    %v367 = vrot.slane %v363, %v366
    %vm368 = vcmp.eq.s32.totalorder %v367, 1
    %v369 = vsel %vm368, %v359, %v353
    %v370 = vsel %vm368, %v360, %v354
    %v371 = vsel %vm368, %v361, %v355
    %v372 = vsel %vm368, %v362, %v356
    %373 = vst [vmem:[%s5] sm:$0xff] %v369
    %374 = vst [vmem:[%s5 + $0x8] sm:$0xff] %v370
    %375 = vst [vmem:[%s5 + $0x10] sm:$0xff] %v371
    %376 = vst [vmem:[%s5 + $0x18] sm:$0xff] %v372
  $region29: #{urresnet_forward.18} parent=0 // pred_fallthru
    _
  // Predicated region
  $region30: #{urresnet_forward.18} parent=0 // pred_check
    _
  $region31: #{urresnet_forward.18} parent=0 // pred_check_branch
    %378 = sbr.rel (0) target = $region33
  $region32: #{urresnet_forward.18} parent=0 // pred_region
    _
  $region33: #{urresnet_forward.18} parent=0 // pred_fallthru
    _
  // Predicated region
  $region34: #{urresnet_forward.18} parent=0 // pred_check
    _
  $region35: #{urresnet_forward.18} parent=0 // pred_check_branch
    %380 = sbr.rel (0) target = $region37
  $region36: #{urresnet_forward.18} parent=0 // pred_region
    _
  $region37: #{urresnet_forward.18} parent=0 // pred_fallthru
    _

// kernel: urresnet_forward.19
$region0: #{urresnet_forward.19}
  #allocation0 [shape = 'u32[]', space=smem, size = 0x4, offset = 0x4, fixed_abs, tag = 'smem constant byte address 0x4 - core index']
  #allocation1 [shape = 'u32[144,128]{1,0:T(1,128)}', space=vmem, size = 0x12000, scoped, tag = 'internal scratch']
  #allocation2 [shape = 'f32[32,64]{1,0:T(8,128)}', space=vmem, size = 0x4000, scoped, tag = 'scratch operand']
  %s0 = inlined_call_operand.vmem [shape: bf16[32,576], index: 0, kind: input, shape index: {}]
  %s1 = inlined_call_operand.vmem [shape: bf16[576,64], index: 1, kind: input, shape index: {}]
  %s2 = inlined_call_operand.vmem [shape: f32[1,64], index: 2, kind: input, shape index: {}]
  %s3 = inlined_call_operand.vmem [shape: f32[1,64], index: 3, kind: input, shape index: {}]
  %s4 = inlined_call_operand.vmem [shape: f32[1,64], index: 4, kind: input, shape index: {}]
  %s5 = inlined_call_operand.vmem [shape: f32[32,64], index: 5, kind: input, shape index: {}]
  %s6 = inlined_call_operand.vmem [shape: f32[32,64], index: 6, kind: output, shape index: {}]
  %s7 = sld [smem:[#allocation0]]
  $region42: #{urresnet_forward.19} parent=0
    _
  %s9 = ssub.s32 1, %s7
  %s10 = scalar_select 0, %s9, %s7
  // Predicated region
  $region2: #{urresnet_forward.19} parent=0 // pred_check
    _
  $region3: #{urresnet_forward.19} parent=0 // pred_check_branch
    %12 = sbr.rel (0) target = $region5
  $region4: #{urresnet_forward.19} parent=0 // pred_region
    _
  $region5: #{urresnet_forward.19} parent=0 // pred_fallthru
    _
  // Predicated region
  $region6: #{urresnet_forward.19} parent=0 // pred_check
    _
  $region7: #{urresnet_forward.19} parent=0 // pred_check_branch
    %14 = sbr.rel (0) target = $region9
  $region8: #{urresnet_forward.19} parent=0 // pred_region
    _
  $region9: #{urresnet_forward.19} parent=0 // pred_fallthru
    _
  // Predicated region
  $region10: #{urresnet_forward.19} parent=0 // pred_check
    _
  $region11: #{urresnet_forward.19} parent=0 // pred_check_branch
    %16 = sbr.rel (0) target = $region13
  $region12: #{urresnet_forward.19} parent=0 // pred_region
    _
  $region13: #{urresnet_forward.19} parent=0 // pred_fallthru
    _
  // Predicated region
  $region14: #{urresnet_forward.19} parent=0 // pred_check
    _
  $region15: #{urresnet_forward.19} parent=0 // pred_check_branch
    %18 = sbr.rel (0) target = $region17
  $region16: #{urresnet_forward.19} parent=0 // pred_region
    _
  $region17: #{urresnet_forward.19} parent=0 // pred_fallthru
    _
  // Predicated region
  $region18: #{urresnet_forward.19} parent=0 // pred_check
    _
  $region19: #{urresnet_forward.19} parent=0 // pred_check_branch
    %20 = sbr.rel (0) target = $region21
  $region20: #{urresnet_forward.19} parent=0 // pred_region
    _
  $region21: #{urresnet_forward.19} parent=0 // pred_fallthru
    _
  // Predicated region
  $region22: #{urresnet_forward.19} parent=0 // pred_check
    _
  $region23: #{urresnet_forward.19} parent=0 // pred_check_branch
    %22 = sbr.rel (0) target = $region25
  $region24: #{urresnet_forward.19} parent=0 // pred_region
    _
  $region25: #{urresnet_forward.19} parent=0 // pred_fallthru
    _
  %p24 = scmp.eq.s32.totalorder 0, 0
  // Predicated region
  $region26: #{urresnet_forward.19} parent=0 // pred_check
    %p25 = pneg %p24
  $region27: #{urresnet_forward.19} parent=0 // pred_check_branch
    %27 = sbr.rel (%p25) target = $region29
  $region28: #{urresnet_forward.19} parent=0 // pred_region
    %vm28 = vcmask 523264
    %29 = vst.msk [vmem:[#allocation2] sm:$0xff] %vm28, 0.0
    %30 = vst.msk [vmem:[#allocation2 + $0x8] sm:$0xff] %vm28, 0.0
    %31 = vst.msk [vmem:[#allocation2 + $0x10] sm:$0xff] %vm28, 0.0
    %32 = vst.msk [vmem:[#allocation2 + $0x18] sm:$0xff] %vm28, 0.0
  $region29: #{urresnet_forward.19} parent=0 // pred_fallthru
    _
  %v33 = vld [vmem:[#allocation2] sm:$0xff]
  %v34 = vld [vmem:[#allocation2 + $0x8] sm:$0xff]
  %v35 = vld [vmem:[#allocation2 + $0x10] sm:$0xff]
  %v36 = vld [vmem:[#allocation2 + $0x18] sm:$0xff]
  %v37 = vld [vmem:[%s0] sm:$0xff]
  %v38 = vld [vmem:[%s0 + $0x8] sm:$0xff]
  %v39 = vld [vmem:[%s0 + $0x10] sm:$0xf]
  %v40 = vld [vmem:[%s0 + $0x14] sm:$0xff]
  %v41 = vld [vmem:[%s0 + $0x1c] sm:$0xff]
  %v42 = vld [vmem:[%s0 + $0x24] sm:$0xf]
  %v43 = vld [vmem:[%s0 + $0x28] sm:$0xff]
  %v44 = vld [vmem:[%s0 + $0x30] sm:$0xff]
  %v45 = vld [vmem:[%s0 + $0x38] sm:$0xf]
  %v46 = vld [vmem:[%s0 + $0x3c] sm:$0xff]
  %v47 = vld [vmem:[%s0 + $0x44] sm:$0xff]
  %v48 = vld [vmem:[%s0 + $0x4c] sm:$0xf]
  %v49 = vld [vmem:[%s1] sm:$0xf]
  %v50 = vld [vmem:[%s1 + $0x4] sm:$0xf]
  %v51 = vld [vmem:[%s1 + $0x8] sm:$0xf]
  %v52 = vld [vmem:[%s1 + $0xc] sm:$0xf]
  %v53 = vld [vmem:[%s1 + $0x10] sm:$0xf]
  %v54 = vld [vmem:[%s1 + $0x14] sm:$0xf]
  %v55 = vld [vmem:[%s1 + $0x18] sm:$0xf]
  %v56 = vld [vmem:[%s1 + $0x1c] sm:$0xf]
  %v57 = vld [vmem:[%s1 + $0x20] sm:$0xf]
  %v58 = vld [vmem:[%s1 + $0x24] sm:$0xf]
  %v59 = vld [vmem:[%s1 + $0x28] sm:$0xf]
  %v60 = vld [vmem:[%s1 + $0x2c] sm:$0xf]
  %v61 = vld [vmem:[%s1 + $0x30] sm:$0xf]
  %v62 = vld [vmem:[%s1 + $0x34] sm:$0xf]
  %v63 = vld [vmem:[%s1 + $0x38] sm:$0xf]
  %v64 = vld [vmem:[%s1 + $0x3c] sm:$0xf]
  %v65 = vld [vmem:[%s1 + $0x40] sm:$0xf]
  %v66 = vld [vmem:[%s1 + $0x44] sm:$0xf]
  %v67 = vld [vmem:[%s1 + $0x48] sm:$0xf]
  %v68 = vld [vmem:[%s1 + $0x4c] sm:$0xf]
  %v69 = vld [vmem:[%s1 + $0x50] sm:$0xf]
  %v70 = vld [vmem:[%s1 + $0x54] sm:$0xf]
  %v71 = vld [vmem:[%s1 + $0x58] sm:$0xf]
  %v72 = vld [vmem:[%s1 + $0x5c] sm:$0xf]
  %v73 = vld [vmem:[%s1 + $0x60] sm:$0xf]
  %v74 = vld [vmem:[%s1 + $0x64] sm:$0xf]
  %v75 = vld [vmem:[%s1 + $0x68] sm:$0xf]
  %v76 = vld [vmem:[%s1 + $0x6c] sm:$0xf]
  %v77 = vld [vmem:[%s1 + $0x70] sm:$0xf]
  %v78 = vld [vmem:[%s1 + $0x74] sm:$0xf]
  %v79 = vld [vmem:[%s1 + $0x78] sm:$0xf]
  %v80 = vld [vmem:[%s1 + $0x7c] sm:$0xf]
  %v81 = vld [vmem:[%s1 + $0x80] sm:$0xf]
  %v82 = vld [vmem:[%s1 + $0x84] sm:$0xf]
  %v83 = vld [vmem:[%s1 + $0x88] sm:$0xf]
  %v84 = vld [vmem:[%s1 + $0x8c] sm:$0xf]
  %v85 = vld [vmem:[%s1 + $0x90] sm:$0xf]
  %v86 = vld [vmem:[%s1 + $0x94] sm:$0xf]
  %v87 = vld [vmem:[%s1 + $0x98] sm:$0xf]
  %v88 = vld [vmem:[%s1 + $0x9c] sm:$0xf]
  %v89 = vld [vmem:[%s1 + $0xa0] sm:$0xf]
  %v90 = vld [vmem:[%s1 + $0xa4] sm:$0xf]
  %v91 = vld [vmem:[%s1 + $0xa8] sm:$0xf]
  %v92 = vld [vmem:[%s1 + $0xac] sm:$0xf]
  %v93 = vld [vmem:[%s1 + $0xb0] sm:$0xf]
  %v94 = vld [vmem:[%s1 + $0xb4] sm:$0xf]
  %v95 = vld [vmem:[%s1 + $0xb8] sm:$0xf]
  %v96 = vld [vmem:[%s1 + $0xbc] sm:$0xf]
  %v97 = vld [vmem:[%s1 + $0xc0] sm:$0xf]
  %v98 = vld [vmem:[%s1 + $0xc4] sm:$0xf]
  %v99 = vld [vmem:[%s1 + $0xc8] sm:$0xf]
  %v100 = vld [vmem:[%s1 + $0xcc] sm:$0xf]
  %v101 = vld [vmem:[%s1 + $0xd0] sm:$0xf]
  %v102 = vld [vmem:[%s1 + $0xd4] sm:$0xf]
  %v103 = vld [vmem:[%s1 + $0xd8] sm:$0xf]
  %v104 = vld [vmem:[%s1 + $0xdc] sm:$0xf]
  %v105 = vld [vmem:[%s1 + $0xe0] sm:$0xf]
  %v106 = vld [vmem:[%s1 + $0xe4] sm:$0xf]
  %v107 = vld [vmem:[%s1 + $0xe8] sm:$0xf]
  %v108 = vld [vmem:[%s1 + $0xec] sm:$0xf]
  %v109 = vld [vmem:[%s1 + $0xf0] sm:$0xf]
  %v110 = vld [vmem:[%s1 + $0xf4] sm:$0xf]
  %v111 = vld [vmem:[%s1 + $0xf8] sm:$0xf]
  %v112 = vld [vmem:[%s1 + $0xfc] sm:$0xf]
  %v113 = vld [vmem:[%s1 + $0x100] sm:$0xf]
  %v114 = vld [vmem:[%s1 + $0x104] sm:$0xf]
  %v115 = vld [vmem:[%s1 + $0x108] sm:$0xf]
  %v116 = vld [vmem:[%s1 + $0x10c] sm:$0xf]
  %v117 = vld [vmem:[%s1 + $0x110] sm:$0xf]
  %v118 = vld [vmem:[%s1 + $0x114] sm:$0xf]
  %v119 = vld [vmem:[%s1 + $0x118] sm:$0xf]
  %v120 = vld [vmem:[%s1 + $0x11c] sm:$0xf]
  %v133 = vunpack.c.l.b16 %v37
  %v134 = vunpack.c.h.b16 %v37
  %v135 = vunpack.c.l.b16 %v38
  %v136 = vunpack.c.h.b16 %v38
  %v137 = vunpack.c.l.b16 %v39
  %v138 = vunpack.c.l.b16 %v40
  %v139 = vunpack.c.h.b16 %v40
  %v140 = vunpack.c.l.b16 %v41
  %v141 = vunpack.c.h.b16 %v41
  %v142 = vunpack.c.l.b16 %v42
  %v143 = vunpack.c.l.b16 %v43
  %v144 = vunpack.c.h.b16 %v43
  %v145 = vunpack.c.l.b16 %v44
  %v146 = vunpack.c.h.b16 %v44
  %v147 = vunpack.c.l.b16 %v45
  %v148 = vunpack.c.l.b16 %v46
  %v149 = vunpack.c.h.b16 %v46
  %v150 = vunpack.c.l.b16 %v47
  %v151 = vunpack.c.h.b16 %v47
  %v152 = vunpack.c.l.b16 %v48
  %v153 = vpack.c.b16 %v138, %v133
  %v154 = vpack.c.b16 %v139, %v134
  %v155 = vpack.c.b16 %v140, %v135
  %v156 = vpack.c.b16 %v141, %v136
  %v157 = vpack.c.b16 %v142, %v137
  %v158 = vpack.c.b16 %v148, %v143
  %v159 = vpack.c.b16 %v149, %v144
  %v160 = vpack.c.b16 %v150, %v145
  %v161 = vpack.c.b16 %v151, %v146
  %v162 = vpack.c.b16 %v152, %v147
  %v243 = vunpack.c.l.b16 %v49
  %v244 = vunpack.c.l.b16 %v50
  %v245 = vunpack.c.l.b16 %v51
  %v246 = vunpack.c.l.b16 %v52
  %v247 = vunpack.c.l.b16 %v53
  %v248 = vunpack.c.l.b16 %v54
  %v249 = vunpack.c.l.b16 %v55
  %v250 = vunpack.c.l.b16 %v56
  %v251 = vunpack.c.l.b16 %v57
  %v252 = vunpack.c.l.b16 %v58
  %v253 = vunpack.c.l.b16 %v59
  %v254 = vunpack.c.l.b16 %v60
  %v255 = vunpack.c.l.b16 %v61
  %v256 = vunpack.c.l.b16 %v62
  %v257 = vunpack.c.l.b16 %v63
  %v258 = vunpack.c.l.b16 %v64
  %v259 = vunpack.c.l.b16 %v65
  %v260 = vunpack.c.l.b16 %v66
  %v261 = vunpack.c.l.b16 %v67
  %v262 = vunpack.c.l.b16 %v68
  %v263 = vunpack.c.l.b16 %v69
  %v264 = vunpack.c.l.b16 %v70
  %v265 = vunpack.c.l.b16 %v71
  %v266 = vunpack.c.l.b16 %v72
  %v267 = vunpack.c.l.b16 %v73
  %v268 = vunpack.c.l.b16 %v74
  %v269 = vunpack.c.l.b16 %v75
  %v270 = vunpack.c.l.b16 %v76
  %v271 = vunpack.c.l.b16 %v77
  %v272 = vunpack.c.l.b16 %v78
  %v273 = vunpack.c.l.b16 %v79
  %v274 = vunpack.c.l.b16 %v80
  %v275 = vunpack.c.l.b16 %v81
  %v276 = vunpack.c.l.b16 %v82
  %v277 = vunpack.c.l.b16 %v83
  %v278 = vunpack.c.l.b16 %v84
  %v279 = vunpack.c.l.b16 %v85
  %v280 = vunpack.c.l.b16 %v86
  %v281 = vunpack.c.l.b16 %v87
  %v282 = vunpack.c.l.b16 %v88
  %v283 = vunpack.c.l.b16 %v89
  %v284 = vunpack.c.l.b16 %v90
  %v285 = vunpack.c.l.b16 %v91
  %v286 = vunpack.c.l.b16 %v92
  %v287 = vunpack.c.l.b16 %v93
  %v288 = vunpack.c.l.b16 %v94
  %v289 = vunpack.c.l.b16 %v95
  %v290 = vunpack.c.l.b16 %v96
  %v291 = vunpack.c.l.b16 %v97
  %v292 = vunpack.c.l.b16 %v98
  %v293 = vunpack.c.l.b16 %v99
  %v294 = vunpack.c.l.b16 %v100
  %v295 = vunpack.c.l.b16 %v101
  %v296 = vunpack.c.l.b16 %v102
  %v297 = vunpack.c.l.b16 %v103
  %v298 = vunpack.c.l.b16 %v104
  %v299 = vunpack.c.l.b16 %v105
  %v300 = vunpack.c.l.b16 %v106
  %v301 = vunpack.c.l.b16 %v107
  %v302 = vunpack.c.l.b16 %v108
  %v303 = vunpack.c.l.b16 %v109
  %v304 = vunpack.c.l.b16 %v110
  %v305 = vunpack.c.l.b16 %v111
  %v306 = vunpack.c.l.b16 %v112
  %v307 = vunpack.c.l.b16 %v113
  %v308 = vunpack.c.l.b16 %v114
  %v309 = vunpack.c.l.b16 %v115
  %v310 = vunpack.c.l.b16 %v116
  %v311 = vunpack.c.l.b16 %v117
  %v312 = vunpack.c.l.b16 %v118
  %v313 = vunpack.c.l.b16 %v119
  %v314 = vunpack.c.l.b16 %v120
  %v315 = vpack.c.b16 %v244, %v243
  %v316 = vpack.c.b16 %v246, %v245
  %v317 = vpack.c.b16 %v248, %v247
  %v318 = vpack.c.b16 %v250, %v249
  %v319 = vpack.c.b16 %v252, %v251
  %v320 = vpack.c.b16 %v254, %v253
  %v321 = vpack.c.b16 %v256, %v255
  %v322 = vpack.c.b16 %v258, %v257
  %v323 = vpack.c.b16 %v260, %v259
  %v324 = vpack.c.b16 %v262, %v261
  %v325 = vpack.c.b16 %v264, %v263
  %v326 = vpack.c.b16 %v266, %v265
  %v327 = vpack.c.b16 %v268, %v267
  %v328 = vpack.c.b16 %v270, %v269
  %v329 = vpack.c.b16 %v272, %v271
  %v330 = vpack.c.b16 %v274, %v273
  %v331 = vpack.c.b16 %v276, %v275
  %v332 = vpack.c.b16 %v278, %v277
  %v333 = vpack.c.b16 %v280, %v279
  %v334 = vpack.c.b16 %v282, %v281
  %v335 = vpack.c.b16 %v284, %v283
  %v336 = vpack.c.b16 %v286, %v285
  %v337 = vpack.c.b16 %v288, %v287
  %v338 = vpack.c.b16 %v290, %v289
  %v339 = vpack.c.b16 %v292, %v291
  %v340 = vpack.c.b16 %v294, %v293
  %v341 = vpack.c.b16 %v296, %v295
  %v342 = vpack.c.b16 %v298, %v297
  %v343 = vpack.c.b16 %v300, %v299
  %v344 = vpack.c.b16 %v302, %v301
  %v345 = vpack.c.b16 %v304, %v303
  %v346 = vpack.c.b16 %v306, %v305
  %v347 = vpack.c.b16 %v308, %v307
  %v348 = vpack.c.b16 %v310, %v309
  %v349 = vpack.c.b16 %v312, %v311
  %v350 = vpack.c.b16 %v314, %v313
  %vm387 = vcmask 523264
  %v389 = vsel %vm387, %v157, 0
  %v392 = vsel %vm387, %v162, 0
  %394 = vmatprep.subr.bf16.mxu0 0
  %395 = vmatpush1.bf16.msra.mxu0 %v315
  %396 = vmatprep.subr.bf16.mxu0 0
  %397 = vmatpush1.bf16.msra.mxu0 %v316
  %398 = vmatprep.subr.bf16.mxu0 0
  %399 = vmatpush1.bf16.msra.mxu0 %v317
  %400 = vmatprep.subr.bf16.mxu0 0
  %401 = vmatpush1.bf16.msra.mxu0 %v318
  %402 = vmatprep.subr.bf16.mxu0 0
  %403 = vmatpush1.bf16.msra.mxu0 %v319
  %404 = vmatprep.subr.bf16.mxu0 0
  %405 = vmatpush1.bf16.msra.mxu0 %v320
  %406 = vmatprep.subr.bf16.mxu0 0
  %407 = vmatpush1.bf16.msra.mxu0 %v321
  %408 = vmatprep.subr.bf16.mxu0 0
  %409 = vmatpush1.bf16.msra.mxu0 %v322
  %410 = vmatprep.subr.bf16.mxu0 0
  %411 = vmatpush1.bf16.msra.mxu0 %v323
  %412 = vmatprep.subr.bf16.mxu0 0
  %413 = vmatpush1.bf16.msra.mxu0 %v324
  %414 = vmatprep.subr.bf16.mxu0 0
  %415 = vmatpush1.bf16.msra.mxu0 %v325
  %416 = vmatprep.subr.bf16.mxu0 0
  %417 = vmatpush1.bf16.msra.mxu0 %v326
  %418 = vmatprep.subr.bf16.mxu0 0
  %419 = vmatpush1.bf16.msra.mxu0 %v327
  %420 = vmatprep.subr.bf16.mxu0 0
  %421 = vmatpush1.bf16.msra.mxu0 %v328
  %422 = vmatprep.subr.bf16.mxu0 0
  %423 = vmatpush1.bf16.msra.mxu0 %v329
  %424 = vmatprep.subr.bf16.mxu0 0
  %425 = vmatpush1.bf16.msra.mxu0 %v330
  %426 = vmatprep.mubr.bf16.mxu0 %v154
  %427 = vmatmul.mubr.bf16.gmra.mrb[0].mxu0 %v153
  %v428 = vpop.f32.mrb[0].mxu0
  %v429 = vadd.f32 0.0, %v428
  %v430 = vpop.f32.mrb[0].mxu0
  %v431 = vpop.f32.mrb[0].mxu0
  %v432 = vadd.f32 0.0, %v431
  %v433 = vpop.f32.mrb[0].mxu0
  %434 = vmatprep.mubr.bf16.mxu0 %v159
  %435 = vmatmul.mubr.bf16.gmra.mrb[0].mxu0 %v158
  %v436 = vpop.f32.mrb[0].mxu0
  %v437 = vadd.f32 0.0, %v436
  %v438 = vpop.f32.mrb[0].mxu0
  %v439 = vpop.f32.mrb[0].mxu0
  %v440 = vadd.f32 0.0, %v439
  %v441 = vpop.f32.mrb[0].mxu0
  %442 = vdwg.mxu0
  %443 = vmatprep.subr.bf16.mxu0 0
  %444 = vmatpush1.bf16.msra.mxu0 %v331
  %445 = vmatprep.subr.bf16.mxu0 0
  %446 = vmatpush1.bf16.msra.mxu0 %v332
  %447 = vmatprep.subr.bf16.mxu0 0
  %448 = vmatpush1.bf16.msra.mxu0 %v333
  %449 = vmatprep.subr.bf16.mxu0 0
  %450 = vmatpush1.bf16.msra.mxu0 %v334
  %451 = vmatprep.subr.bf16.mxu0 0
  %452 = vmatpush1.bf16.msra.mxu0 %v335
  %453 = vmatprep.subr.bf16.mxu0 0
  %454 = vmatpush1.bf16.msra.mxu0 %v336
  %455 = vmatprep.subr.bf16.mxu0 0
  %456 = vmatpush1.bf16.msra.mxu0 %v337
  %457 = vmatprep.subr.bf16.mxu0 0
  %458 = vmatpush1.bf16.msra.mxu0 %v338
  %459 = vmatprep.subr.bf16.mxu0 0
  %460 = vmatpush1.bf16.msra.mxu0 %v339
  %461 = vmatprep.subr.bf16.mxu0 0
  %462 = vmatpush1.bf16.msra.mxu0 %v340
  %463 = vmatprep.subr.bf16.mxu0 0
  %464 = vmatpush1.bf16.msra.mxu0 %v341
  %465 = vmatprep.subr.bf16.mxu0 0
  %466 = vmatpush1.bf16.msra.mxu0 %v342
  %467 = vmatprep.subr.bf16.mxu0 0
  %468 = vmatpush1.bf16.msra.mxu0 %v343
  %469 = vmatprep.subr.bf16.mxu0 0
  %470 = vmatpush1.bf16.msra.mxu0 %v344
  %471 = vmatprep.subr.bf16.mxu0 0
  %472 = vmatpush1.bf16.msra.mxu0 %v345
  %473 = vmatprep.subr.bf16.mxu0 0
  %474 = vmatpush1.bf16.msra.mxu0 %v346
  %475 = vmatprep.mubr.bf16.mxu0 %v156
  %476 = vmatmul.mubr.bf16.gmra.mrb[0].mxu0 %v155
  %v477 = vpop.f32.mrb[0].mxu0
  %v478 = vadd.f32 %v429, %v477
  %v479 = vpop.f32.mrb[0].mxu0
  %v480 = vpop.f32.mrb[0].mxu0
  %v481 = vadd.f32 %v432, %v480
  %v482 = vpop.f32.mrb[0].mxu0
  %483 = vmatprep.mubr.bf16.mxu0 %v161
  %484 = vmatmul.mubr.bf16.gmra.mrb[0].mxu0 %v160
  %v485 = vpop.f32.mrb[0].mxu0
  %v486 = vadd.f32 %v437, %v485
  %v487 = vpop.f32.mrb[0].mxu0
  %v488 = vpop.f32.mrb[0].mxu0
  %v489 = vadd.f32 %v440, %v488
  %v490 = vpop.f32.mrb[0].mxu0
  %491 = vdwg.mxu0
  %492 = vmatprep.subr.bf16.mxu0 0
  %493 = vmatpush1.bf16.msra.mxu0 %v347
  %494 = vmatprep.subr.bf16.mxu0 0
  %495 = vmatpush1.bf16.msra.mxu0 %v348
  %496 = vmatprep.subr.bf16.mxu0 0
  %497 = vmatpush1.bf16.msra.mxu0 %v349
  %498 = vmatprep.subr.bf16.mxu0 0
  %499 = vmatpush1.bf16.msra.mxu0 %v350
  %500 = vmatprep.subr.bf16.mxu0 0
  %501 = vmatpush1.bf16.msra.mxu0 0
  %502 = vmatprep.subr.bf16.mxu0 0
  %503 = vmatpush1.bf16.msra.mxu0 0
  %504 = vmatprep.subr.bf16.mxu0 0
  %505 = vmatpush1.bf16.msra.mxu0 0
  %506 = vmatprep.subr.bf16.mxu0 0
  %507 = vmatpush1.bf16.msra.mxu0 0
  %508 = vmatprep.subr.bf16.mxu0 0
  %509 = vmatpush1.bf16.msra.mxu0 0
  %510 = vmatprep.subr.bf16.mxu0 0
  %511 = vmatpush1.bf16.msra.mxu0 0
  %512 = vmatprep.subr.bf16.mxu0 0
  %513 = vmatpush1.bf16.msra.mxu0 0
  %514 = vmatprep.subr.bf16.mxu0 0
  %515 = vmatpush1.bf16.msra.mxu0 0
  %516 = vmatprep.subr.bf16.mxu0 0
  %517 = vmatpush1.bf16.msra.mxu0 0
  %518 = vmatprep.subr.bf16.mxu0 0
  %519 = vmatpush1.bf16.msra.mxu0 0
  %520 = vmatprep.subr.bf16.mxu0 0
  %521 = vmatpush1.bf16.msra.mxu0 0
  %522 = vmatprep.subr.bf16.mxu0 0
  %523 = vmatpush1.bf16.msra.mxu0 0
  %524 = vmatprep.mubr.bf16.mxu0 0
  %525 = vmatmul.mubr.bf16.gmra.mrb[0].mxu0 %v389
  %v526 = vpop.f32.mrb[0].mxu0
  %v527 = vadd.f32 %v478, %v526
  %v528 = vpop.f32.mrb[0].mxu0
  %v529 = vpop.f32.mrb[0].mxu0
  %v530 = vadd.f32 %v481, %v529
  %v531 = vpop.f32.mrb[0].mxu0
  %532 = vmatprep.mubr.bf16.mxu0 0
  %533 = vmatmul.mubr.bf16.gmra.mrb[0].mxu0 %v392
  %v534 = vpop.f32.mrb[0].mxu0
  %v535 = vadd.f32 %v486, %v534
  %v536 = vpop.f32.mrb[0].mxu0
  %v537 = vpop.f32.mrb[0].mxu0
  %v538 = vadd.f32 %v489, %v537
  %v539 = vpop.f32.mrb[0].mxu0
  %540 = vdwg.mxu0
  %v541 = vadd.f32 %v33, %v527
  %v542 = vadd.f32 %v34, %v530
  %v543 = vadd.f32 %v35, %v535
  %v544 = vadd.f32 %v36, %v538
  %545 = vst.msk [vmem:[#allocation2] sm:$0xff] %vm387, %v541
  %546 = vst.msk [vmem:[#allocation2 + $0x8] sm:$0xff] %vm387, %v542
  %547 = vst.msk [vmem:[#allocation2 + $0x10] sm:$0xff] %vm387, %v543
  %548 = vst.msk [vmem:[#allocation2 + $0x18] sm:$0xff] %vm387, %v544
  // Predicated region
  $region30: #{urresnet_forward.19} parent=0 // pred_check
    %p549 = pneg %p24
  $region31: #{urresnet_forward.19} parent=0 // pred_check_branch
    %551 = sbr.rel (%p549) target = $region33
  $region32: #{urresnet_forward.19} parent=0 // pred_region
    %v552 = vld [vmem:[#allocation2] sm:$0xff]
    %v553 = vld [vmem:[#allocation2 + $0x8] sm:$0xff]
    %v554 = vld [vmem:[#allocation2 + $0x10] sm:$0xff]
    %v555 = vld [vmem:[#allocation2 + $0x18] sm:$0xff]
    %v556 = vld [vmem:[%s2] sm:$0x1]
    %v558 = vlaneseq
    %v559 = vshrl.u32 %v558, 7
    %v560 = vsub.s32 0, %v559
    %v561 = vrot.slane %v556, %v560
    %v563 = vmul.f32 %v552, %v561
    %v564 = vmul.f32 %v553, %v561
    %v565 = vmul.f32 %v554, %v561
    %v566 = vmul.f32 %v555, %v561
    %v567 = vld [vmem:[%s3] sm:$0x1]
    %v569 = vlaneseq
    %v570 = vshrl.u32 %v569, 7
    %v571 = vsub.s32 0, %v570
    %v572 = vrot.slane %v567, %v571
    %v574 = vadd.f32 %v563, %v572
    %v575 = vadd.f32 %v564, %v572
    %v576 = vadd.f32 %v565, %v572
    %v577 = vadd.f32 %v566, %v572
    %v578 = vld [vmem:[%s5] sm:$0xff]
    %v579 = vld [vmem:[%s5 + $0x8] sm:$0xff]
    %v580 = vld [vmem:[%s5 + $0x10] sm:$0xff]
    %v581 = vld [vmem:[%s5 + $0x18] sm:$0xff]
    %v582 = vadd.f32 %v574, %v578
    %v583 = vadd.f32 %v575, %v579
    %v584 = vadd.f32 %v576, %v580
    %v585 = vadd.f32 %v577, %v581
    %v586 = vld [vmem:[%s4] sm:$0x1]
    %vm587 = vcmp.gt.f32.partialorder %v586, 0.0
    %v588 = vmax.f32 %v582, 0.0
    %v589 = vmax.f32 %v583, 0.0
    %v590 = vmax.f32 %v584, 0.0
    %v591 = vmax.f32 %v585, 0.0
    %v592 = vsel %vm587, 1, 0
    %v593 = vlaneseq
    %v594 = vshrl.u32 %v593, 7
    %v595 = vsub.s32 0, %v594
    %v596 = vrot.slane %v592, %v595
    %vm597 = vcmp.eq.s32.totalorder %v596, 1
    %v598 = vsel %vm597, %v588, %v582
    %v599 = vsel %vm597, %v589, %v583
    %v600 = vsel %vm597, %v590, %v584
    %v601 = vsel %vm597, %v591, %v585
    %602 = vst.msk [vmem:[%s6] sm:$0xff] %vm387, %v598
    %603 = vst.msk [vmem:[%s6 + $0x8] sm:$0xff] %vm387, %v599
    %604 = vst.msk [vmem:[%s6 + $0x10] sm:$0xff] %vm387, %v600
    %605 = vst.msk [vmem:[%s6 + $0x18] sm:$0xff] %vm387, %v601
  $region33: #{urresnet_forward.19} parent=0 // pred_fallthru
    _
  // Predicated region
  $region34: #{urresnet_forward.19} parent=0 // pred_check
    _
  $region35: #{urresnet_forward.19} parent=0 // pred_check_branch
    %607 = sbr.rel (0) target = $region37
  $region36: #{urresnet_forward.19} parent=0 // pred_region
    _
  $region37: #{urresnet_forward.19} parent=0 // pred_fallthru
    _
  // Predicated region
  $region38: #{urresnet_forward.19} parent=0 // pred_check
    _
  $region39: #{urresnet_forward.19} parent=0 // pred_check_branch
    %609 = sbr.rel (0) target = $region41
  $region40: #{urresnet_forward.19} parent=0 // pred_region
    _
  $region41: #{urresnet_forward.19} parent=0 // pred_fallthru
    _

// kernel: urresnet_forward.20
$region0: #{urresnet_forward.20}
  #allocation0 [shape = 'u32[]', space=smem, size = 0x4, offset = 0x4, fixed_abs, tag = 'smem constant byte address 0x4 - core index']
  #allocation1 [shape = 'u32[144,128]{1,0:T(1,128)}', space=vmem, size = 0x12000, scoped, tag = 'internal scratch']
  #allocation2 [shape = 'f32[8,256]{1,0:T(8,128)}', space=vmem, size = 0x2000, scoped, tag = 'scratch operand']
  %s0 = inlined_call_operand.vmem [shape: bf16[8,576], index: 0, kind: input, shape index: {}]
  %s1 = inlined_call_operand.vmem [shape: bf16[576,256], index: 1, kind: input, shape index: {}]
  %s2 = inlined_call_operand.vmem [shape: f32[1,256], index: 2, kind: input, shape index: {}]
  %s3 = inlined_call_operand.vmem [shape: f32[1,256], index: 3, kind: input, shape index: {}]
  %s4 = inlined_call_operand.vmem [shape: f32[1,256], index: 4, kind: input, shape index: {}]
  %s5 = inlined_call_operand.vmem [shape: f32[8,256], index: 5, kind: output, shape index: {}]
  %s6 = sld [smem:[#allocation0]]
  $region38: #{urresnet_forward.20} parent=0
    _
  %s8 = ssub.s32 1, %s6
  %s9 = scalar_select 0, %s8, %s6
  // Predicated region
  $region2: #{urresnet_forward.20} parent=0 // pred_check
    _
  $region3: #{urresnet_forward.20} parent=0 // pred_check_branch
    %11 = sbr.rel (0) target = $region5
  $region4: #{urresnet_forward.20} parent=0 // pred_region
    _
  $region5: #{urresnet_forward.20} parent=0 // pred_fallthru
    _
  // Predicated region
  $region6: #{urresnet_forward.20} parent=0 // pred_check
    _
  $region7: #{urresnet_forward.20} parent=0 // pred_check_branch
    %13 = sbr.rel (0) target = $region9
  $region8: #{urresnet_forward.20} parent=0 // pred_region
    _
  $region9: #{urresnet_forward.20} parent=0 // pred_fallthru
    _
  // Predicated region
  $region10: #{urresnet_forward.20} parent=0 // pred_check
    _
  $region11: #{urresnet_forward.20} parent=0 // pred_check_branch
    %15 = sbr.rel (0) target = $region13
  $region12: #{urresnet_forward.20} parent=0 // pred_region
    _
  $region13: #{urresnet_forward.20} parent=0 // pred_fallthru
    _
  // Predicated region
  $region14: #{urresnet_forward.20} parent=0 // pred_check
    _
  $region15: #{urresnet_forward.20} parent=0 // pred_check_branch
    %17 = sbr.rel (0) target = $region17
  $region16: #{urresnet_forward.20} parent=0 // pred_region
    _
  $region17: #{urresnet_forward.20} parent=0 // pred_fallthru
    _
  // Predicated region
  $region18: #{urresnet_forward.20} parent=0 // pred_check
    _
  $region19: #{urresnet_forward.20} parent=0 // pred_check_branch
    %19 = sbr.rel (0) target = $region21
  $region20: #{urresnet_forward.20} parent=0 // pred_region
    _
  $region21: #{urresnet_forward.20} parent=0 // pred_fallthru
    _
  %p21 = scmp.eq.s32.totalorder 0, 0
  // Predicated region
  $region22: #{urresnet_forward.20} parent=0 // pred_check
    %p22 = pneg %p21
  $region23: #{urresnet_forward.20} parent=0 // pred_check_branch
    %24 = sbr.rel (%p22) target = $region25
  $region24: #{urresnet_forward.20} parent=0 // pred_region
    %25 = vst [vmem:[#allocation2] sm:$0xff] 0.0
    %26 = vst [vmem:[#allocation2 + $0x8] sm:$0xff] 0.0
  $region25: #{urresnet_forward.20} parent=0 // pred_fallthru
    _
  %v27 = vld [vmem:[#allocation2] sm:$0xff]
  %v28 = vld [vmem:[#allocation2 + $0x8] sm:$0xff]
  %v29 = vld [vmem:[%s0] sm:$0xff]
  %v30 = vld [vmem:[%s0 + $0x8] sm:$0xff]
  %v31 = vld [vmem:[%s0 + $0x10] sm:$0xf]
  %v32 = vld [vmem:[%s1] sm:$0xff]
  %v33 = vld [vmem:[%s1 + $0x8] sm:$0xff]
  %v34 = vld [vmem:[%s1 + $0x10] sm:$0xff]
  %v35 = vld [vmem:[%s1 + $0x18] sm:$0xff]
  %v36 = vld [vmem:[%s1 + $0x20] sm:$0xff]
  %v37 = vld [vmem:[%s1 + $0x28] sm:$0xff]
  %v38 = vld [vmem:[%s1 + $0x30] sm:$0xff]
  %v39 = vld [vmem:[%s1 + $0x38] sm:$0xff]
  %v40 = vld [vmem:[%s1 + $0x40] sm:$0xff]
  %v41 = vld [vmem:[%s1 + $0x48] sm:$0xff]
  %v42 = vld [vmem:[%s1 + $0x50] sm:$0xff]
  %v43 = vld [vmem:[%s1 + $0x58] sm:$0xff]
  %v44 = vld [vmem:[%s1 + $0x60] sm:$0xff]
  %v45 = vld [vmem:[%s1 + $0x68] sm:$0xff]
  %v46 = vld [vmem:[%s1 + $0x70] sm:$0xff]
  %v47 = vld [vmem:[%s1 + $0x78] sm:$0xff]
  %v48 = vld [vmem:[%s1 + $0x80] sm:$0xff]
  %v49 = vld [vmem:[%s1 + $0x88] sm:$0xff]
  %v50 = vld [vmem:[%s1 + $0x90] sm:$0xff]
  %v51 = vld [vmem:[%s1 + $0x98] sm:$0xff]
  %v52 = vld [vmem:[%s1 + $0xa0] sm:$0xff]
  %v53 = vld [vmem:[%s1 + $0xa8] sm:$0xff]
  %v54 = vld [vmem:[%s1 + $0xb0] sm:$0xff]
  %v55 = vld [vmem:[%s1 + $0xb8] sm:$0xff]
  %v56 = vld [vmem:[%s1 + $0xc0] sm:$0xff]
  %v57 = vld [vmem:[%s1 + $0xc8] sm:$0xff]
  %v58 = vld [vmem:[%s1 + $0xd0] sm:$0xff]
  %v59 = vld [vmem:[%s1 + $0xd8] sm:$0xff]
  %v60 = vld [vmem:[%s1 + $0xe0] sm:$0xff]
  %v61 = vld [vmem:[%s1 + $0xe8] sm:$0xff]
  %v62 = vld [vmem:[%s1 + $0xf0] sm:$0xff]
  %v63 = vld [vmem:[%s1 + $0xf8] sm:$0xff]
  %v64 = vld [vmem:[%s1 + $0x100] sm:$0xff]
  %v65 = vld [vmem:[%s1 + $0x108] sm:$0xff]
  %v66 = vld [vmem:[%s1 + $0x110] sm:$0xff]
  %v67 = vld [vmem:[%s1 + $0x118] sm:$0xff]
  %v68 = vld [vmem:[%s1 + $0x120] sm:$0xff]
  %v69 = vld [vmem:[%s1 + $0x128] sm:$0xff]
  %v70 = vld [vmem:[%s1 + $0x130] sm:$0xff]
  %v71 = vld [vmem:[%s1 + $0x138] sm:$0xff]
  %v72 = vld [vmem:[%s1 + $0x140] sm:$0xff]
  %v73 = vld [vmem:[%s1 + $0x148] sm:$0xff]
  %v74 = vld [vmem:[%s1 + $0x150] sm:$0xff]
  %v75 = vld [vmem:[%s1 + $0x158] sm:$0xff]
  %v76 = vld [vmem:[%s1 + $0x160] sm:$0xff]
  %v77 = vld [vmem:[%s1 + $0x168] sm:$0xff]
  %v78 = vld [vmem:[%s1 + $0x170] sm:$0xff]
  %v79 = vld [vmem:[%s1 + $0x178] sm:$0xff]
  %v80 = vld [vmem:[%s1 + $0x180] sm:$0xff]
  %v81 = vld [vmem:[%s1 + $0x188] sm:$0xff]
  %v82 = vld [vmem:[%s1 + $0x190] sm:$0xff]
  %v83 = vld [vmem:[%s1 + $0x198] sm:$0xff]
  %v84 = vld [vmem:[%s1 + $0x1a0] sm:$0xff]
  %v85 = vld [vmem:[%s1 + $0x1a8] sm:$0xff]
  %v86 = vld [vmem:[%s1 + $0x1b0] sm:$0xff]
  %v87 = vld [vmem:[%s1 + $0x1b8] sm:$0xff]
  %v88 = vld [vmem:[%s1 + $0x1c0] sm:$0xff]
  %v89 = vld [vmem:[%s1 + $0x1c8] sm:$0xff]
  %v90 = vld [vmem:[%s1 + $0x1d0] sm:$0xff]
  %v91 = vld [vmem:[%s1 + $0x1d8] sm:$0xff]
  %v92 = vld [vmem:[%s1 + $0x1e0] sm:$0xff]
  %v93 = vld [vmem:[%s1 + $0x1e8] sm:$0xff]
  %v94 = vld [vmem:[%s1 + $0x1f0] sm:$0xff]
  %v95 = vld [vmem:[%s1 + $0x1f8] sm:$0xff]
  %v96 = vld [vmem:[%s1 + $0x200] sm:$0xff]
  %v97 = vld [vmem:[%s1 + $0x208] sm:$0xff]
  %v98 = vld [vmem:[%s1 + $0x210] sm:$0xff]
  %v99 = vld [vmem:[%s1 + $0x218] sm:$0xff]
  %v100 = vld [vmem:[%s1 + $0x220] sm:$0xff]
  %v101 = vld [vmem:[%s1 + $0x228] sm:$0xff]
  %v102 = vld [vmem:[%s1 + $0x230] sm:$0xff]
  %v103 = vld [vmem:[%s1 + $0x238] sm:$0xff]
  %v107 = vunpack.c.l.b16 %v29
  %v108 = vunpack.c.h.b16 %v29
  %v109 = vunpack.c.l.b16 %v30
  %v110 = vunpack.c.h.b16 %v30
  %v111 = vunpack.c.l.b16 %v31
  %v112 = vpack.c.b16 %v107, %v107
  %v113 = vpack.c.b16 %v108, %v108
  %v114 = vpack.c.b16 %v109, %v109
  %v115 = vpack.c.b16 %v110, %v110
  %v116 = vpack.c.b16 %v111, %v111
  %v193 = vunpack.c.l.b16 %v32
  %v194 = vunpack.c.h.b16 %v32
  %v195 = vunpack.c.l.b16 %v33
  %v196 = vunpack.c.h.b16 %v33
  %v197 = vunpack.c.l.b16 %v34
  %v198 = vunpack.c.h.b16 %v34
  %v199 = vunpack.c.l.b16 %v35
  %v200 = vunpack.c.h.b16 %v35
  %v201 = vunpack.c.l.b16 %v36
  %v202 = vunpack.c.h.b16 %v36
  %v203 = vunpack.c.l.b16 %v37
  %v204 = vunpack.c.h.b16 %v37
  %v205 = vunpack.c.l.b16 %v38
  %v206 = vunpack.c.h.b16 %v38
  %v207 = vunpack.c.l.b16 %v39
  %v208 = vunpack.c.h.b16 %v39
  %v209 = vunpack.c.l.b16 %v40
  %v210 = vunpack.c.h.b16 %v40
  %v211 = vunpack.c.l.b16 %v41
  %v212 = vunpack.c.h.b16 %v41
  %v213 = vunpack.c.l.b16 %v42
  %v214 = vunpack.c.h.b16 %v42
  %v215 = vunpack.c.l.b16 %v43
  %v216 = vunpack.c.h.b16 %v43
  %v217 = vunpack.c.l.b16 %v44
  %v218 = vunpack.c.h.b16 %v44
  %v219 = vunpack.c.l.b16 %v45
  %v220 = vunpack.c.h.b16 %v45
  %v221 = vunpack.c.l.b16 %v46
  %v222 = vunpack.c.h.b16 %v46
  %v223 = vunpack.c.l.b16 %v47
  %v224 = vunpack.c.h.b16 %v47
  %v225 = vunpack.c.l.b16 %v48
  %v226 = vunpack.c.h.b16 %v48
  %v227 = vunpack.c.l.b16 %v49
  %v228 = vunpack.c.h.b16 %v49
  %v229 = vunpack.c.l.b16 %v50
  %v230 = vunpack.c.h.b16 %v50
  %v231 = vunpack.c.l.b16 %v51
  %v232 = vunpack.c.h.b16 %v51
  %v233 = vunpack.c.l.b16 %v52
  %v234 = vunpack.c.h.b16 %v52
  %v235 = vunpack.c.l.b16 %v53
  %v236 = vunpack.c.h.b16 %v53
  %v237 = vunpack.c.l.b16 %v54
  %v238 = vunpack.c.h.b16 %v54
  %v239 = vunpack.c.l.b16 %v55
  %v240 = vunpack.c.h.b16 %v55
  %v241 = vunpack.c.l.b16 %v56
  %v242 = vunpack.c.h.b16 %v56
  %v243 = vunpack.c.l.b16 %v57
  %v244 = vunpack.c.h.b16 %v57
  %v245 = vunpack.c.l.b16 %v58
  %v246 = vunpack.c.h.b16 %v58
  %v247 = vunpack.c.l.b16 %v59
  %v248 = vunpack.c.h.b16 %v59
  %v249 = vunpack.c.l.b16 %v60
  %v250 = vunpack.c.h.b16 %v60
  %v251 = vunpack.c.l.b16 %v61
  %v252 = vunpack.c.h.b16 %v61
  %v253 = vunpack.c.l.b16 %v62
  %v254 = vunpack.c.h.b16 %v62
  %v255 = vunpack.c.l.b16 %v63
  %v256 = vunpack.c.h.b16 %v63
  %v257 = vunpack.c.l.b16 %v64
  %v258 = vunpack.c.h.b16 %v64
  %v259 = vunpack.c.l.b16 %v65
  %v260 = vunpack.c.h.b16 %v65
  %v261 = vunpack.c.l.b16 %v66
  %v262 = vunpack.c.h.b16 %v66
  %v263 = vunpack.c.l.b16 %v67
  %v264 = vunpack.c.h.b16 %v67
  %v265 = vunpack.c.l.b16 %v68
  %v266 = vunpack.c.h.b16 %v68
  %v267 = vunpack.c.l.b16 %v69
  %v268 = vunpack.c.h.b16 %v69
  %v269 = vunpack.c.l.b16 %v70
  %v270 = vunpack.c.h.b16 %v70
  %v271 = vunpack.c.l.b16 %v71
  %v272 = vunpack.c.h.b16 %v71
  %v273 = vunpack.c.l.b16 %v72
  %v274 = vunpack.c.h.b16 %v72
  %v275 = vunpack.c.l.b16 %v73
  %v276 = vunpack.c.h.b16 %v73
  %v277 = vunpack.c.l.b16 %v74
  %v278 = vunpack.c.h.b16 %v74
  %v279 = vunpack.c.l.b16 %v75
  %v280 = vunpack.c.h.b16 %v75
  %v281 = vunpack.c.l.b16 %v76
  %v282 = vunpack.c.h.b16 %v76
  %v283 = vunpack.c.l.b16 %v77
  %v284 = vunpack.c.h.b16 %v77
  %v285 = vunpack.c.l.b16 %v78
  %v286 = vunpack.c.h.b16 %v78
  %v287 = vunpack.c.l.b16 %v79
  %v288 = vunpack.c.h.b16 %v79
  %v289 = vunpack.c.l.b16 %v80
  %v290 = vunpack.c.h.b16 %v80
  %v291 = vunpack.c.l.b16 %v81
  %v292 = vunpack.c.h.b16 %v81
  %v293 = vunpack.c.l.b16 %v82
  %v294 = vunpack.c.h.b16 %v82
  %v295 = vunpack.c.l.b16 %v83
  %v296 = vunpack.c.h.b16 %v83
  %v297 = vunpack.c.l.b16 %v84
  %v298 = vunpack.c.h.b16 %v84
  %v299 = vunpack.c.l.b16 %v85
  %v300 = vunpack.c.h.b16 %v85
  %v301 = vunpack.c.l.b16 %v86
  %v302 = vunpack.c.h.b16 %v86
  %v303 = vunpack.c.l.b16 %v87
  %v304 = vunpack.c.h.b16 %v87
  %v305 = vunpack.c.l.b16 %v88
  %v306 = vunpack.c.h.b16 %v88
  %v307 = vunpack.c.l.b16 %v89
  %v308 = vunpack.c.h.b16 %v89
  %v309 = vunpack.c.l.b16 %v90
  %v310 = vunpack.c.h.b16 %v90
  %v311 = vunpack.c.l.b16 %v91
  %v312 = vunpack.c.h.b16 %v91
  %v313 = vunpack.c.l.b16 %v92
  %v314 = vunpack.c.h.b16 %v92
  %v315 = vunpack.c.l.b16 %v93
  %v316 = vunpack.c.h.b16 %v93
  %v317 = vunpack.c.l.b16 %v94
  %v318 = vunpack.c.h.b16 %v94
  %v319 = vunpack.c.l.b16 %v95
  %v320 = vunpack.c.h.b16 %v95
  %v321 = vunpack.c.l.b16 %v96
  %v322 = vunpack.c.h.b16 %v96
  %v323 = vunpack.c.l.b16 %v97
  %v324 = vunpack.c.h.b16 %v97
  %v325 = vunpack.c.l.b16 %v98
  %v326 = vunpack.c.h.b16 %v98
  %v327 = vunpack.c.l.b16 %v99
  %v328 = vunpack.c.h.b16 %v99
  %v329 = vunpack.c.l.b16 %v100
  %v330 = vunpack.c.h.b16 %v100
  %v331 = vunpack.c.l.b16 %v101
  %v332 = vunpack.c.h.b16 %v101
  %v333 = vunpack.c.l.b16 %v102
  %v334 = vunpack.c.h.b16 %v102
  %v335 = vunpack.c.l.b16 %v103
  %v336 = vunpack.c.h.b16 %v103
  %v337 = vpack.c.b16 %v195, %v193
  %v338 = vpack.c.b16 %v196, %v194
  %v339 = vpack.c.b16 %v199, %v197
  %v340 = vpack.c.b16 %v200, %v198
  %v341 = vpack.c.b16 %v203, %v201
  %v342 = vpack.c.b16 %v204, %v202
  %v343 = vpack.c.b16 %v207, %v205
  %v344 = vpack.c.b16 %v208, %v206
  %v345 = vpack.c.b16 %v211, %v209
  %v346 = vpack.c.b16 %v212, %v210
  %v347 = vpack.c.b16 %v215, %v213
  %v348 = vpack.c.b16 %v216, %v214
  %v349 = vpack.c.b16 %v219, %v217
  %v350 = vpack.c.b16 %v220, %v218
  %v351 = vpack.c.b16 %v223, %v221
  %v352 = vpack.c.b16 %v224, %v222
  %v353 = vpack.c.b16 %v227, %v225
  %v354 = vpack.c.b16 %v228, %v226
  %v355 = vpack.c.b16 %v231, %v229
  %v356 = vpack.c.b16 %v232, %v230
  %v357 = vpack.c.b16 %v235, %v233
  %v358 = vpack.c.b16 %v236, %v234
  %v359 = vpack.c.b16 %v239, %v237
  %v360 = vpack.c.b16 %v240, %v238
  %v361 = vpack.c.b16 %v243, %v241
  %v362 = vpack.c.b16 %v244, %v242
  %v363 = vpack.c.b16 %v247, %v245
  %v364 = vpack.c.b16 %v248, %v246
  %v365 = vpack.c.b16 %v251, %v249
  %v366 = vpack.c.b16 %v252, %v250
  %v367 = vpack.c.b16 %v255, %v253
  %v368 = vpack.c.b16 %v256, %v254
  %v369 = vpack.c.b16 %v259, %v257
  %v370 = vpack.c.b16 %v260, %v258
  %v371 = vpack.c.b16 %v263, %v261
  %v372 = vpack.c.b16 %v264, %v262
  %v373 = vpack.c.b16 %v267, %v265
  %v374 = vpack.c.b16 %v268, %v266
  %v375 = vpack.c.b16 %v271, %v269
  %v376 = vpack.c.b16 %v272, %v270
  %v377 = vpack.c.b16 %v275, %v273
  %v378 = vpack.c.b16 %v276, %v274
  %v379 = vpack.c.b16 %v279, %v277
  %v380 = vpack.c.b16 %v280, %v278
  %v381 = vpack.c.b16 %v283, %v281
  %v382 = vpack.c.b16 %v284, %v282
  %v383 = vpack.c.b16 %v287, %v285
  %v384 = vpack.c.b16 %v288, %v286
  %v385 = vpack.c.b16 %v291, %v289
  %v386 = vpack.c.b16 %v292, %v290
  %v387 = vpack.c.b16 %v295, %v293
  %v388 = vpack.c.b16 %v296, %v294
  %v389 = vpack.c.b16 %v299, %v297
  %v390 = vpack.c.b16 %v300, %v298
  %v391 = vpack.c.b16 %v303, %v301
  %v392 = vpack.c.b16 %v304, %v302
  %v393 = vpack.c.b16 %v307, %v305
  %v394 = vpack.c.b16 %v308, %v306
  %v395 = vpack.c.b16 %v311, %v309
  %v396 = vpack.c.b16 %v312, %v310
  %v397 = vpack.c.b16 %v315, %v313
  %v398 = vpack.c.b16 %v316, %v314
  %v399 = vpack.c.b16 %v319, %v317
  %v400 = vpack.c.b16 %v320, %v318
  %v401 = vpack.c.b16 %v323, %v321
  %v402 = vpack.c.b16 %v324, %v322
  %v403 = vpack.c.b16 %v327, %v325
  %v404 = vpack.c.b16 %v328, %v326
  %v405 = vpack.c.b16 %v331, %v329
  %v406 = vpack.c.b16 %v332, %v330
  %v407 = vpack.c.b16 %v335, %v333
  %v408 = vpack.c.b16 %v336, %v334
  %vm481 = vcmask 523264
  %v483 = vsel %vm481, %v116, 0
  %485 = vmatprep.subr.bf16.mxu0 %v338
  %486 = vmatpush1.bf16.msra.mxu0 %v337
  %487 = vmatprep.subr.bf16.mxu0 %v340
  %488 = vmatpush1.bf16.msra.mxu0 %v339
  %489 = vmatprep.subr.bf16.mxu0 %v342
  %490 = vmatpush1.bf16.msra.mxu0 %v341
  %491 = vmatprep.subr.bf16.mxu0 %v344
  %492 = vmatpush1.bf16.msra.mxu0 %v343
  %493 = vmatprep.subr.bf16.mxu0 %v346
  %494 = vmatpush1.bf16.msra.mxu0 %v345
  %495 = vmatprep.subr.bf16.mxu0 %v348
  %496 = vmatpush1.bf16.msra.mxu0 %v347
  %497 = vmatprep.subr.bf16.mxu0 %v350
  %498 = vmatpush1.bf16.msra.mxu0 %v349
  %499 = vmatprep.subr.bf16.mxu0 %v352
  %500 = vmatpush1.bf16.msra.mxu0 %v351
  %501 = vmatprep.subr.bf16.mxu0 %v354
  %502 = vmatpush1.bf16.msra.mxu0 %v353
  %503 = vmatprep.subr.bf16.mxu0 %v356
  %504 = vmatpush1.bf16.msra.mxu0 %v355
  %505 = vmatprep.subr.bf16.mxu0 %v358
  %506 = vmatpush1.bf16.msra.mxu0 %v357
  %507 = vmatprep.subr.bf16.mxu0 %v360
  %508 = vmatpush1.bf16.msra.mxu0 %v359
  %509 = vmatprep.subr.bf16.mxu0 %v362
  %510 = vmatpush1.bf16.msra.mxu0 %v361
  %511 = vmatprep.subr.bf16.mxu0 %v364
  %512 = vmatpush1.bf16.msra.mxu0 %v363
  %513 = vmatprep.subr.bf16.mxu0 %v366
  %514 = vmatpush1.bf16.msra.mxu0 %v365
  %515 = vmatprep.subr.bf16.mxu0 %v368
  %516 = vmatpush1.bf16.msra.mxu0 %v367
  %517 = vmatprep.mubr.bf16.mxu0 %v113
  %518 = vmatmul.mubr.bf16.gmra.mrb[0].mxu0 %v112
  %v519 = vpop.f32.mrb[0].mxu0
  %v520 = vadd.f32 0.0, %v519
  %v521 = vpop.f32.mrb[0].mxu0
  %v522 = vadd.f32 0.0, %v521
  %v523 = vpop.f32.mrb[0].mxu0
  %v524 = vpop.f32.mrb[0].mxu0
  %525 = vdwg.mxu0
  %526 = vmatprep.subr.bf16.mxu0 %v370
  %527 = vmatpush1.bf16.msra.mxu0 %v369
  %528 = vmatprep.subr.bf16.mxu0 %v372
  %529 = vmatpush1.bf16.msra.mxu0 %v371
  %530 = vmatprep.subr.bf16.mxu0 %v374
  %531 = vmatpush1.bf16.msra.mxu0 %v373
  %532 = vmatprep.subr.bf16.mxu0 %v376
  %533 = vmatpush1.bf16.msra.mxu0 %v375
  %534 = vmatprep.subr.bf16.mxu0 %v378
  %535 = vmatpush1.bf16.msra.mxu0 %v377
  %536 = vmatprep.subr.bf16.mxu0 %v380
  %537 = vmatpush1.bf16.msra.mxu0 %v379
  %538 = vmatprep.subr.bf16.mxu0 %v382
  %539 = vmatpush1.bf16.msra.mxu0 %v381
  %540 = vmatprep.subr.bf16.mxu0 %v384
  %541 = vmatpush1.bf16.msra.mxu0 %v383
  %542 = vmatprep.subr.bf16.mxu0 %v386
  %543 = vmatpush1.bf16.msra.mxu0 %v385
  %544 = vmatprep.subr.bf16.mxu0 %v388
  %545 = vmatpush1.bf16.msra.mxu0 %v387
  %546 = vmatprep.subr.bf16.mxu0 %v390
  %547 = vmatpush1.bf16.msra.mxu0 %v389
  %548 = vmatprep.subr.bf16.mxu0 %v392
  %549 = vmatpush1.bf16.msra.mxu0 %v391
  %550 = vmatprep.subr.bf16.mxu0 %v394
  %551 = vmatpush1.bf16.msra.mxu0 %v393
  %552 = vmatprep.subr.bf16.mxu0 %v396
  %553 = vmatpush1.bf16.msra.mxu0 %v395
  %554 = vmatprep.subr.bf16.mxu0 %v398
  %555 = vmatpush1.bf16.msra.mxu0 %v397
  %556 = vmatprep.subr.bf16.mxu0 %v400
  %557 = vmatpush1.bf16.msra.mxu0 %v399
  %558 = vmatprep.mubr.bf16.mxu0 %v115
  %559 = vmatmul.mubr.bf16.gmra.mrb[0].mxu0 %v114
  %v560 = vpop.f32.mrb[0].mxu0
  %v561 = vadd.f32 %v520, %v560
  %v562 = vpop.f32.mrb[0].mxu0
  %v563 = vadd.f32 %v522, %v562
  %v564 = vpop.f32.mrb[0].mxu0
  %v565 = vpop.f32.mrb[0].mxu0
  %566 = vdwg.mxu0
  %567 = vmatprep.subr.bf16.mxu0 %v402
  %568 = vmatpush1.bf16.msra.mxu0 %v401
  %569 = vmatprep.subr.bf16.mxu0 %v404
  %570 = vmatpush1.bf16.msra.mxu0 %v403
  %571 = vmatprep.subr.bf16.mxu0 %v406
  %572 = vmatpush1.bf16.msra.mxu0 %v405
  %573 = vmatprep.subr.bf16.mxu0 %v408
  %574 = vmatpush1.bf16.msra.mxu0 %v407
  %575 = vmatprep.subr.bf16.mxu0 0
  %576 = vmatpush1.bf16.msra.mxu0 0
  %577 = vmatprep.subr.bf16.mxu0 0
  %578 = vmatpush1.bf16.msra.mxu0 0
  %579 = vmatprep.subr.bf16.mxu0 0
  %580 = vmatpush1.bf16.msra.mxu0 0
  %581 = vmatprep.subr.bf16.mxu0 0
  %582 = vmatpush1.bf16.msra.mxu0 0
  %583 = vmatprep.subr.bf16.mxu0 0
  %584 = vmatpush1.bf16.msra.mxu0 0
  %585 = vmatprep.subr.bf16.mxu0 0
  %586 = vmatpush1.bf16.msra.mxu0 0
  %587 = vmatprep.subr.bf16.mxu0 0
  %588 = vmatpush1.bf16.msra.mxu0 0
  %589 = vmatprep.subr.bf16.mxu0 0
  %590 = vmatpush1.bf16.msra.mxu0 0
  %591 = vmatprep.subr.bf16.mxu0 0
  %592 = vmatpush1.bf16.msra.mxu0 0
  %593 = vmatprep.subr.bf16.mxu0 0
  %594 = vmatpush1.bf16.msra.mxu0 0
  %595 = vmatprep.subr.bf16.mxu0 0
  %596 = vmatpush1.bf16.msra.mxu0 0
  %597 = vmatprep.subr.bf16.mxu0 0
  %598 = vmatpush1.bf16.msra.mxu0 0
  %599 = vmatprep.mubr.bf16.mxu0 0
  %600 = vmatmul.mubr.bf16.gmra.mrb[0].mxu0 %v483
  %v601 = vpop.f32.mrb[0].mxu0
  %v602 = vadd.f32 %v561, %v601
  %v603 = vpop.f32.mrb[0].mxu0
  %v604 = vadd.f32 %v563, %v603
  %v605 = vpop.f32.mrb[0].mxu0
  %v606 = vpop.f32.mrb[0].mxu0
  %607 = vdwg.mxu0
  %v608 = vadd.f32 %v27, %v602
  %v609 = vadd.f32 %v28, %v604
  %610 = vst [vmem:[#allocation2] sm:$0xff] %v608
  %611 = vst [vmem:[#allocation2 + $0x8] sm:$0xff] %v609
  // Predicated region
  $region26: #{urresnet_forward.20} parent=0 // pred_check
    %p612 = pneg %p21
  $region27: #{urresnet_forward.20} parent=0 // pred_check_branch
    %614 = sbr.rel (%p612) target = $region29
  $region28: #{urresnet_forward.20} parent=0 // pred_region
    %v615 = vld [vmem:[#allocation2] sm:$0xff]
    %v616 = vld [vmem:[#allocation2 + $0x8] sm:$0xff]
    %v617 = vld [vmem:[%s2] sm:$0x3]
    %v619 = vlaneseq
    %v620 = vshrl.u32 %v619, 7
    %v621 = vsub.s32 0, %v620
    %v622 = vrot.slane %v617, %v621
    %v623 = vlaneseq
    %v624 = vshrl.u32 %v623, 7
    %v625 = vsub.s32 1, %v624
    %v626 = vrot.slane %v617, %v625
    %v629 = vmul.f32 %v615, %v622
    %v630 = vmul.f32 %v616, %v626
    %v631 = vld [vmem:[%s3] sm:$0x3]
    %v633 = vlaneseq
    %v634 = vshrl.u32 %v633, 7
    %v635 = vsub.s32 0, %v634
    %v636 = vrot.slane %v631, %v635
    %v637 = vlaneseq
    %v638 = vshrl.u32 %v637, 7
    %v639 = vsub.s32 1, %v638
    %v640 = vrot.slane %v631, %v639
    %v643 = vadd.f32 %v629, %v636
    %v644 = vadd.f32 %v630, %v640
    %v645 = vld [vmem:[%s4] sm:$0x3]
    %vm646 = vcmp.gt.f32.partialorder %v645, 0.0
    %v647 = vmax.f32 %v643, 0.0
    %v648 = vmax.f32 %v644, 0.0
    %v649 = vsel %vm646, 1, 0
    %v650 = vlaneseq
    %v651 = vshrl.u32 %v650, 7
    %v652 = vsub.s32 0, %v651
    %v653 = vrot.slane %v649, %v652
    %v654 = vlaneseq
    %v655 = vshrl.u32 %v654, 7
    %v656 = vsub.s32 1, %v655
    %v657 = vrot.slane %v649, %v656
    %vm658 = vcmp.eq.s32.totalorder %v653, 1
    %vm659 = vcmp.eq.s32.totalorder %v657, 1
    %v660 = vsel %vm658, %v647, %v643
    %v661 = vsel %vm659, %v648, %v644
    %662 = vst [vmem:[%s5] sm:$0xff] %v660
    %663 = vst [vmem:[%s5 + $0x8] sm:$0xff] %v661
  $region29: #{urresnet_forward.20} parent=0 // pred_fallthru
    _
  // Predicated region
  $region30: #{urresnet_forward.20} parent=0 // pred_check
    _
  $region31: #{urresnet_forward.20} parent=0 // pred_check_branch
    %665 = sbr.rel (0) target = $region33
  $region32: #{urresnet_forward.20} parent=0 // pred_region
    _
  $region33: #{urresnet_forward.20} parent=0 // pred_fallthru
    _
  // Predicated region
  $region34: #{urresnet_forward.20} parent=0 // pred_check
    _
  $region35: #{urresnet_forward.20} parent=0 // pred_check_branch
    %667 = sbr.rel (0) target = $region37
  $region36: #{urresnet_forward.20} parent=0 // pred_region
    _
  $region37: #{urresnet_forward.20} parent=0 // pred_fallthru
    _

// kernel: urresnet_forward.22
$region0: #{urresnet_forward.22}
  #allocation0 [shape = 'u32[]', space=smem, size = 0x4, offset = 0x4, fixed_abs, tag = 'smem constant byte address 0x4 - core index']
  #allocation1 [shape = 'u32[144,128]{1,0:T(1,128)}', space=vmem, size = 0x12000, scoped, tag = 'internal scratch']
  %s0 = inlined_call_operand.vmem [shape: f32[2,4,128], index: 0, kind: input, shape index: {}]
  %s1 = inlined_call_operand.vmem [shape: f32[2,128], index: 1, kind: output, shape index: {}]
  %s2 = sld [smem:[#allocation0]]
  $region14: #{urresnet_forward.22} parent=0
    _
  %s4 = ssub.s32 1, %s2
  %s5 = scalar_select 0, %s4, %s2
  // Predicated region
  $region2: #{urresnet_forward.22} parent=0 // pred_check
    _
  $region3: #{urresnet_forward.22} parent=0 // pred_check_branch
    %7 = sbr.rel (0) target = $region5
  $region4: #{urresnet_forward.22} parent=0 // pred_region
    _
  $region5: #{urresnet_forward.22} parent=0 // pred_fallthru
    _
  %v8 = vld [vmem:[%s0] sm:$0xf]
  %v9 = vld [vmem:[%s0 + $0x4] sm:$0xf]
  %vm10 = vcmask 1043456
  %v11 = vsel %vm10, %v8, 0.0
  %v12 = vrot.slane %v11, 4
  %v13 = vadd.f32 %v11, %v12
  %v14 = vrot.slane %v13, 2
  %v15 = vadd.f32 %v13, %v14
  %v16 = vrot.slane %v15, 1
  %v17 = vadd.f32 %v15, %v16
  %v18 = vsel %vm10, %v9, 0.0
  %v19 = vrot.slane %v18, 4
  %v20 = vadd.f32 %v18, %v19
  %v21 = vrot.slane %v20, 2
  %v22 = vadd.f32 %v20, %v21
  %v23 = vrot.slane %v22, 1
  %v24 = vadd.f32 %v22, %v23
  %v25 = vrcp.pop 4.0
  %v26 = vmul.f32 %v17, %v25
  %v27 = vmul.f32 %v24, %v25
  %vm30 = vcmask 1041409
  %v31 = vsel %vm30, %v27, %v26
  %33 = vst [vmem:[%s1] sm:$0x3] %v31
  // Predicated region
  $region6: #{urresnet_forward.22} parent=0 // pred_check
    _
  $region7: #{urresnet_forward.22} parent=0 // pred_check_branch
    %35 = sbr.rel (0) target = $region9
  $region8: #{urresnet_forward.22} parent=0 // pred_region
    _
  $region9: #{urresnet_forward.22} parent=0 // pred_fallthru
    _
  // Predicated region
  $region10: #{urresnet_forward.22} parent=0 // pred_check
    _
  $region11: #{urresnet_forward.22} parent=0 // pred_check_branch
    %37 = sbr.rel (0) target = $region13
  $region12: #{urresnet_forward.22} parent=0 // pred_region
    _
  $region13: #{urresnet_forward.22} parent=0 // pred_fallthru
    _

// kernel: urresnet_forward.21
$region0: #{urresnet_forward.21}
  #allocation0 [shape = 'u32[]', space=smem, size = 0x4, offset = 0x4, fixed_abs, tag = 'smem constant byte address 0x4 - core index']
  #allocation1 [shape = 'u32[144,128]{1,0:T(1,128)}', space=vmem, size = 0x12000, scoped, tag = 'internal scratch']
  #allocation2 [shape = 'f32[8,128]{1,0:T(8,128)}', space=vmem, size = 0x1000, scoped, tag = 'scratch operand']
  %s0 = inlined_call_operand.vmem [shape: bf16[8,1152], index: 0, kind: input, shape index: {}]
  %s1 = inlined_call_operand.vmem [shape: bf16[1152,128], index: 1, kind: input, shape index: {}]
  %s2 = inlined_call_operand.vmem [shape: f32[1,128], index: 2, kind: input, shape index: {}]
  %s3 = inlined_call_operand.vmem [shape: f32[1,128], index: 3, kind: input, shape index: {}]
  %s4 = inlined_call_operand.vmem [shape: f32[1,128], index: 4, kind: input, shape index: {}]
  %s5 = inlined_call_operand.vmem [shape: f32[8,128], index: 5, kind: input, shape index: {}]
  %s6 = inlined_call_operand.vmem [shape: f32[8,128], index: 6, kind: output, shape index: {}]
  %s7 = sld [smem:[#allocation0]]
  $region65: #{urresnet_forward.21} parent=0
    _
  %s9 = ssub.s32 1, %s7
  %s10 = scalar_select 0, %s9, %s7
  loop: start=0, step=1, limit=11
  $region2: #{urresnet_forward.21} parent=0 // loop_pre_header
    _
  $region3: #{urresnet_forward.21} parent=0 // loop_header
    %s12 = sphi 0, %s16
    %p13 = scmp.ge.s32.totalorder %s12, 11
    %s19 = sphi 0, %s38
    %s20 = sphi 0, %s34
    %s21 = sphi 0, %s30
    %s22 = sphi 0, %s19
    %s23 = sphi 0, %s20
    %s24 = sphi 0, %s21
    %s25 = sphi 0, %s22
    %s26 = sphi 0, %s23
    %s27 = sphi 0, %s24
    %s43 = sphi 0, %s45
    %s46 = sphi 0, %s43
    %s47 = sphi 0, %s46
    %s63 = sphi 0, %s47
    %s71 = sphi 0, %s73
    %s74 = sphi 0, %s71
    %s75 = sphi 0, %s74
    %s91 = sphi 0, %s75
    %s97 = sphi 0, %s99
    %s100 = sphi 0, %s97
    %s101 = sphi 0, %s100
    %s117 = sphi 0, %s101
    %s123 = sphi 0, %s125
    %s126 = sphi 0, %s123
    %s127 = sphi 0, %s126
    %s143 = sphi 0, %s127
    %s149 = sphi 0, %s151
    %s152 = sphi 0, %s149
    %s153 = sphi 0, %s152
    %s169 = sphi 0, %s153
    %s177 = sphi 0, %s179
    %s180 = sphi 0, %s177
    %s181 = sphi 0, %s180
    %s197 = sphi 0, %s181
    %s205 = sphi 0, %s207
    %s208 = sphi 0, %s205
    %s209 = sphi 0, %s208
    %s225 = sphi 0, %s209
  $region4: #{urresnet_forward.21} parent=0 // loop_header_branch
    %15 = sbr.rel (%p13) target = $region8
  $region5: #{urresnet_forward.21} parent=0 // loop_body
    %s17 = ssub.s32 %s12, 1
    %s18 = ssub.s32 %s12, 2
    %s28 = sadd.s32 1, %s21
    %p29 = scmp.ge.s32.totalorder %s28, 9
    %s30 = scalar_select %p29, 0, %s28
    %s31 = sadd.s32 1, %s20
    %s32 = scalar_select %p29, %s31, %s20
    %p33 = scmp.ge.s32.totalorder %s32, 1
    %s34 = scalar_select %p33, 0, %s32
    %s35 = sadd.s32 1, %s19
    %s36 = scalar_select %p33, %s35, %s19
    %p37 = scmp.ge.s32.totalorder %s36, 1
    %s38 = scalar_select %p37, 0, %s36
    %s39 = ssub.s32 %s19, %s38
    %s40 = ssub.s32 %s21, %s30
    %s41 = sor.u32 %s39, %s40
    %p42 = scmp.eq.s32.totalorder %s41, 0
    %s44 = sadd.s32 %s43, 1
    %s45 = scalar_select %p42, %s43, %s44
    %p48 = pneg %p42
    %p49 = scmp.eq.s32.totalorder %s12, 8
    %p50 = por %p48, %p49
    %p51 = scmp.ne.s32.totalorder %s43, %s46
    %p52 = scmp.eq.s32.totalorder %s12, 0
    %p53 = por %p51, %p52
    %p54 = scmp.ne.s32.totalorder %s43, %s46
    %p55 = scmp.eq.s32.totalorder %s17, 8
    %p56 = por %p54, %p55
    %p57 = scmp.ne.s32.totalorder %s46, %s47
    %p58 = scmp.eq.s32.totalorder %s17, 0
    %p59 = por %p57, %p58
    %p60 = scmp.ne.s32.totalorder %s46, %s47
    %p61 = scmp.eq.s32.totalorder %s18, 8
    %p62 = por %p60, %p61
    %p64 = scmp.ne.s32.totalorder %s47, %s63
    %p65 = scmp.eq.s32.totalorder %s18, 0
    %p66 = por %p64, %p65
    %s67 = ssub.s32 %s21, %s30
    %s68 = ssub.s32 %s20, %s34
    %s69 = sor.u32 %s67, %s68
    %p70 = scmp.eq.s32.totalorder %s69, 0
    %s72 = sadd.s32 %s71, 1
    %s73 = scalar_select %p70, %s71, %s72
    %p76 = pneg %p70
    %p77 = scmp.eq.s32.totalorder %s12, 8
    %p78 = por %p76, %p77
    %p79 = scmp.ne.s32.totalorder %s71, %s74
    %p80 = scmp.eq.s32.totalorder %s12, 0
    %p81 = por %p79, %p80
    %p82 = scmp.ne.s32.totalorder %s71, %s74
    %p83 = scmp.eq.s32.totalorder %s17, 8
    %p84 = por %p82, %p83
    %p85 = scmp.ne.s32.totalorder %s74, %s75
    %p86 = scmp.eq.s32.totalorder %s17, 0
    %p87 = por %p85, %p86
    %p88 = scmp.ne.s32.totalorder %s74, %s75
    %p89 = scmp.eq.s32.totalorder %s18, 8
    %p90 = por %p88, %p89
    %p92 = scmp.ne.s32.totalorder %s75, %s91
    %p93 = scmp.eq.s32.totalorder %s18, 0
    %p94 = por %p92, %p93
    %s95 = ssub.s32 %s20, %s34
    %p96 = scmp.eq.s32.totalorder %s95, 0
    %s98 = sadd.s32 %s97, 1
    %s99 = scalar_select %p96, %s97, %s98
    %p102 = pneg %p96
    %p103 = scmp.eq.s32.totalorder %s12, 8
    %p104 = por %p102, %p103
    %p105 = scmp.ne.s32.totalorder %s97, %s100
    %p106 = scmp.eq.s32.totalorder %s12, 0
    %p107 = por %p105, %p106
    %p108 = scmp.ne.s32.totalorder %s97, %s100
    %p109 = scmp.eq.s32.totalorder %s17, 8
    %p110 = por %p108, %p109
    %p111 = scmp.ne.s32.totalorder %s100, %s101
    %p112 = scmp.eq.s32.totalorder %s17, 0
    %p113 = por %p111, %p112
    %p114 = scmp.ne.s32.totalorder %s100, %s101
    %p115 = scmp.eq.s32.totalorder %s18, 8
    %p116 = por %p114, %p115
    %p118 = scmp.ne.s32.totalorder %s101, %s117
    %p119 = scmp.eq.s32.totalorder %s18, 0
    %p120 = por %p118, %p119
    %s121 = ssub.s32 %s20, %s34
    %p122 = scmp.eq.s32.totalorder %s121, 0
    %s124 = sadd.s32 %s123, 1
    %s125 = scalar_select %p122, %s123, %s124
    %p128 = pneg %p122
    %p129 = scmp.eq.s32.totalorder %s12, 8
    %p130 = por %p128, %p129
    %p131 = scmp.ne.s32.totalorder %s123, %s126
    %p132 = scmp.eq.s32.totalorder %s12, 0
    %p133 = por %p131, %p132
    %p134 = scmp.ne.s32.totalorder %s123, %s126
    %p135 = scmp.eq.s32.totalorder %s17, 8
    %p136 = por %p134, %p135
    %p137 = scmp.ne.s32.totalorder %s126, %s127
    %p138 = scmp.eq.s32.totalorder %s17, 0
    %p139 = por %p137, %p138
    %p140 = scmp.ne.s32.totalorder %s126, %s127
    %p141 = scmp.eq.s32.totalorder %s18, 8
    %p142 = por %p140, %p141
    %p144 = scmp.ne.s32.totalorder %s127, %s143
    %p145 = scmp.eq.s32.totalorder %s18, 0
    %p146 = por %p144, %p145
    %s147 = ssub.s32 %s20, %s34
    %p148 = scmp.eq.s32.totalorder %s147, 0
    %s150 = sadd.s32 %s149, 1
    %s151 = scalar_select %p148, %s149, %s150
    %p154 = pneg %p148
    %p155 = scmp.eq.s32.totalorder %s12, 8
    %p156 = por %p154, %p155
    %p157 = scmp.ne.s32.totalorder %s149, %s152
    %p158 = scmp.eq.s32.totalorder %s12, 0
    %p159 = por %p157, %p158
    %p160 = scmp.ne.s32.totalorder %s149, %s152
    %p161 = scmp.eq.s32.totalorder %s17, 8
    %p162 = por %p160, %p161
    %p163 = scmp.ne.s32.totalorder %s152, %s153
    %p164 = scmp.eq.s32.totalorder %s17, 0
    %p165 = por %p163, %p164
    %p166 = scmp.ne.s32.totalorder %s152, %s153
    %p167 = scmp.eq.s32.totalorder %s18, 8
    %p168 = por %p166, %p167
    %p170 = scmp.ne.s32.totalorder %s153, %s169
    %p171 = scmp.eq.s32.totalorder %s18, 0
    %p172 = por %p170, %p171
    %s173 = ssub.s32 %s19, %s38
    %s174 = ssub.s32 %s20, %s34
    %s175 = sor.u32 %s173, %s174
    %p176 = scmp.eq.s32.totalorder %s175, 0
    %s178 = sadd.s32 %s177, 1
    %s179 = scalar_select %p176, %s177, %s178
    %p182 = pneg %p176
    %p183 = scmp.eq.s32.totalorder %s12, 8
    %p184 = por %p182, %p183
    %p185 = scmp.ne.s32.totalorder %s177, %s180
    %p186 = scmp.eq.s32.totalorder %s12, 0
    %p187 = por %p185, %p186
    %p188 = scmp.ne.s32.totalorder %s177, %s180
    %p189 = scmp.eq.s32.totalorder %s17, 8
    %p190 = por %p188, %p189
    %p191 = scmp.ne.s32.totalorder %s180, %s181
    %p192 = scmp.eq.s32.totalorder %s17, 0
    %p193 = por %p191, %p192
    %p194 = scmp.ne.s32.totalorder %s180, %s181
    %p195 = scmp.eq.s32.totalorder %s18, 8
    %p196 = por %p194, %p195
    %p198 = scmp.ne.s32.totalorder %s181, %s197
    %p199 = scmp.eq.s32.totalorder %s18, 0
    %p200 = por %p198, %p199
    %s201 = ssub.s32 %s19, %s38
    %s202 = ssub.s32 %s20, %s34
    %s203 = sor.u32 %s201, %s202
    %p204 = scmp.eq.s32.totalorder %s203, 0
    %s206 = sadd.s32 %s205, 1
    %s207 = scalar_select %p204, %s205, %s206
    %p210 = pneg %p204
    %p211 = scmp.eq.s32.totalorder %s12, 8
    %p212 = por %p210, %p211
    %p213 = scmp.ne.s32.totalorder %s205, %s208
    %p214 = scmp.eq.s32.totalorder %s12, 0
    %p215 = por %p213, %p214
    %p216 = scmp.ne.s32.totalorder %s205, %s208
    %p217 = scmp.eq.s32.totalorder %s17, 8
    %p218 = por %p216, %p217
    %p219 = scmp.ne.s32.totalorder %s208, %s209
    %p220 = scmp.eq.s32.totalorder %s17, 0
    %p221 = por %p219, %p220
    %p222 = scmp.ne.s32.totalorder %s208, %s209
    %p223 = scmp.eq.s32.totalorder %s18, 8
    %p224 = por %p222, %p223
    %p226 = scmp.ne.s32.totalorder %s209, %s225
    %p227 = scmp.eq.s32.totalorder %s18, 0
    %p228 = por %p226, %p227
    %p229 = scmp.le.s32.totalorder 1, %s12
    %p230 = scmp.lt.s32.totalorder %s12, 10
    %p231 = pnand %p229, %p230
    %p232 = pneg %p231
    // Predicated region
    $region9: #{urresnet_forward.21} parent=5 // pred_check
      _
    $region10: #{urresnet_forward.21} parent=5 // pred_check_branch
      %234 = sbr.rel (%p231) target = $region12
    $region11: #{urresnet_forward.21} parent=5 // pred_region
      %s235 = ssub.s32 %s12, 1
      // Predicated region
      $region13: #{urresnet_forward.21} parent=11 // pred_check
        %p236 = pneg %p113
      $region14: #{urresnet_forward.21} parent=11 // pred_check_branch
        %238 = sbr.rel (%p236) target = $region16
      $region15: #{urresnet_forward.21} parent=11 // pred_region
        %p239 = scmp.lt.s32.totalorder %s23, 0
        %s240 = scalar_select %p239, %s23, 0
        %s241 = scalar_lea.vmem %s2, %s240
      $region16: #{urresnet_forward.21} parent=11 // pred_fallthru
        _
      // Predicated region
      $region17: #{urresnet_forward.21} parent=11 // pred_check
        %p242 = pneg %p139
      $region18: #{urresnet_forward.21} parent=11 // pred_check_branch
        %244 = sbr.rel (%p242) target = $region20
      $region19: #{urresnet_forward.21} parent=11 // pred_region
        %p245 = scmp.lt.s32.totalorder %s23, 0
        %s246 = scalar_select %p245, %s23, 0
        %s247 = scalar_lea.vmem %s3, %s246
      $region20: #{urresnet_forward.21} parent=11 // pred_fallthru
        _
      // Predicated region
      $region21: #{urresnet_forward.21} parent=11 // pred_check
        %p248 = pneg %p165
      $region22: #{urresnet_forward.21} parent=11 // pred_check_branch
        %250 = sbr.rel (%p248) target = $region24
      $region23: #{urresnet_forward.21} parent=11 // pred_region
        %p251 = scmp.lt.s32.totalorder %s23, 0
        %s252 = scalar_select %p251, %s23, 0
        %s253 = scalar_lea.vmem %s4, %s252
      $region24: #{urresnet_forward.21} parent=11 // pred_fallthru
        _
      // Predicated region
      $region25: #{urresnet_forward.21} parent=11 // pred_check
        %p254 = pneg %p193
      $region26: #{urresnet_forward.21} parent=11 // pred_check_branch
        %256 = sbr.rel (%p254) target = $region28
      $region27: #{urresnet_forward.21} parent=11 // pred_region
        %p257 = scmp.lt.s32.totalorder %s22, 0
        %s258 = scalar_select %p257, %s22, 0
        %p259 = scmp.lt.s32.totalorder %s23, 0
        %s260 = scalar_select %p259, %s23, 0
        %s261 = sadd.s32 %s260, %s258
        %s262 = smul.addr %s261, 8
        %s263 = scalar_lea.vmem %s5, %s262
      $region28: #{urresnet_forward.21} parent=11 // pred_fallthru
        _
    $region12: #{urresnet_forward.21} parent=5 // pred_fallthru
      _
    %p264 = scmp.lt.s32.totalorder %s12, 9
    // Predicated region
    $region29: #{urresnet_forward.21} parent=5 // pred_check
      %p265 = pneg %p264
    $region30: #{urresnet_forward.21} parent=5 // pred_check_branch
      %267 = sbr.rel (%p265) target = $region32
    $region31: #{urresnet_forward.21} parent=5 // pred_region
      // Predicated region
      $region33: #{urresnet_forward.21} parent=31 // pred_check
        %p268 = pneg %p53
      $region34: #{urresnet_forward.21} parent=31 // pred_check_branch
        %270 = sbr.rel (%p268) target = $region36
      $region35: #{urresnet_forward.21} parent=31 // pred_region
        %p271 = scmp.lt.s32.totalorder %s19, 0
        %s272 = scalar_select %p271, %s19, 0
        %p273 = scmp.lt.s32.totalorder %s21, 8
        %s274 = scalar_select %p273, %s21, 8
        %s275 = smul.addr %s272, 9
        %s276 = sadd.s32 %s274, %s275
        %s277 = smul.addr %s276, 4
        %s278 = scalar_lea.vmem %s0, %s277
      $region36: #{urresnet_forward.21} parent=31 // pred_fallthru
        _
      // Predicated region
      $region37: #{urresnet_forward.21} parent=31 // pred_check
        %p279 = pneg %p81
      $region38: #{urresnet_forward.21} parent=31 // pred_check_branch
        %281 = sbr.rel (%p279) target = $region40
      $region39: #{urresnet_forward.21} parent=31 // pred_region
        %s282 = smul.u32 16, %s21
        %p283 = scmp.lt.s32.totalorder %s282, 143
        %s284 = scalar_select %p283, %s282, 143
        %p285 = scmp.lt.s32.totalorder %s20, 0
        %s286 = scalar_select %p285, %s20, 0
        %s287 = sadd.s32 %s286, %s284
        %s288 = smul.addr %s287, 4
        %s289 = scalar_lea.vmem %s1, %s288
        %s290 = smul.u32 16, %s21
      $region40: #{urresnet_forward.21} parent=31 // pred_fallthru
        _
    $region32: #{urresnet_forward.21} parent=5 // pred_fallthru
      _
    %p291 = scmp.le.s32.totalorder 1, %s12
    %p292 = scmp.lt.s32.totalorder %s12, 10
    %p293 = pnand %p291, %p292
    %p294 = pneg %p293
    // Predicated region
    $region41: #{urresnet_forward.21} parent=5 // pred_check
      _
    $region42: #{urresnet_forward.21} parent=5 // pred_check_branch
      %296 = sbr.rel (%p293) target = $region44
    $region43: #{urresnet_forward.21} parent=5 // pred_region
      %s297 = ssub.s32 %s12, 1
      %p298 = scmp.lt.s32.totalorder %s22, 0
      %s299 = scalar_select %p298, %s22, 0
      %p300 = scmp.lt.s32.totalorder %s24, 8
      %s301 = scalar_select %p300, %s24, 8
      %s302 = smul.addr %s299, 9
      %s303 = sadd.s32 %s301, %s302
      %s304 = smul.addr %s303, 4
      %s305 = scalar_lea.vmem %s0, %s304
      %p306 = pneg %p59
      %p307 = pneg %p56
      %s308 = smul.u32 16, %s24
      %p309 = scmp.lt.s32.totalorder %s308, 143
      %s310 = scalar_select %p309, %s308, 143
      %p311 = scmp.lt.s32.totalorder %s23, 0
      %s312 = scalar_select %p311, %s23, 0
      %s313 = sadd.s32 %s312, %s310
      %s314 = smul.addr %s313, 4
      %s315 = scalar_lea.vmem %s1, %s314
      %p316 = pneg %p87
      %p317 = pneg %p84
      %p318 = scmp.lt.s32.totalorder %s23, 0
      %s319 = scalar_select %p318, %s23, 0
      %s320 = scalar_lea.vmem %s2, %s319
      %p321 = pneg %p113
      %p322 = pneg %p110
      %p323 = scmp.lt.s32.totalorder %s23, 0
      %s324 = scalar_select %p323, %s23, 0
      %s325 = scalar_lea.vmem %s3, %s324
      %p326 = pneg %p139
      %p327 = pneg %p136
      %p328 = scmp.lt.s32.totalorder %s23, 0
      %s329 = scalar_select %p328, %s23, 0
      %s330 = scalar_lea.vmem %s4, %s329
      %p331 = pneg %p165
      %p332 = pneg %p162
      %p333 = scmp.lt.s32.totalorder %s22, 0
      %s334 = scalar_select %p333, %s22, 0
      %p335 = scmp.lt.s32.totalorder %s23, 0
      %s336 = scalar_select %p335, %s23, 0
      %s337 = sadd.s32 %s336, %s334
      %s338 = smul.addr %s337, 8
      %s339 = scalar_lea.vmem %s5, %s338
      %p340 = pneg %p193
      %p341 = pneg %p190
      %p342 = pneg %p221
      %p343 = pneg %p218
      %p344 = scmp.lt.s32.totalorder %s22, 0
      %s345 = scalar_select %p344, %s22, 0
      %p346 = scmp.lt.s32.totalorder %s23, 0
      %s347 = scalar_select %p346, %s23, 0
      %s348 = sadd.s32 %s347, %s345
      %s349 = smul.addr %s348, 8
      %s350 = scalar_lea.vmem %s6, %s349
      %p351 = scmp.lt.s32.totalorder %s22, 0
      %s352 = scalar_select %p351, %s22, 0
      %p353 = scmp.lt.s32.totalorder %s24, 8
      %s354 = scalar_select %p353, %s24, 8
      %s355 = smul.addr %s352, 9
      %s356 = sadd.s32 %s354, %s355
      %s357 = smul.addr %s356, 4
      %s358 = scalar_lea.vmem %s0, %s357
      %s359 = smul.u32 16, %s24
      %p360 = scmp.lt.s32.totalorder %s359, 143
      %s361 = scalar_select %p360, %s359, 143
      %p362 = scmp.lt.s32.totalorder %s23, 0
      %s363 = scalar_select %p362, %s23, 0
      %s364 = sadd.s32 %s363, %s361
      %s365 = smul.addr %s364, 4
      %s366 = scalar_lea.vmem %s1, %s365
      %s367 = smul.u32 16, %s24
      %p368 = scmp.lt.s32.totalorder %s23, 0
      %s369 = scalar_select %p368, %s23, 0
      %s370 = scalar_lea.vmem %s2, %s369
      %p371 = scmp.lt.s32.totalorder %s23, 0
      %s372 = scalar_select %p371, %s23, 0
      %s373 = scalar_lea.vmem %s3, %s372
      %p374 = scmp.lt.s32.totalorder %s23, 0
      %s375 = scalar_select %p374, %s23, 0
      %s376 = scalar_lea.vmem %s4, %s375
      %p377 = scmp.lt.s32.totalorder %s22, 0
      %s378 = scalar_select %p377, %s22, 0
      %p379 = scmp.lt.s32.totalorder %s23, 0
      %s380 = scalar_select %p379, %s23, 0
      %s381 = sadd.s32 %s380, %s378
      %s382 = smul.addr %s381, 8
      %s383 = scalar_lea.vmem %s5, %s382
      %p384 = scmp.lt.s32.totalorder %s22, 0
      %s385 = scalar_select %p384, %s22, 0
      %p386 = scmp.lt.s32.totalorder %s23, 0
      %s387 = scalar_select %p386, %s23, 0
      %s388 = sadd.s32 %s387, %s385
      %s389 = smul.addr %s388, 8
      %s390 = scalar_lea.vmem %s6, %s389
      %p392 = scmp.eq.s32.totalorder %s24, 0
      // Predicated region
      $region45: #{urresnet_forward.21} parent=43 // pred_check
        %p393 = pneg %p392
      $region46: #{urresnet_forward.21} parent=43 // pred_check_branch
        %395 = sbr.rel (%p393) target = $region48
      $region47: #{urresnet_forward.21} parent=43 // pred_region
        %396 = vst [vmem:[#allocation2] sm:$0xff] 0.0
      $region48: #{urresnet_forward.21} parent=43 // pred_fallthru
        _
      %v397 = vld [vmem:[#allocation2] sm:$0xff]
      %v398 = vld [vmem:[%s358] sm:$0xf]
      %v399 = vld [vmem:[%s366] sm:$0xf]
      %v400 = vld [vmem:[%s366 + $0x4] sm:$0xf]
      %v401 = vld [vmem:[%s366 + $0x8] sm:$0xf]
      %v402 = vld [vmem:[%s366 + $0xc] sm:$0xf]
      %v403 = vld [vmem:[%s366 + $0x10] sm:$0xf]
      %v404 = vld [vmem:[%s366 + $0x14] sm:$0xf]
      %v405 = vld [vmem:[%s366 + $0x18] sm:$0xf]
      %v406 = vld [vmem:[%s366 + $0x1c] sm:$0xf]
      %v407 = vld [vmem:[%s366 + $0x20] sm:$0xf]
      %v408 = vld [vmem:[%s366 + $0x24] sm:$0xf]
      %v409 = vld [vmem:[%s366 + $0x28] sm:$0xf]
      %v410 = vld [vmem:[%s366 + $0x2c] sm:$0xf]
      %v411 = vld [vmem:[%s366 + $0x30] sm:$0xf]
      %v412 = vld [vmem:[%s366 + $0x34] sm:$0xf]
      %v413 = vld [vmem:[%s366 + $0x38] sm:$0xf]
      %v414 = vld [vmem:[%s366 + $0x3c] sm:$0xf]
      %v431 = vunpack.c.l.b16 %v399
      %v432 = vunpack.c.l.b16 %v400
      %v433 = vunpack.c.l.b16 %v401
      %v434 = vunpack.c.l.b16 %v402
      %v435 = vunpack.c.l.b16 %v403
      %v436 = vunpack.c.l.b16 %v404
      %v437 = vunpack.c.l.b16 %v405
      %v438 = vunpack.c.l.b16 %v406
      %v439 = vunpack.c.l.b16 %v407
      %v440 = vunpack.c.l.b16 %v408
      %v441 = vunpack.c.l.b16 %v409
      %v442 = vunpack.c.l.b16 %v410
      %v443 = vunpack.c.l.b16 %v411
      %v444 = vunpack.c.l.b16 %v412
      %v445 = vunpack.c.l.b16 %v413
      %v446 = vunpack.c.l.b16 %v414
      %v447 = vpack.c.b16 %v432, %v431
      %v448 = vpack.c.b16 %v434, %v433
      %v449 = vpack.c.b16 %v436, %v435
      %v450 = vpack.c.b16 %v438, %v437
      %v451 = vpack.c.b16 %v440, %v439
      %v452 = vpack.c.b16 %v442, %v441
      %v453 = vpack.c.b16 %v444, %v443
      %v454 = vpack.c.b16 %v446, %v445
      %463 = vmatprep.subr.bf16.mxu0 0
      %464 = vmatpush1.bf16.msra.mxu0 %v447
      %465 = vmatprep.subr.bf16.mxu0 0
      %466 = vmatpush1.bf16.msra.mxu0 %v448
      %467 = vmatprep.subr.bf16.mxu0 0
      %468 = vmatpush1.bf16.msra.mxu0 %v449
      %469 = vmatprep.subr.bf16.mxu0 0
      %470 = vmatpush1.bf16.msra.mxu0 %v450
      %471 = vmatprep.subr.bf16.mxu0 0
      %472 = vmatpush1.bf16.msra.mxu0 %v451
      %473 = vmatprep.subr.bf16.mxu0 0
      %474 = vmatpush1.bf16.msra.mxu0 %v452
      %475 = vmatprep.subr.bf16.mxu0 0
      %476 = vmatpush1.bf16.msra.mxu0 %v453
      %477 = vmatprep.subr.bf16.mxu0 0
      %478 = vmatpush1.bf16.msra.mxu0 %v454
      %479 = vmatprep.subr.bf16.mxu0 0
      %480 = vmatpush1.bf16.msra.mxu0 0
      %481 = vmatprep.subr.bf16.mxu0 0
      %482 = vmatpush1.bf16.msra.mxu0 0
      %483 = vmatprep.subr.bf16.mxu0 0
      %484 = vmatpush1.bf16.msra.mxu0 0
      %485 = vmatprep.subr.bf16.mxu0 0
      %486 = vmatpush1.bf16.msra.mxu0 0
      %487 = vmatprep.subr.bf16.mxu0 0
      %488 = vmatpush1.bf16.msra.mxu0 0
      %489 = vmatprep.subr.bf16.mxu0 0
      %490 = vmatpush1.bf16.msra.mxu0 0
      %491 = vmatprep.subr.bf16.mxu0 0
      %492 = vmatpush1.bf16.msra.mxu0 0
      %493 = vmatprep.subr.bf16.mxu0 0
      %494 = vmatpush1.bf16.msra.mxu0 0
      %495 = vmatprep.mubr.bf16.mxu0 0
      %496 = vmatmul.mubr.bf16.gmra.mrb[0].mxu0 %v398
      %v497 = vpop.f32.mrb[0].mxu0
      %v498 = vadd.f32 0.0, %v497
      %v499 = vpop.f32.mrb[0].mxu0
      %v500 = vpop.f32.mrb[0].mxu0
      %v501 = vpop.f32.mrb[0].mxu0
      %502 = vdwg.mxu0
      %v503 = vadd.f32 %v397, %v498
      %504 = vst [vmem:[#allocation2] sm:$0xff] %v503
      %p505 = scmp.eq.s32.totalorder %s24, 8
      // Predicated region
      $region49: #{urresnet_forward.21} parent=43 // pred_check
        %p506 = pneg %p505
      $region50: #{urresnet_forward.21} parent=43 // pred_check_branch
        %508 = sbr.rel (%p506) target = $region52
      $region51: #{urresnet_forward.21} parent=43 // pred_region
        %v509 = vld [vmem:[#allocation2] sm:$0xff]
        %v510 = vld [vmem:[%s370] sm:$0x1]
        %v512 = vlaneseq
        %v513 = vshrl.u32 %v512, 7
        %v514 = vsub.s32 0, %v513
        %v515 = vrot.slane %v510, %v514
        %v517 = vmul.f32 %v509, %v515
        %v518 = vld [vmem:[%s373] sm:$0x1]
        %v520 = vlaneseq
        %v521 = vshrl.u32 %v520, 7
        %v522 = vsub.s32 0, %v521
        %v523 = vrot.slane %v518, %v522
        %v525 = vadd.f32 %v517, %v523
        %v526 = vld [vmem:[%s383] sm:$0xff]
        %v527 = vadd.f32 %v525, %v526
        %v528 = vld [vmem:[%s376] sm:$0x1]
        %vm529 = vcmp.gt.f32.partialorder %v528, 0.0
        %v530 = vmax.f32 %v527, 0.0
        %v531 = vsel %vm529, 1, 0
        %v532 = vlaneseq
        %v533 = vshrl.u32 %v532, 7
        %v534 = vsub.s32 0, %v533
        %v535 = vrot.slane %v531, %v534
        %vm536 = vcmp.eq.s32.totalorder %v535, 1
        %v537 = vsel %vm536, %v530, %v527
        %538 = vst [vmem:[%s390] sm:$0xff] %v537
      $region52: #{urresnet_forward.21} parent=43 // pred_fallthru
        _
      %p539 = scmp.lt.s32.totalorder %s22, 0
      %s540 = scalar_select %p539, %s22, 0
      %p541 = scmp.lt.s32.totalorder %s23, 0
      %s542 = scalar_select %p541, %s23, 0
      %s543 = sadd.s32 %s542, %s540
      %s544 = smul.addr %s543, 8
      %s545 = scalar_lea.vmem %s6, %s544
      // Predicated region
      $region53: #{urresnet_forward.21} parent=43 // pred_check
        %p546 = pneg %p218
      $region54: #{urresnet_forward.21} parent=43 // pred_check_branch
        %548 = sbr.rel (%p546) target = $region56
      $region55: #{urresnet_forward.21} parent=43 // pred_region
        _
      $region56: #{urresnet_forward.21} parent=43 // pred_fallthru
        _
      // Predicated region
      $region57: #{urresnet_forward.21} parent=43 // pred_check
        %p549 = pneg %p218
      $region58: #{urresnet_forward.21} parent=43 // pred_check_branch
        %551 = sbr.rel (%p549) target = $region60
      $region59: #{urresnet_forward.21} parent=43 // pred_region
        %p552 = scmp.lt.s32.totalorder %s22, 0
        %s553 = scalar_select %p552, %s22, 0
        %p554 = scmp.lt.s32.totalorder %s23, 0
        %s555 = scalar_select %p554, %s23, 0
        %s556 = sadd.s32 %s555, %s553
        %s557 = smul.addr %s556, 8
        %s558 = scalar_lea.vmem %s6, %s557
      $region60: #{urresnet_forward.21} parent=43 // pred_fallthru
        _
    $region44: #{urresnet_forward.21} parent=5 // pred_fallthru
      _
    %p559 = scmp.le.s32.totalorder 2, %s12
    // Predicated region
    $region61: #{urresnet_forward.21} parent=5 // pred_check
      %p560 = pneg %p559
    $region62: #{urresnet_forward.21} parent=5 // pred_check_branch
      %562 = sbr.rel (%p560) target = $region64
    $region63: #{urresnet_forward.21} parent=5 // pred_region
      %s563 = ssub.s32 %s12, 2
    $region64: #{urresnet_forward.21} parent=5 // pred_fallthru
      _
  $region6: #{urresnet_forward.21} parent=0 // loop_footer
    %s16 = sadd.s32 1, %s12
  $region7: #{urresnet_forward.21} parent=0 // loop_footer_branch
    %11 = sbr.rel target = $region3
  $region8: #{urresnet_forward.21} parent=0 // loop_exit
    _

// kernel: urresnet_forward.23
$region0: #{urresnet_forward.23}
  #allocation0 [shape = 'u32[]', space=smem, size = 0x4, offset = 0x4, fixed_abs, tag = 'smem constant byte address 0x4 - core index']
  #allocation1 [shape = 'u32[144,128]{1,0:T(1,128)}', space=vmem, size = 0x12000, scoped, tag = 'internal scratch']
  #allocation2 [shape = 'f32[2,7]{1,0:T(2,128)}', space=vmem, size = 0x400, scoped, tag = 'scratch operand']
  %s0 = inlined_call_operand.vmem [shape: bf16[2,128], index: 0, kind: input, shape index: {}]
  %s1 = inlined_call_operand.vmem [shape: bf16[128,7], index: 1, kind: input, shape index: {}]
  %s2 = inlined_call_operand.vmem [shape: f32[1,7], index: 2, kind: input, shape index: {}]
  %s3 = inlined_call_operand.vmem [shape: f32[1,7], index: 3, kind: input, shape index: {}]
  %s4 = inlined_call_operand.vmem [shape: f32[1,7], index: 4, kind: input, shape index: {}]
  %s5 = inlined_call_operand.hbm [shape: f32[2,7], index: 5, kind: output, shape index: {}]
  %s6 = sld [smem:[#allocation0]]
  $region38: #{urresnet_forward.23} parent=0
    _
  %s8 = ssub.s32 1, %s6
  %s9 = scalar_select 0, %s8, %s6
  $region1: #{urresnet_forward.23} parent=0
    #allocation3 [shape = 'u8[1024]{0}', space=vmem, size = 0x400, scoped, tag = 'output window, operand 0, single buffered']
    #allocation4 [shape = 's32[1]{0}', space=sflag, size = 0x4, scoped, tag = 'scoped memory for urresnet_forward.23']
    %10 = vsyncpa [#allocation4], 0
    // Predicated region
    $region2: #{urresnet_forward.23} parent=1 // pred_check
      _
    $region3: #{urresnet_forward.23} parent=1 // pred_check_branch
      %12 = sbr.rel (0) target = $region5
    $region4: #{urresnet_forward.23} parent=1 // pred_region
      _
    $region5: #{urresnet_forward.23} parent=1 // pred_fallthru
      _
    // Predicated region
    $region6: #{urresnet_forward.23} parent=1 // pred_check
      _
    $region7: #{urresnet_forward.23} parent=1 // pred_check_branch
      %14 = sbr.rel (0) target = $region9
    $region8: #{urresnet_forward.23} parent=1 // pred_region
      _
    $region9: #{urresnet_forward.23} parent=1 // pred_fallthru
      _
    // Predicated region
    $region10: #{urresnet_forward.23} parent=1 // pred_check
      _
    $region11: #{urresnet_forward.23} parent=1 // pred_check_branch
      %16 = sbr.rel (0) target = $region13
    $region12: #{urresnet_forward.23} parent=1 // pred_region
      _
    $region13: #{urresnet_forward.23} parent=1 // pred_fallthru
      _
    // Predicated region
    $region14: #{urresnet_forward.23} parent=1 // pred_check
      _
    $region15: #{urresnet_forward.23} parent=1 // pred_check_branch
      %18 = sbr.rel (0) target = $region17
    $region16: #{urresnet_forward.23} parent=1 // pred_region
      _
    $region17: #{urresnet_forward.23} parent=1 // pred_fallthru
      _
    // Predicated region
    $region18: #{urresnet_forward.23} parent=1 // pred_check
      _
    $region19: #{urresnet_forward.23} parent=1 // pred_check_branch
      %20 = sbr.rel (0) target = $region21
    $region20: #{urresnet_forward.23} parent=1 // pred_region
      _
    $region21: #{urresnet_forward.23} parent=1 // pred_fallthru
      _
    %p22 = scmp.eq.s32.totalorder 0, 0
    // Predicated region
    $region22: #{urresnet_forward.23} parent=1 // pred_check
      %p23 = pneg %p22
    $region23: #{urresnet_forward.23} parent=1 // pred_check_branch
      %25 = sbr.rel (%p23) target = $region25
    $region24: #{urresnet_forward.23} parent=1 // pred_region
      %vm26 = vcmask 50176
      %27 = vst.msk [vmem:[#allocation2] sm:$0x3] %vm26, 0.0
    $region25: #{urresnet_forward.23} parent=1 // pred_fallthru
      _
    %v28 = vld [vmem:[#allocation2] sm:$0x3]
    %v29 = vld [vmem:[%s0] sm:$0x1]
    %v30 = vld [vmem:[%s1] sm:$0xf]
    %v31 = vld [vmem:[%s1 + $0x4] sm:$0xf]
    %v32 = vld [vmem:[%s1 + $0x8] sm:$0xf]
    %v33 = vld [vmem:[%s1 + $0xc] sm:$0xf]
    %v34 = vld [vmem:[%s1 + $0x10] sm:$0xf]
    %v35 = vld [vmem:[%s1 + $0x14] sm:$0xf]
    %v36 = vld [vmem:[%s1 + $0x18] sm:$0xf]
    %v37 = vld [vmem:[%s1 + $0x1c] sm:$0xf]
    %v38 = vld [vmem:[%s1 + $0x20] sm:$0xf]
    %v39 = vld [vmem:[%s1 + $0x24] sm:$0xf]
    %v40 = vld [vmem:[%s1 + $0x28] sm:$0xf]
    %v41 = vld [vmem:[%s1 + $0x2c] sm:$0xf]
    %v42 = vld [vmem:[%s1 + $0x30] sm:$0xf]
    %v43 = vld [vmem:[%s1 + $0x34] sm:$0xf]
    %v44 = vld [vmem:[%s1 + $0x38] sm:$0xf]
    %v45 = vld [vmem:[%s1 + $0x3c] sm:$0xf]
    %v62 = vunpack.c.l.b16 %v30
    %v63 = vunpack.c.l.b16 %v31
    %v64 = vunpack.c.l.b16 %v32
    %v65 = vunpack.c.l.b16 %v33
    %v66 = vunpack.c.l.b16 %v34
    %v67 = vunpack.c.l.b16 %v35
    %v68 = vunpack.c.l.b16 %v36
    %v69 = vunpack.c.l.b16 %v37
    %v70 = vunpack.c.l.b16 %v38
    %v71 = vunpack.c.l.b16 %v39
    %v72 = vunpack.c.l.b16 %v40
    %v73 = vunpack.c.l.b16 %v41
    %v74 = vunpack.c.l.b16 %v42
    %v75 = vunpack.c.l.b16 %v43
    %v76 = vunpack.c.l.b16 %v44
    %v77 = vunpack.c.l.b16 %v45
    %v78 = vpack.c.b16 %v63, %v62
    %v79 = vpack.c.b16 %v65, %v64
    %v80 = vpack.c.b16 %v67, %v66
    %v81 = vpack.c.b16 %v69, %v68
    %v82 = vpack.c.b16 %v71, %v70
    %v83 = vpack.c.b16 %v73, %v72
    %v84 = vpack.c.b16 %v75, %v74
    %v85 = vpack.c.b16 %v77, %v76
    %94 = vmatprep.subr.bf16.mxu0 0
    %95 = vmatpush1.bf16.msra.mxu0 %v78
    %96 = vmatprep.subr.bf16.mxu0 0
    %97 = vmatpush1.bf16.msra.mxu0 %v79
    %98 = vmatprep.subr.bf16.mxu0 0
    %99 = vmatpush1.bf16.msra.mxu0 %v80
    %100 = vmatprep.subr.bf16.mxu0 0
    %101 = vmatpush1.bf16.msra.mxu0 %v81
    %102 = vmatprep.subr.bf16.mxu0 0
    %103 = vmatpush1.bf16.msra.mxu0 %v82
    %104 = vmatprep.subr.bf16.mxu0 0
    %105 = vmatpush1.bf16.msra.mxu0 %v83
    %106 = vmatprep.subr.bf16.mxu0 0
    %107 = vmatpush1.bf16.msra.mxu0 %v84
    %108 = vmatprep.subr.bf16.mxu0 0
    %109 = vmatpush1.bf16.msra.mxu0 %v85
    %110 = vmatprep.subr.bf16.mxu0 0
    %111 = vmatpush1.bf16.msra.mxu0 0
    %112 = vmatprep.subr.bf16.mxu0 0
    %113 = vmatpush1.bf16.msra.mxu0 0
    %114 = vmatprep.subr.bf16.mxu0 0
    %115 = vmatpush1.bf16.msra.mxu0 0
    %116 = vmatprep.subr.bf16.mxu0 0
    %117 = vmatpush1.bf16.msra.mxu0 0
    %118 = vmatprep.subr.bf16.mxu0 0
    %119 = vmatpush1.bf16.msra.mxu0 0
    %120 = vmatprep.subr.bf16.mxu0 0
    %121 = vmatpush1.bf16.msra.mxu0 0
    %122 = vmatprep.subr.bf16.mxu0 0
    %123 = vmatpush1.bf16.msra.mxu0 0
    %124 = vmatprep.subr.bf16.mxu0 0
    %125 = vmatpush1.bf16.msra.mxu0 0
    %126 = vmatprep.mubr.bf16.mxu0 0
    %127 = vmatmul.mubr.bf16.gmra.mrb[0].mxu0 %v29
    %v128 = vpop.f32.mrb[0].mxu0
    %v129 = vadd.f32 0.0, %v128
    %v130 = vpop.f32.mrb[0].mxu0
    %v131 = vpop.f32.mrb[0].mxu0
    %v132 = vpop.f32.mrb[0].mxu0
    %133 = vdwg.mxu0
    %v134 = vadd.f32 %v28, %v129
    %vm135 = vcmask 50176
    %136 = vst.msk [vmem:[#allocation2] sm:$0x3] %vm135, %v134
    // Predicated region
    $region26: #{urresnet_forward.23} parent=1 // pred_check
      %p137 = pneg %p22
    $region27: #{urresnet_forward.23} parent=1 // pred_check_branch
      %139 = sbr.rel (%p137) target = $region29
    $region28: #{urresnet_forward.23} parent=1 // pred_region
      %v140 = vld [vmem:[#allocation2] sm:$0x3]
      %v141 = vld [vmem:[%s2] sm:$0x1]
      %v143 = vlaneseq
      %v144 = vshrl.u32 %v143, 7
      %v145 = vsub.s32 0, %v144
      %v146 = vrot.slane %v141, %v145
      %v148 = vmul.f32 %v140, %v146
      %v149 = vld [vmem:[%s3] sm:$0x1]
      %v151 = vlaneseq
      %v152 = vshrl.u32 %v151, 7
      %v153 = vsub.s32 0, %v152
      %v154 = vrot.slane %v149, %v153
      %v156 = vadd.f32 %v148, %v154
      %v157 = vld [vmem:[%s4] sm:$0x1]
      %vm158 = vcmp.gt.f32.partialorder %v157, 0.0
      %v159 = vmax.f32 %v156, 0.0
      %v160 = vsel %vm158, 1, 0
      %v161 = vlaneseq
      %v162 = vshrl.u32 %v161, 7
      %v163 = vsub.s32 0, %v162
      %v164 = vrot.slane %v160, %v163
      %vm165 = vcmp.eq.s32.totalorder %v164, 1
      %v166 = vsel %vm165, %v159, %v156
      %167 = vst.msk [vmem:[#allocation3] sm:$0x3] %vm135, %v166
    $region29: #{urresnet_forward.23} parent=1 // pred_fallthru
      _
    // Predicated region
    $region30: #{urresnet_forward.23} parent=1 // pred_check
      _
    $region31: #{urresnet_forward.23} parent=1 // pred_check_branch
      %169 = sbr.rel (0) target = $region33
    $region32: #{urresnet_forward.23} parent=1 // pred_region
      %s171 = ssub.s32 32, 32
      %172 = vsyncadd [#allocation4], %s171
      %s174 = sshll.u32 [#allocation3], 4
      %s175 = int_to_ptr.vmem [resolvable:$true] %s174
      %177 = dma.vmem_to_hbm [thread:$0]  %s175, 32, %s5, [#allocation4]
    $region33: #{urresnet_forward.23} parent=1 // pred_fallthru
      _
    // Predicated region
    $region34: #{urresnet_forward.23} parent=1 // pred_check
      _
    $region35: #{urresnet_forward.23} parent=1 // pred_check_branch
      %179 = sbr.rel (0) target = $region37
    $region36: #{urresnet_forward.23} parent=1 // pred_region
      %180 = dma.done [#allocation4], 32
    $region37: #{urresnet_forward.23} parent=1 // pred_fallthru
      _
    %181 = vsyncpa [#allocation4], 1

</llo_original>
